<compile_context>
chip_gen: v7x
topology: tpu7x:2x2x1
jax: 0.10.0
libtpu: 0.0.40
codegen_flags: <defaults>
</compile_context>

<pallas_src>
import functools

import jax
import jax.numpy as jnp
from jax.experimental import pallas as pl
from jax.experimental.pallas import tpu as pltpu

NEG_SLOPE = 0.01
BN_EPS = 1e-5
# Explicit VMEM budget: safe on v5e/v6e (128 MiB physical) and v7x (64 MiB).
VMEM_LIMIT = 48 * 1024 * 1024


def _round_up(v, m):
    return ((v + m - 1) // m) * m


# ----------------------------------------------------------------------------
# Kernel 1: grouped, tiled  act(x @ w + b)   (bf16 MXU operands, f32 accumulate)
# ----------------------------------------------------------------------------
def _gemm_kernel(x_ref, w_ref, b_ref, o_ref, acc_ref, *, act, slope, nk):
    @pl.when(pl.program_id(3) == 0)
    def _init():
        acc_ref[...] = jnp.zeros_like(acc_ref)

    acc_ref[...] += jnp.dot(x_ref[...], w_ref[...],
                            preferred_element_type=jnp.float32)

    @pl.when(pl.program_id(3) == nk - 1)
    def _finish():
        y = acc_ref[...] + b_ref[...]          # elementwise math in f32 (v5e-friendly)
        if act == "leaky_relu":
            y = jnp.where(y >= 0, y, slope * y)
        elif act == "sigmoid":
            y = jax.nn.sigmoid(y)
        o_ref[...] = y.astype(o_ref.dtype)


def grouped_matmul_bias_act(xg, wg, bg, act="none", slope=NEG_SLOPE,
                            tm=256, tn=256, tk=512):
    """act(xg[g] @ wg[g] + bg[g]) for every group g.

    xg: (G, M, K), wg: (G, K, N), bg: (G, N) -> (G, M, N) float32.
    N/K are zero-padded to multiples of 128 (lane-dense loads/stores) and
    M to a multiple of 16; operands are cast to bf16 for the MXU.
    (On v5e a tn of 128 is the natural N tile; the layers here cap tn anyway.)
    """
    G, M, K = xg.shape
    _, _, N = wg.shape
    tm = min(tm, _round_up(M, 16))
    tn = min(tn, _round_up(N, 128))
    tk = min(tk, _round_up(K, 128))
    Mp, Np, Kp = _round_up(M, tm), _round_up(N, tn), _round_up(K, tk)

    xp = jnp.pad(xg.astype(jnp.bfloat16), ((0, 0), (0, Mp - M), (0, Kp - K)))
    wp = jnp.pad(wg.astype(jnp.bfloat16), ((0, 0), (0, Kp - K), (0, Np - N)))
    bp = jnp.pad(bg.astype(jnp.float32), ((0, 0), (0, Np - N)))[:, None, :]

    nk = Kp // tk
    grid = (G, Mp // tm, Np // tn, nk)
    kernel = functools.partial(_gemm_kernel, act=act, slope=slope, nk=nk)

    out = pl.pallas_call(
        kernel,
        out_shape=jax.ShapeDtypeStruct((G, Mp, Np), jnp.float32),
        grid_spec=pltpu.PrefetchScalarGridSpec(
            num_scalar_prefetch=0,
            grid=grid,
            in_specs=[
                pl.BlockSpec((None, tm, tk), lambda g, i, j, k: (g, i, k)),
                pl.BlockSpec((None, tk, tn), lambda g, i, j, k: (g, k, j)),
                pl.BlockSpec((None, 1, tn), lambda g, i, j, k: (g, 0, j)),
            ],
            out_specs=pl.BlockSpec((None, tm, tn), lambda g, i, j, k: (g, i, j)),
            scratch_shapes=[pltpu.VMEM((tm, tn), jnp.float32)],
        ),
        compiler_params=pltpu.CompilerParams(
            dimension_semantics=("parallel", "parallel", "parallel", "arbitrary"),
            vmem_limit_bytes=VMEM_LIMIT,
        ),
        cost_estimate=pl.CostEstimate(
            flops=2 * G * Mp * Np * Kp,
            transcendentals=G * Mp * Np if act == "sigmoid" else 0,
            bytes_accessed=2 * (xp.size + wp.size) + 4 * (bp.size + G * Mp * Np),
        ),
    )(xp, wp, bp)
    return out[:, :M, :N]


def linear_act(x, w, b, act="none", slope=NEG_SLOPE):
    """act(x @ w + b); x: (M, K), w: (K, N), b: (N,)."""
    return grouped_matmul_bias_act(x[None], w[None], b[None], act=act, slope=slope)[0]


# ----------------------------------------------------------------------------
# Kernel 2: fused  LeakyReLU(BatchNorm(x @ w + b))  (train-mode batch stats)
# ----------------------------------------------------------------------------
def _gemm_bn_lrelu_kernel(x_ref, w_ref, b_ref, g_ref, bb_ref, o_ref, acc_ref,
                          *, nk, valid_m, eps, slope):
    @pl.when(pl.program_id(1) == 0)
    def _init():
        acc_ref[...] = jnp.zeros_like(acc_ref)

    acc_ref[...] += jnp.dot(x_ref[...], w_ref[...],
                            preferred_element_type=jnp.float32)

    @pl.when(pl.program_id(1) == nk - 1)
    def _finish():
        y = acc_ref[...] + b_ref[...]
        mp = acc_ref.shape[0]
        if valid_m == mp:
            mean = jnp.mean(y, axis=0, keepdims=True)
            var = jnp.mean(jnp.square(y - mean), axis=0, keepdims=True)
        else:   # ignore zero-padded rows in the batch statistics
            rows = jax.lax.broadcasted_iota(jnp.int32, (mp, 1), 0)
            msk = (rows < valid_m).astype(jnp.float32)
            inv = 1.0 / float(valid_m)
            mean = jnp.sum(y * msk, axis=0, keepdims=True) * inv
            var = jnp.sum(jnp.square(y - mean) * msk, axis=0, keepdims=True) * inv
        z = (y - mean) * jax.lax.rsqrt(var + eps) * g_ref[...] + bb_ref[...]
        o_ref[...] = jnp.where(z >= 0, z, slope * z).astype(o_ref.dtype)


def matmul_bias_bn_lrelu(x, w, b, gamma, beta, eps=BN_EPS, slope=NEG_SLOPE,
                         tn=256, tk=512):
    """LeakyReLU(BatchNorm(x @ w + b)) with biased (train-mode) batch statistics.

    The full M (= B*H*W) extent stays VMEM-resident because the statistics
    reduce over every row; N and K are tiled (K is the reduction grid axis).
    """
    # TODO(synk): for production-size activations (M*tn*4B > VMEM) this needs a
    # two-pass grid reduction for the statistics instead of a resident M.
    M, K = x.shape
    _, N = w.shape
    tn = min(tn, _round_up(N, 128))
    tk = min(tk, _round_up(K, 128))
    Mp = _round_up(M, 16)
    Np, Kp = _round_up(N, tn), _round_up(K, tk)

    xp = jnp.pad(x.astype(jnp.bfloat16), ((0, Mp - M), (0, Kp - K)))
    wp = jnp.pad(w.astype(jnp.bfloat16), ((0, Kp - K), (0, Np - N)))
    bp = jnp.pad(b.astype(jnp.float32), (0, Np - N))[None, :]
    gp = jnp.pad(gamma.astype(jnp.float32), (0, Np - N))[None, :]
    btp = jnp.pad(beta.astype(jnp.float32), (0, Np - N))[None, :]

    nk = Kp // tk
    kernel = functools.partial(_gemm_bn_lrelu_kernel, nk=nk, valid_m=M,
                               eps=eps, slope=slope)
    out = pl.pallas_call(
        kernel,
        out_shape=jax.ShapeDtypeStruct((Mp, Np), jnp.float32),
        grid_spec=pltpu.PrefetchScalarGridSpec(
            num_scalar_prefetch=0,
            grid=(Np // tn, nk),
            in_specs=[
                pl.BlockSpec((Mp, tk), lambda j, k: (0, k)),
                pl.BlockSpec((tk, tn), lambda j, k: (k, j)),
                pl.BlockSpec((1, tn), lambda j, k: (0, j)),
                pl.BlockSpec((1, tn), lambda j, k: (0, j)),
                pl.BlockSpec((1, tn), lambda j, k: (0, j)),
            ],
            out_specs=pl.BlockSpec((Mp, tn), lambda j, k: (0, j)),
            scratch_shapes=[pltpu.VMEM((Mp, tn), jnp.float32)],
        ),
        compiler_params=pltpu.CompilerParams(
            dimension_semantics=("parallel", "arbitrary"),
            vmem_limit_bytes=VMEM_LIMIT,
        ),
        cost_estimate=pl.CostEstimate(
            flops=2 * Mp * Np * Kp + 8 * Mp * Np,
            transcendentals=Np,
            bytes_accessed=2 * (xp.size + wp.size) + 4 * Mp * Np,
        ),
    )(xp, wp, bp, gp, btp)
    return out[:M, :N]


# ----------------------------------------------------------------------------
# Conv / ConvTranspose layers in NHWC (patch extraction glue in plain JAX)
# ----------------------------------------------------------------------------
def _im2col_nhwc(x, k, stride, padding):
    """(B,H,W,C) -> ((B*Ho*Wo, C*k*k), Ho, Wo); feature order (C, kh, kw)."""
    patches = jax.lax.conv_general_dilated_patches(
        x, (k, k), (stride, stride),
        padding=((padding, padding), (padding, padding)),
        dimension_numbers=("NHWC", "HWIO", "NHWC"))
    B, Ho, Wo, F = patches.shape
    return patches.reshape(B * Ho * Wo, F), Ho, Wo


def conv2d_bn_lrelu(x, w, b, gamma, beta, stride, padding):
    """Conv2d + BatchNorm2d(train stats) + LeakyReLU (fused in one Pallas call).

    x: (B,H,W,Cin) NHWC, w: PyTorch layout (Cout,Cin,k,k)."""
    Cout, Cin, k, _ = w.shape
    B = x.shape[0]
    patches, Ho, Wo = _im2col_nhwc(x, k, stride, padding)
    wm = w.reshape(Cout, Cin * k * k).T          # (Cin*k*k, Cout) == patch feature order
    y = matmul_bias_bn_lrelu(patches, wm, b, gamma, beta)
    return y.reshape(B, Ho, Wo, Cout)            # already NHWC, no transpose


# output parity -> (taps of the 4-wide kernel used, one-sided input padding)
_SUBPIX_TAPS = {0: (3, 1), 1: (2, 0)}
_SUBPIX_PAD = {0: (1, 0), 1: (0, 1)}


def conv_transpose2d_s2k4p1(x, w, b, act):
    """ConvTranspose2d(kernel=4, stride=2, padding=1), NHWC, sub-pixel form.

    Instead of zero-stuffing the input (75% wasted MXU work + DMA), each of the
    4 output-parity classes (r, c) is an ordinary 2x2 conv of the un-dilated
    input with the sub-kernel W[:, :, taps_r, taps_c]; the 4 classes run as one
    grouped Pallas GEMM (leading grid axis G=4) and are interleaved afterwards.
    x: (B,H,W,Cin), w: PyTorch layout (Cin,Cout,4,4) -> (B,2H,2W,Cout).
    """
    B, H, W, Cin = x.shape
    Cout = w.shape[1]
    patch_list, wmat_list = [], []
    for r in (0, 1):
        for c in (0, 1):
            pr = jnp.array(_SUBPIX_TAPS[r])
            pc = jnp.array(_SUBPIX_TAPS[c])
            wsub = w[:, :, pr, :][:, :, :, pc]                       # (Cin,Cout,2,2)
            wmat_list.append(wsub.transpose(0, 2, 3, 1).reshape(Cin * 4, Cout))
            patches = jax.lax.conv_general_dilated_patches(
                x, (2, 2), (1, 1),
                padding=(_SUBPIX_PAD[r], _SUBPIX_PAD[c]),
                dimension_numbers=("NHWC", "HWIO", "NHWC"))
            patch_list.append(patches.reshape(B * H * W, Cin * 4))
    xg = jnp.stack(patch_list)                                       # (4, B*H*W, 4*Cin)
    wg = jnp.stack(wmat_list)                                        # (4, 4*Cin, Cout)
    bg = jnp.broadcast_to(b.astype(jnp.float32), (4, Cout))
    y = grouped_matmul_bias_act(xg, wg, bg, act=act)                 # (4, B*H*W, Cout)
    y = y.reshape(2, 2, B, H, W, Cout).transpose(2, 3, 0, 4, 1, 5)   # (B,H,2,W,2,C)
    return y.reshape(B, 2 * H, 2 * W, Cout)


# ----------------------------------------------------------------------------
# Parameter construction (deterministic, synthetic)
# ----------------------------------------------------------------------------
def make_params(key, latent_dim=32, backbone_channels=32, image_res=64):
    bc = latent_dim * 8          # decoder bottleneck channels
    init_size = image_res // 32

    def nrm(k, shape, scale=0.05):
        return scale * jax.random.normal(k, shape, dtype=jnp.float32)

    ks = jax.random.split(key, 32)
    i = iter(range(32))
    p = {}
    # Encoder conv stack
    p["e_conv1_w"] = nrm(ks[next(i)], (64, 3, 4, 4));    p["e_conv1_b"] = nrm(ks[next(i)], (64,))
    p["e_bn1_g"] = jnp.ones((64,));                      p["e_bn1_b"] = jnp.zeros((64,))
    p["e_conv2_w"] = nrm(ks[next(i)], (128, 64, 4, 4));  p["e_conv2_b"] = nrm(ks[next(i)], (128,))
    p["e_bn2_g"] = jnp.ones((128,));                     p["e_bn2_b"] = jnp.zeros((128,))
    p["e_conv3_w"] = nrm(ks[next(i)], (backbone_channels, 128, 3, 3))
    p["e_conv3_b"] = nrm(ks[next(i)], (backbone_channels,))
    p["e_bn3_g"] = jnp.ones((backbone_channels,));       p["e_bn3_b"] = jnp.zeros((backbone_channels,))
    # Encoder linear stack (stored as (in, out))
    p["e_lin1_w"] = nrm(ks[next(i)], (backbone_channels * 16, backbone_channels * 4))
    p["e_lin1_b"] = nrm(ks[next(i)], (backbone_channels * 4,))
    p["e_lin2_w"] = nrm(ks[next(i)], (backbone_channels * 4, latent_dim))
    p["e_lin2_b"] = nrm(ks[next(i)], (latent_dim,))
    # Decoder linear
    p["d_lin_w"] = nrm(ks[next(i)], (latent_dim, bc));   p["d_lin_b"] = nrm(ks[next(i)], (bc,))
    # Decoder conv-transpose stack (PyTorch weight layout: (Cin, Cout, k, k))
    p["d_ct1_w"] = nrm(ks[next(i)], (bc, 256, init_size, init_size)); p["d_ct1_b"] = nrm(ks[next(i)], (256,))
    p["d_ct2_w"] = nrm(ks[next(i)], (256, 128, 4, 4));   p["d_ct2_b"] = nrm(ks[next(i)], (128,))
    p["d_ct3_w"] = nrm(ks[next(i)], (128, 64, 4, 4));    p["d_ct3_b"] = nrm(ks[next(i)], (64,))
    p["d_ct4_w"] = nrm(ks[next(i)], (64, 32, 4, 4));     p["d_ct4_b"] = nrm(ks[next(i)], (32,))
    p["d_ct5_w"] = nrm(ks[next(i)], (32, 3, 4, 4));      p["d_ct5_b"] = nrm(ks[next(i)], (3,))
    return p


# ----------------------------------------------------------------------------
# Forward pass (activations NHWC internally)
# ----------------------------------------------------------------------------
def encoder_forward(x_nchw, p):
    x = x_nchw.transpose(0, 2, 3, 1)                     # NCHW -> NHWC once
    h = conv2d_bn_lrelu(x, p["e_conv1_w"], p["e_conv1_b"], p["e_bn1_g"], p["e_bn1_b"], 2, 1)
    h = conv2d_bn_lrelu(h, p["e_conv2_w"], p["e_conv2_b"], p["e_bn2_g"], p["e_bn2_b"], 2, 1)
    h = conv2d_bn_lrelu(h, p["e_conv3_w"], p["e_conv3_b"], p["e_bn3_g"], p["e_bn3_b"], 1, 1)
    B, H, W, C = h.shape
    # AdaptiveAvgPool2d((4,4)) for H, W divisible by 4 (identity at 4x4).
    # TODO(synk): general non-divisible floor/ceil pooling windows not implemented.
    pooled = h.reshape(B, 4, H // 4, 4, W // 4, C).mean(axis=(2, 4))   # (B,4,4,C)
    # flatten in PyTorch NCHW order (tiny tensor; matches nn.Linear semantics)
    pooled = pooled.transpose(0, 3, 1, 2).reshape(B, -1)
    h = linear_act(pooled, p["e_lin1_w"], p["e_lin1_b"], act="leaky_relu")
    return linear_act(h, p["e_lin2_w"], p["e_lin2_b"], act="none")


def decoder_forward(latent, p):
    B = latent.shape[0]
    lined = linear_act(latent, p["d_lin_w"], p["d_lin_b"], act="leaky_relu")
    # d_ct1: ConvTranspose2d on a 1x1 spatial map == a plain matmul
    Cin, Cout, k, _ = p["d_ct1_w"].shape
    w1 = p["d_ct1_w"].transpose(0, 2, 3, 1).reshape(Cin, k * k * Cout)
    b1 = jnp.tile(p["d_ct1_b"], k * k)
    h = linear_act(lined, w1, b1, act="leaky_relu").reshape(B, k, k, Cout)  # NHWC
    h = conv_transpose2d_s2k4p1(h, p["d_ct2_w"], p["d_ct2_b"], act="leaky_relu")
    h = conv_transpose2d_s2k4p1(h, p["d_ct3_w"], p["d_ct3_b"], act="leaky_relu")
    h = conv_transpose2d_s2k4p1(h, p["d_ct4_w"], p["d_ct4_b"], act="leaky_relu")
    img = conv_transpose2d_s2k4p1(h, p["d_ct5_w"], p["d_ct5_b"], act="sigmoid")
    return img.transpose(0, 3, 1, 2)                     # NHWC -> NCHW once


@jax.jit
def clagnosco_autoencoder_forward(x, params):
    latent = encoder_forward(x, params)
    recon = decoder_forward(latent, params)
    return latent, recon


# ----------------------------------------------------------------------------
# Pure-JAX f32 reference (for a loose numerical cross-check of the kernels)
# ----------------------------------------------------------------------------
def _ref_conv(x, w, b, stride, padding):
    y = jax.lax.conv_general_dilated(
        x, w, (stride, stride), ((padding, padding), (padding, padding)),
        dimension_numbers=("NCHW", "OIHW", "NCHW"),
        precision=jax.lax.Precision.HIGHEST)
    return y + b.reshape(1, -1, 1, 1)


def _ref_convT(x, w, b, stride, padding):
    k = w.shape[-1]
    wt = jnp.flip(w, (2, 3)).transpose(1, 0, 2, 3)       # (Cout, Cin, k, k)
    pad = k - 1 - padding
    y = jax.lax.conv_general_dilated(
        x, wt, (1, 1), ((pad, pad), (pad, pad)), lhs_dilation=(stride, stride),
        dimension_numbers=("NCHW", "OIHW", "NCHW"),
        precision=jax.lax.Precision.HIGHEST)
    return y + b.reshape(1, -1, 1, 1)


def _ref_bn_lrelu(x, g, bt):
    mean = x.mean(axis=(0, 2, 3), keepdims=True)
    var = ((x - mean) ** 2).mean(axis=(0, 2, 3), keepdims=True)
    y = (x - mean) * jax.lax.rsqrt(var + BN_EPS) * g.reshape(1, -1, 1, 1) + bt.reshape(1, -1, 1, 1)
    return jnp.where(y >= 0, y, NEG_SLOPE * y)


def _ref_lrelu(x):
    return jnp.where(x >= 0, x, NEG_SLOPE * x)


def _dot(a, b):
    return jnp.dot(a, b, precision=jax.lax.Precision.HIGHEST)


@jax.jit
def reference_forward(x, p):
    h = _ref_bn_lrelu(_ref_conv(x, p["e_conv1_w"], p["e_conv1_b"], 2, 1), p["e_bn1_g"], p["e_bn1_b"])
    h = _ref_bn_lrelu(_ref_conv(h, p["e_conv2_w"], p["e_conv2_b"], 2, 1), p["e_bn2_g"], p["e_bn2_b"])
    h = _ref_bn_lrelu(_ref_conv(h, p["e_conv3_w"], p["e_conv3_b"], 1, 1), p["e_bn3_g"], p["e_bn3_b"])
    B, C, H, W = h.shape
    pooled = h.reshape(B, C, 4, H // 4, 4, W // 4).mean(axis=(3, 5)).reshape(B, -1)
    h = _ref_lrelu(_dot(pooled, p["e_lin1_w"]) + p["e_lin1_b"])
    latent = _dot(h, p["e_lin2_w"]) + p["e_lin2_b"]
    lined = _ref_lrelu(_dot(latent, p["d_lin_w"]) + p["d_lin_b"])
    h = lined.reshape(B, -1, 1, 1)
    h = _ref_lrelu(_ref_convT(h, p["d_ct1_w"], p["d_ct1_b"], 1, 0))
    h = _ref_lrelu(_ref_convT(h, p["d_ct2_w"], p["d_ct2_b"], 2, 1))
    h = _ref_lrelu(_ref_convT(h, p["d_ct3_w"], p["d_ct3_b"], 2, 1))
    h = _ref_lrelu(_ref_convT(h, p["d_ct4_w"], p["d_ct4_b"], 2, 1))
    img = jax.nn.sigmoid(_ref_convT(h, p["d_ct5_w"], p["d_ct5_b"], 2, 1))
    return latent, img


# ----------------------------------------------------------------------------
if __name__ == "__main__":
    LATENT_DIM = 32
    BACKBONE_CH = 32
    IMAGE_RES = 64   # decoder: init_size = 2, output spatial = 2 * 16 = 32

    key = jax.random.PRNGKey(0)
    k_par, k_in = jax.random.split(key)
    params = make_params(k_par, latent_dim=LATENT_DIM,
                         backbone_channels=BACKBONE_CH, image_res=IMAGE_RES)
    x = jax.random.normal(k_in, (2, 3, 16, 16), dtype=jnp.float32)

    latent, recon = jax.block_until_ready(clagnosco_autoencoder_forward(x, params))

    assert latent.shape == (2, LATENT_DIM), latent.shape
    assert recon.shape == (2, 3, 32, 32), recon.shape
    assert bool(jnp.all(jnp.isfinite(latent))) and bool(jnp.all(jnp.isfinite(recon)))
    assert bool(jnp.all(recon >= 0.0)) and bool(jnp.all(recon <= 1.0))  # sigmoid output

    # Loose cross-check vs a pure-JAX f32 reference (kernel matmuls run in bf16).
    lat_ref, rec_ref = jax.block_until_ready(reference_forward(x, params))

    def max_rel(a, b):
        return float(jnp.max(jnp.abs(a - b)) / (jnp.max(jnp.abs(b)) + 1e-6))

    assert max_rel(latent, lat_ref) < 0.1, ("latent mismatch", max_rel(latent, lat_ref))
    assert max_rel(recon, rec_ref) < 0.1, ("recon mismatch", max_rel(recon, rec_ref))

    print("KERNEL_OK")
</pallas_src>

<mosaic_0001>
module attributes {stable_mosaic.version = 11 : i64} {
  func.func @_gemm_bn_lrelu_kernel(%arg0: i32, %arg1: i32, %arg2: memref<128x128xbf16, #tpu.memory_space<vmem>>, %arg3: memref<128x128xbf16, #tpu.memory_space<vmem>>, %arg4: memref<1x128xf32, #tpu.memory_space<vmem>>, %arg5: memref<1x128xf32, #tpu.memory_space<vmem>>, %arg6: memref<1x128xf32, #tpu.memory_space<vmem>>, %arg7: memref<128x128xf32, #tpu.memory_space<vmem>>, %arg8: memref<128x128xf32, #tpu.memory_space<vmem>>) attributes {dimension_semantics = [#tpu.dimension_semantics<parallel>, #tpu.dimension_semantics<arbitrary>], iteration_bounds = array<i64: 1, 1>, scalar_prefetch = 0 : i64, scratch_operands = 1 : i64, tpu.core_type = #tpu.core_type<tc>, window_params = [{transform_indices = @transform_0, window_bounds = array<i64: 128, 128>}, {transform_indices = @transform_1, window_bounds = array<i64: 128, 128>}, {transform_indices = @transform_2, window_bounds = array<i64: 1, 128>}, {transform_indices = @transform_3, window_bounds = array<i64: 1, 128>}, {transform_indices = @transform_4, window_bounds = array<i64: 1, 128>}, {transform_indices = @transform_5, window_bounds = array<i64: 128, 128>}]} {
    %c0_i32 = arith.constant 0 : i32
    %0 = arith.cmpi eq, %arg1, %c0_i32 : i32
    %1 = arith.extui %0 : i1 to i32
    %c0_i32_0 = arith.constant 0 : i32
    %2 = arith.cmpi ne, %1, %c0_i32_0 : i32
    scf.if %2 {
      %cst_10 = arith.constant 0.000000e+00 : f32
      %12 = vector.broadcast %cst_10 : f32 to vector<128x128xf32>
      %c0_11 = arith.constant 0 : index
      %c0_12 = arith.constant 0 : index
      %13 = vector.load %arg8[%c0_11, %c0_12] : memref<128x128xf32, #tpu.memory_space<vmem>>, vector<128x128xf32>
      tpu.vector_store %arg8[%c0_11, %c0_12], %12 {strides = array<i32>} : memref<128x128xf32, #tpu.memory_space<vmem>>, vector<128x128xf32>,
    } else {
    }
    %c0 = arith.constant 0 : index
    %c0_1 = arith.constant 0 : index
    %3 = vector.load %arg8[%c0, %c0_1] : memref<128x128xf32, #tpu.memory_space<vmem>>, vector<128x128xf32>
    %c0_2 = arith.constant 0 : index
    %c0_3 = arith.constant 0 : index
    %4 = vector.load %arg2[%c0_2, %c0_3] : memref<128x128xbf16, #tpu.memory_space<vmem>>, vector<128x128xbf16>
    %c0_4 = arith.constant 0 : index
    %c0_5 = arith.constant 0 : index
    %5 = vector.load %arg3[%c0_4, %c0_5] : memref<128x128xbf16, #tpu.memory_space<vmem>>, vector<128x128xbf16>
    %cst = arith.constant dense<0.000000e+00> : vector<128x128xf32>
    %6 = tpu.matmul %4, %5, %cst {dimension_numbers = #tpu.dot_dimension_numbers<[1], [0], [0], [1], [0, 0, 1, 1], [], []>} : vector<128x128xbf16>, vector<128x128xbf16>, vector<128x128xf32> -> vector<128x128xf32>
    %7 = arith.addf %3, %6 : vector<128x128xf32>
    %c0_6 = arith.constant 0 : index
    %c0_7 = arith.constant 0 : index
    %8 = vector.load %arg8[%c0_6, %c0_7] : memref<128x128xf32, #tpu.memory_space<vmem>>, vector<128x128xf32>
    tpu.vector_store %arg8[%c0_6, %c0_7], %7 {strides = array<i32>} : memref<128x128xf32, #tpu.memory_space<vmem>>, vector<128x128xf32>,
    %c0_i32_8 = arith.constant 0 : i32
    %9 = arith.cmpi eq, %arg1, %c0_i32_8 : i32
    %10 = arith.extui %9 : i1 to i32
    %c0_i32_9 = arith.constant 0 : i32
    %11 = arith.cmpi ne, %10, %c0_i32_9 : i32
    scf.if %11 {
      %c0_10 = arith.constant 0 : index
      %c0_11 = arith.constant 0 : index
      %12 = vector.load %arg8[%c0_10, %c0_11] : memref<128x128xf32, #tpu.memory_space<vmem>>, vector<128x128xf32>
      %c0_12 = arith.constant 0 : index
      %c0_13 = arith.constant 0 : index
      %13 = vector.load %arg4[%c0_12, %c0_13] : memref<1x128xf32, #tpu.memory_space<vmem>>, vector<1x128xf32>
      %14 = vector.broadcast %13 : vector<1x128xf32> to vector<128x128xf32>
      %15 = arith.addf %12, %14 : vector<128x128xf32>
      %cst_14 = arith.constant dense<0.000000e+00> : vector<128xf32>
      %16 = vector.multi_reduction <add>, %15, %cst_14 [0] : vector<128x128xf32> to vector<128xf32>
      %17 = vector.shape_cast %16 : vector<128xf32> to vector<1x128xf32>
      %cst_15 = arith.constant 1.280000e+02 : f32
      %18 = vector.broadcast %cst_15 : f32 to vector<1x128xf32>
      %19 = arith.divf %17, %18 : vector<1x128xf32>
      %20 = vector.broadcast %19 : vector<1x128xf32> to vector<128x128xf32>
      %21 = arith.subf %15, %20 : vector<128x128xf32>
      %22 = arith.mulf %21, %21 : vector<128x128xf32>
      %cst_16 = arith.constant dense<0.000000e+00> : vector<128xf32>
      %23 = vector.multi_reduction <add>, %22, %cst_16 [0] : vector<128x128xf32> to vector<128xf32>
      %24 = vector.shape_cast %23 : vector<128xf32> to vector<1x128xf32>
      %cst_17 = arith.constant 1.280000e+02 : f32
      %25 = vector.broadcast %cst_17 : f32 to vector<1x128xf32>
      %26 = arith.divf %24, %25 : vector<1x128xf32>
      %27 = vector.broadcast %19 : vector<1x128xf32> to vector<128x128xf32>
      %28 = arith.subf %15, %27 : vector<128x128xf32>
      %cst_18 = arith.constant 9.99999974E-6 : f32
      %29 = vector.broadcast %cst_18 : f32 to vector<1x128xf32>
      %30 = arith.addf %26, %29 : vector<1x128xf32>
      %31 = math.rsqrt %30 : vector<1x128xf32>
      %32 = vector.broadcast %31 : vector<1x128xf32> to vector<128x128xf32>
      %33 = arith.mulf %28, %32 : vector<128x128xf32>
      %c0_19 = arith.constant 0 : index
      %c0_20 = arith.constant 0 : index
      %34 = vector.load %arg5[%c0_19, %c0_20] : memref<1x128xf32, #tpu.memory_space<vmem>>, vector<1x128xf32>
      %35 = vector.broadcast %34 : vector<1x128xf32> to vector<128x128xf32>
      %36 = arith.mulf %33, %35 : vector<128x128xf32>
      %c0_21 = arith.constant 0 : index
      %c0_22 = arith.constant 0 : index
      %37 = vector.load %arg6[%c0_21, %c0_22] : memref<1x128xf32, #tpu.memory_space<vmem>>, vector<1x128xf32>
      %38 = vector.broadcast %37 : vector<1x128xf32> to vector<128x128xf32>
      %39 = arith.addf %36, %38 : vector<128x128xf32>
      %cst_23 = arith.constant 0.000000e+00 : f32
      %40 = vector.broadcast %cst_23 : f32 to vector<128x128xf32>
      %41 = arith.cmpf oge, %39, %40 : vector<128x128xf32>
      %cst_24 = arith.constant 0.00999999977 : f32
      %42 = vector.broadcast %cst_24 : f32 to vector<128x128xf32>
      %43 = arith.mulf %42, %39 : vector<128x128xf32>
      %44 = arith.select %41, %39, %43 : vector<128x128xi1>, vector<128x128xf32>
      %c0_25 = arith.constant 0 : index
      %c0_26 = arith.constant 0 : index
      %45 = vector.load %arg7[%c0_25, %c0_26] : memref<128x128xf32, #tpu.memory_space<vmem>>, vector<128x128xf32>
      tpu.vector_store %arg7[%c0_25, %c0_26], %44 {strides = array<i32>} : memref<128x128xf32, #tpu.memory_space<vmem>>, vector<128x128xf32>,
    } else {
    }
    return
  }
  func.func @transform_0(%arg0: i32, %arg1: i32) -> (i32, i32) {
    %c0_i32 = arith.constant 0 : i32
    %c0_i32_0 = arith.constant 0 : i32
    return %c0_i32, %arg1 : i32, i32
  }
  func.func @transform_1(%arg0: i32, %arg1: i32) -> (i32, i32) {
    %c0_i32 = arith.constant 0 : i32
    return %arg1, %arg0 : i32, i32
  }
  func.func @transform_2(%arg0: i32, %arg1: i32) -> (i32, i32) {
    %c0_i32 = arith.constant 0 : i32
    %c0_i32_0 = arith.constant 0 : i32
    return %c0_i32, %arg0 : i32, i32
  }
  func.func @transform_3(%arg0: i32, %arg1: i32) -> (i32, i32) {
    %c0_i32 = arith.constant 0 : i32
    %c0_i32_0 = arith.constant 0 : i32
    return %c0_i32, %arg0 : i32, i32
  }
  func.func @transform_4(%arg0: i32, %arg1: i32) -> (i32, i32) {
    %c0_i32 = arith.constant 0 : i32
    %c0_i32_0 = arith.constant 0 : i32
    return %c0_i32, %arg0 : i32, i32
  }
  func.func @transform_5(%arg0: i32, %arg1: i32) -> (i32, i32) {
    %c0_i32 = arith.constant 0 : i32
    %c0_i32_0 = arith.constant 0 : i32
    return %c0_i32, %arg0 : i32, i32
  }
}

module attributes {stable_mosaic.version = 11 : i64} {
  func.func @_gemm_bn_lrelu_kernel(%arg0: i32, %arg1: i32, %arg2: memref<32x512xbf16, #tpu.memory_space<vmem>>, %arg3: memref<512x128xbf16, #tpu.memory_space<vmem>>, %arg4: memref<1x128xf32, #tpu.memory_space<vmem>>, %arg5: memref<1x128xf32, #tpu.memory_space<vmem>>, %arg6: memref<1x128xf32, #tpu.memory_space<vmem>>, %arg7: memref<32x128xf32, #tpu.memory_space<vmem>>, %arg8: memref<32x128xf32, #tpu.memory_space<vmem>>) attributes {dimension_semantics = [#tpu.dimension_semantics<parallel>, #tpu.dimension_semantics<arbitrary>], iteration_bounds = array<i64: 1, 2>, scalar_prefetch = 0 : i64, scratch_operands = 1 : i64, tpu.core_type = #tpu.core_type<tc>, window_params = [{transform_indices = @transform_0, window_bounds = array<i64: 32, 512>}, {transform_indices = @transform_1, window_bounds = array<i64: 512, 128>}, {transform_indices = @transform_2, window_bounds = array<i64: 1, 128>}, {transform_indices = @transform_3, window_bounds = array<i64: 1, 128>}, {transform_indices = @transform_4, window_bounds = array<i64: 1, 128>}, {transform_indices = @transform_5, window_bounds = array<i64: 32, 128>}]} {
    %c0_i32 = arith.constant 0 : i32
    %0 = arith.cmpi eq, %arg1, %c0_i32 : i32
    %1 = arith.extui %0 : i1 to i32
    %c0_i32_0 = arith.constant 0 : i32
    %2 = arith.cmpi ne, %1, %c0_i32_0 : i32
    scf.if %2 {
      %cst_9 = arith.constant 0.000000e+00 : f32
      %12 = vector.broadcast %cst_9 : f32 to vector<32x128xf32>
      %c0_10 = arith.constant 0 : index
      %c0_11 = arith.constant 0 : index
      %13 = vector.load %arg8[%c0_10, %c0_11] : memref<32x128xf32, #tpu.memory_space<vmem>>, vector<32x128xf32>
      tpu.vector_store %arg8[%c0_10, %c0_11], %12 {strides = array<i32>} : memref<32x128xf32, #tpu.memory_space<vmem>>, vector<32x128xf32>,
    } else {
    }
    %c0 = arith.constant 0 : index
    %c0_1 = arith.constant 0 : index
    %3 = vector.load %arg8[%c0, %c0_1] : memref<32x128xf32, #tpu.memory_space<vmem>>, vector<32x128xf32>
    %c0_2 = arith.constant 0 : index
    %c0_3 = arith.constant 0 : index
    %4 = vector.load %arg2[%c0_2, %c0_3] : memref<32x512xbf16, #tpu.memory_space<vmem>>, vector<32x512xbf16>
    %c0_4 = arith.constant 0 : index
    %c0_5 = arith.constant 0 : index
    %5 = vector.load %arg3[%c0_4, %c0_5] : memref<512x128xbf16, #tpu.memory_space<vmem>>, vector<512x128xbf16>
    %cst = arith.constant dense<0.000000e+00> : vector<32x128xf32>
    %6 = tpu.matmul %4, %5, %cst {dimension_numbers = #tpu.dot_dimension_numbers<[1], [0], [0], [1], [0, 0, 1, 1], [], []>} : vector<32x512xbf16>, vector<512x128xbf16>, vector<32x128xf32> -> vector<32x128xf32>
    %7 = arith.addf %3, %6 : vector<32x128xf32>
    %c0_6 = arith.constant 0 : index
    %c0_7 = arith.constant 0 : index
    %8 = vector.load %arg8[%c0_6, %c0_7] : memref<32x128xf32, #tpu.memory_space<vmem>>, vector<32x128xf32>
    tpu.vector_store %arg8[%c0_6, %c0_7], %7 {strides = array<i32>} : memref<32x128xf32, #tpu.memory_space<vmem>>, vector<32x128xf32>,
    %c1_i32 = arith.constant 1 : i32
    %9 = arith.cmpi eq, %arg1, %c1_i32 : i32
    %10 = arith.extui %9 : i1 to i32
    %c0_i32_8 = arith.constant 0 : i32
    %11 = arith.cmpi ne, %10, %c0_i32_8 : i32
    scf.if %11 {
      %c0_9 = arith.constant 0 : index
      %c0_10 = arith.constant 0 : index
      %12 = vector.load %arg8[%c0_9, %c0_10] : memref<32x128xf32, #tpu.memory_space<vmem>>, vector<32x128xf32>
      %c0_11 = arith.constant 0 : index
      %c0_12 = arith.constant 0 : index
      %13 = vector.load %arg4[%c0_11, %c0_12] : memref<1x128xf32, #tpu.memory_space<vmem>>, vector<1x128xf32>
      %14 = vector.broadcast %13 : vector<1x128xf32> to vector<32x128xf32>
      %15 = arith.addf %12, %14 : vector<32x128xf32>
      %cst_13 = arith.constant dense<0.000000e+00> : vector<128xf32>
      %16 = vector.multi_reduction <add>, %15, %cst_13 [0] : vector<32x128xf32> to vector<128xf32>
      %17 = vector.shape_cast %16 : vector<128xf32> to vector<1x128xf32>
      %cst_14 = arith.constant 3.200000e+01 : f32
      %18 = vector.broadcast %cst_14 : f32 to vector<1x128xf32>
      %19 = arith.divf %17, %18 : vector<1x128xf32>
      %20 = vector.broadcast %19 : vector<1x128xf32> to vector<32x128xf32>
      %21 = arith.subf %15, %20 : vector<32x128xf32>
      %22 = arith.mulf %21, %21 : vector<32x128xf32>
      %cst_15 = arith.constant dense<0.000000e+00> : vector<128xf32>
      %23 = vector.multi_reduction <add>, %22, %cst_15 [0] : vector<32x128xf32> to vector<128xf32>
      %24 = vector.shape_cast %23 : vector<128xf32> to vector<1x128xf32>
      %cst_16 = arith.constant 3.200000e+01 : f32
      %25 = vector.broadcast %cst_16 : f32 to vector<1x128xf32>
      %26 = arith.divf %24, %25 : vector<1x128xf32>
      %27 = vector.broadcast %19 : vector<1x128xf32> to vector<32x128xf32>
      %28 = arith.subf %15, %27 : vector<32x128xf32>
      %cst_17 = arith.constant 9.99999974E-6 : f32
      %29 = vector.broadcast %cst_17 : f32 to vector<1x128xf32>
      %30 = arith.addf %26, %29 : vector<1x128xf32>
      %31 = math.rsqrt %30 : vector<1x128xf32>
      %32 = vector.broadcast %31 : vector<1x128xf32> to vector<32x128xf32>
      %33 = arith.mulf %28, %32 : vector<32x128xf32>
      %c0_18 = arith.constant 0 : index
      %c0_19 = arith.constant 0 : index
      %34 = vector.load %arg5[%c0_18, %c0_19] : memref<1x128xf32, #tpu.memory_space<vmem>>, vector<1x128xf32>
      %35 = vector.broadcast %34 : vector<1x128xf32> to vector<32x128xf32>
      %36 = arith.mulf %33, %35 : vector<32x128xf32>
      %c0_20 = arith.constant 0 : index
      %c0_21 = arith.constant 0 : index
      %37 = vector.load %arg6[%c0_20, %c0_21] : memref<1x128xf32, #tpu.memory_space<vmem>>, vector<1x128xf32>
      %38 = vector.broadcast %37 : vector<1x128xf32> to vector<32x128xf32>
      %39 = arith.addf %36, %38 : vector<32x128xf32>
      %cst_22 = arith.constant 0.000000e+00 : f32
      %40 = vector.broadcast %cst_22 : f32 to vector<32x128xf32>
      %41 = arith.cmpf oge, %39, %40 : vector<32x128xf32>
      %cst_23 = arith.constant 0.00999999977 : f32
      %42 = vector.broadcast %cst_23 : f32 to vector<32x128xf32>
      %43 = arith.mulf %42, %39 : vector<32x128xf32>
      %44 = arith.select %41, %39, %43 : vector<32x128xi1>, vector<32x128xf32>
      %c0_24 = arith.constant 0 : index
      %c0_25 = arith.constant 0 : index
      %45 = vector.load %arg7[%c0_24, %c0_25] : memref<32x128xf32, #tpu.memory_space<vmem>>, vector<32x128xf32>
      tpu.vector_store %arg7[%c0_24, %c0_25], %44 {strides = array<i32>} : memref<32x128xf32, #tpu.memory_space<vmem>>, vector<32x128xf32>,
    } else {
    }
    return
  }
  func.func @transform_0(%arg0: i32, %arg1: i32) -> (i32, i32) {
    %c0_i32 = arith.constant 0 : i32
    %c0_i32_0 = arith.constant 0 : i32
    return %c0_i32, %arg1 : i32, i32
  }
  func.func @transform_1(%arg0: i32, %arg1: i32) -> (i32, i32) {
    %c0_i32 = arith.constant 0 : i32
    return %arg1, %arg0 : i32, i32
  }
  func.func @transform_2(%arg0: i32, %arg1: i32) -> (i32, i32) {
    %c0_i32 = arith.constant 0 : i32
    %c0_i32_0 = arith.constant 0 : i32
    return %c0_i32, %arg0 : i32, i32
  }
  func.func @transform_3(%arg0: i32, %arg1: i32) -> (i32, i32) {
    %c0_i32 = arith.constant 0 : i32
    %c0_i32_0 = arith.constant 0 : i32
    return %c0_i32, %arg0 : i32, i32
  }
  func.func @transform_4(%arg0: i32, %arg1: i32) -> (i32, i32) {
    %c0_i32 = arith.constant 0 : i32
    %c0_i32_0 = arith.constant 0 : i32
    return %c0_i32, %arg0 : i32, i32
  }
  func.func @transform_5(%arg0: i32, %arg1: i32) -> (i32, i32) {
    %c0_i32 = arith.constant 0 : i32
    %c0_i32_0 = arith.constant 0 : i32
    return %c0_i32, %arg0 : i32, i32
  }
}

module attributes {stable_mosaic.version = 11 : i64} {
  func.func @_gemm_bn_lrelu_kernel(%arg0: i32, %arg1: i32, %arg2: memref<32x512xbf16, #tpu.memory_space<vmem>>, %arg3: memref<512x128xbf16, #tpu.memory_space<vmem>>, %arg4: memref<1x128xf32, #tpu.memory_space<vmem>>, %arg5: memref<1x128xf32, #tpu.memory_space<vmem>>, %arg6: memref<1x128xf32, #tpu.memory_space<vmem>>, %arg7: memref<32x128xf32, #tpu.memory_space<vmem>>, %arg8: memref<32x128xf32, #tpu.memory_space<vmem>>) attributes {dimension_semantics = [#tpu.dimension_semantics<parallel>, #tpu.dimension_semantics<arbitrary>], iteration_bounds = array<i64: 1, 3>, scalar_prefetch = 0 : i64, scratch_operands = 1 : i64, tpu.core_type = #tpu.core_type<tc>, window_params = [{transform_indices = @transform_0, window_bounds = array<i64: 32, 512>}, {transform_indices = @transform_1, window_bounds = array<i64: 512, 128>}, {transform_indices = @transform_2, window_bounds = array<i64: 1, 128>}, {transform_indices = @transform_3, window_bounds = array<i64: 1, 128>}, {transform_indices = @transform_4, window_bounds = array<i64: 1, 128>}, {transform_indices = @transform_5, window_bounds = array<i64: 32, 128>}]} {
    %c0_i32 = arith.constant 0 : i32
    %0 = arith.cmpi eq, %arg1, %c0_i32 : i32
    %1 = arith.extui %0 : i1 to i32
    %c0_i32_0 = arith.constant 0 : i32
    %2 = arith.cmpi ne, %1, %c0_i32_0 : i32
    scf.if %2 {
      %cst_9 = arith.constant 0.000000e+00 : f32
      %12 = vector.broadcast %cst_9 : f32 to vector<32x128xf32>
      %c0_10 = arith.constant 0 : index
      %c0_11 = arith.constant 0 : index
      %13 = vector.load %arg8[%c0_10, %c0_11] : memref<32x128xf32, #tpu.memory_space<vmem>>, vector<32x128xf32>
      tpu.vector_store %arg8[%c0_10, %c0_11], %12 {strides = array<i32>} : memref<32x128xf32, #tpu.memory_space<vmem>>, vector<32x128xf32>,
    } else {
    }
    %c0 = arith.constant 0 : index
    %c0_1 = arith.constant 0 : index
    %3 = vector.load %arg8[%c0, %c0_1] : memref<32x128xf32, #tpu.memory_space<vmem>>, vector<32x128xf32>
    %c0_2 = arith.constant 0 : index
    %c0_3 = arith.constant 0 : index
    %4 = vector.load %arg2[%c0_2, %c0_3] : memref<32x512xbf16, #tpu.memory_space<vmem>>, vector<32x512xbf16>
    %c0_4 = arith.constant 0 : index
    %c0_5 = arith.constant 0 : index
    %5 = vector.load %arg3[%c0_4, %c0_5] : memref<512x128xbf16, #tpu.memory_space<vmem>>, vector<512x128xbf16>
    %cst = arith.constant dense<0.000000e+00> : vector<32x128xf32>
    %6 = tpu.matmul %4, %5, %cst {dimension_numbers = #tpu.dot_dimension_numbers<[1], [0], [0], [1], [0, 0, 1, 1], [], []>} : vector<32x512xbf16>, vector<512x128xbf16>, vector<32x128xf32> -> vector<32x128xf32>
    %7 = arith.addf %3, %6 : vector<32x128xf32>
    %c0_6 = arith.constant 0 : index
    %c0_7 = arith.constant 0 : index
    %8 = vector.load %arg8[%c0_6, %c0_7] : memref<32x128xf32, #tpu.memory_space<vmem>>, vector<32x128xf32>
    tpu.vector_store %arg8[%c0_6, %c0_7], %7 {strides = array<i32>} : memref<32x128xf32, #tpu.memory_space<vmem>>, vector<32x128xf32>,
    %c2_i32 = arith.constant 2 : i32
    %9 = arith.cmpi eq, %arg1, %c2_i32 : i32
    %10 = arith.extui %9 : i1 to i32
    %c0_i32_8 = arith.constant 0 : i32
    %11 = arith.cmpi ne, %10, %c0_i32_8 : i32
    scf.if %11 {
      %c0_9 = arith.constant 0 : index
      %c0_10 = arith.constant 0 : index
      %12 = vector.load %arg8[%c0_9, %c0_10] : memref<32x128xf32, #tpu.memory_space<vmem>>, vector<32x128xf32>
      %c0_11 = arith.constant 0 : index
      %c0_12 = arith.constant 0 : index
      %13 = vector.load %arg4[%c0_11, %c0_12] : memref<1x128xf32, #tpu.memory_space<vmem>>, vector<1x128xf32>
      %14 = vector.broadcast %13 : vector<1x128xf32> to vector<32x128xf32>
      %15 = arith.addf %12, %14 : vector<32x128xf32>
      %cst_13 = arith.constant dense<0.000000e+00> : vector<128xf32>
      %16 = vector.multi_reduction <add>, %15, %cst_13 [0] : vector<32x128xf32> to vector<128xf32>
      %17 = vector.shape_cast %16 : vector<128xf32> to vector<1x128xf32>
      %cst_14 = arith.constant 3.200000e+01 : f32
      %18 = vector.broadcast %cst_14 : f32 to vector<1x128xf32>
      %19 = arith.divf %17, %18 : vector<1x128xf32>
      %20 = vector.broadcast %19 : vector<1x128xf32> to vector<32x128xf32>
      %21 = arith.subf %15, %20 : vector<32x128xf32>
      %22 = arith.mulf %21, %21 : vector<32x128xf32>
      %cst_15 = arith.constant dense<0.000000e+00> : vector<128xf32>
      %23 = vector.multi_reduction <add>, %22, %cst_15 [0] : vector<32x128xf32> to vector<128xf32>
      %24 = vector.shape_cast %23 : vector<128xf32> to vector<1x128xf32>
      %cst_16 = arith.constant 3.200000e+01 : f32
      %25 = vector.broadcast %cst_16 : f32 to vector<1x128xf32>
      %26 = arith.divf %24, %25 : vector<1x128xf32>
      %27 = vector.broadcast %19 : vector<1x128xf32> to vector<32x128xf32>
      %28 = arith.subf %15, %27 : vector<32x128xf32>
      %cst_17 = arith.constant 9.99999974E-6 : f32
      %29 = vector.broadcast %cst_17 : f32 to vector<1x128xf32>
      %30 = arith.addf %26, %29 : vector<1x128xf32>
      %31 = math.rsqrt %30 : vector<1x128xf32>
      %32 = vector.broadcast %31 : vector<1x128xf32> to vector<32x128xf32>
      %33 = arith.mulf %28, %32 : vector<32x128xf32>
      %c0_18 = arith.constant 0 : index
      %c0_19 = arith.constant 0 : index
      %34 = vector.load %arg5[%c0_18, %c0_19] : memref<1x128xf32, #tpu.memory_space<vmem>>, vector<1x128xf32>
      %35 = vector.broadcast %34 : vector<1x128xf32> to vector<32x128xf32>
      %36 = arith.mulf %33, %35 : vector<32x128xf32>
      %c0_20 = arith.constant 0 : index
      %c0_21 = arith.constant 0 : index
      %37 = vector.load %arg6[%c0_20, %c0_21] : memref<1x128xf32, #tpu.memory_space<vmem>>, vector<1x128xf32>
      %38 = vector.broadcast %37 : vector<1x128xf32> to vector<32x128xf32>
      %39 = arith.addf %36, %38 : vector<32x128xf32>
      %cst_22 = arith.constant 0.000000e+00 : f32
      %40 = vector.broadcast %cst_22 : f32 to vector<32x128xf32>
      %41 = arith.cmpf oge, %39, %40 : vector<32x128xf32>
      %cst_23 = arith.constant 0.00999999977 : f32
      %42 = vector.broadcast %cst_23 : f32 to vector<32x128xf32>
      %43 = arith.mulf %42, %39 : vector<32x128xf32>
      %44 = arith.select %41, %39, %43 : vector<32x128xi1>, vector<32x128xf32>
      %c0_24 = arith.constant 0 : index
      %c0_25 = arith.constant 0 : index
      %45 = vector.load %arg7[%c0_24, %c0_25] : memref<32x128xf32, #tpu.memory_space<vmem>>, vector<32x128xf32>
      tpu.vector_store %arg7[%c0_24, %c0_25], %44 {strides = array<i32>} : memref<32x128xf32, #tpu.memory_space<vmem>>, vector<32x128xf32>,
    } else {
    }
    return
  }
  func.func @transform_0(%arg0: i32, %arg1: i32) -> (i32, i32) {
    %c0_i32 = arith.constant 0 : i32
    %c0_i32_0 = arith.constant 0 : i32
    return %c0_i32, %arg1 : i32, i32
  }
  func.func @transform_1(%arg0: i32, %arg1: i32) -> (i32, i32) {
    %c0_i32 = arith.constant 0 : i32
    return %arg1, %arg0 : i32, i32
  }
  func.func @transform_2(%arg0: i32, %arg1: i32) -> (i32, i32) {
    %c0_i32 = arith.constant 0 : i32
    %c0_i32_0 = arith.constant 0 : i32
    return %c0_i32, %arg0 : i32, i32
  }
  func.func @transform_3(%arg0: i32, %arg1: i32) -> (i32, i32) {
    %c0_i32 = arith.constant 0 : i32
    %c0_i32_0 = arith.constant 0 : i32
    return %c0_i32, %arg0 : i32, i32
  }
  func.func @transform_4(%arg0: i32, %arg1: i32) -> (i32, i32) {
    %c0_i32 = arith.constant 0 : i32
    %c0_i32_0 = arith.constant 0 : i32
    return %c0_i32, %arg0 : i32, i32
  }
  func.func @transform_5(%arg0: i32, %arg1: i32) -> (i32, i32) {
    %c0_i32 = arith.constant 0 : i32
    %c0_i32_0 = arith.constant 0 : i32
    return %c0_i32, %arg0 : i32, i32
  }
}

module attributes {stable_mosaic.version = 11 : i64} {
  func.func @_gemm_kernel(%arg0: i32, %arg1: i32, %arg2: i32, %arg3: i32, %arg4: memref<1x16x512xbf16, #tpu.memory_space<vmem>>, %arg5: memref<1x512x128xbf16, #tpu.memory_space<vmem>>, %arg6: memref<1x1x128xf32, #tpu.memory_space<vmem>>, %arg7: memref<1x16x128xf32, #tpu.memory_space<vmem>>, %arg8: memref<16x128xf32, #tpu.memory_space<vmem>>) attributes {dimension_semantics = [#tpu.dimension_semantics<parallel>, #tpu.dimension_semantics<parallel>, #tpu.dimension_semantics<parallel>, #tpu.dimension_semantics<arbitrary>], iteration_bounds = array<i64: 1, 1, 1, 1>, scalar_prefetch = 0 : i64, scratch_operands = 1 : i64, tpu.core_type = #tpu.core_type<tc>, window_params = [{transform_indices = @transform_0, window_bounds = array<i64: 1, 16, 512>}, {transform_indices = @transform_1, window_bounds = array<i64: 1, 512, 128>}, {transform_indices = @transform_2, window_bounds = array<i64: 1, 1, 128>}, {transform_indices = @transform_3, window_bounds = array<i64: 1, 16, 128>}]} {
    %c0_i32 = arith.constant 0 : i32
    %0 = arith.cmpi eq, %arg3, %c0_i32 : i32
    %1 = arith.extui %0 : i1 to i32
    %c0_i32_0 = arith.constant 0 : i32
    %2 = arith.cmpi ne, %1, %c0_i32_0 : i32
    scf.if %2 {
      %cst_12 = arith.constant 0.000000e+00 : f32
      %14 = vector.broadcast %cst_12 : f32 to vector<16x128xf32>
      %c0_13 = arith.constant 0 : index
      %c0_14 = arith.constant 0 : index
      %15 = vector.load %arg8[%c0_13, %c0_14] : memref<16x128xf32, #tpu.memory_space<vmem>>, vector<16x128xf32>
      tpu.vector_store %arg8[%c0_13, %c0_14], %14 {strides = array<i32>} : memref<16x128xf32, #tpu.memory_space<vmem>>, vector<16x128xf32>,
    } else {
    }
    %c0 = arith.constant 0 : index
    %c0_1 = arith.constant 0 : index
    %3 = vector.load %arg8[%c0, %c0_1] : memref<16x128xf32, #tpu.memory_space<vmem>>, vector<16x128xf32>
    %c0_2 = arith.constant 0 : index
    %c0_3 = arith.constant 0 : index
    %c0_4 = arith.constant 0 : index
    %4 = vector.load %arg4[%c0_2, %c0_3, %c0_4] : memref<1x16x512xbf16, #tpu.memory_space<vmem>>, vector<1x16x512xbf16>
    %5 = vector.shape_cast %4 : vector<1x16x512xbf16> to vector<16x512xbf16>
    %c0_5 = arith.constant 0 : index
    %c0_6 = arith.constant 0 : index
    %c0_7 = arith.constant 0 : index
    %6 = vector.load %arg5[%c0_5, %c0_6, %c0_7] : memref<1x512x128xbf16, #tpu.memory_space<vmem>>, vector<1x512x128xbf16>
    %7 = vector.shape_cast %6 : vector<1x512x128xbf16> to vector<512x128xbf16>
    %cst = arith.constant dense<0.000000e+00> : vector<16x128xf32>
    %8 = tpu.matmul %5, %7, %cst {dimension_numbers = #tpu.dot_dimension_numbers<[1], [0], [0], [1], [0, 0, 1, 1], [], []>} : vector<16x512xbf16>, vector<512x128xbf16>, vector<16x128xf32> -> vector<16x128xf32>
    %9 = arith.addf %3, %8 : vector<16x128xf32>
    %c0_8 = arith.constant 0 : index
    %c0_9 = arith.constant 0 : index
    %10 = vector.load %arg8[%c0_8, %c0_9] : memref<16x128xf32, #tpu.memory_space<vmem>>, vector<16x128xf32>
    tpu.vector_store %arg8[%c0_8, %c0_9], %9 {strides = array<i32>} : memref<16x128xf32, #tpu.memory_space<vmem>>, vector<16x128xf32>,
    %c0_i32_10 = arith.constant 0 : i32
    %11 = arith.cmpi eq, %arg3, %c0_i32_10 : i32
    %12 = arith.extui %11 : i1 to i32
    %c0_i32_11 = arith.constant 0 : i32
    %13 = arith.cmpi ne, %12, %c0_i32_11 : i32
    scf.if %13 {
      %c0_12 = arith.constant 0 : index
      %c0_13 = arith.constant 0 : index
      %14 = vector.load %arg8[%c0_12, %c0_13] : memref<16x128xf32, #tpu.memory_space<vmem>>, vector<16x128xf32>
      %c0_14 = arith.constant 0 : index
      %c0_15 = arith.constant 0 : index
      %c0_16 = arith.constant 0 : index
      %15 = vector.load %arg6[%c0_14, %c0_15, %c0_16] : memref<1x1x128xf32, #tpu.memory_space<vmem>>, vector<1x1x128xf32>
      %16 = vector.shape_cast %15 : vector<1x1x128xf32> to vector<1x128xf32>
      %17 = vector.broadcast %16 : vector<1x128xf32> to vector<16x128xf32>
      %18 = arith.addf %14, %17 : vector<16x128xf32>
      %cst_17 = arith.constant 0.000000e+00 : f32
      %19 = vector.broadcast %cst_17 : f32 to vector<16x128xf32>
      %20 = arith.cmpf oge, %18, %19 : vector<16x128xf32>
      %cst_18 = arith.constant 0.00999999977 : f32
      %21 = vector.broadcast %cst_18 : f32 to vector<16x128xf32>
      %22 = arith.mulf %21, %18 : vector<16x128xf32>
      %23 = arith.select %20, %18, %22 : vector<16x128xi1>, vector<16x128xf32>
      %c0_19 = arith.constant 0 : index
      %c0_20 = arith.constant 0 : index
      %c0_21 = arith.constant 0 : index
      %24 = vector.load %arg7[%c0_19, %c0_20, %c0_21] : memref<1x16x128xf32, #tpu.memory_space<vmem>>, vector<1x16x128xf32>
      %25 = vector.shape_cast %24 : vector<1x16x128xf32> to vector<16x128xf32>
      %26 = vector.shape_cast %23 : vector<16x128xf32> to vector<1x16x128xf32>
      tpu.vector_store %arg7[%c0_19, %c0_20, %c0_21], %26 {strides = array<i32>} : memref<1x16x128xf32, #tpu.memory_space<vmem>>, vector<1x16x128xf32>,
    } else {
    }
    return
  }
  func.func @transform_0(%arg0: i32, %arg1: i32, %arg2: i32, %arg3: i32) -> (i32, i32, i32) {
    %c0_i32 = arith.constant 0 : i32
    return %arg0, %arg1, %arg3 : i32, i32, i32
  }
  func.func @transform_1(%arg0: i32, %arg1: i32, %arg2: i32, %arg3: i32) -> (i32, i32, i32) {
    %c0_i32 = arith.constant 0 : i32
    return %arg0, %arg3, %arg2 : i32, i32, i32
  }
  func.func @transform_2(%arg0: i32, %arg1: i32, %arg2: i32, %arg3: i32) -> (i32, i32, i32) {
    %c0_i32 = arith.constant 0 : i32
    %c0_i32_0 = arith.constant 0 : i32
    return %arg0, %c0_i32, %arg2 : i32, i32, i32
  }
  func.func @transform_3(%arg0: i32, %arg1: i32, %arg2: i32, %arg3: i32) -> (i32, i32, i32) {
    %c0_i32 = arith.constant 0 : i32
    return %arg0, %arg1, %arg2 : i32, i32, i32
  }
}

module attributes {stable_mosaic.version = 11 : i64} {
  func.func @_gemm_kernel(%arg0: i32, %arg1: i32, %arg2: i32, %arg3: i32, %arg4: memref<1x16x128xbf16, #tpu.memory_space<vmem>>, %arg5: memref<1x128x128xbf16, #tpu.memory_space<vmem>>, %arg6: memref<1x1x128xf32, #tpu.memory_space<vmem>>, %arg7: memref<1x16x128xf32, #tpu.memory_space<vmem>>, %arg8: memref<16x128xf32, #tpu.memory_space<vmem>>) attributes {dimension_semantics = [#tpu.dimension_semantics<parallel>, #tpu.dimension_semantics<parallel>, #tpu.dimension_semantics<parallel>, #tpu.dimension_semantics<arbitrary>], iteration_bounds = array<i64: 1, 1, 1, 1>, scalar_prefetch = 0 : i64, scratch_operands = 1 : i64, tpu.core_type = #tpu.core_type<tc>, window_params = [{transform_indices = @transform_0, window_bounds = array<i64: 1, 16, 128>}, {transform_indices = @transform_1, window_bounds = array<i64: 1, 128, 128>}, {transform_indices = @transform_2, window_bounds = array<i64: 1, 1, 128>}, {transform_indices = @transform_3, window_bounds = array<i64: 1, 16, 128>}]} {
    %c0_i32 = arith.constant 0 : i32
    %0 = arith.cmpi eq, %arg3, %c0_i32 : i32
    %1 = arith.extui %0 : i1 to i32
    %c0_i32_0 = arith.constant 0 : i32
    %2 = arith.cmpi ne, %1, %c0_i32_0 : i32
    scf.if %2 {
      %cst_12 = arith.constant 0.000000e+00 : f32
      %14 = vector.broadcast %cst_12 : f32 to vector<16x128xf32>
      %c0_13 = arith.constant 0 : index
      %c0_14 = arith.constant 0 : index
      %15 = vector.load %arg8[%c0_13, %c0_14] : memref<16x128xf32, #tpu.memory_space<vmem>>, vector<16x128xf32>
      tpu.vector_store %arg8[%c0_13, %c0_14], %14 {strides = array<i32>} : memref<16x128xf32, #tpu.memory_space<vmem>>, vector<16x128xf32>,
    } else {
    }
    %c0 = arith.constant 0 : index
    %c0_1 = arith.constant 0 : index
    %3 = vector.load %arg8[%c0, %c0_1] : memref<16x128xf32, #tpu.memory_space<vmem>>, vector<16x128xf32>
    %c0_2 = arith.constant 0 : index
    %c0_3 = arith.constant 0 : index
    %c0_4 = arith.constant 0 : index
    %4 = vector.load %arg4[%c0_2, %c0_3, %c0_4] : memref<1x16x128xbf16, #tpu.memory_space<vmem>>, vector<1x16x128xbf16>
    %5 = vector.shape_cast %4 : vector<1x16x128xbf16> to vector<16x128xbf16>
    %c0_5 = arith.constant 0 : index
    %c0_6 = arith.constant 0 : index
    %c0_7 = arith.constant 0 : index
    %6 = vector.load %arg5[%c0_5, %c0_6, %c0_7] : memref<1x128x128xbf16, #tpu.memory_space<vmem>>, vector<1x128x128xbf16>
    %7 = vector.shape_cast %6 : vector<1x128x128xbf16> to vector<128x128xbf16>
    %cst = arith.constant dense<0.000000e+00> : vector<16x128xf32>
    %8 = tpu.matmul %5, %7, %cst {dimension_numbers = #tpu.dot_dimension_numbers<[1], [0], [0], [1], [0, 0, 1, 1], [], []>} : vector<16x128xbf16>, vector<128x128xbf16>, vector<16x128xf32> -> vector<16x128xf32>
    %9 = arith.addf %3, %8 : vector<16x128xf32>
    %c0_8 = arith.constant 0 : index
    %c0_9 = arith.constant 0 : index
    %10 = vector.load %arg8[%c0_8, %c0_9] : memref<16x128xf32, #tpu.memory_space<vmem>>, vector<16x128xf32>
    tpu.vector_store %arg8[%c0_8, %c0_9], %9 {strides = array<i32>} : memref<16x128xf32, #tpu.memory_space<vmem>>, vector<16x128xf32>,
    %c0_i32_10 = arith.constant 0 : i32
    %11 = arith.cmpi eq, %arg3, %c0_i32_10 : i32
    %12 = arith.extui %11 : i1 to i32
    %c0_i32_11 = arith.constant 0 : i32
    %13 = arith.cmpi ne, %12, %c0_i32_11 : i32
    scf.if %13 {
      %c0_12 = arith.constant 0 : index
      %c0_13 = arith.constant 0 : index
      %14 = vector.load %arg8[%c0_12, %c0_13] : memref<16x128xf32, #tpu.memory_space<vmem>>, vector<16x128xf32>
      %c0_14 = arith.constant 0 : index
      %c0_15 = arith.constant 0 : index
      %c0_16 = arith.constant 0 : index
      %15 = vector.load %arg6[%c0_14, %c0_15, %c0_16] : memref<1x1x128xf32, #tpu.memory_space<vmem>>, vector<1x1x128xf32>
      %16 = vector.shape_cast %15 : vector<1x1x128xf32> to vector<1x128xf32>
      %17 = vector.broadcast %16 : vector<1x128xf32> to vector<16x128xf32>
      %18 = arith.addf %14, %17 : vector<16x128xf32>
      %c0_17 = arith.constant 0 : index
      %c0_18 = arith.constant 0 : index
      %c0_19 = arith.constant 0 : index
      %19 = vector.load %arg7[%c0_17, %c0_18, %c0_19] : memref<1x16x128xf32, #tpu.memory_space<vmem>>, vector<1x16x128xf32>
      %20 = vector.shape_cast %19 : vector<1x16x128xf32> to vector<16x128xf32>
      %21 = vector.shape_cast %18 : vector<16x128xf32> to vector<1x16x128xf32>
      tpu.vector_store %arg7[%c0_17, %c0_18, %c0_19], %21 {strides = array<i32>} : memref<1x16x128xf32, #tpu.memory_space<vmem>>, vector<1x16x128xf32>,
    } else {
    }
    return
  }
  func.func @transform_0(%arg0: i32, %arg1: i32, %arg2: i32, %arg3: i32) -> (i32, i32, i32) {
    %c0_i32 = arith.constant 0 : i32
    return %arg0, %arg1, %arg3 : i32, i32, i32
  }
  func.func @transform_1(%arg0: i32, %arg1: i32, %arg2: i32, %arg3: i32) -> (i32, i32, i32) {
    %c0_i32 = arith.constant 0 : i32
    return %arg0, %arg3, %arg2 : i32, i32, i32
  }
  func.func @transform_2(%arg0: i32, %arg1: i32, %arg2: i32, %arg3: i32) -> (i32, i32, i32) {
    %c0_i32 = arith.constant 0 : i32
    %c0_i32_0 = arith.constant 0 : i32
    return %arg0, %c0_i32, %arg2 : i32, i32, i32
  }
  func.func @transform_3(%arg0: i32, %arg1: i32, %arg2: i32, %arg3: i32) -> (i32, i32, i32) {
    %c0_i32 = arith.constant 0 : i32
    return %arg0, %arg1, %arg2 : i32, i32, i32
  }
}

module attributes {stable_mosaic.version = 11 : i64} {
  func.func @_gemm_kernel(%arg0: i32, %arg1: i32, %arg2: i32, %arg3: i32, %arg4: memref<1x16x128xbf16, #tpu.memory_space<vmem>>, %arg5: memref<1x128x256xbf16, #tpu.memory_space<vmem>>, %arg6: memref<1x1x256xf32, #tpu.memory_space<vmem>>, %arg7: memref<1x16x256xf32, #tpu.memory_space<vmem>>, %arg8: memref<16x256xf32, #tpu.memory_space<vmem>>) attributes {dimension_semantics = [#tpu.dimension_semantics<parallel>, #tpu.dimension_semantics<parallel>, #tpu.dimension_semantics<parallel>, #tpu.dimension_semantics<arbitrary>], iteration_bounds = array<i64: 1, 1, 1, 1>, scalar_prefetch = 0 : i64, scratch_operands = 1 : i64, tpu.core_type = #tpu.core_type<tc>, window_params = [{transform_indices = @transform_0, window_bounds = array<i64: 1, 16, 128>}, {transform_indices = @transform_1, window_bounds = array<i64: 1, 128, 256>}, {transform_indices = @transform_2, window_bounds = array<i64: 1, 1, 256>}, {transform_indices = @transform_3, window_bounds = array<i64: 1, 16, 256>}]} {
    %c0_i32 = arith.constant 0 : i32
    %0 = arith.cmpi eq, %arg3, %c0_i32 : i32
    %1 = arith.extui %0 : i1 to i32
    %c0_i32_0 = arith.constant 0 : i32
    %2 = arith.cmpi ne, %1, %c0_i32_0 : i32
    scf.if %2 {
      %cst_12 = arith.constant 0.000000e+00 : f32
      %14 = vector.broadcast %cst_12 : f32 to vector<16x256xf32>
      %c0_13 = arith.constant 0 : index
      %c0_14 = arith.constant 0 : index
      %15 = vector.load %arg8[%c0_13, %c0_14] : memref<16x256xf32, #tpu.memory_space<vmem>>, vector<16x256xf32>
      tpu.vector_store %arg8[%c0_13, %c0_14], %14 {strides = array<i32>} : memref<16x256xf32, #tpu.memory_space<vmem>>, vector<16x256xf32>,
    } else {
    }
    %c0 = arith.constant 0 : index
    %c0_1 = arith.constant 0 : index
    %3 = vector.load %arg8[%c0, %c0_1] : memref<16x256xf32, #tpu.memory_space<vmem>>, vector<16x256xf32>
    %c0_2 = arith.constant 0 : index
    %c0_3 = arith.constant 0 : index
    %c0_4 = arith.constant 0 : index
    %4 = vector.load %arg4[%c0_2, %c0_3, %c0_4] : memref<1x16x128xbf16, #tpu.memory_space<vmem>>, vector<1x16x128xbf16>
    %5 = vector.shape_cast %4 : vector<1x16x128xbf16> to vector<16x128xbf16>
    %c0_5 = arith.constant 0 : index
    %c0_6 = arith.constant 0 : index
    %c0_7 = arith.constant 0 : index
    %6 = vector.load %arg5[%c0_5, %c0_6, %c0_7] : memref<1x128x256xbf16, #tpu.memory_space<vmem>>, vector<1x128x256xbf16>
    %7 = vector.shape_cast %6 : vector<1x128x256xbf16> to vector<128x256xbf16>
    %cst = arith.constant dense<0.000000e+00> : vector<16x256xf32>
    %8 = tpu.matmul %5, %7, %cst {dimension_numbers = #tpu.dot_dimension_numbers<[1], [0], [0], [1], [0, 0, 1, 1], [], []>} : vector<16x128xbf16>, vector<128x256xbf16>, vector<16x256xf32> -> vector<16x256xf32>
    %9 = arith.addf %3, %8 : vector<16x256xf32>
    %c0_8 = arith.constant 0 : index
    %c0_9 = arith.constant 0 : index
    %10 = vector.load %arg8[%c0_8, %c0_9] : memref<16x256xf32, #tpu.memory_space<vmem>>, vector<16x256xf32>
    tpu.vector_store %arg8[%c0_8, %c0_9], %9 {strides = array<i32>} : memref<16x256xf32, #tpu.memory_space<vmem>>, vector<16x256xf32>,
    %c0_i32_10 = arith.constant 0 : i32
    %11 = arith.cmpi eq, %arg3, %c0_i32_10 : i32
    %12 = arith.extui %11 : i1 to i32
    %c0_i32_11 = arith.constant 0 : i32
    %13 = arith.cmpi ne, %12, %c0_i32_11 : i32
    scf.if %13 {
      %c0_12 = arith.constant 0 : index
      %c0_13 = arith.constant 0 : index
      %14 = vector.load %arg8[%c0_12, %c0_13] : memref<16x256xf32, #tpu.memory_space<vmem>>, vector<16x256xf32>
      %c0_14 = arith.constant 0 : index
      %c0_15 = arith.constant 0 : index
      %c0_16 = arith.constant 0 : index
      %15 = vector.load %arg6[%c0_14, %c0_15, %c0_16] : memref<1x1x256xf32, #tpu.memory_space<vmem>>, vector<1x1x256xf32>
      %16 = vector.shape_cast %15 : vector<1x1x256xf32> to vector<1x256xf32>
      %17 = vector.broadcast %16 : vector<1x256xf32> to vector<16x256xf32>
      %18 = arith.addf %14, %17 : vector<16x256xf32>
      %cst_17 = arith.constant 0.000000e+00 : f32
      %19 = vector.broadcast %cst_17 : f32 to vector<16x256xf32>
      %20 = arith.cmpf oge, %18, %19 : vector<16x256xf32>
      %cst_18 = arith.constant 0.00999999977 : f32
      %21 = vector.broadcast %cst_18 : f32 to vector<16x256xf32>
      %22 = arith.mulf %21, %18 : vector<16x256xf32>
      %23 = arith.select %20, %18, %22 : vector<16x256xi1>, vector<16x256xf32>
      %c0_19 = arith.constant 0 : index
      %c0_20 = arith.constant 0 : index
      %c0_21 = arith.constant 0 : index
      %24 = vector.load %arg7[%c0_19, %c0_20, %c0_21] : memref<1x16x256xf32, #tpu.memory_space<vmem>>, vector<1x16x256xf32>
      %25 = vector.shape_cast %24 : vector<1x16x256xf32> to vector<16x256xf32>
      %26 = vector.shape_cast %23 : vector<16x256xf32> to vector<1x16x256xf32>
      tpu.vector_store %arg7[%c0_19, %c0_20, %c0_21], %26 {strides = array<i32>} : memref<1x16x256xf32, #tpu.memory_space<vmem>>, vector<1x16x256xf32>,
    } else {
    }
    return
  }
  func.func @transform_0(%arg0: i32, %arg1: i32, %arg2: i32, %arg3: i32) -> (i32, i32, i32) {
    %c0_i32 = arith.constant 0 : i32
    return %arg0, %arg1, %arg3 : i32, i32, i32
  }
  func.func @transform_1(%arg0: i32, %arg1: i32, %arg2: i32, %arg3: i32) -> (i32, i32, i32) {
    %c0_i32 = arith.constant 0 : i32
    return %arg0, %arg3, %arg2 : i32, i32, i32
  }
  func.func @transform_2(%arg0: i32, %arg1: i32, %arg2: i32, %arg3: i32) -> (i32, i32, i32) {
    %c0_i32 = arith.constant 0 : i32
    %c0_i32_0 = arith.constant 0 : i32
    return %arg0, %c0_i32, %arg2 : i32, i32, i32
  }
  func.func @transform_3(%arg0: i32, %arg1: i32, %arg2: i32, %arg3: i32) -> (i32, i32, i32) {
    %c0_i32 = arith.constant 0 : i32
    return %arg0, %arg1, %arg2 : i32, i32, i32
  }
}

module attributes {stable_mosaic.version = 11 : i64} {
  func.func @_gemm_kernel(%arg0: i32, %arg1: i32, %arg2: i32, %arg3: i32, %arg4: memref<1x16x256xbf16, #tpu.memory_space<vmem>>, %arg5: memref<1x256x256xbf16, #tpu.memory_space<vmem>>, %arg6: memref<1x1x256xf32, #tpu.memory_space<vmem>>, %arg7: memref<1x16x256xf32, #tpu.memory_space<vmem>>, %arg8: memref<16x256xf32, #tpu.memory_space<vmem>>) attributes {dimension_semantics = [#tpu.dimension_semantics<parallel>, #tpu.dimension_semantics<parallel>, #tpu.dimension_semantics<parallel>, #tpu.dimension_semantics<arbitrary>], iteration_bounds = array<i64: 1, 1, 4, 1>, scalar_prefetch = 0 : i64, scratch_operands = 1 : i64, tpu.core_type = #tpu.core_type<tc>, window_params = [{transform_indices = @transform_0, window_bounds = array<i64: 1, 16, 256>}, {transform_indices = @transform_1, window_bounds = array<i64: 1, 256, 256>}, {transform_indices = @transform_2, window_bounds = array<i64: 1, 1, 256>}, {transform_indices = @transform_3, window_bounds = array<i64: 1, 16, 256>}]} {
    %c0_i32 = arith.constant 0 : i32
    %0 = arith.cmpi eq, %arg3, %c0_i32 : i32
    %1 = arith.extui %0 : i1 to i32
    %c0_i32_0 = arith.constant 0 : i32
    %2 = arith.cmpi ne, %1, %c0_i32_0 : i32
    scf.if %2 {
      %cst_12 = arith.constant 0.000000e+00 : f32
      %14 = vector.broadcast %cst_12 : f32 to vector<16x256xf32>
      %c0_13 = arith.constant 0 : index
      %c0_14 = arith.constant 0 : index
      %15 = vector.load %arg8[%c0_13, %c0_14] : memref<16x256xf32, #tpu.memory_space<vmem>>, vector<16x256xf32>
      tpu.vector_store %arg8[%c0_13, %c0_14], %14 {strides = array<i32>} : memref<16x256xf32, #tpu.memory_space<vmem>>, vector<16x256xf32>,
    } else {
    }
    %c0 = arith.constant 0 : index
    %c0_1 = arith.constant 0 : index
    %3 = vector.load %arg8[%c0, %c0_1] : memref<16x256xf32, #tpu.memory_space<vmem>>, vector<16x256xf32>
    %c0_2 = arith.constant 0 : index
    %c0_3 = arith.constant 0 : index
    %c0_4 = arith.constant 0 : index
    %4 = vector.load %arg4[%c0_2, %c0_3, %c0_4] : memref<1x16x256xbf16, #tpu.memory_space<vmem>>, vector<1x16x256xbf16>
    %5 = vector.shape_cast %4 : vector<1x16x256xbf16> to vector<16x256xbf16>
    %c0_5 = arith.constant 0 : index
    %c0_6 = arith.constant 0 : index
    %c0_7 = arith.constant 0 : index
    %6 = vector.load %arg5[%c0_5, %c0_6, %c0_7] : memref<1x256x256xbf16, #tpu.memory_space<vmem>>, vector<1x256x256xbf16>
    %7 = vector.shape_cast %6 : vector<1x256x256xbf16> to vector<256x256xbf16>
    %cst = arith.constant dense<0.000000e+00> : vector<16x256xf32>
    %8 = tpu.matmul %5, %7, %cst {dimension_numbers = #tpu.dot_dimension_numbers<[1], [0], [0], [1], [0, 0, 1, 1], [], []>} : vector<16x256xbf16>, vector<256x256xbf16>, vector<16x256xf32> -> vector<16x256xf32>
    %9 = arith.addf %3, %8 : vector<16x256xf32>
    %c0_8 = arith.constant 0 : index
    %c0_9 = arith.constant 0 : index
    %10 = vector.load %arg8[%c0_8, %c0_9] : memref<16x256xf32, #tpu.memory_space<vmem>>, vector<16x256xf32>
    tpu.vector_store %arg8[%c0_8, %c0_9], %9 {strides = array<i32>} : memref<16x256xf32, #tpu.memory_space<vmem>>, vector<16x256xf32>,
    %c0_i32_10 = arith.constant 0 : i32
    %11 = arith.cmpi eq, %arg3, %c0_i32_10 : i32
    %12 = arith.extui %11 : i1 to i32
    %c0_i32_11 = arith.constant 0 : i32
    %13 = arith.cmpi ne, %12, %c0_i32_11 : i32
    scf.if %13 {
      %c0_12 = arith.constant 0 : index
      %c0_13 = arith.constant 0 : index
      %14 = vector.load %arg8[%c0_12, %c0_13] : memref<16x256xf32, #tpu.memory_space<vmem>>, vector<16x256xf32>
      %c0_14 = arith.constant 0 : index
      %c0_15 = arith.constant 0 : index
      %c0_16 = arith.constant 0 : index
      %15 = vector.load %arg6[%c0_14, %c0_15, %c0_16] : memref<1x1x256xf32, #tpu.memory_space<vmem>>, vector<1x1x256xf32>
      %16 = vector.shape_cast %15 : vector<1x1x256xf32> to vector<1x256xf32>
      %17 = vector.broadcast %16 : vector<1x256xf32> to vector<16x256xf32>
      %18 = arith.addf %14, %17 : vector<16x256xf32>
      %cst_17 = arith.constant 0.000000e+00 : f32
      %19 = vector.broadcast %cst_17 : f32 to vector<16x256xf32>
      %20 = arith.cmpf oge, %18, %19 : vector<16x256xf32>
      %cst_18 = arith.constant 0.00999999977 : f32
      %21 = vector.broadcast %cst_18 : f32 to vector<16x256xf32>
      %22 = arith.mulf %21, %18 : vector<16x256xf32>
      %23 = arith.select %20, %18, %22 : vector<16x256xi1>, vector<16x256xf32>
      %c0_19 = arith.constant 0 : index
      %c0_20 = arith.constant 0 : index
      %c0_21 = arith.constant 0 : index
      %24 = vector.load %arg7[%c0_19, %c0_20, %c0_21] : memref<1x16x256xf32, #tpu.memory_space<vmem>>, vector<1x16x256xf32>
      %25 = vector.shape_cast %24 : vector<1x16x256xf32> to vector<16x256xf32>
      %26 = vector.shape_cast %23 : vector<16x256xf32> to vector<1x16x256xf32>
      tpu.vector_store %arg7[%c0_19, %c0_20, %c0_21], %26 {strides = array<i32>} : memref<1x16x256xf32, #tpu.memory_space<vmem>>, vector<1x16x256xf32>,
    } else {
    }
    return
  }
  func.func @transform_0(%arg0: i32, %arg1: i32, %arg2: i32, %arg3: i32) -> (i32, i32, i32) {
    %c0_i32 = arith.constant 0 : i32
    return %arg0, %arg1, %arg3 : i32, i32, i32
  }
  func.func @transform_1(%arg0: i32, %arg1: i32, %arg2: i32, %arg3: i32) -> (i32, i32, i32) {
    %c0_i32 = arith.constant 0 : i32
    return %arg0, %arg3, %arg2 : i32, i32, i32
  }
  func.func @transform_2(%arg0: i32, %arg1: i32, %arg2: i32, %arg3: i32) -> (i32, i32, i32) {
    %c0_i32 = arith.constant 0 : i32
    %c0_i32_0 = arith.constant 0 : i32
    return %arg0, %c0_i32, %arg2 : i32, i32, i32
  }
  func.func @transform_3(%arg0: i32, %arg1: i32, %arg2: i32, %arg3: i32) -> (i32, i32, i32) {
    %c0_i32 = arith.constant 0 : i32
    return %arg0, %arg1, %arg2 : i32, i32, i32
  }
}

module attributes {stable_mosaic.version = 11 : i64} {
  func.func @_gemm_kernel(%arg0: i32, %arg1: i32, %arg2: i32, %arg3: i32, %arg4: memref<1x16x512xbf16, #tpu.memory_space<vmem>>, %arg5: memref<1x512x128xbf16, #tpu.memory_space<vmem>>, %arg6: memref<1x1x128xf32, #tpu.memory_space<vmem>>, %arg7: memref<1x16x128xf32, #tpu.memory_space<vmem>>, %arg8: memref<16x128xf32, #tpu.memory_space<vmem>>) attributes {dimension_semantics = [#tpu.dimension_semantics<parallel>, #tpu.dimension_semantics<parallel>, #tpu.dimension_semantics<parallel>, #tpu.dimension_semantics<arbitrary>], iteration_bounds = array<i64: 4, 1, 1, 2>, scalar_prefetch = 0 : i64, scratch_operands = 1 : i64, tpu.core_type = #tpu.core_type<tc>, window_params = [{transform_indices = @transform_0, window_bounds = array<i64: 1, 16, 512>}, {transform_indices = @transform_1, window_bounds = array<i64: 1, 512, 128>}, {transform_indices = @transform_2, window_bounds = array<i64: 1, 1, 128>}, {transform_indices = @transform_3, window_bounds = array<i64: 1, 16, 128>}]} {
    %c0_i32 = arith.constant 0 : i32
    %0 = arith.cmpi eq, %arg3, %c0_i32 : i32
    %1 = arith.extui %0 : i1 to i32
    %c0_i32_0 = arith.constant 0 : i32
    %2 = arith.cmpi ne, %1, %c0_i32_0 : i32
    scf.if %2 {
      %cst_11 = arith.constant 0.000000e+00 : f32
      %14 = vector.broadcast %cst_11 : f32 to vector<16x128xf32>
      %c0_12 = arith.constant 0 : index
      %c0_13 = arith.constant 0 : index
      %15 = vector.load %arg8[%c0_12, %c0_13] : memref<16x128xf32, #tpu.memory_space<vmem>>, vector<16x128xf32>
      tpu.vector_store %arg8[%c0_12, %c0_13], %14 {strides = array<i32>} : memref<16x128xf32, #tpu.memory_space<vmem>>, vector<16x128xf32>,
    } else {
    }
    %c0 = arith.constant 0 : index
    %c0_1 = arith.constant 0 : index
    %3 = vector.load %arg8[%c0, %c0_1] : memref<16x128xf32, #tpu.memory_space<vmem>>, vector<16x128xf32>
    %c0_2 = arith.constant 0 : index
    %c0_3 = arith.constant 0 : index
    %c0_4 = arith.constant 0 : index
    %4 = vector.load %arg4[%c0_2, %c0_3, %c0_4] : memref<1x16x512xbf16, #tpu.memory_space<vmem>>, vector<1x16x512xbf16>
    %5 = vector.shape_cast %4 : vector<1x16x512xbf16> to vector<16x512xbf16>
    %c0_5 = arith.constant 0 : index
    %c0_6 = arith.constant 0 : index
    %c0_7 = arith.constant 0 : index
    %6 = vector.load %arg5[%c0_5, %c0_6, %c0_7] : memref<1x512x128xbf16, #tpu.memory_space<vmem>>, vector<1x512x128xbf16>
    %7 = vector.shape_cast %6 : vector<1x512x128xbf16> to vector<512x128xbf16>
    %cst = arith.constant dense<0.000000e+00> : vector<16x128xf32>
    %8 = tpu.matmul %5, %7, %cst {dimension_numbers = #tpu.dot_dimension_numbers<[1], [0], [0], [1], [0, 0, 1, 1], [], []>} : vector<16x512xbf16>, vector<512x128xbf16>, vector<16x128xf32> -> vector<16x128xf32>
    %9 = arith.addf %3, %8 : vector<16x128xf32>
    %c0_8 = arith.constant 0 : index
    %c0_9 = arith.constant 0 : index
    %10 = vector.load %arg8[%c0_8, %c0_9] : memref<16x128xf32, #tpu.memory_space<vmem>>, vector<16x128xf32>
    tpu.vector_store %arg8[%c0_8, %c0_9], %9 {strides = array<i32>} : memref<16x128xf32, #tpu.memory_space<vmem>>, vector<16x128xf32>,
    %c1_i32 = arith.constant 1 : i32
    %11 = arith.cmpi eq, %arg3, %c1_i32 : i32
    %12 = arith.extui %11 : i1 to i32
    %c0_i32_10 = arith.constant 0 : i32
    %13 = arith.cmpi ne, %12, %c0_i32_10 : i32
    scf.if %13 {
      %c0_11 = arith.constant 0 : index
      %c0_12 = arith.constant 0 : index
      %14 = vector.load %arg8[%c0_11, %c0_12] : memref<16x128xf32, #tpu.memory_space<vmem>>, vector<16x128xf32>
      %c0_13 = arith.constant 0 : index
      %c0_14 = arith.constant 0 : index
      %c0_15 = arith.constant 0 : index
      %15 = vector.load %arg6[%c0_13, %c0_14, %c0_15] : memref<1x1x128xf32, #tpu.memory_space<vmem>>, vector<1x1x128xf32>
      %16 = vector.shape_cast %15 : vector<1x1x128xf32> to vector<1x128xf32>
      %17 = vector.broadcast %16 : vector<1x128xf32> to vector<16x128xf32>
      %18 = arith.addf %14, %17 : vector<16x128xf32>
      %cst_16 = arith.constant 0.000000e+00 : f32
      %19 = vector.broadcast %cst_16 : f32 to vector<16x128xf32>
      %20 = arith.cmpf oge, %18, %19 : vector<16x128xf32>
      %cst_17 = arith.constant 0.00999999977 : f32
      %21 = vector.broadcast %cst_17 : f32 to vector<16x128xf32>
      %22 = arith.mulf %21, %18 : vector<16x128xf32>
      %23 = arith.select %20, %18, %22 : vector<16x128xi1>, vector<16x128xf32>
      %c0_18 = arith.constant 0 : index
      %c0_19 = arith.constant 0 : index
      %c0_20 = arith.constant 0 : index
      %24 = vector.load %arg7[%c0_18, %c0_19, %c0_20] : memref<1x16x128xf32, #tpu.memory_space<vmem>>, vector<1x16x128xf32>
      %25 = vector.shape_cast %24 : vector<1x16x128xf32> to vector<16x128xf32>
      %26 = vector.shape_cast %23 : vector<16x128xf32> to vector<1x16x128xf32>
      tpu.vector_store %arg7[%c0_18, %c0_19, %c0_20], %26 {strides = array<i32>} : memref<1x16x128xf32, #tpu.memory_space<vmem>>, vector<1x16x128xf32>,
    } else {
    }
    return
  }
  func.func @transform_0(%arg0: i32, %arg1: i32, %arg2: i32, %arg3: i32) -> (i32, i32, i32) {
    %c0_i32 = arith.constant 0 : i32
    return %arg0, %arg1, %arg3 : i32, i32, i32
  }
  func.func @transform_1(%arg0: i32, %arg1: i32, %arg2: i32, %arg3: i32) -> (i32, i32, i32) {
    %c0_i32 = arith.constant 0 : i32
    return %arg0, %arg3, %arg2 : i32, i32, i32
  }
  func.func @transform_2(%arg0: i32, %arg1: i32, %arg2: i32, %arg3: i32) -> (i32, i32, i32) {
    %c0_i32 = arith.constant 0 : i32
    %c0_i32_0 = arith.constant 0 : i32
    return %arg0, %c0_i32, %arg2 : i32, i32, i32
  }
  func.func @transform_3(%arg0: i32, %arg1: i32, %arg2: i32, %arg3: i32) -> (i32, i32, i32) {
    %c0_i32 = arith.constant 0 : i32
    return %arg0, %arg1, %arg2 : i32, i32, i32
  }
}

module attributes {stable_mosaic.version = 11 : i64} {
  func.func @_gemm_kernel(%arg0: i32, %arg1: i32, %arg2: i32, %arg3: i32, %arg4: memref<1x32x512xbf16, #tpu.memory_space<vmem>>, %arg5: memref<1x512x128xbf16, #tpu.memory_space<vmem>>, %arg6: memref<1x1x128xf32, #tpu.memory_space<vmem>>, %arg7: memref<1x32x128xf32, #tpu.memory_space<vmem>>, %arg8: memref<32x128xf32, #tpu.memory_space<vmem>>) attributes {dimension_semantics = [#tpu.dimension_semantics<parallel>, #tpu.dimension_semantics<parallel>, #tpu.dimension_semantics<parallel>, #tpu.dimension_semantics<arbitrary>], iteration_bounds = array<i64: 4, 1, 1, 1>, scalar_prefetch = 0 : i64, scratch_operands = 1 : i64, tpu.core_type = #tpu.core_type<tc>, window_params = [{transform_indices = @transform_0, window_bounds = array<i64: 1, 32, 512>}, {transform_indices = @transform_1, window_bounds = array<i64: 1, 512, 128>}, {transform_indices = @transform_2, window_bounds = array<i64: 1, 1, 128>}, {transform_indices = @transform_3, window_bounds = array<i64: 1, 32, 128>}]} {
    %c0_i32 = arith.constant 0 : i32
    %0 = arith.cmpi eq, %arg3, %c0_i32 : i32
    %1 = arith.extui %0 : i1 to i32
    %c0_i32_0 = arith.constant 0 : i32
    %2 = arith.cmpi ne, %1, %c0_i32_0 : i32
    scf.if %2 {
      %cst_12 = arith.constant 0.000000e+00 : f32
      %14 = vector.broadcast %cst_12 : f32 to vector<32x128xf32>
      %c0_13 = arith.constant 0 : index
      %c0_14 = arith.constant 0 : index
      %15 = vector.load %arg8[%c0_13, %c0_14] : memref<32x128xf32, #tpu.memory_space<vmem>>, vector<32x128xf32>
      tpu.vector_store %arg8[%c0_13, %c0_14], %14 {strides = array<i32>} : memref<32x128xf32, #tpu.memory_space<vmem>>, vector<32x128xf32>,
    } else {
    }
    %c0 = arith.constant 0 : index
    %c0_1 = arith.constant 0 : index
    %3 = vector.load %arg8[%c0, %c0_1] : memref<32x128xf32, #tpu.memory_space<vmem>>, vector<32x128xf32>
    %c0_2 = arith.constant 0 : index
    %c0_3 = arith.constant 0 : index
    %c0_4 = arith.constant 0 : index
    %4 = vector.load %arg4[%c0_2, %c0_3, %c0_4] : memref<1x32x512xbf16, #tpu.memory_space<vmem>>, vector<1x32x512xbf16>
    %5 = vector.shape_cast %4 : vector<1x32x512xbf16> to vector<32x512xbf16>
    %c0_5 = arith.constant 0 : index
    %c0_6 = arith.constant 0 : index
    %c0_7 = arith.constant 0 : index
    %6 = vector.load %arg5[%c0_5, %c0_6, %c0_7] : memref<1x512x128xbf16, #tpu.memory_space<vmem>>, vector<1x512x128xbf16>
    %7 = vector.shape_cast %6 : vector<1x512x128xbf16> to vector<512x128xbf16>
    %cst = arith.constant dense<0.000000e+00> : vector<32x128xf32>
    %8 = tpu.matmul %5, %7, %cst {dimension_numbers = #tpu.dot_dimension_numbers<[1], [0], [0], [1], [0, 0, 1, 1], [], []>} : vector<32x512xbf16>, vector<512x128xbf16>, vector<32x128xf32> -> vector<32x128xf32>
    %9 = arith.addf %3, %8 : vector<32x128xf32>
    %c0_8 = arith.constant 0 : index
    %c0_9 = arith.constant 0 : index
    %10 = vector.load %arg8[%c0_8, %c0_9] : memref<32x128xf32, #tpu.memory_space<vmem>>, vector<32x128xf32>
    tpu.vector_store %arg8[%c0_8, %c0_9], %9 {strides = array<i32>} : memref<32x128xf32, #tpu.memory_space<vmem>>, vector<32x128xf32>,
    %c0_i32_10 = arith.constant 0 : i32
    %11 = arith.cmpi eq, %arg3, %c0_i32_10 : i32
    %12 = arith.extui %11 : i1 to i32
    %c0_i32_11 = arith.constant 0 : i32
    %13 = arith.cmpi ne, %12, %c0_i32_11 : i32
    scf.if %13 {
      %c0_12 = arith.constant 0 : index
      %c0_13 = arith.constant 0 : index
      %14 = vector.load %arg8[%c0_12, %c0_13] : memref<32x128xf32, #tpu.memory_space<vmem>>, vector<32x128xf32>
      %c0_14 = arith.constant 0 : index
      %c0_15 = arith.constant 0 : index
      %c0_16 = arith.constant 0 : index
      %15 = vector.load %arg6[%c0_14, %c0_15, %c0_16] : memref<1x1x128xf32, #tpu.memory_space<vmem>>, vector<1x1x128xf32>
      %16 = vector.shape_cast %15 : vector<1x1x128xf32> to vector<1x128xf32>
      %17 = vector.broadcast %16 : vector<1x128xf32> to vector<32x128xf32>
      %18 = arith.addf %14, %17 : vector<32x128xf32>
      %cst_17 = arith.constant 0.000000e+00 : f32
      %19 = vector.broadcast %cst_17 : f32 to vector<32x128xf32>
      %20 = arith.cmpf oge, %18, %19 : vector<32x128xf32>
      %cst_18 = arith.constant 0.00999999977 : f32
      %21 = vector.broadcast %cst_18 : f32 to vector<32x128xf32>
      %22 = arith.mulf %21, %18 : vector<32x128xf32>
      %23 = arith.select %20, %18, %22 : vector<32x128xi1>, vector<32x128xf32>
      %c0_19 = arith.constant 0 : index
      %c0_20 = arith.constant 0 : index
      %c0_21 = arith.constant 0 : index
      %24 = vector.load %arg7[%c0_19, %c0_20, %c0_21] : memref<1x32x128xf32, #tpu.memory_space<vmem>>, vector<1x32x128xf32>
      %25 = vector.shape_cast %24 : vector<1x32x128xf32> to vector<32x128xf32>
      %26 = vector.shape_cast %23 : vector<32x128xf32> to vector<1x32x128xf32>
      tpu.vector_store %arg7[%c0_19, %c0_20, %c0_21], %26 {strides = array<i32>} : memref<1x32x128xf32, #tpu.memory_space<vmem>>, vector<1x32x128xf32>,
    } else {
    }
    return
  }
  func.func @transform_0(%arg0: i32, %arg1: i32, %arg2: i32, %arg3: i32) -> (i32, i32, i32) {
    %c0_i32 = arith.constant 0 : i32
    return %arg0, %arg1, %arg3 : i32, i32, i32
  }
  func.func @transform_1(%arg0: i32, %arg1: i32, %arg2: i32, %arg3: i32) -> (i32, i32, i32) {
    %c0_i32 = arith.constant 0 : i32
    return %arg0, %arg3, %arg2 : i32, i32, i32
  }
  func.func @transform_2(%arg0: i32, %arg1: i32, %arg2: i32, %arg3: i32) -> (i32, i32, i32) {
    %c0_i32 = arith.constant 0 : i32
    %c0_i32_0 = arith.constant 0 : i32
    return %arg0, %c0_i32, %arg2 : i32, i32, i32
  }
  func.func @transform_3(%arg0: i32, %arg1: i32, %arg2: i32, %arg3: i32) -> (i32, i32, i32) {
    %c0_i32 = arith.constant 0 : i32
    return %arg0, %arg1, %arg2 : i32, i32, i32
  }
}

module attributes {stable_mosaic.version = 11 : i64} {
  func.func @_gemm_kernel(%arg0: i32, %arg1: i32, %arg2: i32, %arg3: i32, %arg4: memref<1x128x256xbf16, #tpu.memory_space<vmem>>, %arg5: memref<1x256x128xbf16, #tpu.memory_space<vmem>>, %arg6: memref<1x1x128xf32, #tpu.memory_space<vmem>>, %arg7: memref<1x128x128xf32, #tpu.memory_space<vmem>>, %arg8: memref<128x128xf32, #tpu.memory_space<vmem>>) attributes {dimension_semantics = [#tpu.dimension_semantics<parallel>, #tpu.dimension_semantics<parallel>, #tpu.dimension_semantics<parallel>, #tpu.dimension_semantics<arbitrary>], iteration_bounds = array<i64: 4, 1, 1, 1>, scalar_prefetch = 0 : i64, scratch_operands = 1 : i64, tpu.core_type = #tpu.core_type<tc>, window_params = [{transform_indices = @transform_0, window_bounds = array<i64: 1, 128, 256>}, {transform_indices = @transform_1, window_bounds = array<i64: 1, 256, 128>}, {transform_indices = @transform_2, window_bounds = array<i64: 1, 1, 128>}, {transform_indices = @transform_3, window_bounds = array<i64: 1, 128, 128>}]} {
    %c0_i32 = arith.constant 0 : i32
    %0 = arith.cmpi eq, %arg3, %c0_i32 : i32
    %1 = arith.extui %0 : i1 to i32
    %c0_i32_0 = arith.constant 0 : i32
    %2 = arith.cmpi ne, %1, %c0_i32_0 : i32
    scf.if %2 {
      %cst_12 = arith.constant 0.000000e+00 : f32
      %14 = vector.broadcast %cst_12 : f32 to vector<128x128xf32>
      %c0_13 = arith.constant 0 : index
      %c0_14 = arith.constant 0 : index
      %15 = vector.load %arg8[%c0_13, %c0_14] : memref<128x128xf32, #tpu.memory_space<vmem>>, vector<128x128xf32>
      tpu.vector_store %arg8[%c0_13, %c0_14], %14 {strides = array<i32>} : memref<128x128xf32, #tpu.memory_space<vmem>>, vector<128x128xf32>,
    } else {
    }
    %c0 = arith.constant 0 : index
    %c0_1 = arith.constant 0 : index
    %3 = vector.load %arg8[%c0, %c0_1] : memref<128x128xf32, #tpu.memory_space<vmem>>, vector<128x128xf32>
    %c0_2 = arith.constant 0 : index
    %c0_3 = arith.constant 0 : index
    %c0_4 = arith.constant 0 : index
    %4 = vector.load %arg4[%c0_2, %c0_3, %c0_4] : memref<1x128x256xbf16, #tpu.memory_space<vmem>>, vector<1x128x256xbf16>
    %5 = vector.shape_cast %4 : vector<1x128x256xbf16> to vector<128x256xbf16>
    %c0_5 = arith.constant 0 : index
    %c0_6 = arith.constant 0 : index
    %c0_7 = arith.constant 0 : index
    %6 = vector.load %arg5[%c0_5, %c0_6, %c0_7] : memref<1x256x128xbf16, #tpu.memory_space<vmem>>, vector<1x256x128xbf16>
    %7 = vector.shape_cast %6 : vector<1x256x128xbf16> to vector<256x128xbf16>
    %cst = arith.constant dense<0.000000e+00> : vector<128x128xf32>
    %8 = tpu.matmul %5, %7, %cst {dimension_numbers = #tpu.dot_dimension_numbers<[1], [0], [0], [1], [0, 0, 1, 1], [], []>} : vector<128x256xbf16>, vector<256x128xbf16>, vector<128x128xf32> -> vector<128x128xf32>
    %9 = arith.addf %3, %8 : vector<128x128xf32>
    %c0_8 = arith.constant 0 : index
    %c0_9 = arith.constant 0 : index
    %10 = vector.load %arg8[%c0_8, %c0_9] : memref<128x128xf32, #tpu.memory_space<vmem>>, vector<128x128xf32>
    tpu.vector_store %arg8[%c0_8, %c0_9], %9 {strides = array<i32>} : memref<128x128xf32, #tpu.memory_space<vmem>>, vector<128x128xf32>,
    %c0_i32_10 = arith.constant 0 : i32
    %11 = arith.cmpi eq, %arg3, %c0_i32_10 : i32
    %12 = arith.extui %11 : i1 to i32
    %c0_i32_11 = arith.constant 0 : i32
    %13 = arith.cmpi ne, %12, %c0_i32_11 : i32
    scf.if %13 {
      %c0_12 = arith.constant 0 : index
      %c0_13 = arith.constant 0 : index
      %14 = vector.load %arg8[%c0_12, %c0_13] : memref<128x128xf32, #tpu.memory_space<vmem>>, vector<128x128xf32>
      %c0_14 = arith.constant 0 : index
      %c0_15 = arith.constant 0 : index
      %c0_16 = arith.constant 0 : index
      %15 = vector.load %arg6[%c0_14, %c0_15, %c0_16] : memref<1x1x128xf32, #tpu.memory_space<vmem>>, vector<1x1x128xf32>
      %16 = vector.shape_cast %15 : vector<1x1x128xf32> to vector<1x128xf32>
      %17 = vector.broadcast %16 : vector<1x128xf32> to vector<128x128xf32>
      %18 = arith.addf %14, %17 : vector<128x128xf32>
      %cst_17 = arith.constant 0.000000e+00 : f32
      %19 = vector.broadcast %cst_17 : f32 to vector<128x128xf32>
      %20 = arith.cmpf oge, %18, %19 : vector<128x128xf32>
      %cst_18 = arith.constant 0.00999999977 : f32
      %21 = vector.broadcast %cst_18 : f32 to vector<128x128xf32>
      %22 = arith.mulf %21, %18 : vector<128x128xf32>
      %23 = arith.select %20, %18, %22 : vector<128x128xi1>, vector<128x128xf32>
      %c0_19 = arith.constant 0 : index
      %c0_20 = arith.constant 0 : index
      %c0_21 = arith.constant 0 : index
      %24 = vector.load %arg7[%c0_19, %c0_20, %c0_21] : memref<1x128x128xf32, #tpu.memory_space<vmem>>, vector<1x128x128xf32>
      %25 = vector.shape_cast %24 : vector<1x128x128xf32> to vector<128x128xf32>
      %26 = vector.shape_cast %23 : vector<128x128xf32> to vector<1x128x128xf32>
      tpu.vector_store %arg7[%c0_19, %c0_20, %c0_21], %26 {strides = array<i32>} : memref<1x128x128xf32, #tpu.memory_space<vmem>>, vector<1x128x128xf32>,
    } else {
    }
    return
  }
  func.func @transform_0(%arg0: i32, %arg1: i32, %arg2: i32, %arg3: i32) -> (i32, i32, i32) {
    %c0_i32 = arith.constant 0 : i32
    return %arg0, %arg1, %arg3 : i32, i32, i32
  }
  func.func @transform_1(%arg0: i32, %arg1: i32, %arg2: i32, %arg3: i32) -> (i32, i32, i32) {
    %c0_i32 = arith.constant 0 : i32
    return %arg0, %arg3, %arg2 : i32, i32, i32
  }
  func.func @transform_2(%arg0: i32, %arg1: i32, %arg2: i32, %arg3: i32) -> (i32, i32, i32) {
    %c0_i32 = arith.constant 0 : i32
    %c0_i32_0 = arith.constant 0 : i32
    return %arg0, %c0_i32, %arg2 : i32, i32, i32
  }
  func.func @transform_3(%arg0: i32, %arg1: i32, %arg2: i32, %arg3: i32) -> (i32, i32, i32) {
    %c0_i32 = arith.constant 0 : i32
    return %arg0, %arg1, %arg2 : i32, i32, i32
  }
}

module attributes {stable_mosaic.version = 11 : i64} {
  func.func @_gemm_kernel(%arg0: i32, %arg1: i32, %arg2: i32, %arg3: i32, %arg4: memref<1x256x128xbf16, #tpu.memory_space<vmem>>, %arg5: memref<1x128x128xbf16, #tpu.memory_space<vmem>>, %arg6: memref<1x1x128xf32, #tpu.memory_space<vmem>>, %arg7: memref<1x256x128xf32, #tpu.memory_space<vmem>>, %arg8: memref<256x128xf32, #tpu.memory_space<vmem>>) attributes {dimension_semantics = [#tpu.dimension_semantics<parallel>, #tpu.dimension_semantics<parallel>, #tpu.dimension_semantics<parallel>, #tpu.dimension_semantics<arbitrary>], iteration_bounds = array<i64: 4, 2, 1, 1>, scalar_prefetch = 0 : i64, scratch_operands = 1 : i64, tpu.core_type = #tpu.core_type<tc>, window_params = [{transform_indices = @transform_0, window_bounds = array<i64: 1, 256, 128>}, {transform_indices = @transform_1, window_bounds = array<i64: 1, 128, 128>}, {transform_indices = @transform_2, window_bounds = array<i64: 1, 1, 128>}, {transform_indices = @transform_3, window_bounds = array<i64: 1, 256, 128>}]} {
    %c0_i32 = arith.constant 0 : i32
    %0 = arith.cmpi eq, %arg3, %c0_i32 : i32
    %1 = arith.extui %0 : i1 to i32
    %c0_i32_0 = arith.constant 0 : i32
    %2 = arith.cmpi ne, %1, %c0_i32_0 : i32
    scf.if %2 {
      %cst_12 = arith.constant 0.000000e+00 : f32
      %14 = vector.broadcast %cst_12 : f32 to vector<256x128xf32>
      %c0_13 = arith.constant 0 : index
      %c0_14 = arith.constant 0 : index
      %15 = vector.load %arg8[%c0_13, %c0_14] : memref<256x128xf32, #tpu.memory_space<vmem>>, vector<256x128xf32>
      tpu.vector_store %arg8[%c0_13, %c0_14], %14 {strides = array<i32>} : memref<256x128xf32, #tpu.memory_space<vmem>>, vector<256x128xf32>,
    } else {
    }
    %c0 = arith.constant 0 : index
    %c0_1 = arith.constant 0 : index
    %3 = vector.load %arg8[%c0, %c0_1] : memref<256x128xf32, #tpu.memory_space<vmem>>, vector<256x128xf32>
    %c0_2 = arith.constant 0 : index
    %c0_3 = arith.constant 0 : index
    %c0_4 = arith.constant 0 : index
    %4 = vector.load %arg4[%c0_2, %c0_3, %c0_4] : memref<1x256x128xbf16, #tpu.memory_space<vmem>>, vector<1x256x128xbf16>
    %5 = vector.shape_cast %4 : vector<1x256x128xbf16> to vector<256x128xbf16>
    %c0_5 = arith.constant 0 : index
    %c0_6 = arith.constant 0 : index
    %c0_7 = arith.constant 0 : index
    %6 = vector.load %arg5[%c0_5, %c0_6, %c0_7] : memref<1x128x128xbf16, #tpu.memory_space<vmem>>, vector<1x128x128xbf16>
    %7 = vector.shape_cast %6 : vector<1x128x128xbf16> to vector<128x128xbf16>
    %cst = arith.constant dense<0.000000e+00> : vector<256x128xf32>
    %8 = tpu.matmul %5, %7, %cst {dimension_numbers = #tpu.dot_dimension_numbers<[1], [0], [0], [1], [0, 0, 1, 1], [], []>} : vector<256x128xbf16>, vector<128x128xbf16>, vector<256x128xf32> -> vector<256x128xf32>
    %9 = arith.addf %3, %8 : vector<256x128xf32>
    %c0_8 = arith.constant 0 : index
    %c0_9 = arith.constant 0 : index
    %10 = vector.load %arg8[%c0_8, %c0_9] : memref<256x128xf32, #tpu.memory_space<vmem>>, vector<256x128xf32>
    tpu.vector_store %arg8[%c0_8, %c0_9], %9 {strides = array<i32>} : memref<256x128xf32, #tpu.memory_space<vmem>>, vector<256x128xf32>,
    %c0_i32_10 = arith.constant 0 : i32
    %11 = arith.cmpi eq, %arg3, %c0_i32_10 : i32
    %12 = arith.extui %11 : i1 to i32
    %c0_i32_11 = arith.constant 0 : i32
    %13 = arith.cmpi ne, %12, %c0_i32_11 : i32
    scf.if %13 {
      %c0_12 = arith.constant 0 : index
      %c0_13 = arith.constant 0 : index
      %14 = vector.load %arg8[%c0_12, %c0_13] : memref<256x128xf32, #tpu.memory_space<vmem>>, vector<256x128xf32>
      %c0_14 = arith.constant 0 : index
      %c0_15 = arith.constant 0 : index
      %c0_16 = arith.constant 0 : index
      %15 = vector.load %arg6[%c0_14, %c0_15, %c0_16] : memref<1x1x128xf32, #tpu.memory_space<vmem>>, vector<1x1x128xf32>
      %16 = vector.shape_cast %15 : vector<1x1x128xf32> to vector<1x128xf32>
      %17 = vector.broadcast %16 : vector<1x128xf32> to vector<256x128xf32>
      %18 = arith.addf %14, %17 : vector<256x128xf32>
      %19 = arith.negf %18 : vector<256x128xf32>
      %20 = math.exp %19 : vector<256x128xf32>
      %cst_17 = arith.constant 1.000000e+00 : f32
      %21 = vector.broadcast %cst_17 : f32 to vector<256x128xf32>
      %22 = arith.addf %21, %20 : vector<256x128xf32>
      %23 = arith.divf %21, %22 : vector<256x128xf32>
      %c0_18 = arith.constant 0 : index
      %c0_19 = arith.constant 0 : index
      %c0_20 = arith.constant 0 : index
      %24 = vector.load %arg7[%c0_18, %c0_19, %c0_20] : memref<1x256x128xf32, #tpu.memory_space<vmem>>, vector<1x256x128xf32>
      %25 = vector.shape_cast %24 : vector<1x256x128xf32> to vector<256x128xf32>
      %26 = vector.shape_cast %23 : vector<256x128xf32> to vector<1x256x128xf32>
      tpu.vector_store %arg7[%c0_18, %c0_19, %c0_20], %26 {strides = array<i32>} : memref<1x256x128xf32, #tpu.memory_space<vmem>>, vector<1x256x128xf32>,
    } else {
    }
    return
  }
  func.func @transform_0(%arg0: i32, %arg1: i32, %arg2: i32, %arg3: i32) -> (i32, i32, i32) {
    %c0_i32 = arith.constant 0 : i32
    return %arg0, %arg1, %arg3 : i32, i32, i32
  }
  func.func @transform_1(%arg0: i32, %arg1: i32, %arg2: i32, %arg3: i32) -> (i32, i32, i32) {
    %c0_i32 = arith.constant 0 : i32
    return %arg0, %arg3, %arg2 : i32, i32, i32
  }
  func.func @transform_2(%arg0: i32, %arg1: i32, %arg2: i32, %arg3: i32) -> (i32, i32, i32) {
    %c0_i32 = arith.constant 0 : i32
    %c0_i32_0 = arith.constant 0 : i32
    return %arg0, %c0_i32, %arg2 : i32, i32, i32
  }
  func.func @transform_3(%arg0: i32, %arg1: i32, %arg2: i32, %arg3: i32) -> (i32, i32, i32) {
    %c0_i32 = arith.constant 0 : i32
    return %arg0, %arg1, %arg2 : i32, i32, i32
  }
}

</mosaic_0001>

<llo_original>
// kernel: clagnosco_autoencoder_forward.11
$region0: #{clagnosco_autoencoder_forward.11}
  #allocation0 [shape = 'u32[]', space=smem, size = 0x4, offset = 0x4, fixed_abs, tag = 'smem constant byte address 0x4 - core index']
  #allocation1 [shape = 'u32[144,128]{1,0:T(1,128)}', space=vmem, size = 0x12000, scoped, tag = 'internal scratch']
  #allocation2 [shape = 'f32[128,128]{1,0:T(8,128)}', space=vmem, size = 0x10000, scoped, tag = 'scratch operand']
  %s0 = inlined_call_operand.vmem [shape: bf16[128,128], index: 0, kind: input, shape index: {}]
  %s1 = inlined_call_operand.vmem [shape: bf16[128,128], index: 1, kind: input, shape index: {}]
  %s2 = inlined_call_operand.vmem [shape: f32[1,128], index: 2, kind: input, shape index: {}]
  %s3 = inlined_call_operand.vmem [shape: f32[1,128], index: 3, kind: input, shape index: {}]
  %s4 = inlined_call_operand.vmem [shape: f32[1,128], index: 4, kind: input, shape index: {}]
  %s5 = inlined_call_operand.vmem [shape: f32[128,128], index: 5, kind: output, shape index: {}]
  %s6 = sld [smem:[#allocation0]]
  $region38: #{clagnosco_autoencoder_forward.11} parent=0
    _
  %s8 = ssub.s32 1, %s6
  %s9 = scalar_select 0, %s8, %s6
  // Predicated region
  $region2: #{clagnosco_autoencoder_forward.11} parent=0 // pred_check
    _
  $region3: #{clagnosco_autoencoder_forward.11} parent=0 // pred_check_branch
    %11 = sbr.rel (0) target = $region5
  $region4: #{clagnosco_autoencoder_forward.11} parent=0 // pred_region
    _
  $region5: #{clagnosco_autoencoder_forward.11} parent=0 // pred_fallthru
    _
  // Predicated region
  $region6: #{clagnosco_autoencoder_forward.11} parent=0 // pred_check
    _
  $region7: #{clagnosco_autoencoder_forward.11} parent=0 // pred_check_branch
    %13 = sbr.rel (0) target = $region9
  $region8: #{clagnosco_autoencoder_forward.11} parent=0 // pred_region
    _
  $region9: #{clagnosco_autoencoder_forward.11} parent=0 // pred_fallthru
    _
  // Predicated region
  $region10: #{clagnosco_autoencoder_forward.11} parent=0 // pred_check
    _
  $region11: #{clagnosco_autoencoder_forward.11} parent=0 // pred_check_branch
    %15 = sbr.rel (0) target = $region13
  $region12: #{clagnosco_autoencoder_forward.11} parent=0 // pred_region
    _
  $region13: #{clagnosco_autoencoder_forward.11} parent=0 // pred_fallthru
    _
  // Predicated region
  $region14: #{clagnosco_autoencoder_forward.11} parent=0 // pred_check
    _
  $region15: #{clagnosco_autoencoder_forward.11} parent=0 // pred_check_branch
    %17 = sbr.rel (0) target = $region17
  $region16: #{clagnosco_autoencoder_forward.11} parent=0 // pred_region
    _
  $region17: #{clagnosco_autoencoder_forward.11} parent=0 // pred_fallthru
    _
  // Predicated region
  $region18: #{clagnosco_autoencoder_forward.11} parent=0 // pred_check
    _
  $region19: #{clagnosco_autoencoder_forward.11} parent=0 // pred_check_branch
    %19 = sbr.rel (0) target = $region21
  $region20: #{clagnosco_autoencoder_forward.11} parent=0 // pred_region
    _
  $region21: #{clagnosco_autoencoder_forward.11} parent=0 // pred_fallthru
    _
  %p21 = scmp.eq.s32.totalorder 0, 0
  // Predicated region
  $region22: #{clagnosco_autoencoder_forward.11} parent=0 // pred_check
    %p22 = pneg %p21
  $region23: #{clagnosco_autoencoder_forward.11} parent=0 // pred_check_branch
    %24 = sbr.rel (%p22) target = $region25
  $region24: #{clagnosco_autoencoder_forward.11} parent=0 // pred_region
    %25 = vst [vmem:[#allocation2] sm:$0xff] 0.0
    %26 = vst [vmem:[#allocation2 + $0x8] sm:$0xff] 0.0
    %27 = vst [vmem:[#allocation2 + $0x10] sm:$0xff] 0.0
    %28 = vst [vmem:[#allocation2 + $0x18] sm:$0xff] 0.0
    %29 = vst [vmem:[#allocation2 + $0x20] sm:$0xff] 0.0
    %30 = vst [vmem:[#allocation2 + $0x28] sm:$0xff] 0.0
    %31 = vst [vmem:[#allocation2 + $0x30] sm:$0xff] 0.0
    %32 = vst [vmem:[#allocation2 + $0x38] sm:$0xff] 0.0
    %33 = vst [vmem:[#allocation2 + $0x40] sm:$0xff] 0.0
    %34 = vst [vmem:[#allocation2 + $0x48] sm:$0xff] 0.0
    %35 = vst [vmem:[#allocation2 + $0x50] sm:$0xff] 0.0
    %36 = vst [vmem:[#allocation2 + $0x58] sm:$0xff] 0.0
    %37 = vst [vmem:[#allocation2 + $0x60] sm:$0xff] 0.0
    %38 = vst [vmem:[#allocation2 + $0x68] sm:$0xff] 0.0
    %39 = vst [vmem:[#allocation2 + $0x70] sm:$0xff] 0.0
    %40 = vst [vmem:[#allocation2 + $0x78] sm:$0xff] 0.0
  $region25: #{clagnosco_autoencoder_forward.11} parent=0 // pred_fallthru
    _
  %v41 = vld [vmem:[#allocation2] sm:$0xff]
  %v42 = vld [vmem:[#allocation2 + $0x8] sm:$0xff]
  %v43 = vld [vmem:[#allocation2 + $0x10] sm:$0xff]
  %v44 = vld [vmem:[#allocation2 + $0x18] sm:$0xff]
  %v45 = vld [vmem:[#allocation2 + $0x20] sm:$0xff]
  %v46 = vld [vmem:[#allocation2 + $0x28] sm:$0xff]
  %v47 = vld [vmem:[#allocation2 + $0x30] sm:$0xff]
  %v48 = vld [vmem:[#allocation2 + $0x38] sm:$0xff]
  %v49 = vld [vmem:[#allocation2 + $0x40] sm:$0xff]
  %v50 = vld [vmem:[#allocation2 + $0x48] sm:$0xff]
  %v51 = vld [vmem:[#allocation2 + $0x50] sm:$0xff]
  %v52 = vld [vmem:[#allocation2 + $0x58] sm:$0xff]
  %v53 = vld [vmem:[#allocation2 + $0x60] sm:$0xff]
  %v54 = vld [vmem:[#allocation2 + $0x68] sm:$0xff]
  %v55 = vld [vmem:[#allocation2 + $0x70] sm:$0xff]
  %v56 = vld [vmem:[#allocation2 + $0x78] sm:$0xff]
  %v57 = vld [vmem:[%s0] sm:$0xf]
  %v58 = vld [vmem:[%s0 + $0x4] sm:$0xf]
  %v59 = vld [vmem:[%s0 + $0x8] sm:$0xf]
  %v60 = vld [vmem:[%s0 + $0xc] sm:$0xf]
  %v61 = vld [vmem:[%s0 + $0x10] sm:$0xf]
  %v62 = vld [vmem:[%s0 + $0x14] sm:$0xf]
  %v63 = vld [vmem:[%s0 + $0x18] sm:$0xf]
  %v64 = vld [vmem:[%s0 + $0x1c] sm:$0xf]
  %v65 = vld [vmem:[%s0 + $0x20] sm:$0xf]
  %v66 = vld [vmem:[%s0 + $0x24] sm:$0xf]
  %v67 = vld [vmem:[%s0 + $0x28] sm:$0xf]
  %v68 = vld [vmem:[%s0 + $0x2c] sm:$0xf]
  %v69 = vld [vmem:[%s0 + $0x30] sm:$0xf]
  %v70 = vld [vmem:[%s0 + $0x34] sm:$0xf]
  %v71 = vld [vmem:[%s0 + $0x38] sm:$0xf]
  %v72 = vld [vmem:[%s0 + $0x3c] sm:$0xf]
  %v73 = vld [vmem:[%s1] sm:$0xf]
  %v74 = vld [vmem:[%s1 + $0x4] sm:$0xf]
  %v75 = vld [vmem:[%s1 + $0x8] sm:$0xf]
  %v76 = vld [vmem:[%s1 + $0xc] sm:$0xf]
  %v77 = vld [vmem:[%s1 + $0x10] sm:$0xf]
  %v78 = vld [vmem:[%s1 + $0x14] sm:$0xf]
  %v79 = vld [vmem:[%s1 + $0x18] sm:$0xf]
  %v80 = vld [vmem:[%s1 + $0x1c] sm:$0xf]
  %v81 = vld [vmem:[%s1 + $0x20] sm:$0xf]
  %v82 = vld [vmem:[%s1 + $0x24] sm:$0xf]
  %v83 = vld [vmem:[%s1 + $0x28] sm:$0xf]
  %v84 = vld [vmem:[%s1 + $0x2c] sm:$0xf]
  %v85 = vld [vmem:[%s1 + $0x30] sm:$0xf]
  %v86 = vld [vmem:[%s1 + $0x34] sm:$0xf]
  %v87 = vld [vmem:[%s1 + $0x38] sm:$0xf]
  %v88 = vld [vmem:[%s1 + $0x3c] sm:$0xf]
  %v105 = vunpack.c.l.b16 %v57
  %v106 = vunpack.c.l.b16 %v58
  %v107 = vunpack.c.l.b16 %v59
  %v108 = vunpack.c.l.b16 %v60
  %v109 = vunpack.c.l.b16 %v61
  %v110 = vunpack.c.l.b16 %v62
  %v111 = vunpack.c.l.b16 %v63
  %v112 = vunpack.c.l.b16 %v64
  %v113 = vunpack.c.l.b16 %v65
  %v114 = vunpack.c.l.b16 %v66
  %v115 = vunpack.c.l.b16 %v67
  %v116 = vunpack.c.l.b16 %v68
  %v117 = vunpack.c.l.b16 %v69
  %v118 = vunpack.c.l.b16 %v70
  %v119 = vunpack.c.l.b16 %v71
  %v120 = vunpack.c.l.b16 %v72
  %v121 = vpack.c.b16 %v106, %v105
  %v122 = vpack.c.b16 %v108, %v107
  %v123 = vpack.c.b16 %v110, %v109
  %v124 = vpack.c.b16 %v112, %v111
  %v125 = vpack.c.b16 %v114, %v113
  %v126 = vpack.c.b16 %v116, %v115
  %v127 = vpack.c.b16 %v118, %v117
  %v128 = vpack.c.b16 %v120, %v119
  %v153 = vunpack.c.l.b16 %v73
  %v154 = vunpack.c.l.b16 %v74
  %v155 = vunpack.c.l.b16 %v75
  %v156 = vunpack.c.l.b16 %v76
  %v157 = vunpack.c.l.b16 %v77
  %v158 = vunpack.c.l.b16 %v78
  %v159 = vunpack.c.l.b16 %v79
  %v160 = vunpack.c.l.b16 %v80
  %v161 = vunpack.c.l.b16 %v81
  %v162 = vunpack.c.l.b16 %v82
  %v163 = vunpack.c.l.b16 %v83
  %v164 = vunpack.c.l.b16 %v84
  %v165 = vunpack.c.l.b16 %v85
  %v166 = vunpack.c.l.b16 %v86
  %v167 = vunpack.c.l.b16 %v87
  %v168 = vunpack.c.l.b16 %v88
  %v169 = vpack.c.b16 %v154, %v153
  %v170 = vpack.c.b16 %v156, %v155
  %v171 = vpack.c.b16 %v158, %v157
  %v172 = vpack.c.b16 %v160, %v159
  %v173 = vpack.c.b16 %v162, %v161
  %v174 = vpack.c.b16 %v164, %v163
  %v175 = vpack.c.b16 %v166, %v165
  %v176 = vpack.c.b16 %v168, %v167
  %185 = vmatprep.subr.bf16.mxu0 0
  %186 = vmatpush1.bf16.msra.mxu0 %v169
  %187 = vmatprep.subr.bf16.mxu0 0
  %188 = vmatpush1.bf16.msra.mxu0 %v170
  %189 = vmatprep.subr.bf16.mxu0 0
  %190 = vmatpush1.bf16.msra.mxu0 %v171
  %191 = vmatprep.subr.bf16.mxu0 0
  %192 = vmatpush1.bf16.msra.mxu0 %v172
  %193 = vmatprep.subr.bf16.mxu0 0
  %194 = vmatpush1.bf16.msra.mxu0 %v173
  %195 = vmatprep.subr.bf16.mxu0 0
  %196 = vmatpush1.bf16.msra.mxu0 %v174
  %197 = vmatprep.subr.bf16.mxu0 0
  %198 = vmatpush1.bf16.msra.mxu0 %v175
  %199 = vmatprep.subr.bf16.mxu0 0
  %200 = vmatpush1.bf16.msra.mxu0 %v176
  %201 = vmatprep.subr.bf16.mxu0 0
  %202 = vmatpush1.bf16.msra.mxu0 0
  %203 = vmatprep.subr.bf16.mxu0 0
  %204 = vmatpush1.bf16.msra.mxu0 0
  %205 = vmatprep.subr.bf16.mxu0 0
  %206 = vmatpush1.bf16.msra.mxu0 0
  %207 = vmatprep.subr.bf16.mxu0 0
  %208 = vmatpush1.bf16.msra.mxu0 0
  %209 = vmatprep.subr.bf16.mxu0 0
  %210 = vmatpush1.bf16.msra.mxu0 0
  %211 = vmatprep.subr.bf16.mxu0 0
  %212 = vmatpush1.bf16.msra.mxu0 0
  %213 = vmatprep.subr.bf16.mxu0 0
  %214 = vmatpush1.bf16.msra.mxu0 0
  %215 = vmatprep.subr.bf16.mxu0 0
  %216 = vmatpush1.bf16.msra.mxu0 0
  %217 = vmatprep.mubr.bf16.mxu0 0
  %218 = vmatmul.mubr.bf16.gmra.mrb[0].mxu0 %v121
  %v219 = vpop.f32.mrb[0].mxu0
  %v220 = vadd.f32 0.0, %v219
  %v221 = vpop.f32.mrb[0].mxu0
  %v222 = vpop.f32.mrb[0].mxu0
  %v223 = vadd.f32 0.0, %v222
  %v224 = vpop.f32.mrb[0].mxu0
  %225 = vmatprep.mubr.bf16.mxu0 0
  %226 = vmatmul.mubr.bf16.gmra.mrb[0].mxu0 %v122
  %v227 = vpop.f32.mrb[0].mxu0
  %v228 = vadd.f32 0.0, %v227
  %v229 = vpop.f32.mrb[0].mxu0
  %v230 = vpop.f32.mrb[0].mxu0
  %v231 = vadd.f32 0.0, %v230
  %v232 = vpop.f32.mrb[0].mxu0
  %233 = vmatprep.mubr.bf16.mxu0 0
  %234 = vmatmul.mubr.bf16.gmra.mrb[0].mxu0 %v123
  %v235 = vpop.f32.mrb[0].mxu0
  %v236 = vadd.f32 0.0, %v235
  %v237 = vpop.f32.mrb[0].mxu0
  %v238 = vpop.f32.mrb[0].mxu0
  %v239 = vadd.f32 0.0, %v238
  %v240 = vpop.f32.mrb[0].mxu0
  %241 = vmatprep.mubr.bf16.mxu0 0
  %242 = vmatmul.mubr.bf16.gmra.mrb[0].mxu0 %v124
  %v243 = vpop.f32.mrb[0].mxu0
  %v244 = vadd.f32 0.0, %v243
  %v245 = vpop.f32.mrb[0].mxu0
  %v246 = vpop.f32.mrb[0].mxu0
  %v247 = vadd.f32 0.0, %v246
  %v248 = vpop.f32.mrb[0].mxu0
  %249 = vmatprep.mubr.bf16.mxu0 0
  %250 = vmatmul.mubr.bf16.gmra.mrb[0].mxu0 %v125
  %v251 = vpop.f32.mrb[0].mxu0
  %v252 = vadd.f32 0.0, %v251
  %v253 = vpop.f32.mrb[0].mxu0
  %v254 = vpop.f32.mrb[0].mxu0
  %v255 = vadd.f32 0.0, %v254
  %v256 = vpop.f32.mrb[0].mxu0
  %257 = vmatprep.mubr.bf16.mxu0 0
  %258 = vmatmul.mubr.bf16.gmra.mrb[0].mxu0 %v126
  %v259 = vpop.f32.mrb[0].mxu0
  %v260 = vadd.f32 0.0, %v259
  %v261 = vpop.f32.mrb[0].mxu0
  %v262 = vpop.f32.mrb[0].mxu0
  %v263 = vadd.f32 0.0, %v262
  %v264 = vpop.f32.mrb[0].mxu0
  %265 = vmatprep.mubr.bf16.mxu0 0
  %266 = vmatmul.mubr.bf16.gmra.mrb[0].mxu0 %v127
  %v267 = vpop.f32.mrb[0].mxu0
  %v268 = vadd.f32 0.0, %v267
  %v269 = vpop.f32.mrb[0].mxu0
  %v270 = vpop.f32.mrb[0].mxu0
  %v271 = vadd.f32 0.0, %v270
  %v272 = vpop.f32.mrb[0].mxu0
  %273 = vmatprep.mubr.bf16.mxu0 0
  %274 = vmatmul.mubr.bf16.gmra.mrb[0].mxu0 %v128
  %v275 = vpop.f32.mrb[0].mxu0
  %v276 = vadd.f32 0.0, %v275
  %v277 = vpop.f32.mrb[0].mxu0
  %v278 = vpop.f32.mrb[0].mxu0
  %v279 = vadd.f32 0.0, %v278
  %v280 = vpop.f32.mrb[0].mxu0
  %281 = vdwg.mxu0
  %v282 = vadd.f32 %v41, %v220
  %v283 = vadd.f32 %v42, %v223
  %v284 = vadd.f32 %v43, %v228
  %v285 = vadd.f32 %v44, %v231
  %v286 = vadd.f32 %v45, %v236
  %v287 = vadd.f32 %v46, %v239
  %v288 = vadd.f32 %v47, %v244
  %v289 = vadd.f32 %v48, %v247
  %v290 = vadd.f32 %v49, %v252
  %v291 = vadd.f32 %v50, %v255
  %v292 = vadd.f32 %v51, %v260
  %v293 = vadd.f32 %v52, %v263
  %v294 = vadd.f32 %v53, %v268
  %v295 = vadd.f32 %v54, %v271
  %v296 = vadd.f32 %v55, %v276
  %v297 = vadd.f32 %v56, %v279
  %298 = vst [vmem:[#allocation2] sm:$0xff] %v282
  %299 = vst [vmem:[#allocation2 + $0x8] sm:$0xff] %v283
  %300 = vst [vmem:[#allocation2 + $0x10] sm:$0xff] %v284
  %301 = vst [vmem:[#allocation2 + $0x18] sm:$0xff] %v285
  %302 = vst [vmem:[#allocation2 + $0x20] sm:$0xff] %v286
  %303 = vst [vmem:[#allocation2 + $0x28] sm:$0xff] %v287
  %304 = vst [vmem:[#allocation2 + $0x30] sm:$0xff] %v288
  %305 = vst [vmem:[#allocation2 + $0x38] sm:$0xff] %v289
  %306 = vst [vmem:[#allocation2 + $0x40] sm:$0xff] %v290
  %307 = vst [vmem:[#allocation2 + $0x48] sm:$0xff] %v291
  %308 = vst [vmem:[#allocation2 + $0x50] sm:$0xff] %v292
  %309 = vst [vmem:[#allocation2 + $0x58] sm:$0xff] %v293
  %310 = vst [vmem:[#allocation2 + $0x60] sm:$0xff] %v294
  %311 = vst [vmem:[#allocation2 + $0x68] sm:$0xff] %v295
  %312 = vst [vmem:[#allocation2 + $0x70] sm:$0xff] %v296
  %313 = vst [vmem:[#allocation2 + $0x78] sm:$0xff] %v297
  // Predicated region
  $region26: #{clagnosco_autoencoder_forward.11} parent=0 // pred_check
    %p314 = pneg %p21
  $region27: #{clagnosco_autoencoder_forward.11} parent=0 // pred_check_branch
    %316 = sbr.rel (%p314) target = $region29
  $region28: #{clagnosco_autoencoder_forward.11} parent=0 // pred_region
    %v317 = vld [vmem:[#allocation2] sm:$0xff]
    %v318 = vld [vmem:[#allocation2 + $0x8] sm:$0xff]
    %v319 = vld [vmem:[#allocation2 + $0x10] sm:$0xff]
    %v320 = vld [vmem:[#allocation2 + $0x18] sm:$0xff]
    %v321 = vld [vmem:[#allocation2 + $0x20] sm:$0xff]
    %v322 = vld [vmem:[#allocation2 + $0x28] sm:$0xff]
    %v323 = vld [vmem:[#allocation2 + $0x30] sm:$0xff]
    %v324 = vld [vmem:[#allocation2 + $0x38] sm:$0xff]
    %v325 = vld [vmem:[#allocation2 + $0x40] sm:$0xff]
    %v326 = vld [vmem:[#allocation2 + $0x48] sm:$0xff]
    %v327 = vld [vmem:[#allocation2 + $0x50] sm:$0xff]
    %v328 = vld [vmem:[#allocation2 + $0x58] sm:$0xff]
    %v329 = vld [vmem:[#allocation2 + $0x60] sm:$0xff]
    %v330 = vld [vmem:[#allocation2 + $0x68] sm:$0xff]
    %v331 = vld [vmem:[#allocation2 + $0x70] sm:$0xff]
    %v332 = vld [vmem:[#allocation2 + $0x78] sm:$0xff]
    %v333 = vld [vmem:[%s2] sm:$0x1]
    %v335 = vlaneseq
    %v336 = vshrl.u32 %v335, 7
    %v337 = vsub.s32 0, %v336
    %v338 = vrot.slane %v333, %v337
    %v340 = vadd.f32 %v317, %v338
    %v341 = vadd.f32 %v318, %v338
    %v342 = vadd.f32 %v319, %v338
    %v343 = vadd.f32 %v320, %v338
    %v344 = vadd.f32 %v321, %v338
    %v345 = vadd.f32 %v322, %v338
    %v346 = vadd.f32 %v323, %v338
    %v347 = vadd.f32 %v324, %v338
    %v348 = vadd.f32 %v325, %v338
    %v349 = vadd.f32 %v326, %v338
    %v350 = vadd.f32 %v327, %v338
    %v351 = vadd.f32 %v328, %v338
    %v352 = vadd.f32 %v329, %v338
    %v353 = vadd.f32 %v330, %v338
    %v354 = vadd.f32 %v331, %v338
    %v355 = vadd.f32 %v332, %v338
    %v356 = vadd.f32 %v340, %v341
    %v357 = vadd.f32 %v356, %v342
    %v358 = vadd.f32 %v357, %v343
    %v359 = vadd.f32 %v358, %v344
    %v360 = vadd.f32 %v359, %v345
    %v361 = vadd.f32 %v360, %v346
    %v362 = vadd.f32 %v361, %v347
    %v363 = vadd.f32 %v362, %v348
    %v364 = vadd.f32 %v363, %v349
    %v365 = vadd.f32 %v364, %v350
    %v366 = vadd.f32 %v365, %v351
    %v367 = vadd.f32 %v366, %v352
    %v368 = vadd.f32 %v367, %v353
    %v369 = vadd.f32 %v368, %v354
    %v370 = vadd.f32 %v369, %v355
    %v371 = vrot.slane %v370, 4
    %v372 = vadd.f32 %v370, %v371
    %v373 = vrot.slane %v372, 2
    %v374 = vadd.f32 %v372, %v373
    %v375 = vrot.slane %v374, 1
    %v376 = vadd.f32 %v374, %v375
    %v377 = vrcp.pop 128.0
    %v378 = vmul.f32 %v376, %v377
    %v379 = vsub.f32 %v340, %v378
    %v380 = vsub.f32 %v341, %v378
    %v381 = vsub.f32 %v342, %v378
    %v382 = vsub.f32 %v343, %v378
    %v383 = vsub.f32 %v344, %v378
    %v384 = vsub.f32 %v345, %v378
    %v385 = vsub.f32 %v346, %v378
    %v386 = vsub.f32 %v347, %v378
    %v387 = vsub.f32 %v348, %v378
    %v388 = vsub.f32 %v349, %v378
    %v389 = vsub.f32 %v350, %v378
    %v390 = vsub.f32 %v351, %v378
    %v391 = vsub.f32 %v352, %v378
    %v392 = vsub.f32 %v353, %v378
    %v393 = vsub.f32 %v354, %v378
    %v394 = vsub.f32 %v355, %v378
    %v395 = vmul.f32 %v379, %v379
    %v396 = vmul.f32 %v380, %v380
    %v397 = vmul.f32 %v381, %v381
    %v398 = vmul.f32 %v382, %v382
    %v399 = vmul.f32 %v383, %v383
    %v400 = vmul.f32 %v384, %v384
    %v401 = vmul.f32 %v385, %v385
    %v402 = vmul.f32 %v386, %v386
    %v403 = vmul.f32 %v387, %v387
    %v404 = vmul.f32 %v388, %v388
    %v405 = vmul.f32 %v389, %v389
    %v406 = vmul.f32 %v390, %v390
    %v407 = vmul.f32 %v391, %v391
    %v408 = vmul.f32 %v392, %v392
    %v409 = vmul.f32 %v393, %v393
    %v410 = vmul.f32 %v394, %v394
    %v411 = vadd.f32 %v395, %v396
    %v412 = vadd.f32 %v411, %v397
    %v413 = vadd.f32 %v412, %v398
    %v414 = vadd.f32 %v413, %v399
    %v415 = vadd.f32 %v414, %v400
    %v416 = vadd.f32 %v415, %v401
    %v417 = vadd.f32 %v416, %v402
    %v418 = vadd.f32 %v417, %v403
    %v419 = vadd.f32 %v418, %v404
    %v420 = vadd.f32 %v419, %v405
    %v421 = vadd.f32 %v420, %v406
    %v422 = vadd.f32 %v421, %v407
    %v423 = vadd.f32 %v422, %v408
    %v424 = vadd.f32 %v423, %v409
    %v425 = vadd.f32 %v424, %v410
    %v426 = vrot.slane %v425, 4
    %v427 = vadd.f32 %v425, %v426
    %v428 = vrot.slane %v427, 2
    %v429 = vadd.f32 %v427, %v428
    %v430 = vrot.slane %v429, 1
    %v431 = vadd.f32 %v429, %v430
    %v432 = vmul.f32 %v431, %v377
    %v433 = vadd.f32 %v432, 1e-05
    %v434 = vrsqrt.pop %v433
    %v435 = vmul.f32 %v379, %v434
    %v436 = vmul.f32 %v380, %v434
    %v437 = vmul.f32 %v381, %v434
    %v438 = vmul.f32 %v382, %v434
    %v439 = vmul.f32 %v383, %v434
    %v440 = vmul.f32 %v384, %v434
    %v441 = vmul.f32 %v385, %v434
    %v442 = vmul.f32 %v386, %v434
    %v443 = vmul.f32 %v387, %v434
    %v444 = vmul.f32 %v388, %v434
    %v445 = vmul.f32 %v389, %v434
    %v446 = vmul.f32 %v390, %v434
    %v447 = vmul.f32 %v391, %v434
    %v448 = vmul.f32 %v392, %v434
    %v449 = vmul.f32 %v393, %v434
    %v450 = vmul.f32 %v394, %v434
    %v451 = vld [vmem:[%s3] sm:$0x1]
    %v453 = vlaneseq
    %v454 = vshrl.u32 %v453, 7
    %v455 = vsub.s32 0, %v454
    %v456 = vrot.slane %v451, %v455
    %v458 = vmul.f32 %v435, %v456
    %v459 = vmul.f32 %v436, %v456
    %v460 = vmul.f32 %v437, %v456
    %v461 = vmul.f32 %v438, %v456
    %v462 = vmul.f32 %v439, %v456
    %v463 = vmul.f32 %v440, %v456
    %v464 = vmul.f32 %v441, %v456
    %v465 = vmul.f32 %v442, %v456
    %v466 = vmul.f32 %v443, %v456
    %v467 = vmul.f32 %v444, %v456
    %v468 = vmul.f32 %v445, %v456
    %v469 = vmul.f32 %v446, %v456
    %v470 = vmul.f32 %v447, %v456
    %v471 = vmul.f32 %v448, %v456
    %v472 = vmul.f32 %v449, %v456
    %v473 = vmul.f32 %v450, %v456
    %v474 = vld [vmem:[%s4] sm:$0x1]
    %v476 = vlaneseq
    %v477 = vshrl.u32 %v476, 7
    %v478 = vsub.s32 0, %v477
    %v479 = vrot.slane %v474, %v478
    %v481 = vadd.f32 %v458, %v479
    %v482 = vadd.f32 %v459, %v479
    %v483 = vadd.f32 %v460, %v479
    %v484 = vadd.f32 %v461, %v479
    %v485 = vadd.f32 %v462, %v479
    %v486 = vadd.f32 %v463, %v479
    %v487 = vadd.f32 %v464, %v479
    %v488 = vadd.f32 %v465, %v479
    %v489 = vadd.f32 %v466, %v479
    %v490 = vadd.f32 %v467, %v479
    %v491 = vadd.f32 %v468, %v479
    %v492 = vadd.f32 %v469, %v479
    %v493 = vadd.f32 %v470, %v479
    %v494 = vadd.f32 %v471, %v479
    %v495 = vadd.f32 %v472, %v479
    %v496 = vadd.f32 %v473, %v479
    %vm497 = vcmp.ge.f32.partialorder %v481, 0.0
    %vm498 = vcmp.ge.f32.partialorder %v482, 0.0
    %vm499 = vcmp.ge.f32.partialorder %v483, 0.0
    %vm500 = vcmp.ge.f32.partialorder %v484, 0.0
    %vm501 = vcmp.ge.f32.partialorder %v485, 0.0
    %vm502 = vcmp.ge.f32.partialorder %v486, 0.0
    %vm503 = vcmp.ge.f32.partialorder %v487, 0.0
    %vm504 = vcmp.ge.f32.partialorder %v488, 0.0
    %vm505 = vcmp.ge.f32.partialorder %v489, 0.0
    %vm506 = vcmp.ge.f32.partialorder %v490, 0.0
    %vm507 = vcmp.ge.f32.partialorder %v491, 0.0
    %vm508 = vcmp.ge.f32.partialorder %v492, 0.0
    %vm509 = vcmp.ge.f32.partialorder %v493, 0.0
    %vm510 = vcmp.ge.f32.partialorder %v494, 0.0
    %vm511 = vcmp.ge.f32.partialorder %v495, 0.0
    %vm512 = vcmp.ge.f32.partialorder %v496, 0.0
    %v513 = vmul.f32 %v481, 0.01
    %v514 = vmul.f32 %v482, 0.01
    %v515 = vmul.f32 %v483, 0.01
    %v516 = vmul.f32 %v484, 0.01
    %v517 = vmul.f32 %v485, 0.01
    %v518 = vmul.f32 %v486, 0.01
    %v519 = vmul.f32 %v487, 0.01
    %v520 = vmul.f32 %v488, 0.01
    %v521 = vmul.f32 %v489, 0.01
    %v522 = vmul.f32 %v490, 0.01
    %v523 = vmul.f32 %v491, 0.01
    %v524 = vmul.f32 %v492, 0.01
    %v525 = vmul.f32 %v493, 0.01
    %v526 = vmul.f32 %v494, 0.01
    %v527 = vmul.f32 %v495, 0.01
    %v528 = vmul.f32 %v496, 0.01
    %v529 = vsel %vm497, %v481, %v513
    %v530 = vsel %vm498, %v482, %v514
    %v531 = vsel %vm499, %v483, %v515
    %v532 = vsel %vm500, %v484, %v516
    %v533 = vsel %vm501, %v485, %v517
    %v534 = vsel %vm502, %v486, %v518
    %v535 = vsel %vm503, %v487, %v519
    %v536 = vsel %vm504, %v488, %v520
    %v537 = vsel %vm505, %v489, %v521
    %v538 = vsel %vm506, %v490, %v522
    %v539 = vsel %vm507, %v491, %v523
    %v540 = vsel %vm508, %v492, %v524
    %v541 = vsel %vm509, %v493, %v525
    %v542 = vsel %vm510, %v494, %v526
    %v543 = vsel %vm511, %v495, %v527
    %v544 = vsel %vm512, %v496, %v528
    %545 = vst [vmem:[%s5] sm:$0xff] %v529
    %546 = vst [vmem:[%s5 + $0x8] sm:$0xff] %v530
    %547 = vst [vmem:[%s5 + $0x10] sm:$0xff] %v531
    %548 = vst [vmem:[%s5 + $0x18] sm:$0xff] %v532
    %549 = vst [vmem:[%s5 + $0x20] sm:$0xff] %v533
    %550 = vst [vmem:[%s5 + $0x28] sm:$0xff] %v534
    %551 = vst [vmem:[%s5 + $0x30] sm:$0xff] %v535
    %552 = vst [vmem:[%s5 + $0x38] sm:$0xff] %v536
    %553 = vst [vmem:[%s5 + $0x40] sm:$0xff] %v537
    %554 = vst [vmem:[%s5 + $0x48] sm:$0xff] %v538
    %555 = vst [vmem:[%s5 + $0x50] sm:$0xff] %v539
    %556 = vst [vmem:[%s5 + $0x58] sm:$0xff] %v540
    %557 = vst [vmem:[%s5 + $0x60] sm:$0xff] %v541
    %558 = vst [vmem:[%s5 + $0x68] sm:$0xff] %v542
    %559 = vst [vmem:[%s5 + $0x70] sm:$0xff] %v543
    %560 = vst [vmem:[%s5 + $0x78] sm:$0xff] %v544
  $region29: #{clagnosco_autoencoder_forward.11} parent=0 // pred_fallthru
    _
  // Predicated region
  $region30: #{clagnosco_autoencoder_forward.11} parent=0 // pred_check
    _
  $region31: #{clagnosco_autoencoder_forward.11} parent=0 // pred_check_branch
    %562 = sbr.rel (0) target = $region33
  $region32: #{clagnosco_autoencoder_forward.11} parent=0 // pred_region
    _
  $region33: #{clagnosco_autoencoder_forward.11} parent=0 // pred_fallthru
    _
  // Predicated region
  $region34: #{clagnosco_autoencoder_forward.11} parent=0 // pred_check
    _
  $region35: #{clagnosco_autoencoder_forward.11} parent=0 // pred_check_branch
    %564 = sbr.rel (0) target = $region37
  $region36: #{clagnosco_autoencoder_forward.11} parent=0 // pred_region
    _
  $region37: #{clagnosco_autoencoder_forward.11} parent=0 // pred_fallthru
    _

// kernel: clagnosco_autoencoder_forward.12
$region0: #{clagnosco_autoencoder_forward.12}
  #allocation0 [shape = 'u32[]', space=smem, size = 0x4, offset = 0x4, fixed_abs, tag = 'smem constant byte address 0x4 - core index']
  #allocation1 [shape = 'u32[144,128]{1,0:T(1,128)}', space=vmem, size = 0x12000, scoped, tag = 'internal scratch']
  #allocation2 [shape = 'f32[32,128]{1,0:T(8,128)}', space=vmem, size = 0x4000, scoped, tag = 'scratch operand']
  %s0 = inlined_call_operand.vmem [shape: bf16[32,1024], index: 0, kind: input, shape index: {}]
  %s1 = inlined_call_operand.vmem [shape: bf16[1024,128], index: 1, kind: input, shape index: {}]
  %s2 = inlined_call_operand.vmem [shape: f32[1,128], index: 2, kind: input, shape index: {}]
  %s3 = inlined_call_operand.vmem [shape: f32[1,128], index: 3, kind: input, shape index: {}]
  %s4 = inlined_call_operand.vmem [shape: f32[1,128], index: 4, kind: input, shape index: {}]
  %s5 = inlined_call_operand.vmem [shape: f32[32,128], index: 5, kind: output, shape index: {}]
  %s6 = sld [smem:[#allocation0]]
  $region84: #{clagnosco_autoencoder_forward.12} parent=0
    _
  %s8 = ssub.s32 1, %s6
  %s9 = scalar_select 0, %s8, %s6
  $region1: #{clagnosco_autoencoder_forward.12} parent=0
    #allocation3 [shape = 'u8[65536]{0}', space=vmem, size = 0x10000, scoped, tag = 'input window, operand 0']
    loop: start=0, step=1, limit=4
    $region2: #{clagnosco_autoencoder_forward.12} parent=1 // loop_pre_header
      _
    $region3: #{clagnosco_autoencoder_forward.12} parent=1 // loop_header
      %s11 = sphi 0, %s15
      %p12 = scmp.ge.s32.totalorder %s11, 4
      %s18 = sphi 0, %s30
      %s19 = sphi 0, %s26
      %s20 = sphi 0, %s18
      %s21 = sphi 0, %s19
      %s22 = sphi 0, %s20
      %s23 = sphi 0, %s21
      %s33 = sphi 0, %s35
      %s36 = sphi 0, %s33
      %s37 = sphi 0, %s36
      %s53 = sphi 0, %s37
      %s61 = sphi 0, %s63
      %s64 = sphi 0, %s61
      %s65 = sphi 0, %s64
      %s81 = sphi 0, %s65
      %s87 = sphi 0, %s89
      %s90 = sphi 0, %s87
      %s91 = sphi 0, %s90
      %s107 = sphi 0, %s91
      %s113 = sphi 0, %s115
      %s116 = sphi 0, %s113
      %s117 = sphi 0, %s116
      %s133 = sphi 0, %s117
      %s139 = sphi 0, %s141
      %s142 = sphi 0, %s139
      %s143 = sphi 0, %s142
      %s159 = sphi 0, %s143
      %s165 = sphi 0, %s167
      %s168 = sphi 0, %s165
      %s169 = sphi 0, %s168
      %s185 = sphi 0, %s169
    $region4: #{clagnosco_autoencoder_forward.12} parent=1 // loop_header_branch
      %14 = sbr.rel (%p12) target = $region8
    $region5: #{clagnosco_autoencoder_forward.12} parent=1 // loop_body
      %s16 = ssub.s32 %s11, 1
      %s17 = ssub.s32 %s11, 2
      %s24 = sadd.s32 1, %s19
      %p25 = scmp.ge.s32.totalorder %s24, 2
      %s26 = scalar_select %p25, 0, %s24
      %s27 = sadd.s32 1, %s18
      %s28 = scalar_select %p25, %s27, %s18
      %p29 = scmp.ge.s32.totalorder %s28, 1
      %s30 = scalar_select %p29, 0, %s28
      %s31 = ssub.s32 %s19, %s26
      %p32 = scmp.eq.s32.totalorder %s31, 0
      %s34 = sadd.s32 %s33, 1
      %s35 = scalar_select %p32, %s33, %s34
      %p38 = pneg %p32
      %p39 = scmp.eq.s32.totalorder %s11, 1
      %p40 = por %p38, %p39
      %p41 = scmp.ne.s32.totalorder %s33, %s36
      %p42 = scmp.eq.s32.totalorder %s11, 0
      %p43 = por %p41, %p42
      %p44 = scmp.ne.s32.totalorder %s33, %s36
      %p45 = scmp.eq.s32.totalorder %s16, 1
      %p46 = por %p44, %p45
      %p47 = scmp.ne.s32.totalorder %s36, %s37
      %p48 = scmp.eq.s32.totalorder %s16, 0
      %p49 = por %p47, %p48
      %p50 = scmp.ne.s32.totalorder %s36, %s37
      %p51 = scmp.eq.s32.totalorder %s17, 1
      %p52 = por %p50, %p51
      %p54 = scmp.ne.s32.totalorder %s37, %s53
      %p55 = scmp.eq.s32.totalorder %s17, 0
      %p56 = por %p54, %p55
      %s57 = ssub.s32 %s19, %s26
      %s58 = ssub.s32 %s18, %s30
      %s59 = sor.u32 %s57, %s58
      %p60 = scmp.eq.s32.totalorder %s59, 0
      %s62 = sadd.s32 %s61, 1
      %s63 = scalar_select %p60, %s61, %s62
      %p66 = pneg %p60
      %p67 = scmp.eq.s32.totalorder %s11, 1
      %p68 = por %p66, %p67
      %p69 = scmp.ne.s32.totalorder %s61, %s64
      %p70 = scmp.eq.s32.totalorder %s11, 0
      %p71 = por %p69, %p70
      %p72 = scmp.ne.s32.totalorder %s61, %s64
      %p73 = scmp.eq.s32.totalorder %s16, 1
      %p74 = por %p72, %p73
      %p75 = scmp.ne.s32.totalorder %s64, %s65
      %p76 = scmp.eq.s32.totalorder %s16, 0
      %p77 = por %p75, %p76
      %p78 = scmp.ne.s32.totalorder %s64, %s65
      %p79 = scmp.eq.s32.totalorder %s17, 1
      %p80 = por %p78, %p79
      %p82 = scmp.ne.s32.totalorder %s65, %s81
      %p83 = scmp.eq.s32.totalorder %s17, 0
      %p84 = por %p82, %p83
      %s85 = ssub.s32 %s18, %s30
      %p86 = scmp.eq.s32.totalorder %s85, 0
      %s88 = sadd.s32 %s87, 1
      %s89 = scalar_select %p86, %s87, %s88
      %p92 = pneg %p86
      %p93 = scmp.eq.s32.totalorder %s11, 1
      %p94 = por %p92, %p93
      %p95 = scmp.ne.s32.totalorder %s87, %s90
      %p96 = scmp.eq.s32.totalorder %s11, 0
      %p97 = por %p95, %p96
      %p98 = scmp.ne.s32.totalorder %s87, %s90
      %p99 = scmp.eq.s32.totalorder %s16, 1
      %p100 = por %p98, %p99
      %p101 = scmp.ne.s32.totalorder %s90, %s91
      %p102 = scmp.eq.s32.totalorder %s16, 0
      %p103 = por %p101, %p102
      %p104 = scmp.ne.s32.totalorder %s90, %s91
      %p105 = scmp.eq.s32.totalorder %s17, 1
      %p106 = por %p104, %p105
      %p108 = scmp.ne.s32.totalorder %s91, %s107
      %p109 = scmp.eq.s32.totalorder %s17, 0
      %p110 = por %p108, %p109
      %s111 = ssub.s32 %s18, %s30
      %p112 = scmp.eq.s32.totalorder %s111, 0
      %s114 = sadd.s32 %s113, 1
      %s115 = scalar_select %p112, %s113, %s114
      %p118 = pneg %p112
      %p119 = scmp.eq.s32.totalorder %s11, 1
      %p120 = por %p118, %p119
      %p121 = scmp.ne.s32.totalorder %s113, %s116
      %p122 = scmp.eq.s32.totalorder %s11, 0
      %p123 = por %p121, %p122
      %p124 = scmp.ne.s32.totalorder %s113, %s116
      %p125 = scmp.eq.s32.totalorder %s16, 1
      %p126 = por %p124, %p125
      %p127 = scmp.ne.s32.totalorder %s116, %s117
      %p128 = scmp.eq.s32.totalorder %s16, 0
      %p129 = por %p127, %p128
      %p130 = scmp.ne.s32.totalorder %s116, %s117
      %p131 = scmp.eq.s32.totalorder %s17, 1
      %p132 = por %p130, %p131
      %p134 = scmp.ne.s32.totalorder %s117, %s133
      %p135 = scmp.eq.s32.totalorder %s17, 0
      %p136 = por %p134, %p135
      %s137 = ssub.s32 %s18, %s30
      %p138 = scmp.eq.s32.totalorder %s137, 0
      %s140 = sadd.s32 %s139, 1
      %s141 = scalar_select %p138, %s139, %s140
      %p144 = pneg %p138
      %p145 = scmp.eq.s32.totalorder %s11, 1
      %p146 = por %p144, %p145
      %p147 = scmp.ne.s32.totalorder %s139, %s142
      %p148 = scmp.eq.s32.totalorder %s11, 0
      %p149 = por %p147, %p148
      %p150 = scmp.ne.s32.totalorder %s139, %s142
      %p151 = scmp.eq.s32.totalorder %s16, 1
      %p152 = por %p150, %p151
      %p153 = scmp.ne.s32.totalorder %s142, %s143
      %p154 = scmp.eq.s32.totalorder %s16, 0
      %p155 = por %p153, %p154
      %p156 = scmp.ne.s32.totalorder %s142, %s143
      %p157 = scmp.eq.s32.totalorder %s17, 1
      %p158 = por %p156, %p157
      %p160 = scmp.ne.s32.totalorder %s143, %s159
      %p161 = scmp.eq.s32.totalorder %s17, 0
      %p162 = por %p160, %p161
      %s163 = ssub.s32 %s18, %s30
      %p164 = scmp.eq.s32.totalorder %s163, 0
      %s166 = sadd.s32 %s165, 1
      %s167 = scalar_select %p164, %s165, %s166
      %p170 = pneg %p164
      %p171 = scmp.eq.s32.totalorder %s11, 1
      %p172 = por %p170, %p171
      %p173 = scmp.ne.s32.totalorder %s165, %s168
      %p174 = scmp.eq.s32.totalorder %s11, 0
      %p175 = por %p173, %p174
      %p176 = scmp.ne.s32.totalorder %s165, %s168
      %p177 = scmp.eq.s32.totalorder %s16, 1
      %p178 = por %p176, %p177
      %p179 = scmp.ne.s32.totalorder %s168, %s169
      %p180 = scmp.eq.s32.totalorder %s16, 0
      %p181 = por %p179, %p180
      %p182 = scmp.ne.s32.totalorder %s168, %s169
      %p183 = scmp.eq.s32.totalorder %s17, 1
      %p184 = por %p182, %p183
      %p186 = scmp.ne.s32.totalorder %s169, %s185
      %p187 = scmp.eq.s32.totalorder %s17, 0
      %p188 = por %p186, %p187
      %p189 = scmp.le.s32.totalorder 1, %s11
      %p190 = scmp.lt.s32.totalorder %s11, 3
      %p191 = pnand %p189, %p190
      %p192 = pneg %p191
      // Predicated region
      $region9: #{clagnosco_autoencoder_forward.12} parent=5 // pred_check
        _
      $region10: #{clagnosco_autoencoder_forward.12} parent=5 // pred_check_branch
        %194 = sbr.rel (%p191) target = $region12
      $region11: #{clagnosco_autoencoder_forward.12} parent=5 // pred_region
        %s195 = ssub.s32 %s11, 1
        // Predicated region
        $region13: #{clagnosco_autoencoder_forward.12} parent=11 // pred_check
          %p196 = pneg %p103
        $region14: #{clagnosco_autoencoder_forward.12} parent=11 // pred_check_branch
          %198 = sbr.rel (%p196) target = $region16
        $region15: #{clagnosco_autoencoder_forward.12} parent=11 // pred_region
          %p199 = scmp.lt.s32.totalorder %s20, 0
          %s200 = scalar_select %p199, %s20, 0
          %s201 = scalar_lea.vmem %s2, %s200
        $region16: #{clagnosco_autoencoder_forward.12} parent=11 // pred_fallthru
          _
        // Predicated region
        $region17: #{clagnosco_autoencoder_forward.12} parent=11 // pred_check
          %p202 = pneg %p129
        $region18: #{clagnosco_autoencoder_forward.12} parent=11 // pred_check_branch
          %204 = sbr.rel (%p202) target = $region20
        $region19: #{clagnosco_autoencoder_forward.12} parent=11 // pred_region
          %p205 = scmp.lt.s32.totalorder %s20, 0
          %s206 = scalar_select %p205, %s20, 0
          %s207 = scalar_lea.vmem %s3, %s206
        $region20: #{clagnosco_autoencoder_forward.12} parent=11 // pred_fallthru
          _
        // Predicated region
        $region21: #{clagnosco_autoencoder_forward.12} parent=11 // pred_check
          %p208 = pneg %p155
        $region22: #{clagnosco_autoencoder_forward.12} parent=11 // pred_check_branch
          %210 = sbr.rel (%p208) target = $region24
        $region23: #{clagnosco_autoencoder_forward.12} parent=11 // pred_region
          %p211 = scmp.lt.s32.totalorder %s20, 0
          %s212 = scalar_select %p211, %s20, 0
          %s213 = scalar_lea.vmem %s4, %s212
        $region24: #{clagnosco_autoencoder_forward.12} parent=11 // pred_fallthru
          _
      $region12: #{clagnosco_autoencoder_forward.12} parent=5 // pred_fallthru
        _
      %p214 = scmp.lt.s32.totalorder %s11, 2
      // Predicated region
      $region25: #{clagnosco_autoencoder_forward.12} parent=5 // pred_check
        %p215 = pneg %p214
      $region26: #{clagnosco_autoencoder_forward.12} parent=5 // pred_check_branch
        %217 = sbr.rel (%p215) target = $region28
      $region27: #{clagnosco_autoencoder_forward.12} parent=5 // pred_region
        // Predicated region
        $region29: #{clagnosco_autoencoder_forward.12} parent=27 // pred_check
          %p218 = pneg %p43
        $region30: #{clagnosco_autoencoder_forward.12} parent=27 // pred_check_branch
          %220 = sbr.rel (%p218) target = $region32
        $region31: #{clagnosco_autoencoder_forward.12} parent=27 // pred_region
          %s221 = sand.u32 %s33, 1
          %s222 = sand.u32 %s33, 1
          %s223 = smul.addr %s222, 64
          %s224 = scalar_lea.vmem [#allocation3], %s223
          %s225 = smul.u32 4, %s19
          %s226 = smul.addr %s225, 4
          %s227 = scalar_lea.vmem %s0, %s226
          // Predicated region
          $region33: #{clagnosco_autoencoder_forward.12} parent=31 // pred_check
            _
          $region34: #{clagnosco_autoencoder_forward.12} parent=31 // pred_check_branch
            %229 = sbr.rel (0) target = $region36
          $region35: #{clagnosco_autoencoder_forward.12} parent=31 // pred_region
            // Predicated region
            $region37: #{clagnosco_autoencoder_forward.12} parent=35 // pred_check
              _
            $region38: #{clagnosco_autoencoder_forward.12} parent=35 // pred_check_branch
              %231 = sbr.rel (0) target = $region40
            $region39: #{clagnosco_autoencoder_forward.12} parent=35 // pred_region
              loop: start=0, step=1, limit=1
              $region41: #{clagnosco_autoencoder_forward.12} parent=39 // loop_pre_header
                _
              $region42: #{clagnosco_autoencoder_forward.12} parent=39 // loop_header
                %s233 = sphi 0, %s237
                %p234 = scmp.ge.s32.totalorder %s233, 1
                %s238 = sphi %s227, %s227
                %s239 = sphi %s224, %s224
              $region43: #{clagnosco_autoencoder_forward.12} parent=39 // loop_header_branch
                %236 = sbr.rel (%p234) target = $region47
              $region44: #{clagnosco_autoencoder_forward.12} parent=39 // loop_body
                %v240 = vld [vmem:[%s238] sm:$0xff]
                %241 = vst [vmem:[%s239] sm:$0xff] %v240
                %v242 = vld [vmem:[%s238 + $0x8] sm:$0xff]
                %243 = vst [vmem:[%s239 + $0x8] sm:$0xff] %v242
                %v244 = vld [vmem:[%s238 + $0x20] sm:$0xff]
                %245 = vst [vmem:[%s239 + $0x10] sm:$0xff] %v244
                %v246 = vld [vmem:[%s238 + $0x28] sm:$0xff]
                %247 = vst [vmem:[%s239 + $0x18] sm:$0xff] %v246
                %v248 = vld [vmem:[%s238 + $0x40] sm:$0xff]
                %249 = vst [vmem:[%s239 + $0x20] sm:$0xff] %v248
                %v250 = vld [vmem:[%s238 + $0x48] sm:$0xff]
                %251 = vst [vmem:[%s239 + $0x28] sm:$0xff] %v250
                %v252 = vld [vmem:[%s238 + $0x60] sm:$0xff]
                %253 = vst [vmem:[%s239 + $0x30] sm:$0xff] %v252
                %v254 = vld [vmem:[%s238 + $0x68] sm:$0xff]
                %255 = vst [vmem:[%s239 + $0x38] sm:$0xff] %v254
              $region45: #{clagnosco_autoencoder_forward.12} parent=39 // loop_footer
                %s237 = sadd.s32 1, %s233
              $region46: #{clagnosco_autoencoder_forward.12} parent=39 // loop_footer_branch
                %232 = sbr.rel target = $region42
              $region47: #{clagnosco_autoencoder_forward.12} parent=39 // loop_exit
                _
            $region40: #{clagnosco_autoencoder_forward.12} parent=35 // pred_fallthru
              _
            // Predicated region
            $region48: #{clagnosco_autoencoder_forward.12} parent=35 // pred_check
              _
            $region49: #{clagnosco_autoencoder_forward.12} parent=35 // pred_check_branch
              %257 = sbr.rel target = $region51
            $region50: #{clagnosco_autoencoder_forward.12} parent=35 // pred_region
              _
            $region51: #{clagnosco_autoencoder_forward.12} parent=35 // pred_fallthru
              _
          $region36: #{clagnosco_autoencoder_forward.12} parent=31 // pred_fallthru
            _
          %258 = vnop
        $region32: #{clagnosco_autoencoder_forward.12} parent=27 // pred_fallthru
          _
        // Predicated region
        $region52: #{clagnosco_autoencoder_forward.12} parent=27 // pred_check
          %p259 = pneg %p71
        $region53: #{clagnosco_autoencoder_forward.12} parent=27 // pred_check_branch
          %261 = sbr.rel (%p259) target = $region55
        $region54: #{clagnosco_autoencoder_forward.12} parent=27 // pred_region
          %s262 = smul.u32 64, %s19
          %p263 = scmp.lt.s32.totalorder %s262, 127
          %s264 = scalar_select %p263, %s262, 127
          %p265 = scmp.lt.s32.totalorder %s18, 0
          %s266 = scalar_select %p265, %s18, 0
          %s267 = sadd.s32 %s266, %s264
          %s268 = smul.addr %s267, 4
          %s269 = scalar_lea.vmem %s1, %s268
          %s270 = smul.u32 64, %s19
        $region55: #{clagnosco_autoencoder_forward.12} parent=27 // pred_fallthru
          _
      $region28: #{clagnosco_autoencoder_forward.12} parent=5 // pred_fallthru
        _
      %p271 = scmp.le.s32.totalorder 1, %s11
      %p272 = scmp.lt.s32.totalorder %s11, 3
      %p273 = pnand %p271, %p272
      %p274 = pneg %p273
      // Predicated region
      $region56: #{clagnosco_autoencoder_forward.12} parent=5 // pred_check
        _
      $region57: #{clagnosco_autoencoder_forward.12} parent=5 // pred_check_branch
        %276 = sbr.rel (%p273) target = $region59
      $region58: #{clagnosco_autoencoder_forward.12} parent=5 // pred_region
        %s277 = ssub.s32 %s11, 1
        %s278 = sand.u32 %s36, 1
        %s279 = sand.u32 %s36, 1
        %s280 = smul.addr %s279, 64
        %s281 = scalar_lea.vmem [#allocation3], %s280
        // Predicated region
        $region60: #{clagnosco_autoencoder_forward.12} parent=58 // pred_check
          %p282 = pneg %p49
        $region61: #{clagnosco_autoencoder_forward.12} parent=58 // pred_check_branch
          %284 = sbr.rel (%p282) target = $region63
        $region62: #{clagnosco_autoencoder_forward.12} parent=58 // pred_region
          _
        $region63: #{clagnosco_autoencoder_forward.12} parent=58 // pred_fallthru
          _
        %s285 = sand.u32 %s36, 1
        %s286 = sand.u32 %s36, 1
        %s287 = smul.addr %s286, 64
        %s288 = scalar_lea.vmem [#allocation3], %s287
        %p289 = pneg %p49
        %p290 = pneg %p46
        %s291 = smul.u32 64, %s21
        %p292 = scmp.lt.s32.totalorder %s291, 127
        %s293 = scalar_select %p292, %s291, 127
        %p294 = scmp.lt.s32.totalorder %s20, 0
        %s295 = scalar_select %p294, %s20, 0
        %s296 = sadd.s32 %s295, %s293
        %s297 = smul.addr %s296, 4
        %s298 = scalar_lea.vmem %s1, %s297
        %p299 = pneg %p77
        %p300 = pneg %p74
        %p301 = scmp.lt.s32.totalorder %s20, 0
        %s302 = scalar_select %p301, %s20, 0
        %s303 = scalar_lea.vmem %s2, %s302
        %p304 = pneg %p103
        %p305 = pneg %p100
        %p306 = scmp.lt.s32.totalorder %s20, 0
        %s307 = scalar_select %p306, %s20, 0
        %s308 = scalar_lea.vmem %s3, %s307
        %p309 = pneg %p129
        %p310 = pneg %p126
        %p311 = scmp.lt.s32.totalorder %s20, 0
        %s312 = scalar_select %p311, %s20, 0
        %s313 = scalar_lea.vmem %s4, %s312
        %p314 = pneg %p155
        %p315 = pneg %p152
        %p316 = pneg %p181
        %p317 = pneg %p178
        %p318 = scmp.lt.s32.totalorder %s20, 0
        %s319 = scalar_select %p318, %s20, 0
        %s320 = smul.addr %s319, 8
        %s321 = scalar_lea.vmem %s5, %s320
        %s322 = smul.u32 4, %s21
        %s323 = smul.u32 64, %s21
        %p324 = scmp.lt.s32.totalorder %s323, 127
        %s325 = scalar_select %p324, %s323, 127
        %p326 = scmp.lt.s32.totalorder %s20, 0
        %s327 = scalar_select %p326, %s20, 0
        %s328 = sadd.s32 %s327, %s325
        %s329 = smul.addr %s328, 4
        %s330 = scalar_lea.vmem %s1, %s329
        %s331 = smul.u32 64, %s21
        %p332 = scmp.lt.s32.totalorder %s20, 0
        %s333 = scalar_select %p332, %s20, 0
        %s334 = scalar_lea.vmem %s2, %s333
        %p335 = scmp.lt.s32.totalorder %s20, 0
        %s336 = scalar_select %p335, %s20, 0
        %s337 = scalar_lea.vmem %s3, %s336
        %p338 = scmp.lt.s32.totalorder %s20, 0
        %s339 = scalar_select %p338, %s20, 0
        %s340 = scalar_lea.vmem %s4, %s339
        %p341 = scmp.lt.s32.totalorder %s20, 0
        %s342 = scalar_select %p341, %s20, 0
        %s343 = smul.addr %s342, 8
        %s344 = scalar_lea.vmem %s5, %s343
        %p346 = scmp.eq.s32.totalorder %s21, 0
        // Predicated region
        $region64: #{clagnosco_autoencoder_forward.12} parent=58 // pred_check
          %p347 = pneg %p346
        $region65: #{clagnosco_autoencoder_forward.12} parent=58 // pred_check_branch
          %349 = sbr.rel (%p347) target = $region67
        $region66: #{clagnosco_autoencoder_forward.12} parent=58 // pred_region
          %350 = vst [vmem:[#allocation2] sm:$0xff] 0.0
          %351 = vst [vmem:[#allocation2 + $0x8] sm:$0xff] 0.0
          %352 = vst [vmem:[#allocation2 + $0x10] sm:$0xff] 0.0
          %353 = vst [vmem:[#allocation2 + $0x18] sm:$0xff] 0.0
        $region67: #{clagnosco_autoencoder_forward.12} parent=58 // pred_fallthru
          _
        %v354 = vld [vmem:[#allocation2] sm:$0xff]
        %v355 = vld [vmem:[#allocation2 + $0x8] sm:$0xff]
        %v356 = vld [vmem:[#allocation2 + $0x10] sm:$0xff]
        %v357 = vld [vmem:[#allocation2 + $0x18] sm:$0xff]
        %v358 = vld [vmem:[%s281] sm:$0xff]
        %v359 = vld [vmem:[%s281 + $0x8] sm:$0xff]
        %v360 = vld [vmem:[%s281 + $0x10] sm:$0xff]
        %v361 = vld [vmem:[%s281 + $0x18] sm:$0xff]
        %v362 = vld [vmem:[%s281 + $0x20] sm:$0xff]
        %v363 = vld [vmem:[%s281 + $0x28] sm:$0xff]
        %v364 = vld [vmem:[%s281 + $0x30] sm:$0xff]
        %v365 = vld [vmem:[%s281 + $0x38] sm:$0xff]
        %v366 = vld [vmem:[%s330] sm:$0xf]
        %v367 = vld [vmem:[%s330 + $0x4] sm:$0xf]
        %v368 = vld [vmem:[%s330 + $0x8] sm:$0xf]
        %v369 = vld [vmem:[%s330 + $0xc] sm:$0xf]
        %v370 = vld [vmem:[%s330 + $0x10] sm:$0xf]
        %v371 = vld [vmem:[%s330 + $0x14] sm:$0xf]
        %v372 = vld [vmem:[%s330 + $0x18] sm:$0xf]
        %v373 = vld [vmem:[%s330 + $0x1c] sm:$0xf]
        %v374 = vld [vmem:[%s330 + $0x20] sm:$0xf]
        %v375 = vld [vmem:[%s330 + $0x24] sm:$0xf]
        %v376 = vld [vmem:[%s330 + $0x28] sm:$0xf]
        %v377 = vld [vmem:[%s330 + $0x2c] sm:$0xf]
        %v378 = vld [vmem:[%s330 + $0x30] sm:$0xf]
        %v379 = vld [vmem:[%s330 + $0x34] sm:$0xf]
        %v380 = vld [vmem:[%s330 + $0x38] sm:$0xf]
        %v381 = vld [vmem:[%s330 + $0x3c] sm:$0xf]
        %v382 = vld [vmem:[%s330 + $0x40] sm:$0xf]
        %v383 = vld [vmem:[%s330 + $0x44] sm:$0xf]
        %v384 = vld [vmem:[%s330 + $0x48] sm:$0xf]
        %v385 = vld [vmem:[%s330 + $0x4c] sm:$0xf]
        %v386 = vld [vmem:[%s330 + $0x50] sm:$0xf]
        %v387 = vld [vmem:[%s330 + $0x54] sm:$0xf]
        %v388 = vld [vmem:[%s330 + $0x58] sm:$0xf]
        %v389 = vld [vmem:[%s330 + $0x5c] sm:$0xf]
        %v390 = vld [vmem:[%s330 + $0x60] sm:$0xf]
        %v391 = vld [vmem:[%s330 + $0x64] sm:$0xf]
        %v392 = vld [vmem:[%s330 + $0x68] sm:$0xf]
        %v393 = vld [vmem:[%s330 + $0x6c] sm:$0xf]
        %v394 = vld [vmem:[%s330 + $0x70] sm:$0xf]
        %v395 = vld [vmem:[%s330 + $0x74] sm:$0xf]
        %v396 = vld [vmem:[%s330 + $0x78] sm:$0xf]
        %v397 = vld [vmem:[%s330 + $0x7c] sm:$0xf]
        %v398 = vld [vmem:[%s330 + $0x80] sm:$0xf]
        %v399 = vld [vmem:[%s330 + $0x84] sm:$0xf]
        %v400 = vld [vmem:[%s330 + $0x88] sm:$0xf]
        %v401 = vld [vmem:[%s330 + $0x8c] sm:$0xf]
        %v402 = vld [vmem:[%s330 + $0x90] sm:$0xf]
        %v403 = vld [vmem:[%s330 + $0x94] sm:$0xf]
        %v404 = vld [vmem:[%s330 + $0x98] sm:$0xf]
        %v405 = vld [vmem:[%s330 + $0x9c] sm:$0xf]
        %v406 = vld [vmem:[%s330 + $0xa0] sm:$0xf]
        %v407 = vld [vmem:[%s330 + $0xa4] sm:$0xf]
        %v408 = vld [vmem:[%s330 + $0xa8] sm:$0xf]
        %v409 = vld [vmem:[%s330 + $0xac] sm:$0xf]
        %v410 = vld [vmem:[%s330 + $0xb0] sm:$0xf]
        %v411 = vld [vmem:[%s330 + $0xb4] sm:$0xf]
        %v412 = vld [vmem:[%s330 + $0xb8] sm:$0xf]
        %v413 = vld [vmem:[%s330 + $0xbc] sm:$0xf]
        %v414 = vld [vmem:[%s330 + $0xc0] sm:$0xf]
        %v415 = vld [vmem:[%s330 + $0xc4] sm:$0xf]
        %v416 = vld [vmem:[%s330 + $0xc8] sm:$0xf]
        %v417 = vld [vmem:[%s330 + $0xcc] sm:$0xf]
        %v418 = vld [vmem:[%s330 + $0xd0] sm:$0xf]
        %v419 = vld [vmem:[%s330 + $0xd4] sm:$0xf]
        %v420 = vld [vmem:[%s330 + $0xd8] sm:$0xf]
        %v421 = vld [vmem:[%s330 + $0xdc] sm:$0xf]
        %v422 = vld [vmem:[%s330 + $0xe0] sm:$0xf]
        %v423 = vld [vmem:[%s330 + $0xe4] sm:$0xf]
        %v424 = vld [vmem:[%s330 + $0xe8] sm:$0xf]
        %v425 = vld [vmem:[%s330 + $0xec] sm:$0xf]
        %v426 = vld [vmem:[%s330 + $0xf0] sm:$0xf]
        %v427 = vld [vmem:[%s330 + $0xf4] sm:$0xf]
        %v428 = vld [vmem:[%s330 + $0xf8] sm:$0xf]
        %v429 = vld [vmem:[%s330 + $0xfc] sm:$0xf]
        %v438 = vunpack.c.l.b16 %v358
        %v439 = vunpack.c.h.b16 %v358
        %v440 = vunpack.c.l.b16 %v359
        %v441 = vunpack.c.h.b16 %v359
        %v442 = vunpack.c.l.b16 %v360
        %v443 = vunpack.c.h.b16 %v360
        %v444 = vunpack.c.l.b16 %v361
        %v445 = vunpack.c.h.b16 %v361
        %v446 = vunpack.c.l.b16 %v362
        %v447 = vunpack.c.h.b16 %v362
        %v448 = vunpack.c.l.b16 %v363
        %v449 = vunpack.c.h.b16 %v363
        %v450 = vunpack.c.l.b16 %v364
        %v451 = vunpack.c.h.b16 %v364
        %v452 = vunpack.c.l.b16 %v365
        %v453 = vunpack.c.h.b16 %v365
        %v454 = vpack.c.b16 %v442, %v438
        %v455 = vpack.c.b16 %v443, %v439
        %v456 = vpack.c.b16 %v444, %v440
        %v457 = vpack.c.b16 %v445, %v441
        %v458 = vpack.c.b16 %v450, %v446
        %v459 = vpack.c.b16 %v451, %v447
        %v460 = vpack.c.b16 %v452, %v448
        %v461 = vpack.c.b16 %v453, %v449
        %v534 = vunpack.c.l.b16 %v366
        %v535 = vunpack.c.l.b16 %v367
        %v536 = vunpack.c.l.b16 %v368
        %v537 = vunpack.c.l.b16 %v369
        %v538 = vunpack.c.l.b16 %v370
        %v539 = vunpack.c.l.b16 %v371
        %v540 = vunpack.c.l.b16 %v372
        %v541 = vunpack.c.l.b16 %v373
        %v542 = vunpack.c.l.b16 %v374
        %v543 = vunpack.c.l.b16 %v375
        %v544 = vunpack.c.l.b16 %v376
        %v545 = vunpack.c.l.b16 %v377
        %v546 = vunpack.c.l.b16 %v378
        %v547 = vunpack.c.l.b16 %v379
        %v548 = vunpack.c.l.b16 %v380
        %v549 = vunpack.c.l.b16 %v381
        %v550 = vunpack.c.l.b16 %v382
        %v551 = vunpack.c.l.b16 %v383
        %v552 = vunpack.c.l.b16 %v384
        %v553 = vunpack.c.l.b16 %v385
        %v554 = vunpack.c.l.b16 %v386
        %v555 = vunpack.c.l.b16 %v387
        %v556 = vunpack.c.l.b16 %v388
        %v557 = vunpack.c.l.b16 %v389
        %v558 = vunpack.c.l.b16 %v390
        %v559 = vunpack.c.l.b16 %v391
        %v560 = vunpack.c.l.b16 %v392
        %v561 = vunpack.c.l.b16 %v393
        %v562 = vunpack.c.l.b16 %v394
        %v563 = vunpack.c.l.b16 %v395
        %v564 = vunpack.c.l.b16 %v396
        %v565 = vunpack.c.l.b16 %v397
        %v566 = vunpack.c.l.b16 %v398
        %v567 = vunpack.c.l.b16 %v399
        %v568 = vunpack.c.l.b16 %v400
        %v569 = vunpack.c.l.b16 %v401
        %v570 = vunpack.c.l.b16 %v402
        %v571 = vunpack.c.l.b16 %v403
        %v572 = vunpack.c.l.b16 %v404
        %v573 = vunpack.c.l.b16 %v405
        %v574 = vunpack.c.l.b16 %v406
        %v575 = vunpack.c.l.b16 %v407
        %v576 = vunpack.c.l.b16 %v408
        %v577 = vunpack.c.l.b16 %v409
        %v578 = vunpack.c.l.b16 %v410
        %v579 = vunpack.c.l.b16 %v411
        %v580 = vunpack.c.l.b16 %v412
        %v581 = vunpack.c.l.b16 %v413
        %v582 = vunpack.c.l.b16 %v414
        %v583 = vunpack.c.l.b16 %v415
        %v584 = vunpack.c.l.b16 %v416
        %v585 = vunpack.c.l.b16 %v417
        %v586 = vunpack.c.l.b16 %v418
        %v587 = vunpack.c.l.b16 %v419
        %v588 = vunpack.c.l.b16 %v420
        %v589 = vunpack.c.l.b16 %v421
        %v590 = vunpack.c.l.b16 %v422
        %v591 = vunpack.c.l.b16 %v423
        %v592 = vunpack.c.l.b16 %v424
        %v593 = vunpack.c.l.b16 %v425
        %v594 = vunpack.c.l.b16 %v426
        %v595 = vunpack.c.l.b16 %v427
        %v596 = vunpack.c.l.b16 %v428
        %v597 = vunpack.c.l.b16 %v429
        %v598 = vpack.c.b16 %v535, %v534
        %v599 = vpack.c.b16 %v537, %v536
        %v600 = vpack.c.b16 %v539, %v538
        %v601 = vpack.c.b16 %v541, %v540
        %v602 = vpack.c.b16 %v543, %v542
        %v603 = vpack.c.b16 %v545, %v544
        %v604 = vpack.c.b16 %v547, %v546
        %v605 = vpack.c.b16 %v549, %v548
        %v606 = vpack.c.b16 %v551, %v550
        %v607 = vpack.c.b16 %v553, %v552
        %v608 = vpack.c.b16 %v555, %v554
        %v609 = vpack.c.b16 %v557, %v556
        %v610 = vpack.c.b16 %v559, %v558
        %v611 = vpack.c.b16 %v561, %v560
        %v612 = vpack.c.b16 %v563, %v562
        %v613 = vpack.c.b16 %v565, %v564
        %v614 = vpack.c.b16 %v567, %v566
        %v615 = vpack.c.b16 %v569, %v568
        %v616 = vpack.c.b16 %v571, %v570
        %v617 = vpack.c.b16 %v573, %v572
        %v618 = vpack.c.b16 %v575, %v574
        %v619 = vpack.c.b16 %v577, %v576
        %v620 = vpack.c.b16 %v579, %v578
        %v621 = vpack.c.b16 %v581, %v580
        %v622 = vpack.c.b16 %v583, %v582
        %v623 = vpack.c.b16 %v585, %v584
        %v624 = vpack.c.b16 %v587, %v586
        %v625 = vpack.c.b16 %v589, %v588
        %v626 = vpack.c.b16 %v591, %v590
        %v627 = vpack.c.b16 %v593, %v592
        %v628 = vpack.c.b16 %v595, %v594
        %v629 = vpack.c.b16 %v597, %v596
        %662 = vmatprep.subr.bf16.mxu0 0
        %663 = vmatpush1.bf16.msra.mxu0 %v598
        %664 = vmatprep.subr.bf16.mxu0 0
        %665 = vmatpush1.bf16.msra.mxu0 %v599
        %666 = vmatprep.subr.bf16.mxu0 0
        %667 = vmatpush1.bf16.msra.mxu0 %v600
        %668 = vmatprep.subr.bf16.mxu0 0
        %669 = vmatpush1.bf16.msra.mxu0 %v601
        %670 = vmatprep.subr.bf16.mxu0 0
        %671 = vmatpush1.bf16.msra.mxu0 %v602
        %672 = vmatprep.subr.bf16.mxu0 0
        %673 = vmatpush1.bf16.msra.mxu0 %v603
        %674 = vmatprep.subr.bf16.mxu0 0
        %675 = vmatpush1.bf16.msra.mxu0 %v604
        %676 = vmatprep.subr.bf16.mxu0 0
        %677 = vmatpush1.bf16.msra.mxu0 %v605
        %678 = vmatprep.subr.bf16.mxu0 0
        %679 = vmatpush1.bf16.msra.mxu0 %v606
        %680 = vmatprep.subr.bf16.mxu0 0
        %681 = vmatpush1.bf16.msra.mxu0 %v607
        %682 = vmatprep.subr.bf16.mxu0 0
        %683 = vmatpush1.bf16.msra.mxu0 %v608
        %684 = vmatprep.subr.bf16.mxu0 0
        %685 = vmatpush1.bf16.msra.mxu0 %v609
        %686 = vmatprep.subr.bf16.mxu0 0
        %687 = vmatpush1.bf16.msra.mxu0 %v610
        %688 = vmatprep.subr.bf16.mxu0 0
        %689 = vmatpush1.bf16.msra.mxu0 %v611
        %690 = vmatprep.subr.bf16.mxu0 0
        %691 = vmatpush1.bf16.msra.mxu0 %v612
        %692 = vmatprep.subr.bf16.mxu0 0
        %693 = vmatpush1.bf16.msra.mxu0 %v613
        %694 = vmatprep.mubr.bf16.mxu0 %v455
        %695 = vmatmul.mubr.bf16.gmra.mrb[0].mxu0 %v454
        %v696 = vpop.f32.mrb[0].mxu0
        %v697 = vadd.f32 0.0, %v696
        %v698 = vpop.f32.mrb[0].mxu0
        %v699 = vpop.f32.mrb[0].mxu0
        %v700 = vadd.f32 0.0, %v699
        %v701 = vpop.f32.mrb[0].mxu0
        %702 = vmatprep.mubr.bf16.mxu0 %v459
        %703 = vmatmul.mubr.bf16.gmra.mrb[0].mxu0 %v458
        %v704 = vpop.f32.mrb[0].mxu0
        %v705 = vadd.f32 0.0, %v704
        %v706 = vpop.f32.mrb[0].mxu0
        %v707 = vpop.f32.mrb[0].mxu0
        %v708 = vadd.f32 0.0, %v707
        %v709 = vpop.f32.mrb[0].mxu0
        %710 = vdwg.mxu0
        %711 = vmatprep.subr.bf16.mxu0 0
        %712 = vmatpush1.bf16.msra.mxu0 %v614
        %713 = vmatprep.subr.bf16.mxu0 0
        %714 = vmatpush1.bf16.msra.mxu0 %v615
        %715 = vmatprep.subr.bf16.mxu0 0
        %716 = vmatpush1.bf16.msra.mxu0 %v616
        %717 = vmatprep.subr.bf16.mxu0 0
        %718 = vmatpush1.bf16.msra.mxu0 %v617
        %719 = vmatprep.subr.bf16.mxu0 0
        %720 = vmatpush1.bf16.msra.mxu0 %v618
        %721 = vmatprep.subr.bf16.mxu0 0
        %722 = vmatpush1.bf16.msra.mxu0 %v619
        %723 = vmatprep.subr.bf16.mxu0 0
        %724 = vmatpush1.bf16.msra.mxu0 %v620
        %725 = vmatprep.subr.bf16.mxu0 0
        %726 = vmatpush1.bf16.msra.mxu0 %v621
        %727 = vmatprep.subr.bf16.mxu0 0
        %728 = vmatpush1.bf16.msra.mxu0 %v622
        %729 = vmatprep.subr.bf16.mxu0 0
        %730 = vmatpush1.bf16.msra.mxu0 %v623
        %731 = vmatprep.subr.bf16.mxu0 0
        %732 = vmatpush1.bf16.msra.mxu0 %v624
        %733 = vmatprep.subr.bf16.mxu0 0
        %734 = vmatpush1.bf16.msra.mxu0 %v625
        %735 = vmatprep.subr.bf16.mxu0 0
        %736 = vmatpush1.bf16.msra.mxu0 %v626
        %737 = vmatprep.subr.bf16.mxu0 0
        %738 = vmatpush1.bf16.msra.mxu0 %v627
        %739 = vmatprep.subr.bf16.mxu0 0
        %740 = vmatpush1.bf16.msra.mxu0 %v628
        %741 = vmatprep.subr.bf16.mxu0 0
        %742 = vmatpush1.bf16.msra.mxu0 %v629
        %743 = vmatprep.mubr.bf16.mxu0 %v457
        %744 = vmatmul.mubr.bf16.gmra.mrb[0].mxu0 %v456
        %v745 = vpop.f32.mrb[0].mxu0
        %v746 = vadd.f32 %v697, %v745
        %v747 = vpop.f32.mrb[0].mxu0
        %v748 = vpop.f32.mrb[0].mxu0
        %v749 = vadd.f32 %v700, %v748
        %v750 = vpop.f32.mrb[0].mxu0
        %751 = vmatprep.mubr.bf16.mxu0 %v461
        %752 = vmatmul.mubr.bf16.gmra.mrb[0].mxu0 %v460
        %v753 = vpop.f32.mrb[0].mxu0
        %v754 = vadd.f32 %v705, %v753
        %v755 = vpop.f32.mrb[0].mxu0
        %v756 = vpop.f32.mrb[0].mxu0
        %v757 = vadd.f32 %v708, %v756
        %v758 = vpop.f32.mrb[0].mxu0
        %759 = vdwg.mxu0
        %v760 = vadd.f32 %v354, %v746
        %v761 = vadd.f32 %v355, %v749
        %v762 = vadd.f32 %v356, %v754
        %v763 = vadd.f32 %v357, %v757
        %764 = vst [vmem:[#allocation2] sm:$0xff] %v760
        %765 = vst [vmem:[#allocation2 + $0x8] sm:$0xff] %v761
        %766 = vst [vmem:[#allocation2 + $0x10] sm:$0xff] %v762
        %767 = vst [vmem:[#allocation2 + $0x18] sm:$0xff] %v763
        %p768 = scmp.eq.s32.totalorder %s21, 1
        // Predicated region
        $region68: #{clagnosco_autoencoder_forward.12} parent=58 // pred_check
          %p769 = pneg %p768
        $region69: #{clagnosco_autoencoder_forward.12} parent=58 // pred_check_branch
          %771 = sbr.rel (%p769) target = $region71
        $region70: #{clagnosco_autoencoder_forward.12} parent=58 // pred_region
          %v772 = vld [vmem:[#allocation2] sm:$0xff]
          %v773 = vld [vmem:[#allocation2 + $0x8] sm:$0xff]
          %v774 = vld [vmem:[#allocation2 + $0x10] sm:$0xff]
          %v775 = vld [vmem:[#allocation2 + $0x18] sm:$0xff]
          %v776 = vld [vmem:[%s334] sm:$0x1]
          %v778 = vlaneseq
          %v779 = vshrl.u32 %v778, 7
          %v780 = vsub.s32 0, %v779
          %v781 = vrot.slane %v776, %v780
          %v783 = vadd.f32 %v772, %v781
          %v784 = vadd.f32 %v773, %v781
          %v785 = vadd.f32 %v774, %v781
          %v786 = vadd.f32 %v775, %v781
          %v787 = vadd.f32 %v783, %v784
          %v788 = vadd.f32 %v787, %v785
          %v789 = vadd.f32 %v788, %v786
          %v790 = vrot.slane %v789, 4
          %v791 = vadd.f32 %v789, %v790
          %v792 = vrot.slane %v791, 2
          %v793 = vadd.f32 %v791, %v792
          %v794 = vrot.slane %v793, 1
          %v795 = vadd.f32 %v793, %v794
          %v796 = vrcp.pop 32.0
          %v797 = vmul.f32 %v795, %v796
          %v798 = vsub.f32 %v783, %v797
          %v799 = vsub.f32 %v784, %v797
          %v800 = vsub.f32 %v785, %v797
          %v801 = vsub.f32 %v786, %v797
          %v802 = vmul.f32 %v798, %v798
          %v803 = vmul.f32 %v799, %v799
          %v804 = vmul.f32 %v800, %v800
          %v805 = vmul.f32 %v801, %v801
          %v806 = vadd.f32 %v802, %v803
          %v807 = vadd.f32 %v806, %v804
          %v808 = vadd.f32 %v807, %v805
          %v809 = vrot.slane %v808, 4
          %v810 = vadd.f32 %v808, %v809
          %v811 = vrot.slane %v810, 2
          %v812 = vadd.f32 %v810, %v811
          %v813 = vrot.slane %v812, 1
          %v814 = vadd.f32 %v812, %v813
          %v815 = vmul.f32 %v814, %v796
          %v816 = vadd.f32 %v815, 1e-05
          %v817 = vrsqrt.pop %v816
          %v818 = vmul.f32 %v798, %v817
          %v819 = vmul.f32 %v799, %v817
          %v820 = vmul.f32 %v800, %v817
          %v821 = vmul.f32 %v801, %v817
          %v822 = vld [vmem:[%s337] sm:$0x1]
          %v824 = vlaneseq
          %v825 = vshrl.u32 %v824, 7
          %v826 = vsub.s32 0, %v825
          %v827 = vrot.slane %v822, %v826
          %v829 = vmul.f32 %v818, %v827
          %v830 = vmul.f32 %v819, %v827
          %v831 = vmul.f32 %v820, %v827
          %v832 = vmul.f32 %v821, %v827
          %v833 = vld [vmem:[%s340] sm:$0x1]
          %v835 = vlaneseq
          %v836 = vshrl.u32 %v835, 7
          %v837 = vsub.s32 0, %v836
          %v838 = vrot.slane %v833, %v837
          %v840 = vadd.f32 %v829, %v838
          %v841 = vadd.f32 %v830, %v838
          %v842 = vadd.f32 %v831, %v838
          %v843 = vadd.f32 %v832, %v838
          %vm844 = vcmp.ge.f32.partialorder %v840, 0.0
          %vm845 = vcmp.ge.f32.partialorder %v841, 0.0
          %vm846 = vcmp.ge.f32.partialorder %v842, 0.0
          %vm847 = vcmp.ge.f32.partialorder %v843, 0.0
          %v848 = vmul.f32 %v840, 0.01
          %v849 = vmul.f32 %v841, 0.01
          %v850 = vmul.f32 %v842, 0.01
          %v851 = vmul.f32 %v843, 0.01
          %v852 = vsel %vm844, %v840, %v848
          %v853 = vsel %vm845, %v841, %v849
          %v854 = vsel %vm846, %v842, %v850
          %v855 = vsel %vm847, %v843, %v851
          %856 = vst [vmem:[%s344] sm:$0xff] %v852
          %857 = vst [vmem:[%s344 + $0x8] sm:$0xff] %v853
          %858 = vst [vmem:[%s344 + $0x10] sm:$0xff] %v854
          %859 = vst [vmem:[%s344 + $0x18] sm:$0xff] %v855
        $region71: #{clagnosco_autoencoder_forward.12} parent=58 // pred_fallthru
          _
        %p860 = scmp.lt.s32.totalorder %s20, 0
        %s861 = scalar_select %p860, %s20, 0
        %s862 = smul.addr %s861, 8
        %s863 = scalar_lea.vmem %s5, %s862
        // Predicated region
        $region72: #{clagnosco_autoencoder_forward.12} parent=58 // pred_check
          %p864 = pneg %p178
        $region73: #{clagnosco_autoencoder_forward.12} parent=58 // pred_check_branch
          %866 = sbr.rel (%p864) target = $region75
        $region74: #{clagnosco_autoencoder_forward.12} parent=58 // pred_region
          _
        $region75: #{clagnosco_autoencoder_forward.12} parent=58 // pred_fallthru
          _
        // Predicated region
        $region76: #{clagnosco_autoencoder_forward.12} parent=58 // pred_check
          %p867 = pneg %p178
        $region77: #{clagnosco_autoencoder_forward.12} parent=58 // pred_check_branch
          %869 = sbr.rel (%p867) target = $region79
        $region78: #{clagnosco_autoencoder_forward.12} parent=58 // pred_region
          %p870 = scmp.lt.s32.totalorder %s20, 0
          %s871 = scalar_select %p870, %s20, 0
          %s872 = smul.addr %s871, 8
          %s873 = scalar_lea.vmem %s5, %s872
        $region79: #{clagnosco_autoencoder_forward.12} parent=58 // pred_fallthru
          _
      $region59: #{clagnosco_autoencoder_forward.12} parent=5 // pred_fallthru
        _
      %p874 = scmp.le.s32.totalorder 2, %s11
      // Predicated region
      $region80: #{clagnosco_autoencoder_forward.12} parent=5 // pred_check
        %p875 = pneg %p874
      $region81: #{clagnosco_autoencoder_forward.12} parent=5 // pred_check_branch
        %877 = sbr.rel (%p875) target = $region83
      $region82: #{clagnosco_autoencoder_forward.12} parent=5 // pred_region
        %s878 = ssub.s32 %s11, 2
      $region83: #{clagnosco_autoencoder_forward.12} parent=5 // pred_fallthru
        _
    $region6: #{clagnosco_autoencoder_forward.12} parent=1 // loop_footer
      %s15 = sadd.s32 1, %s11
    $region7: #{clagnosco_autoencoder_forward.12} parent=1 // loop_footer_branch
      %10 = sbr.rel target = $region3
    $region8: #{clagnosco_autoencoder_forward.12} parent=1 // loop_exit
      _

// kernel: clagnosco_autoencoder_forward.13
$region0: #{clagnosco_autoencoder_forward.13}
  #allocation0 [shape = 'u32[]', space=smem, size = 0x4, offset = 0x4, fixed_abs, tag = 'smem constant byte address 0x4 - core index']
  #allocation1 [shape = 'u32[144,128]{1,0:T(1,128)}', space=vmem, size = 0x12000, scoped, tag = 'internal scratch']
  #allocation2 [shape = 'f32[32,128]{1,0:T(8,128)}', space=vmem, size = 0x4000, scoped, tag = 'scratch operand']
  %s0 = inlined_call_operand.vmem [shape: bf16[32,1536], index: 0, kind: input, shape index: {}]
  %s1 = inlined_call_operand.vmem [shape: bf16[1536,128], index: 1, kind: input, shape index: {}]
  %s2 = inlined_call_operand.vmem [shape: f32[1,128], index: 2, kind: input, shape index: {}]
  %s3 = inlined_call_operand.vmem [shape: f32[1,128], index: 3, kind: input, shape index: {}]
  %s4 = inlined_call_operand.vmem [shape: f32[1,128], index: 4, kind: input, shape index: {}]
  %s5 = inlined_call_operand.vmem [shape: f32[32,128], index: 5, kind: output, shape index: {}]
  %s6 = sld [smem:[#allocation0]]
  $region84: #{clagnosco_autoencoder_forward.13} parent=0
    _
  %s8 = ssub.s32 1, %s6
  %s9 = scalar_select 0, %s8, %s6
  $region1: #{clagnosco_autoencoder_forward.13} parent=0
    #allocation3 [shape = 'u8[65536]{0}', space=vmem, size = 0x10000, scoped, tag = 'input window, operand 0']
    loop: start=0, step=1, limit=5
    $region2: #{clagnosco_autoencoder_forward.13} parent=1 // loop_pre_header
      _
    $region3: #{clagnosco_autoencoder_forward.13} parent=1 // loop_header
      %s11 = sphi 0, %s15
      %p12 = scmp.ge.s32.totalorder %s11, 5
      %s18 = sphi 0, %s30
      %s19 = sphi 0, %s26
      %s20 = sphi 0, %s18
      %s21 = sphi 0, %s19
      %s22 = sphi 0, %s20
      %s23 = sphi 0, %s21
      %s33 = sphi 0, %s35
      %s36 = sphi 0, %s33
      %s37 = sphi 0, %s36
      %s53 = sphi 0, %s37
      %s61 = sphi 0, %s63
      %s64 = sphi 0, %s61
      %s65 = sphi 0, %s64
      %s81 = sphi 0, %s65
      %s87 = sphi 0, %s89
      %s90 = sphi 0, %s87
      %s91 = sphi 0, %s90
      %s107 = sphi 0, %s91
      %s113 = sphi 0, %s115
      %s116 = sphi 0, %s113
      %s117 = sphi 0, %s116
      %s133 = sphi 0, %s117
      %s139 = sphi 0, %s141
      %s142 = sphi 0, %s139
      %s143 = sphi 0, %s142
      %s159 = sphi 0, %s143
      %s165 = sphi 0, %s167
      %s168 = sphi 0, %s165
      %s169 = sphi 0, %s168
      %s185 = sphi 0, %s169
    $region4: #{clagnosco_autoencoder_forward.13} parent=1 // loop_header_branch
      %14 = sbr.rel (%p12) target = $region8
    $region5: #{clagnosco_autoencoder_forward.13} parent=1 // loop_body
      %s16 = ssub.s32 %s11, 1
      %s17 = ssub.s32 %s11, 2
      %s24 = sadd.s32 1, %s19
      %p25 = scmp.ge.s32.totalorder %s24, 3
      %s26 = scalar_select %p25, 0, %s24
      %s27 = sadd.s32 1, %s18
      %s28 = scalar_select %p25, %s27, %s18
      %p29 = scmp.ge.s32.totalorder %s28, 1
      %s30 = scalar_select %p29, 0, %s28
      %s31 = ssub.s32 %s19, %s26
      %p32 = scmp.eq.s32.totalorder %s31, 0
      %s34 = sadd.s32 %s33, 1
      %s35 = scalar_select %p32, %s33, %s34
      %p38 = pneg %p32
      %p39 = scmp.eq.s32.totalorder %s11, 2
      %p40 = por %p38, %p39
      %p41 = scmp.ne.s32.totalorder %s33, %s36
      %p42 = scmp.eq.s32.totalorder %s11, 0
      %p43 = por %p41, %p42
      %p44 = scmp.ne.s32.totalorder %s33, %s36
      %p45 = scmp.eq.s32.totalorder %s16, 2
      %p46 = por %p44, %p45
      %p47 = scmp.ne.s32.totalorder %s36, %s37
      %p48 = scmp.eq.s32.totalorder %s16, 0
      %p49 = por %p47, %p48
      %p50 = scmp.ne.s32.totalorder %s36, %s37
      %p51 = scmp.eq.s32.totalorder %s17, 2
      %p52 = por %p50, %p51
      %p54 = scmp.ne.s32.totalorder %s37, %s53
      %p55 = scmp.eq.s32.totalorder %s17, 0
      %p56 = por %p54, %p55
      %s57 = ssub.s32 %s19, %s26
      %s58 = ssub.s32 %s18, %s30
      %s59 = sor.u32 %s57, %s58
      %p60 = scmp.eq.s32.totalorder %s59, 0
      %s62 = sadd.s32 %s61, 1
      %s63 = scalar_select %p60, %s61, %s62
      %p66 = pneg %p60
      %p67 = scmp.eq.s32.totalorder %s11, 2
      %p68 = por %p66, %p67
      %p69 = scmp.ne.s32.totalorder %s61, %s64
      %p70 = scmp.eq.s32.totalorder %s11, 0
      %p71 = por %p69, %p70
      %p72 = scmp.ne.s32.totalorder %s61, %s64
      %p73 = scmp.eq.s32.totalorder %s16, 2
      %p74 = por %p72, %p73
      %p75 = scmp.ne.s32.totalorder %s64, %s65
      %p76 = scmp.eq.s32.totalorder %s16, 0
      %p77 = por %p75, %p76
      %p78 = scmp.ne.s32.totalorder %s64, %s65
      %p79 = scmp.eq.s32.totalorder %s17, 2
      %p80 = por %p78, %p79
      %p82 = scmp.ne.s32.totalorder %s65, %s81
      %p83 = scmp.eq.s32.totalorder %s17, 0
      %p84 = por %p82, %p83
      %s85 = ssub.s32 %s18, %s30
      %p86 = scmp.eq.s32.totalorder %s85, 0
      %s88 = sadd.s32 %s87, 1
      %s89 = scalar_select %p86, %s87, %s88
      %p92 = pneg %p86
      %p93 = scmp.eq.s32.totalorder %s11, 2
      %p94 = por %p92, %p93
      %p95 = scmp.ne.s32.totalorder %s87, %s90
      %p96 = scmp.eq.s32.totalorder %s11, 0
      %p97 = por %p95, %p96
      %p98 = scmp.ne.s32.totalorder %s87, %s90
      %p99 = scmp.eq.s32.totalorder %s16, 2
      %p100 = por %p98, %p99
      %p101 = scmp.ne.s32.totalorder %s90, %s91
      %p102 = scmp.eq.s32.totalorder %s16, 0
      %p103 = por %p101, %p102
      %p104 = scmp.ne.s32.totalorder %s90, %s91
      %p105 = scmp.eq.s32.totalorder %s17, 2
      %p106 = por %p104, %p105
      %p108 = scmp.ne.s32.totalorder %s91, %s107
      %p109 = scmp.eq.s32.totalorder %s17, 0
      %p110 = por %p108, %p109
      %s111 = ssub.s32 %s18, %s30
      %p112 = scmp.eq.s32.totalorder %s111, 0
      %s114 = sadd.s32 %s113, 1
      %s115 = scalar_select %p112, %s113, %s114
      %p118 = pneg %p112
      %p119 = scmp.eq.s32.totalorder %s11, 2
      %p120 = por %p118, %p119
      %p121 = scmp.ne.s32.totalorder %s113, %s116
      %p122 = scmp.eq.s32.totalorder %s11, 0
      %p123 = por %p121, %p122
      %p124 = scmp.ne.s32.totalorder %s113, %s116
      %p125 = scmp.eq.s32.totalorder %s16, 2
      %p126 = por %p124, %p125
      %p127 = scmp.ne.s32.totalorder %s116, %s117
      %p128 = scmp.eq.s32.totalorder %s16, 0
      %p129 = por %p127, %p128
      %p130 = scmp.ne.s32.totalorder %s116, %s117
      %p131 = scmp.eq.s32.totalorder %s17, 2
      %p132 = por %p130, %p131
      %p134 = scmp.ne.s32.totalorder %s117, %s133
      %p135 = scmp.eq.s32.totalorder %s17, 0
      %p136 = por %p134, %p135
      %s137 = ssub.s32 %s18, %s30
      %p138 = scmp.eq.s32.totalorder %s137, 0
      %s140 = sadd.s32 %s139, 1
      %s141 = scalar_select %p138, %s139, %s140
      %p144 = pneg %p138
      %p145 = scmp.eq.s32.totalorder %s11, 2
      %p146 = por %p144, %p145
      %p147 = scmp.ne.s32.totalorder %s139, %s142
      %p148 = scmp.eq.s32.totalorder %s11, 0
      %p149 = por %p147, %p148
      %p150 = scmp.ne.s32.totalorder %s139, %s142
      %p151 = scmp.eq.s32.totalorder %s16, 2
      %p152 = por %p150, %p151
      %p153 = scmp.ne.s32.totalorder %s142, %s143
      %p154 = scmp.eq.s32.totalorder %s16, 0
      %p155 = por %p153, %p154
      %p156 = scmp.ne.s32.totalorder %s142, %s143
      %p157 = scmp.eq.s32.totalorder %s17, 2
      %p158 = por %p156, %p157
      %p160 = scmp.ne.s32.totalorder %s143, %s159
      %p161 = scmp.eq.s32.totalorder %s17, 0
      %p162 = por %p160, %p161
      %s163 = ssub.s32 %s18, %s30
      %p164 = scmp.eq.s32.totalorder %s163, 0
      %s166 = sadd.s32 %s165, 1
      %s167 = scalar_select %p164, %s165, %s166
      %p170 = pneg %p164
      %p171 = scmp.eq.s32.totalorder %s11, 2
      %p172 = por %p170, %p171
      %p173 = scmp.ne.s32.totalorder %s165, %s168
      %p174 = scmp.eq.s32.totalorder %s11, 0
      %p175 = por %p173, %p174
      %p176 = scmp.ne.s32.totalorder %s165, %s168
      %p177 = scmp.eq.s32.totalorder %s16, 2
      %p178 = por %p176, %p177
      %p179 = scmp.ne.s32.totalorder %s168, %s169
      %p180 = scmp.eq.s32.totalorder %s16, 0
      %p181 = por %p179, %p180
      %p182 = scmp.ne.s32.totalorder %s168, %s169
      %p183 = scmp.eq.s32.totalorder %s17, 2
      %p184 = por %p182, %p183
      %p186 = scmp.ne.s32.totalorder %s169, %s185
      %p187 = scmp.eq.s32.totalorder %s17, 0
      %p188 = por %p186, %p187
      %p189 = scmp.le.s32.totalorder 1, %s11
      %p190 = scmp.lt.s32.totalorder %s11, 4
      %p191 = pnand %p189, %p190
      %p192 = pneg %p191
      // Predicated region
      $region9: #{clagnosco_autoencoder_forward.13} parent=5 // pred_check
        _
      $region10: #{clagnosco_autoencoder_forward.13} parent=5 // pred_check_branch
        %194 = sbr.rel (%p191) target = $region12
      $region11: #{clagnosco_autoencoder_forward.13} parent=5 // pred_region
        %s195 = ssub.s32 %s11, 1
        // Predicated region
        $region13: #{clagnosco_autoencoder_forward.13} parent=11 // pred_check
          %p196 = pneg %p103
        $region14: #{clagnosco_autoencoder_forward.13} parent=11 // pred_check_branch
          %198 = sbr.rel (%p196) target = $region16
        $region15: #{clagnosco_autoencoder_forward.13} parent=11 // pred_region
          %p199 = scmp.lt.s32.totalorder %s20, 0
          %s200 = scalar_select %p199, %s20, 0
          %s201 = scalar_lea.vmem %s2, %s200
        $region16: #{clagnosco_autoencoder_forward.13} parent=11 // pred_fallthru
          _
        // Predicated region
        $region17: #{clagnosco_autoencoder_forward.13} parent=11 // pred_check
          %p202 = pneg %p129
        $region18: #{clagnosco_autoencoder_forward.13} parent=11 // pred_check_branch
          %204 = sbr.rel (%p202) target = $region20
        $region19: #{clagnosco_autoencoder_forward.13} parent=11 // pred_region
          %p205 = scmp.lt.s32.totalorder %s20, 0
          %s206 = scalar_select %p205, %s20, 0
          %s207 = scalar_lea.vmem %s3, %s206
        $region20: #{clagnosco_autoencoder_forward.13} parent=11 // pred_fallthru
          _
        // Predicated region
        $region21: #{clagnosco_autoencoder_forward.13} parent=11 // pred_check
          %p208 = pneg %p155
        $region22: #{clagnosco_autoencoder_forward.13} parent=11 // pred_check_branch
          %210 = sbr.rel (%p208) target = $region24
        $region23: #{clagnosco_autoencoder_forward.13} parent=11 // pred_region
          %p211 = scmp.lt.s32.totalorder %s20, 0
          %s212 = scalar_select %p211, %s20, 0
          %s213 = scalar_lea.vmem %s4, %s212
        $region24: #{clagnosco_autoencoder_forward.13} parent=11 // pred_fallthru
          _
      $region12: #{clagnosco_autoencoder_forward.13} parent=5 // pred_fallthru
        _
      %p214 = scmp.lt.s32.totalorder %s11, 3
      // Predicated region
      $region25: #{clagnosco_autoencoder_forward.13} parent=5 // pred_check
        %p215 = pneg %p214
      $region26: #{clagnosco_autoencoder_forward.13} parent=5 // pred_check_branch
        %217 = sbr.rel (%p215) target = $region28
      $region27: #{clagnosco_autoencoder_forward.13} parent=5 // pred_region
        // Predicated region
        $region29: #{clagnosco_autoencoder_forward.13} parent=27 // pred_check
          %p218 = pneg %p43
        $region30: #{clagnosco_autoencoder_forward.13} parent=27 // pred_check_branch
          %220 = sbr.rel (%p218) target = $region32
        $region31: #{clagnosco_autoencoder_forward.13} parent=27 // pred_region
          %s221 = sand.u32 %s33, 1
          %s222 = sand.u32 %s33, 1
          %s223 = smul.addr %s222, 64
          %s224 = scalar_lea.vmem [#allocation3], %s223
          %s225 = smul.u32 4, %s19
          %s226 = smul.addr %s225, 4
          %s227 = scalar_lea.vmem %s0, %s226
          // Predicated region
          $region33: #{clagnosco_autoencoder_forward.13} parent=31 // pred_check
            _
          $region34: #{clagnosco_autoencoder_forward.13} parent=31 // pred_check_branch
            %229 = sbr.rel (0) target = $region36
          $region35: #{clagnosco_autoencoder_forward.13} parent=31 // pred_region
            // Predicated region
            $region37: #{clagnosco_autoencoder_forward.13} parent=35 // pred_check
              _
            $region38: #{clagnosco_autoencoder_forward.13} parent=35 // pred_check_branch
              %231 = sbr.rel (0) target = $region40
            $region39: #{clagnosco_autoencoder_forward.13} parent=35 // pred_region
              loop: start=0, step=1, limit=1
              $region41: #{clagnosco_autoencoder_forward.13} parent=39 // loop_pre_header
                _
              $region42: #{clagnosco_autoencoder_forward.13} parent=39 // loop_header
                %s233 = sphi 0, %s237
                %p234 = scmp.ge.s32.totalorder %s233, 1
                %s238 = sphi %s227, %s227
                %s239 = sphi %s224, %s224
              $region43: #{clagnosco_autoencoder_forward.13} parent=39 // loop_header_branch
                %236 = sbr.rel (%p234) target = $region47
              $region44: #{clagnosco_autoencoder_forward.13} parent=39 // loop_body
                %v240 = vld [vmem:[%s238] sm:$0xff]
                %241 = vst [vmem:[%s239] sm:$0xff] %v240
                %v242 = vld [vmem:[%s238 + $0x8] sm:$0xff]
                %243 = vst [vmem:[%s239 + $0x8] sm:$0xff] %v242
                %v244 = vld [vmem:[%s238 + $0x30] sm:$0xff]
                %245 = vst [vmem:[%s239 + $0x10] sm:$0xff] %v244
                %v246 = vld [vmem:[%s238 + $0x38] sm:$0xff]
                %247 = vst [vmem:[%s239 + $0x18] sm:$0xff] %v246
                %v248 = vld [vmem:[%s238 + $0x60] sm:$0xff]
                %249 = vst [vmem:[%s239 + $0x20] sm:$0xff] %v248
                %v250 = vld [vmem:[%s238 + $0x68] sm:$0xff]
                %251 = vst [vmem:[%s239 + $0x28] sm:$0xff] %v250
                %v252 = vld [vmem:[%s238 + $0x90] sm:$0xff]
                %253 = vst [vmem:[%s239 + $0x30] sm:$0xff] %v252
                %v254 = vld [vmem:[%s238 + $0x98] sm:$0xff]
                %255 = vst [vmem:[%s239 + $0x38] sm:$0xff] %v254
              $region45: #{clagnosco_autoencoder_forward.13} parent=39 // loop_footer
                %s237 = sadd.s32 1, %s233
              $region46: #{clagnosco_autoencoder_forward.13} parent=39 // loop_footer_branch
                %232 = sbr.rel target = $region42
              $region47: #{clagnosco_autoencoder_forward.13} parent=39 // loop_exit
                _
            $region40: #{clagnosco_autoencoder_forward.13} parent=35 // pred_fallthru
              _
            // Predicated region
            $region48: #{clagnosco_autoencoder_forward.13} parent=35 // pred_check
              _
            $region49: #{clagnosco_autoencoder_forward.13} parent=35 // pred_check_branch
              %257 = sbr.rel target = $region51
            $region50: #{clagnosco_autoencoder_forward.13} parent=35 // pred_region
              _
            $region51: #{clagnosco_autoencoder_forward.13} parent=35 // pred_fallthru
              _
          $region36: #{clagnosco_autoencoder_forward.13} parent=31 // pred_fallthru
            _
          %258 = vnop
        $region32: #{clagnosco_autoencoder_forward.13} parent=27 // pred_fallthru
          _
        // Predicated region
        $region52: #{clagnosco_autoencoder_forward.13} parent=27 // pred_check
          %p259 = pneg %p71
        $region53: #{clagnosco_autoencoder_forward.13} parent=27 // pred_check_branch
          %261 = sbr.rel (%p259) target = $region55
        $region54: #{clagnosco_autoencoder_forward.13} parent=27 // pred_region
          %s262 = smul.u32 64, %s19
          %p263 = scmp.lt.s32.totalorder %s262, 191
          %s264 = scalar_select %p263, %s262, 191
          %p265 = scmp.lt.s32.totalorder %s18, 0
          %s266 = scalar_select %p265, %s18, 0
          %s267 = sadd.s32 %s266, %s264
          %s268 = smul.addr %s267, 4
          %s269 = scalar_lea.vmem %s1, %s268
          %s270 = smul.u32 64, %s19
        $region55: #{clagnosco_autoencoder_forward.13} parent=27 // pred_fallthru
          _
      $region28: #{clagnosco_autoencoder_forward.13} parent=5 // pred_fallthru
        _
      %p271 = scmp.le.s32.totalorder 1, %s11
      %p272 = scmp.lt.s32.totalorder %s11, 4
      %p273 = pnand %p271, %p272
      %p274 = pneg %p273
      // Predicated region
      $region56: #{clagnosco_autoencoder_forward.13} parent=5 // pred_check
        _
      $region57: #{clagnosco_autoencoder_forward.13} parent=5 // pred_check_branch
        %276 = sbr.rel (%p273) target = $region59
      $region58: #{clagnosco_autoencoder_forward.13} parent=5 // pred_region
        %s277 = ssub.s32 %s11, 1
        %s278 = sand.u32 %s36, 1
        %s279 = sand.u32 %s36, 1
        %s280 = smul.addr %s279, 64
        %s281 = scalar_lea.vmem [#allocation3], %s280
        // Predicated region
        $region60: #{clagnosco_autoencoder_forward.13} parent=58 // pred_check
          %p282 = pneg %p49
        $region61: #{clagnosco_autoencoder_forward.13} parent=58 // pred_check_branch
          %284 = sbr.rel (%p282) target = $region63
        $region62: #{clagnosco_autoencoder_forward.13} parent=58 // pred_region
          _
        $region63: #{clagnosco_autoencoder_forward.13} parent=58 // pred_fallthru
          _
        %s285 = sand.u32 %s36, 1
        %s286 = sand.u32 %s36, 1
        %s287 = smul.addr %s286, 64
        %s288 = scalar_lea.vmem [#allocation3], %s287
        %p289 = pneg %p49
        %p290 = pneg %p46
        %s291 = smul.u32 64, %s21
        %p292 = scmp.lt.s32.totalorder %s291, 191
        %s293 = scalar_select %p292, %s291, 191
        %p294 = scmp.lt.s32.totalorder %s20, 0
        %s295 = scalar_select %p294, %s20, 0
        %s296 = sadd.s32 %s295, %s293
        %s297 = smul.addr %s296, 4
        %s298 = scalar_lea.vmem %s1, %s297
        %p299 = pneg %p77
        %p300 = pneg %p74
        %p301 = scmp.lt.s32.totalorder %s20, 0
        %s302 = scalar_select %p301, %s20, 0
        %s303 = scalar_lea.vmem %s2, %s302
        %p304 = pneg %p103
        %p305 = pneg %p100
        %p306 = scmp.lt.s32.totalorder %s20, 0
        %s307 = scalar_select %p306, %s20, 0
        %s308 = scalar_lea.vmem %s3, %s307
        %p309 = pneg %p129
        %p310 = pneg %p126
        %p311 = scmp.lt.s32.totalorder %s20, 0
        %s312 = scalar_select %p311, %s20, 0
        %s313 = scalar_lea.vmem %s4, %s312
        %p314 = pneg %p155
        %p315 = pneg %p152
        %p316 = pneg %p181
        %p317 = pneg %p178
        %p318 = scmp.lt.s32.totalorder %s20, 0
        %s319 = scalar_select %p318, %s20, 0
        %s320 = smul.addr %s319, 8
        %s321 = scalar_lea.vmem %s5, %s320
        %s322 = smul.u32 4, %s21
        %s323 = smul.u32 64, %s21
        %p324 = scmp.lt.s32.totalorder %s323, 191
        %s325 = scalar_select %p324, %s323, 191
        %p326 = scmp.lt.s32.totalorder %s20, 0
        %s327 = scalar_select %p326, %s20, 0
        %s328 = sadd.s32 %s327, %s325
        %s329 = smul.addr %s328, 4
        %s330 = scalar_lea.vmem %s1, %s329
        %s331 = smul.u32 64, %s21
        %p332 = scmp.lt.s32.totalorder %s20, 0
        %s333 = scalar_select %p332, %s20, 0
        %s334 = scalar_lea.vmem %s2, %s333
        %p335 = scmp.lt.s32.totalorder %s20, 0
        %s336 = scalar_select %p335, %s20, 0
        %s337 = scalar_lea.vmem %s3, %s336
        %p338 = scmp.lt.s32.totalorder %s20, 0
        %s339 = scalar_select %p338, %s20, 0
        %s340 = scalar_lea.vmem %s4, %s339
        %p341 = scmp.lt.s32.totalorder %s20, 0
        %s342 = scalar_select %p341, %s20, 0
        %s343 = smul.addr %s342, 8
        %s344 = scalar_lea.vmem %s5, %s343
        %p346 = scmp.eq.s32.totalorder %s21, 0
        // Predicated region
        $region64: #{clagnosco_autoencoder_forward.13} parent=58 // pred_check
          %p347 = pneg %p346
        $region65: #{clagnosco_autoencoder_forward.13} parent=58 // pred_check_branch
          %349 = sbr.rel (%p347) target = $region67
        $region66: #{clagnosco_autoencoder_forward.13} parent=58 // pred_region
          %350 = vst [vmem:[#allocation2] sm:$0xff] 0.0
          %351 = vst [vmem:[#allocation2 + $0x8] sm:$0xff] 0.0
          %352 = vst [vmem:[#allocation2 + $0x10] sm:$0xff] 0.0
          %353 = vst [vmem:[#allocation2 + $0x18] sm:$0xff] 0.0
        $region67: #{clagnosco_autoencoder_forward.13} parent=58 // pred_fallthru
          _
        %v354 = vld [vmem:[#allocation2] sm:$0xff]
        %v355 = vld [vmem:[#allocation2 + $0x8] sm:$0xff]
        %v356 = vld [vmem:[#allocation2 + $0x10] sm:$0xff]
        %v357 = vld [vmem:[#allocation2 + $0x18] sm:$0xff]
        %v358 = vld [vmem:[%s281] sm:$0xff]
        %v359 = vld [vmem:[%s281 + $0x8] sm:$0xff]
        %v360 = vld [vmem:[%s281 + $0x10] sm:$0xff]
        %v361 = vld [vmem:[%s281 + $0x18] sm:$0xff]
        %v362 = vld [vmem:[%s281 + $0x20] sm:$0xff]
        %v363 = vld [vmem:[%s281 + $0x28] sm:$0xff]
        %v364 = vld [vmem:[%s281 + $0x30] sm:$0xff]
        %v365 = vld [vmem:[%s281 + $0x38] sm:$0xff]
        %v366 = vld [vmem:[%s330] sm:$0xf]
        %v367 = vld [vmem:[%s330 + $0x4] sm:$0xf]
        %v368 = vld [vmem:[%s330 + $0x8] sm:$0xf]
        %v369 = vld [vmem:[%s330 + $0xc] sm:$0xf]
        %v370 = vld [vmem:[%s330 + $0x10] sm:$0xf]
        %v371 = vld [vmem:[%s330 + $0x14] sm:$0xf]
        %v372 = vld [vmem:[%s330 + $0x18] sm:$0xf]
        %v373 = vld [vmem:[%s330 + $0x1c] sm:$0xf]
        %v374 = vld [vmem:[%s330 + $0x20] sm:$0xf]
        %v375 = vld [vmem:[%s330 + $0x24] sm:$0xf]
        %v376 = vld [vmem:[%s330 + $0x28] sm:$0xf]
        %v377 = vld [vmem:[%s330 + $0x2c] sm:$0xf]
        %v378 = vld [vmem:[%s330 + $0x30] sm:$0xf]
        %v379 = vld [vmem:[%s330 + $0x34] sm:$0xf]
        %v380 = vld [vmem:[%s330 + $0x38] sm:$0xf]
        %v381 = vld [vmem:[%s330 + $0x3c] sm:$0xf]
        %v382 = vld [vmem:[%s330 + $0x40] sm:$0xf]
        %v383 = vld [vmem:[%s330 + $0x44] sm:$0xf]
        %v384 = vld [vmem:[%s330 + $0x48] sm:$0xf]
        %v385 = vld [vmem:[%s330 + $0x4c] sm:$0xf]
        %v386 = vld [vmem:[%s330 + $0x50] sm:$0xf]
        %v387 = vld [vmem:[%s330 + $0x54] sm:$0xf]
        %v388 = vld [vmem:[%s330 + $0x58] sm:$0xf]
        %v389 = vld [vmem:[%s330 + $0x5c] sm:$0xf]
        %v390 = vld [vmem:[%s330 + $0x60] sm:$0xf]
        %v391 = vld [vmem:[%s330 + $0x64] sm:$0xf]
        %v392 = vld [vmem:[%s330 + $0x68] sm:$0xf]
        %v393 = vld [vmem:[%s330 + $0x6c] sm:$0xf]
        %v394 = vld [vmem:[%s330 + $0x70] sm:$0xf]
        %v395 = vld [vmem:[%s330 + $0x74] sm:$0xf]
        %v396 = vld [vmem:[%s330 + $0x78] sm:$0xf]
        %v397 = vld [vmem:[%s330 + $0x7c] sm:$0xf]
        %v398 = vld [vmem:[%s330 + $0x80] sm:$0xf]
        %v399 = vld [vmem:[%s330 + $0x84] sm:$0xf]
        %v400 = vld [vmem:[%s330 + $0x88] sm:$0xf]
        %v401 = vld [vmem:[%s330 + $0x8c] sm:$0xf]
        %v402 = vld [vmem:[%s330 + $0x90] sm:$0xf]
        %v403 = vld [vmem:[%s330 + $0x94] sm:$0xf]
        %v404 = vld [vmem:[%s330 + $0x98] sm:$0xf]
        %v405 = vld [vmem:[%s330 + $0x9c] sm:$0xf]
        %v406 = vld [vmem:[%s330 + $0xa0] sm:$0xf]
        %v407 = vld [vmem:[%s330 + $0xa4] sm:$0xf]
        %v408 = vld [vmem:[%s330 + $0xa8] sm:$0xf]
        %v409 = vld [vmem:[%s330 + $0xac] sm:$0xf]
        %v410 = vld [vmem:[%s330 + $0xb0] sm:$0xf]
        %v411 = vld [vmem:[%s330 + $0xb4] sm:$0xf]
        %v412 = vld [vmem:[%s330 + $0xb8] sm:$0xf]
        %v413 = vld [vmem:[%s330 + $0xbc] sm:$0xf]
        %v414 = vld [vmem:[%s330 + $0xc0] sm:$0xf]
        %v415 = vld [vmem:[%s330 + $0xc4] sm:$0xf]
        %v416 = vld [vmem:[%s330 + $0xc8] sm:$0xf]
        %v417 = vld [vmem:[%s330 + $0xcc] sm:$0xf]
        %v418 = vld [vmem:[%s330 + $0xd0] sm:$0xf]
        %v419 = vld [vmem:[%s330 + $0xd4] sm:$0xf]
        %v420 = vld [vmem:[%s330 + $0xd8] sm:$0xf]
        %v421 = vld [vmem:[%s330 + $0xdc] sm:$0xf]
        %v422 = vld [vmem:[%s330 + $0xe0] sm:$0xf]
        %v423 = vld [vmem:[%s330 + $0xe4] sm:$0xf]
        %v424 = vld [vmem:[%s330 + $0xe8] sm:$0xf]
        %v425 = vld [vmem:[%s330 + $0xec] sm:$0xf]
        %v426 = vld [vmem:[%s330 + $0xf0] sm:$0xf]
        %v427 = vld [vmem:[%s330 + $0xf4] sm:$0xf]
        %v428 = vld [vmem:[%s330 + $0xf8] sm:$0xf]
        %v429 = vld [vmem:[%s330 + $0xfc] sm:$0xf]
        %v438 = vunpack.c.l.b16 %v358
        %v439 = vunpack.c.h.b16 %v358
        %v440 = vunpack.c.l.b16 %v359
        %v441 = vunpack.c.h.b16 %v359
        %v442 = vunpack.c.l.b16 %v360
        %v443 = vunpack.c.h.b16 %v360
        %v444 = vunpack.c.l.b16 %v361
        %v445 = vunpack.c.h.b16 %v361
        %v446 = vunpack.c.l.b16 %v362
        %v447 = vunpack.c.h.b16 %v362
        %v448 = vunpack.c.l.b16 %v363
        %v449 = vunpack.c.h.b16 %v363
        %v450 = vunpack.c.l.b16 %v364
        %v451 = vunpack.c.h.b16 %v364
        %v452 = vunpack.c.l.b16 %v365
        %v453 = vunpack.c.h.b16 %v365
        %v454 = vpack.c.b16 %v442, %v438
        %v455 = vpack.c.b16 %v443, %v439
        %v456 = vpack.c.b16 %v444, %v440
        %v457 = vpack.c.b16 %v445, %v441
        %v458 = vpack.c.b16 %v450, %v446
        %v459 = vpack.c.b16 %v451, %v447
        %v460 = vpack.c.b16 %v452, %v448
        %v461 = vpack.c.b16 %v453, %v449
        %v534 = vunpack.c.l.b16 %v366
        %v535 = vunpack.c.l.b16 %v367
        %v536 = vunpack.c.l.b16 %v368
        %v537 = vunpack.c.l.b16 %v369
        %v538 = vunpack.c.l.b16 %v370
        %v539 = vunpack.c.l.b16 %v371
        %v540 = vunpack.c.l.b16 %v372
        %v541 = vunpack.c.l.b16 %v373
        %v542 = vunpack.c.l.b16 %v374
        %v543 = vunpack.c.l.b16 %v375
        %v544 = vunpack.c.l.b16 %v376
        %v545 = vunpack.c.l.b16 %v377
        %v546 = vunpack.c.l.b16 %v378
        %v547 = vunpack.c.l.b16 %v379
        %v548 = vunpack.c.l.b16 %v380
        %v549 = vunpack.c.l.b16 %v381
        %v550 = vunpack.c.l.b16 %v382
        %v551 = vunpack.c.l.b16 %v383
        %v552 = vunpack.c.l.b16 %v384
        %v553 = vunpack.c.l.b16 %v385
        %v554 = vunpack.c.l.b16 %v386
        %v555 = vunpack.c.l.b16 %v387
        %v556 = vunpack.c.l.b16 %v388
        %v557 = vunpack.c.l.b16 %v389
        %v558 = vunpack.c.l.b16 %v390
        %v559 = vunpack.c.l.b16 %v391
        %v560 = vunpack.c.l.b16 %v392
        %v561 = vunpack.c.l.b16 %v393
        %v562 = vunpack.c.l.b16 %v394
        %v563 = vunpack.c.l.b16 %v395
        %v564 = vunpack.c.l.b16 %v396
        %v565 = vunpack.c.l.b16 %v397
        %v566 = vunpack.c.l.b16 %v398
        %v567 = vunpack.c.l.b16 %v399
        %v568 = vunpack.c.l.b16 %v400
        %v569 = vunpack.c.l.b16 %v401
        %v570 = vunpack.c.l.b16 %v402
        %v571 = vunpack.c.l.b16 %v403
        %v572 = vunpack.c.l.b16 %v404
        %v573 = vunpack.c.l.b16 %v405
        %v574 = vunpack.c.l.b16 %v406
        %v575 = vunpack.c.l.b16 %v407
        %v576 = vunpack.c.l.b16 %v408
        %v577 = vunpack.c.l.b16 %v409
        %v578 = vunpack.c.l.b16 %v410
        %v579 = vunpack.c.l.b16 %v411
        %v580 = vunpack.c.l.b16 %v412
        %v581 = vunpack.c.l.b16 %v413
        %v582 = vunpack.c.l.b16 %v414
        %v583 = vunpack.c.l.b16 %v415
        %v584 = vunpack.c.l.b16 %v416
        %v585 = vunpack.c.l.b16 %v417
        %v586 = vunpack.c.l.b16 %v418
        %v587 = vunpack.c.l.b16 %v419
        %v588 = vunpack.c.l.b16 %v420
        %v589 = vunpack.c.l.b16 %v421
        %v590 = vunpack.c.l.b16 %v422
        %v591 = vunpack.c.l.b16 %v423
        %v592 = vunpack.c.l.b16 %v424
        %v593 = vunpack.c.l.b16 %v425
        %v594 = vunpack.c.l.b16 %v426
        %v595 = vunpack.c.l.b16 %v427
        %v596 = vunpack.c.l.b16 %v428
        %v597 = vunpack.c.l.b16 %v429
        %v598 = vpack.c.b16 %v535, %v534
        %v599 = vpack.c.b16 %v537, %v536
        %v600 = vpack.c.b16 %v539, %v538
        %v601 = vpack.c.b16 %v541, %v540
        %v602 = vpack.c.b16 %v543, %v542
        %v603 = vpack.c.b16 %v545, %v544
        %v604 = vpack.c.b16 %v547, %v546
        %v605 = vpack.c.b16 %v549, %v548
        %v606 = vpack.c.b16 %v551, %v550
        %v607 = vpack.c.b16 %v553, %v552
        %v608 = vpack.c.b16 %v555, %v554
        %v609 = vpack.c.b16 %v557, %v556
        %v610 = vpack.c.b16 %v559, %v558
        %v611 = vpack.c.b16 %v561, %v560
        %v612 = vpack.c.b16 %v563, %v562
        %v613 = vpack.c.b16 %v565, %v564
        %v614 = vpack.c.b16 %v567, %v566
        %v615 = vpack.c.b16 %v569, %v568
        %v616 = vpack.c.b16 %v571, %v570
        %v617 = vpack.c.b16 %v573, %v572
        %v618 = vpack.c.b16 %v575, %v574
        %v619 = vpack.c.b16 %v577, %v576
        %v620 = vpack.c.b16 %v579, %v578
        %v621 = vpack.c.b16 %v581, %v580
        %v622 = vpack.c.b16 %v583, %v582
        %v623 = vpack.c.b16 %v585, %v584
        %v624 = vpack.c.b16 %v587, %v586
        %v625 = vpack.c.b16 %v589, %v588
        %v626 = vpack.c.b16 %v591, %v590
        %v627 = vpack.c.b16 %v593, %v592
        %v628 = vpack.c.b16 %v595, %v594
        %v629 = vpack.c.b16 %v597, %v596
        %662 = vmatprep.subr.bf16.mxu0 0
        %663 = vmatpush1.bf16.msra.mxu0 %v598
        %664 = vmatprep.subr.bf16.mxu0 0
        %665 = vmatpush1.bf16.msra.mxu0 %v599
        %666 = vmatprep.subr.bf16.mxu0 0
        %667 = vmatpush1.bf16.msra.mxu0 %v600
        %668 = vmatprep.subr.bf16.mxu0 0
        %669 = vmatpush1.bf16.msra.mxu0 %v601
        %670 = vmatprep.subr.bf16.mxu0 0
        %671 = vmatpush1.bf16.msra.mxu0 %v602
        %672 = vmatprep.subr.bf16.mxu0 0
        %673 = vmatpush1.bf16.msra.mxu0 %v603
        %674 = vmatprep.subr.bf16.mxu0 0
        %675 = vmatpush1.bf16.msra.mxu0 %v604
        %676 = vmatprep.subr.bf16.mxu0 0
        %677 = vmatpush1.bf16.msra.mxu0 %v605
        %678 = vmatprep.subr.bf16.mxu0 0
        %679 = vmatpush1.bf16.msra.mxu0 %v606
        %680 = vmatprep.subr.bf16.mxu0 0
        %681 = vmatpush1.bf16.msra.mxu0 %v607
        %682 = vmatprep.subr.bf16.mxu0 0
        %683 = vmatpush1.bf16.msra.mxu0 %v608
        %684 = vmatprep.subr.bf16.mxu0 0
        %685 = vmatpush1.bf16.msra.mxu0 %v609
        %686 = vmatprep.subr.bf16.mxu0 0
        %687 = vmatpush1.bf16.msra.mxu0 %v610
        %688 = vmatprep.subr.bf16.mxu0 0
        %689 = vmatpush1.bf16.msra.mxu0 %v611
        %690 = vmatprep.subr.bf16.mxu0 0
        %691 = vmatpush1.bf16.msra.mxu0 %v612
        %692 = vmatprep.subr.bf16.mxu0 0
        %693 = vmatpush1.bf16.msra.mxu0 %v613
        %694 = vmatprep.mubr.bf16.mxu0 %v455
        %695 = vmatmul.mubr.bf16.gmra.mrb[0].mxu0 %v454
        %v696 = vpop.f32.mrb[0].mxu0
        %v697 = vadd.f32 0.0, %v696
        %v698 = vpop.f32.mrb[0].mxu0
        %v699 = vpop.f32.mrb[0].mxu0
        %v700 = vadd.f32 0.0, %v699
        %v701 = vpop.f32.mrb[0].mxu0
        %702 = vmatprep.mubr.bf16.mxu0 %v459
        %703 = vmatmul.mubr.bf16.gmra.mrb[0].mxu0 %v458
        %v704 = vpop.f32.mrb[0].mxu0
        %v705 = vadd.f32 0.0, %v704
        %v706 = vpop.f32.mrb[0].mxu0
        %v707 = vpop.f32.mrb[0].mxu0
        %v708 = vadd.f32 0.0, %v707
        %v709 = vpop.f32.mrb[0].mxu0
        %710 = vdwg.mxu0
        %711 = vmatprep.subr.bf16.mxu0 0
        %712 = vmatpush1.bf16.msra.mxu0 %v614
        %713 = vmatprep.subr.bf16.mxu0 0
        %714 = vmatpush1.bf16.msra.mxu0 %v615
        %715 = vmatprep.subr.bf16.mxu0 0
        %716 = vmatpush1.bf16.msra.mxu0 %v616
        %717 = vmatprep.subr.bf16.mxu0 0
        %718 = vmatpush1.bf16.msra.mxu0 %v617
        %719 = vmatprep.subr.bf16.mxu0 0
        %720 = vmatpush1.bf16.msra.mxu0 %v618
        %721 = vmatprep.subr.bf16.mxu0 0
        %722 = vmatpush1.bf16.msra.mxu0 %v619
        %723 = vmatprep.subr.bf16.mxu0 0
        %724 = vmatpush1.bf16.msra.mxu0 %v620
        %725 = vmatprep.subr.bf16.mxu0 0
        %726 = vmatpush1.bf16.msra.mxu0 %v621
        %727 = vmatprep.subr.bf16.mxu0 0
        %728 = vmatpush1.bf16.msra.mxu0 %v622
        %729 = vmatprep.subr.bf16.mxu0 0
        %730 = vmatpush1.bf16.msra.mxu0 %v623
        %731 = vmatprep.subr.bf16.mxu0 0
        %732 = vmatpush1.bf16.msra.mxu0 %v624
        %733 = vmatprep.subr.bf16.mxu0 0
        %734 = vmatpush1.bf16.msra.mxu0 %v625
        %735 = vmatprep.subr.bf16.mxu0 0
        %736 = vmatpush1.bf16.msra.mxu0 %v626
        %737 = vmatprep.subr.bf16.mxu0 0
        %738 = vmatpush1.bf16.msra.mxu0 %v627
        %739 = vmatprep.subr.bf16.mxu0 0
        %740 = vmatpush1.bf16.msra.mxu0 %v628
        %741 = vmatprep.subr.bf16.mxu0 0
        %742 = vmatpush1.bf16.msra.mxu0 %v629
        %743 = vmatprep.mubr.bf16.mxu0 %v457
        %744 = vmatmul.mubr.bf16.gmra.mrb[0].mxu0 %v456
        %v745 = vpop.f32.mrb[0].mxu0
        %v746 = vadd.f32 %v697, %v745
        %v747 = vpop.f32.mrb[0].mxu0
        %v748 = vpop.f32.mrb[0].mxu0
        %v749 = vadd.f32 %v700, %v748
        %v750 = vpop.f32.mrb[0].mxu0
        %751 = vmatprep.mubr.bf16.mxu0 %v461
        %752 = vmatmul.mubr.bf16.gmra.mrb[0].mxu0 %v460
        %v753 = vpop.f32.mrb[0].mxu0
        %v754 = vadd.f32 %v705, %v753
        %v755 = vpop.f32.mrb[0].mxu0
        %v756 = vpop.f32.mrb[0].mxu0
        %v757 = vadd.f32 %v708, %v756
        %v758 = vpop.f32.mrb[0].mxu0
        %759 = vdwg.mxu0
        %v760 = vadd.f32 %v354, %v746
        %v761 = vadd.f32 %v355, %v749
        %v762 = vadd.f32 %v356, %v754
        %v763 = vadd.f32 %v357, %v757
        %764 = vst [vmem:[#allocation2] sm:$0xff] %v760
        %765 = vst [vmem:[#allocation2 + $0x8] sm:$0xff] %v761
        %766 = vst [vmem:[#allocation2 + $0x10] sm:$0xff] %v762
        %767 = vst [vmem:[#allocation2 + $0x18] sm:$0xff] %v763
        %p768 = scmp.eq.s32.totalorder %s21, 2
        // Predicated region
        $region68: #{clagnosco_autoencoder_forward.13} parent=58 // pred_check
          %p769 = pneg %p768
        $region69: #{clagnosco_autoencoder_forward.13} parent=58 // pred_check_branch
          %771 = sbr.rel (%p769) target = $region71
        $region70: #{clagnosco_autoencoder_forward.13} parent=58 // pred_region
          %v772 = vld [vmem:[#allocation2] sm:$0xff]
          %v773 = vld [vmem:[#allocation2 + $0x8] sm:$0xff]
          %v774 = vld [vmem:[#allocation2 + $0x10] sm:$0xff]
          %v775 = vld [vmem:[#allocation2 + $0x18] sm:$0xff]
          %v776 = vld [vmem:[%s334] sm:$0x1]
          %v778 = vlaneseq
          %v779 = vshrl.u32 %v778, 7
          %v780 = vsub.s32 0, %v779
          %v781 = vrot.slane %v776, %v780
          %v783 = vadd.f32 %v772, %v781
          %v784 = vadd.f32 %v773, %v781
          %v785 = vadd.f32 %v774, %v781
          %v786 = vadd.f32 %v775, %v781
          %v787 = vadd.f32 %v783, %v784
          %v788 = vadd.f32 %v787, %v785
          %v789 = vadd.f32 %v788, %v786
          %v790 = vrot.slane %v789, 4
          %v791 = vadd.f32 %v789, %v790
          %v792 = vrot.slane %v791, 2
          %v793 = vadd.f32 %v791, %v792
          %v794 = vrot.slane %v793, 1
          %v795 = vadd.f32 %v793, %v794
          %v796 = vrcp.pop 32.0
          %v797 = vmul.f32 %v795, %v796
          %v798 = vsub.f32 %v783, %v797
          %v799 = vsub.f32 %v784, %v797
          %v800 = vsub.f32 %v785, %v797
          %v801 = vsub.f32 %v786, %v797
          %v802 = vmul.f32 %v798, %v798
          %v803 = vmul.f32 %v799, %v799
          %v804 = vmul.f32 %v800, %v800
          %v805 = vmul.f32 %v801, %v801
          %v806 = vadd.f32 %v802, %v803
          %v807 = vadd.f32 %v806, %v804
          %v808 = vadd.f32 %v807, %v805
          %v809 = vrot.slane %v808, 4
          %v810 = vadd.f32 %v808, %v809
          %v811 = vrot.slane %v810, 2
          %v812 = vadd.f32 %v810, %v811
          %v813 = vrot.slane %v812, 1
          %v814 = vadd.f32 %v812, %v813
          %v815 = vmul.f32 %v814, %v796
          %v816 = vadd.f32 %v815, 1e-05
          %v817 = vrsqrt.pop %v816
          %v818 = vmul.f32 %v798, %v817
          %v819 = vmul.f32 %v799, %v817
          %v820 = vmul.f32 %v800, %v817
          %v821 = vmul.f32 %v801, %v817
          %v822 = vld [vmem:[%s337] sm:$0x1]
          %v824 = vlaneseq
          %v825 = vshrl.u32 %v824, 7
          %v826 = vsub.s32 0, %v825
          %v827 = vrot.slane %v822, %v826
          %v829 = vmul.f32 %v818, %v827
          %v830 = vmul.f32 %v819, %v827
          %v831 = vmul.f32 %v820, %v827
          %v832 = vmul.f32 %v821, %v827
          %v833 = vld [vmem:[%s340] sm:$0x1]
          %v835 = vlaneseq
          %v836 = vshrl.u32 %v835, 7
          %v837 = vsub.s32 0, %v836
          %v838 = vrot.slane %v833, %v837
          %v840 = vadd.f32 %v829, %v838
          %v841 = vadd.f32 %v830, %v838
          %v842 = vadd.f32 %v831, %v838
          %v843 = vadd.f32 %v832, %v838
          %vm844 = vcmp.ge.f32.partialorder %v840, 0.0
          %vm845 = vcmp.ge.f32.partialorder %v841, 0.0
          %vm846 = vcmp.ge.f32.partialorder %v842, 0.0
          %vm847 = vcmp.ge.f32.partialorder %v843, 0.0
          %v848 = vmul.f32 %v840, 0.01
          %v849 = vmul.f32 %v841, 0.01
          %v850 = vmul.f32 %v842, 0.01
          %v851 = vmul.f32 %v843, 0.01
          %v852 = vsel %vm844, %v840, %v848
          %v853 = vsel %vm845, %v841, %v849
          %v854 = vsel %vm846, %v842, %v850
          %v855 = vsel %vm847, %v843, %v851
          %856 = vst [vmem:[%s344] sm:$0xff] %v852
          %857 = vst [vmem:[%s344 + $0x8] sm:$0xff] %v853
          %858 = vst [vmem:[%s344 + $0x10] sm:$0xff] %v854
          %859 = vst [vmem:[%s344 + $0x18] sm:$0xff] %v855
        $region71: #{clagnosco_autoencoder_forward.13} parent=58 // pred_fallthru
          _
        %p860 = scmp.lt.s32.totalorder %s20, 0
        %s861 = scalar_select %p860, %s20, 0
        %s862 = smul.addr %s861, 8
        %s863 = scalar_lea.vmem %s5, %s862
        // Predicated region
        $region72: #{clagnosco_autoencoder_forward.13} parent=58 // pred_check
          %p864 = pneg %p178
        $region73: #{clagnosco_autoencoder_forward.13} parent=58 // pred_check_branch
          %866 = sbr.rel (%p864) target = $region75
        $region74: #{clagnosco_autoencoder_forward.13} parent=58 // pred_region
          _
        $region75: #{clagnosco_autoencoder_forward.13} parent=58 // pred_fallthru
          _
        // Predicated region
        $region76: #{clagnosco_autoencoder_forward.13} parent=58 // pred_check
          %p867 = pneg %p178
        $region77: #{clagnosco_autoencoder_forward.13} parent=58 // pred_check_branch
          %869 = sbr.rel (%p867) target = $region79
        $region78: #{clagnosco_autoencoder_forward.13} parent=58 // pred_region
          %p870 = scmp.lt.s32.totalorder %s20, 0
          %s871 = scalar_select %p870, %s20, 0
          %s872 = smul.addr %s871, 8
          %s873 = scalar_lea.vmem %s5, %s872
        $region79: #{clagnosco_autoencoder_forward.13} parent=58 // pred_fallthru
          _
      $region59: #{clagnosco_autoencoder_forward.13} parent=5 // pred_fallthru
        _
      %p874 = scmp.le.s32.totalorder 2, %s11
      // Predicated region
      $region80: #{clagnosco_autoencoder_forward.13} parent=5 // pred_check
        %p875 = pneg %p874
      $region81: #{clagnosco_autoencoder_forward.13} parent=5 // pred_check_branch
        %877 = sbr.rel (%p875) target = $region83
      $region82: #{clagnosco_autoencoder_forward.13} parent=5 // pred_region
        %s878 = ssub.s32 %s11, 2
      $region83: #{clagnosco_autoencoder_forward.13} parent=5 // pred_fallthru
        _
    $region6: #{clagnosco_autoencoder_forward.13} parent=1 // loop_footer
      %s15 = sadd.s32 1, %s11
    $region7: #{clagnosco_autoencoder_forward.13} parent=1 // loop_footer_branch
      %10 = sbr.rel target = $region3
    $region8: #{clagnosco_autoencoder_forward.13} parent=1 // loop_exit
      _

// kernel: clagnosco_autoencoder_forward.14
$region0: #{clagnosco_autoencoder_forward.14}
  #allocation0 [shape = 'u32[]', space=smem, size = 0x4, offset = 0x4, fixed_abs, tag = 'smem constant byte address 0x4 - core index']
  #allocation1 [shape = 'u32[144,128]{1,0:T(1,128)}', space=vmem, size = 0x12000, scoped, tag = 'internal scratch']
  #allocation2 [shape = 'f32[16,128]{1,0:T(8,128)}', space=vmem, size = 0x2000, scoped, tag = 'scratch operand']
  %s0 = inlined_call_operand.vmem [shape: bf16[1,16,512], index: 0, kind: input, shape index: {}]
  %s1 = inlined_call_operand.vmem [shape: bf16[1,512,128], index: 1, kind: input, shape index: {}]
  %s2 = inlined_call_operand.vmem [shape: f32[1,1,128], index: 2, kind: input, shape index: {}]
  %s3 = inlined_call_operand.vmem [shape: f32[1,16,128], index: 3, kind: output, shape index: {}]
  %s4 = sld [smem:[#allocation0]]
  $region30: #{clagnosco_autoencoder_forward.14} parent=0
    _
  %s6 = ssub.s32 1, %s4
  %s7 = scalar_select 0, %s6, %s4
  // Predicated region
  $region2: #{clagnosco_autoencoder_forward.14} parent=0 // pred_check
    _
  $region3: #{clagnosco_autoencoder_forward.14} parent=0 // pred_check_branch
    %9 = sbr.rel (0) target = $region5
  $region4: #{clagnosco_autoencoder_forward.14} parent=0 // pred_region
    _
  $region5: #{clagnosco_autoencoder_forward.14} parent=0 // pred_fallthru
    _
  // Predicated region
  $region6: #{clagnosco_autoencoder_forward.14} parent=0 // pred_check
    _
  $region7: #{clagnosco_autoencoder_forward.14} parent=0 // pred_check_branch
    %11 = sbr.rel (0) target = $region9
  $region8: #{clagnosco_autoencoder_forward.14} parent=0 // pred_region
    _
  $region9: #{clagnosco_autoencoder_forward.14} parent=0 // pred_fallthru
    _
  // Predicated region
  $region10: #{clagnosco_autoencoder_forward.14} parent=0 // pred_check
    _
  $region11: #{clagnosco_autoencoder_forward.14} parent=0 // pred_check_branch
    %13 = sbr.rel (0) target = $region13
  $region12: #{clagnosco_autoencoder_forward.14} parent=0 // pred_region
    _
  $region13: #{clagnosco_autoencoder_forward.14} parent=0 // pred_fallthru
    _
  %p15 = scmp.eq.s32.totalorder 0, 0
  // Predicated region
  $region14: #{clagnosco_autoencoder_forward.14} parent=0 // pred_check
    %p16 = pneg %p15
  $region15: #{clagnosco_autoencoder_forward.14} parent=0 // pred_check_branch
    %18 = sbr.rel (%p16) target = $region17
  $region16: #{clagnosco_autoencoder_forward.14} parent=0 // pred_region
    %19 = vst [vmem:[#allocation2] sm:$0xff] 0.0
    %20 = vst [vmem:[#allocation2 + $0x8] sm:$0xff] 0.0
  $region17: #{clagnosco_autoencoder_forward.14} parent=0 // pred_fallthru
    _
  %v21 = vld [vmem:[#allocation2] sm:$0xff]
  %v22 = vld [vmem:[#allocation2 + $0x8] sm:$0xff]
  %v23 = vld [vmem:[%s0] sm:$0xff]
  %v24 = vld [vmem:[%s0 + $0x8] sm:$0xff]
  %v25 = vld [vmem:[%s0 + $0x10] sm:$0xff]
  %v26 = vld [vmem:[%s0 + $0x18] sm:$0xff]
  %v27 = vld [vmem:[%s1] sm:$0xf]
  %v28 = vld [vmem:[%s1 + $0x4] sm:$0xf]
  %v29 = vld [vmem:[%s1 + $0x8] sm:$0xf]
  %v30 = vld [vmem:[%s1 + $0xc] sm:$0xf]
  %v31 = vld [vmem:[%s1 + $0x10] sm:$0xf]
  %v32 = vld [vmem:[%s1 + $0x14] sm:$0xf]
  %v33 = vld [vmem:[%s1 + $0x18] sm:$0xf]
  %v34 = vld [vmem:[%s1 + $0x1c] sm:$0xf]
  %v35 = vld [vmem:[%s1 + $0x20] sm:$0xf]
  %v36 = vld [vmem:[%s1 + $0x24] sm:$0xf]
  %v37 = vld [vmem:[%s1 + $0x28] sm:$0xf]
  %v38 = vld [vmem:[%s1 + $0x2c] sm:$0xf]
  %v39 = vld [vmem:[%s1 + $0x30] sm:$0xf]
  %v40 = vld [vmem:[%s1 + $0x34] sm:$0xf]
  %v41 = vld [vmem:[%s1 + $0x38] sm:$0xf]
  %v42 = vld [vmem:[%s1 + $0x3c] sm:$0xf]
  %v43 = vld [vmem:[%s1 + $0x40] sm:$0xf]
  %v44 = vld [vmem:[%s1 + $0x44] sm:$0xf]
  %v45 = vld [vmem:[%s1 + $0x48] sm:$0xf]
  %v46 = vld [vmem:[%s1 + $0x4c] sm:$0xf]
  %v47 = vld [vmem:[%s1 + $0x50] sm:$0xf]
  %v48 = vld [vmem:[%s1 + $0x54] sm:$0xf]
  %v49 = vld [vmem:[%s1 + $0x58] sm:$0xf]
  %v50 = vld [vmem:[%s1 + $0x5c] sm:$0xf]
  %v51 = vld [vmem:[%s1 + $0x60] sm:$0xf]
  %v52 = vld [vmem:[%s1 + $0x64] sm:$0xf]
  %v53 = vld [vmem:[%s1 + $0x68] sm:$0xf]
  %v54 = vld [vmem:[%s1 + $0x6c] sm:$0xf]
  %v55 = vld [vmem:[%s1 + $0x70] sm:$0xf]
  %v56 = vld [vmem:[%s1 + $0x74] sm:$0xf]
  %v57 = vld [vmem:[%s1 + $0x78] sm:$0xf]
  %v58 = vld [vmem:[%s1 + $0x7c] sm:$0xf]
  %v59 = vld [vmem:[%s1 + $0x80] sm:$0xf]
  %v60 = vld [vmem:[%s1 + $0x84] sm:$0xf]
  %v61 = vld [vmem:[%s1 + $0x88] sm:$0xf]
  %v62 = vld [vmem:[%s1 + $0x8c] sm:$0xf]
  %v63 = vld [vmem:[%s1 + $0x90] sm:$0xf]
  %v64 = vld [vmem:[%s1 + $0x94] sm:$0xf]
  %v65 = vld [vmem:[%s1 + $0x98] sm:$0xf]
  %v66 = vld [vmem:[%s1 + $0x9c] sm:$0xf]
  %v67 = vld [vmem:[%s1 + $0xa0] sm:$0xf]
  %v68 = vld [vmem:[%s1 + $0xa4] sm:$0xf]
  %v69 = vld [vmem:[%s1 + $0xa8] sm:$0xf]
  %v70 = vld [vmem:[%s1 + $0xac] sm:$0xf]
  %v71 = vld [vmem:[%s1 + $0xb0] sm:$0xf]
  %v72 = vld [vmem:[%s1 + $0xb4] sm:$0xf]
  %v73 = vld [vmem:[%s1 + $0xb8] sm:$0xf]
  %v74 = vld [vmem:[%s1 + $0xbc] sm:$0xf]
  %v75 = vld [vmem:[%s1 + $0xc0] sm:$0xf]
  %v76 = vld [vmem:[%s1 + $0xc4] sm:$0xf]
  %v77 = vld [vmem:[%s1 + $0xc8] sm:$0xf]
  %v78 = vld [vmem:[%s1 + $0xcc] sm:$0xf]
  %v79 = vld [vmem:[%s1 + $0xd0] sm:$0xf]
  %v80 = vld [vmem:[%s1 + $0xd4] sm:$0xf]
  %v81 = vld [vmem:[%s1 + $0xd8] sm:$0xf]
  %v82 = vld [vmem:[%s1 + $0xdc] sm:$0xf]
  %v83 = vld [vmem:[%s1 + $0xe0] sm:$0xf]
  %v84 = vld [vmem:[%s1 + $0xe4] sm:$0xf]
  %v85 = vld [vmem:[%s1 + $0xe8] sm:$0xf]
  %v86 = vld [vmem:[%s1 + $0xec] sm:$0xf]
  %v87 = vld [vmem:[%s1 + $0xf0] sm:$0xf]
  %v88 = vld [vmem:[%s1 + $0xf4] sm:$0xf]
  %v89 = vld [vmem:[%s1 + $0xf8] sm:$0xf]
  %v90 = vld [vmem:[%s1 + $0xfc] sm:$0xf]
  %v95 = vunpack.c.l.b16 %v23
  %v96 = vunpack.c.h.b16 %v23
  %v97 = vunpack.c.l.b16 %v24
  %v98 = vunpack.c.h.b16 %v24
  %v99 = vunpack.c.l.b16 %v25
  %v100 = vunpack.c.h.b16 %v25
  %v101 = vunpack.c.l.b16 %v26
  %v102 = vunpack.c.h.b16 %v26
  %v103 = vpack.c.b16 %v99, %v95
  %v104 = vpack.c.b16 %v100, %v96
  %v105 = vpack.c.b16 %v101, %v97
  %v106 = vpack.c.b16 %v102, %v98
  %v175 = vunpack.c.l.b16 %v27
  %v176 = vunpack.c.l.b16 %v28
  %v177 = vunpack.c.l.b16 %v29
  %v178 = vunpack.c.l.b16 %v30
  %v179 = vunpack.c.l.b16 %v31
  %v180 = vunpack.c.l.b16 %v32
  %v181 = vunpack.c.l.b16 %v33
  %v182 = vunpack.c.l.b16 %v34
  %v183 = vunpack.c.l.b16 %v35
  %v184 = vunpack.c.l.b16 %v36
  %v185 = vunpack.c.l.b16 %v37
  %v186 = vunpack.c.l.b16 %v38
  %v187 = vunpack.c.l.b16 %v39
  %v188 = vunpack.c.l.b16 %v40
  %v189 = vunpack.c.l.b16 %v41
  %v190 = vunpack.c.l.b16 %v42
  %v191 = vunpack.c.l.b16 %v43
  %v192 = vunpack.c.l.b16 %v44
  %v193 = vunpack.c.l.b16 %v45
  %v194 = vunpack.c.l.b16 %v46
  %v195 = vunpack.c.l.b16 %v47
  %v196 = vunpack.c.l.b16 %v48
  %v197 = vunpack.c.l.b16 %v49
  %v198 = vunpack.c.l.b16 %v50
  %v199 = vunpack.c.l.b16 %v51
  %v200 = vunpack.c.l.b16 %v52
  %v201 = vunpack.c.l.b16 %v53
  %v202 = vunpack.c.l.b16 %v54
  %v203 = vunpack.c.l.b16 %v55
  %v204 = vunpack.c.l.b16 %v56
  %v205 = vunpack.c.l.b16 %v57
  %v206 = vunpack.c.l.b16 %v58
  %v207 = vunpack.c.l.b16 %v59
  %v208 = vunpack.c.l.b16 %v60
  %v209 = vunpack.c.l.b16 %v61
  %v210 = vunpack.c.l.b16 %v62
  %v211 = vunpack.c.l.b16 %v63
  %v212 = vunpack.c.l.b16 %v64
  %v213 = vunpack.c.l.b16 %v65
  %v214 = vunpack.c.l.b16 %v66
  %v215 = vunpack.c.l.b16 %v67
  %v216 = vunpack.c.l.b16 %v68
  %v217 = vunpack.c.l.b16 %v69
  %v218 = vunpack.c.l.b16 %v70
  %v219 = vunpack.c.l.b16 %v71
  %v220 = vunpack.c.l.b16 %v72
  %v221 = vunpack.c.l.b16 %v73
  %v222 = vunpack.c.l.b16 %v74
  %v223 = vunpack.c.l.b16 %v75
  %v224 = vunpack.c.l.b16 %v76
  %v225 = vunpack.c.l.b16 %v77
  %v226 = vunpack.c.l.b16 %v78
  %v227 = vunpack.c.l.b16 %v79
  %v228 = vunpack.c.l.b16 %v80
  %v229 = vunpack.c.l.b16 %v81
  %v230 = vunpack.c.l.b16 %v82
  %v231 = vunpack.c.l.b16 %v83
  %v232 = vunpack.c.l.b16 %v84
  %v233 = vunpack.c.l.b16 %v85
  %v234 = vunpack.c.l.b16 %v86
  %v235 = vunpack.c.l.b16 %v87
  %v236 = vunpack.c.l.b16 %v88
  %v237 = vunpack.c.l.b16 %v89
  %v238 = vunpack.c.l.b16 %v90
  %v239 = vpack.c.b16 %v176, %v175
  %v240 = vpack.c.b16 %v178, %v177
  %v241 = vpack.c.b16 %v180, %v179
  %v242 = vpack.c.b16 %v182, %v181
  %v243 = vpack.c.b16 %v184, %v183
  %v244 = vpack.c.b16 %v186, %v185
  %v245 = vpack.c.b16 %v188, %v187
  %v246 = vpack.c.b16 %v190, %v189
  %v247 = vpack.c.b16 %v192, %v191
  %v248 = vpack.c.b16 %v194, %v193
  %v249 = vpack.c.b16 %v196, %v195
  %v250 = vpack.c.b16 %v198, %v197
  %v251 = vpack.c.b16 %v200, %v199
  %v252 = vpack.c.b16 %v202, %v201
  %v253 = vpack.c.b16 %v204, %v203
  %v254 = vpack.c.b16 %v206, %v205
  %v255 = vpack.c.b16 %v208, %v207
  %v256 = vpack.c.b16 %v210, %v209
  %v257 = vpack.c.b16 %v212, %v211
  %v258 = vpack.c.b16 %v214, %v213
  %v259 = vpack.c.b16 %v216, %v215
  %v260 = vpack.c.b16 %v218, %v217
  %v261 = vpack.c.b16 %v220, %v219
  %v262 = vpack.c.b16 %v222, %v221
  %v263 = vpack.c.b16 %v224, %v223
  %v264 = vpack.c.b16 %v226, %v225
  %v265 = vpack.c.b16 %v228, %v227
  %v266 = vpack.c.b16 %v230, %v229
  %v267 = vpack.c.b16 %v232, %v231
  %v268 = vpack.c.b16 %v234, %v233
  %v269 = vpack.c.b16 %v236, %v235
  %v270 = vpack.c.b16 %v238, %v237
  %303 = vmatprep.subr.bf16.mxu0 0
  %304 = vmatpush1.bf16.msra.mxu0 %v239
  %305 = vmatprep.subr.bf16.mxu0 0
  %306 = vmatpush1.bf16.msra.mxu0 %v240
  %307 = vmatprep.subr.bf16.mxu0 0
  %308 = vmatpush1.bf16.msra.mxu0 %v241
  %309 = vmatprep.subr.bf16.mxu0 0
  %310 = vmatpush1.bf16.msra.mxu0 %v242
  %311 = vmatprep.subr.bf16.mxu0 0
  %312 = vmatpush1.bf16.msra.mxu0 %v243
  %313 = vmatprep.subr.bf16.mxu0 0
  %314 = vmatpush1.bf16.msra.mxu0 %v244
  %315 = vmatprep.subr.bf16.mxu0 0
  %316 = vmatpush1.bf16.msra.mxu0 %v245
  %317 = vmatprep.subr.bf16.mxu0 0
  %318 = vmatpush1.bf16.msra.mxu0 %v246
  %319 = vmatprep.subr.bf16.mxu0 0
  %320 = vmatpush1.bf16.msra.mxu0 %v247
  %321 = vmatprep.subr.bf16.mxu0 0
  %322 = vmatpush1.bf16.msra.mxu0 %v248
  %323 = vmatprep.subr.bf16.mxu0 0
  %324 = vmatpush1.bf16.msra.mxu0 %v249
  %325 = vmatprep.subr.bf16.mxu0 0
  %326 = vmatpush1.bf16.msra.mxu0 %v250
  %327 = vmatprep.subr.bf16.mxu0 0
  %328 = vmatpush1.bf16.msra.mxu0 %v251
  %329 = vmatprep.subr.bf16.mxu0 0
  %330 = vmatpush1.bf16.msra.mxu0 %v252
  %331 = vmatprep.subr.bf16.mxu0 0
  %332 = vmatpush1.bf16.msra.mxu0 %v253
  %333 = vmatprep.subr.bf16.mxu0 0
  %334 = vmatpush1.bf16.msra.mxu0 %v254
  %335 = vmatprep.mubr.bf16.mxu0 %v104
  %336 = vmatmul.mubr.bf16.gmra.mrb[0].mxu0 %v103
  %v337 = vpop.f32.mrb[0].mxu0
  %v338 = vadd.f32 0.0, %v337
  %v339 = vpop.f32.mrb[0].mxu0
  %v340 = vpop.f32.mrb[0].mxu0
  %v341 = vadd.f32 0.0, %v340
  %v342 = vpop.f32.mrb[0].mxu0
  %343 = vdwg.mxu0
  %344 = vmatprep.subr.bf16.mxu0 0
  %345 = vmatpush1.bf16.msra.mxu0 %v255
  %346 = vmatprep.subr.bf16.mxu0 0
  %347 = vmatpush1.bf16.msra.mxu0 %v256
  %348 = vmatprep.subr.bf16.mxu0 0
  %349 = vmatpush1.bf16.msra.mxu0 %v257
  %350 = vmatprep.subr.bf16.mxu0 0
  %351 = vmatpush1.bf16.msra.mxu0 %v258
  %352 = vmatprep.subr.bf16.mxu0 0
  %353 = vmatpush1.bf16.msra.mxu0 %v259
  %354 = vmatprep.subr.bf16.mxu0 0
  %355 = vmatpush1.bf16.msra.mxu0 %v260
  %356 = vmatprep.subr.bf16.mxu0 0
  %357 = vmatpush1.bf16.msra.mxu0 %v261
  %358 = vmatprep.subr.bf16.mxu0 0
  %359 = vmatpush1.bf16.msra.mxu0 %v262
  %360 = vmatprep.subr.bf16.mxu0 0
  %361 = vmatpush1.bf16.msra.mxu0 %v263
  %362 = vmatprep.subr.bf16.mxu0 0
  %363 = vmatpush1.bf16.msra.mxu0 %v264
  %364 = vmatprep.subr.bf16.mxu0 0
  %365 = vmatpush1.bf16.msra.mxu0 %v265
  %366 = vmatprep.subr.bf16.mxu0 0
  %367 = vmatpush1.bf16.msra.mxu0 %v266
  %368 = vmatprep.subr.bf16.mxu0 0
  %369 = vmatpush1.bf16.msra.mxu0 %v267
  %370 = vmatprep.subr.bf16.mxu0 0
  %371 = vmatpush1.bf16.msra.mxu0 %v268
  %372 = vmatprep.subr.bf16.mxu0 0
  %373 = vmatpush1.bf16.msra.mxu0 %v269
  %374 = vmatprep.subr.bf16.mxu0 0
  %375 = vmatpush1.bf16.msra.mxu0 %v270
  %376 = vmatprep.mubr.bf16.mxu0 %v106
  %377 = vmatmul.mubr.bf16.gmra.mrb[0].mxu0 %v105
  %v378 = vpop.f32.mrb[0].mxu0
  %v379 = vadd.f32 %v338, %v378
  %v380 = vpop.f32.mrb[0].mxu0
  %v381 = vpop.f32.mrb[0].mxu0
  %v382 = vadd.f32 %v341, %v381
  %v383 = vpop.f32.mrb[0].mxu0
  %384 = vdwg.mxu0
  %v385 = vadd.f32 %v21, %v379
  %v386 = vadd.f32 %v22, %v382
  %387 = vst [vmem:[#allocation2] sm:$0xff] %v385
  %388 = vst [vmem:[#allocation2 + $0x8] sm:$0xff] %v386
  // Predicated region
  $region18: #{clagnosco_autoencoder_forward.14} parent=0 // pred_check
    %p389 = pneg %p15
  $region19: #{clagnosco_autoencoder_forward.14} parent=0 // pred_check_branch
    %391 = sbr.rel (%p389) target = $region21
  $region20: #{clagnosco_autoencoder_forward.14} parent=0 // pred_region
    %v392 = vld [vmem:[#allocation2] sm:$0xff]
    %v393 = vld [vmem:[#allocation2 + $0x8] sm:$0xff]
    %v394 = vld [vmem:[%s2] sm:$0x1]
    %v396 = vlaneseq
    %v397 = vshrl.u32 %v396, 7
    %v398 = vsub.s32 0, %v397
    %v399 = vrot.slane %v394, %v398
    %v401 = vadd.f32 %v392, %v399
    %v402 = vadd.f32 %v393, %v399
    %vm403 = vcmp.ge.f32.partialorder %v401, 0.0
    %vm404 = vcmp.ge.f32.partialorder %v402, 0.0
    %v405 = vmul.f32 %v401, 0.01
    %v406 = vmul.f32 %v402, 0.01
    %v407 = vsel %vm403, %v401, %v405
    %v408 = vsel %vm404, %v402, %v406
    %409 = vst [vmem:[%s3] sm:$0xff] %v407
    %410 = vst [vmem:[%s3 + $0x8] sm:$0xff] %v408
  $region21: #{clagnosco_autoencoder_forward.14} parent=0 // pred_fallthru
    _
  // Predicated region
  $region22: #{clagnosco_autoencoder_forward.14} parent=0 // pred_check
    _
  $region23: #{clagnosco_autoencoder_forward.14} parent=0 // pred_check_branch
    %412 = sbr.rel (0) target = $region25
  $region24: #{clagnosco_autoencoder_forward.14} parent=0 // pred_region
    _
  $region25: #{clagnosco_autoencoder_forward.14} parent=0 // pred_fallthru
    _
  // Predicated region
  $region26: #{clagnosco_autoencoder_forward.14} parent=0 // pred_check
    _
  $region27: #{clagnosco_autoencoder_forward.14} parent=0 // pred_check_branch
    %414 = sbr.rel (0) target = $region29
  $region28: #{clagnosco_autoencoder_forward.14} parent=0 // pred_region
    _
  $region29: #{clagnosco_autoencoder_forward.14} parent=0 // pred_fallthru
    _

// kernel: clagnosco_autoencoder_forward.15
$region0: #{clagnosco_autoencoder_forward.15}
  #allocation0 [shape = 'u32[]', space=smem, size = 0x4, offset = 0x4, fixed_abs, tag = 'smem constant byte address 0x4 - core index']
  #allocation1 [shape = 'u32[144,128]{1,0:T(1,128)}', space=vmem, size = 0x12000, scoped, tag = 'internal scratch']
  #allocation2 [shape = 'f32[16,128]{1,0:T(8,128)}', space=vmem, size = 0x2000, scoped, tag = 'scratch operand']
  %s0 = inlined_call_operand.vmem [shape: bf16[1,16,128], index: 0, kind: input, shape index: {}]
  %s1 = inlined_call_operand.vmem [shape: bf16[1,128,128], index: 1, kind: input, shape index: {}]
  %s2 = inlined_call_operand.vmem [shape: f32[1,1,128], index: 2, kind: input, shape index: {}]
  %s3 = inlined_call_operand.vmem [shape: f32[1,16,128], index: 3, kind: output, shape index: {}]
  %s4 = sld [smem:[#allocation0]]
  $region30: #{clagnosco_autoencoder_forward.15} parent=0
    _
  %s6 = ssub.s32 1, %s4
  %s7 = scalar_select 0, %s6, %s4
  // Predicated region
  $region2: #{clagnosco_autoencoder_forward.15} parent=0 // pred_check
    _
  $region3: #{clagnosco_autoencoder_forward.15} parent=0 // pred_check_branch
    %9 = sbr.rel (0) target = $region5
  $region4: #{clagnosco_autoencoder_forward.15} parent=0 // pred_region
    _
  $region5: #{clagnosco_autoencoder_forward.15} parent=0 // pred_fallthru
    _
  // Predicated region
  $region6: #{clagnosco_autoencoder_forward.15} parent=0 // pred_check
    _
  $region7: #{clagnosco_autoencoder_forward.15} parent=0 // pred_check_branch
    %11 = sbr.rel (0) target = $region9
  $region8: #{clagnosco_autoencoder_forward.15} parent=0 // pred_region
    _
  $region9: #{clagnosco_autoencoder_forward.15} parent=0 // pred_fallthru
    _
  // Predicated region
  $region10: #{clagnosco_autoencoder_forward.15} parent=0 // pred_check
    _
  $region11: #{clagnosco_autoencoder_forward.15} parent=0 // pred_check_branch
    %13 = sbr.rel (0) target = $region13
  $region12: #{clagnosco_autoencoder_forward.15} parent=0 // pred_region
    _
  $region13: #{clagnosco_autoencoder_forward.15} parent=0 // pred_fallthru
    _
  %p15 = scmp.eq.s32.totalorder 0, 0
  // Predicated region
  $region14: #{clagnosco_autoencoder_forward.15} parent=0 // pred_check
    %p16 = pneg %p15
  $region15: #{clagnosco_autoencoder_forward.15} parent=0 // pred_check_branch
    %18 = sbr.rel (%p16) target = $region17
  $region16: #{clagnosco_autoencoder_forward.15} parent=0 // pred_region
    %19 = vst [vmem:[#allocation2] sm:$0xff] 0.0
    %20 = vst [vmem:[#allocation2 + $0x8] sm:$0xff] 0.0
  $region17: #{clagnosco_autoencoder_forward.15} parent=0 // pred_fallthru
    _
  %v21 = vld [vmem:[#allocation2] sm:$0xff]
  %v22 = vld [vmem:[#allocation2 + $0x8] sm:$0xff]
  %v23 = vld [vmem:[%s0] sm:$0xf]
  %v24 = vld [vmem:[%s0 + $0x4] sm:$0xf]
  %v25 = vld [vmem:[%s1] sm:$0xf]
  %v26 = vld [vmem:[%s1 + $0x4] sm:$0xf]
  %v27 = vld [vmem:[%s1 + $0x8] sm:$0xf]
  %v28 = vld [vmem:[%s1 + $0xc] sm:$0xf]
  %v29 = vld [vmem:[%s1 + $0x10] sm:$0xf]
  %v30 = vld [vmem:[%s1 + $0x14] sm:$0xf]
  %v31 = vld [vmem:[%s1 + $0x18] sm:$0xf]
  %v32 = vld [vmem:[%s1 + $0x1c] sm:$0xf]
  %v33 = vld [vmem:[%s1 + $0x20] sm:$0xf]
  %v34 = vld [vmem:[%s1 + $0x24] sm:$0xf]
  %v35 = vld [vmem:[%s1 + $0x28] sm:$0xf]
  %v36 = vld [vmem:[%s1 + $0x2c] sm:$0xf]
  %v37 = vld [vmem:[%s1 + $0x30] sm:$0xf]
  %v38 = vld [vmem:[%s1 + $0x34] sm:$0xf]
  %v39 = vld [vmem:[%s1 + $0x38] sm:$0xf]
  %v40 = vld [vmem:[%s1 + $0x3c] sm:$0xf]
  %v43 = vunpack.c.l.b16 %v23
  %v44 = vunpack.c.l.b16 %v24
  %v45 = vpack.c.b16 %v44, %v43
  %v63 = vunpack.c.l.b16 %v25
  %v64 = vunpack.c.l.b16 %v26
  %v65 = vunpack.c.l.b16 %v27
  %v66 = vunpack.c.l.b16 %v28
  %v67 = vunpack.c.l.b16 %v29
  %v68 = vunpack.c.l.b16 %v30
  %v69 = vunpack.c.l.b16 %v31
  %v70 = vunpack.c.l.b16 %v32
  %v71 = vunpack.c.l.b16 %v33
  %v72 = vunpack.c.l.b16 %v34
  %v73 = vunpack.c.l.b16 %v35
  %v74 = vunpack.c.l.b16 %v36
  %v75 = vunpack.c.l.b16 %v37
  %v76 = vunpack.c.l.b16 %v38
  %v77 = vunpack.c.l.b16 %v39
  %v78 = vunpack.c.l.b16 %v40
  %v79 = vpack.c.b16 %v64, %v63
  %v80 = vpack.c.b16 %v66, %v65
  %v81 = vpack.c.b16 %v68, %v67
  %v82 = vpack.c.b16 %v70, %v69
  %v83 = vpack.c.b16 %v72, %v71
  %v84 = vpack.c.b16 %v74, %v73
  %v85 = vpack.c.b16 %v76, %v75
  %v86 = vpack.c.b16 %v78, %v77
  %95 = vmatprep.subr.bf16.mxu0 0
  %96 = vmatpush1.bf16.msra.mxu0 %v79
  %97 = vmatprep.subr.bf16.mxu0 0
  %98 = vmatpush1.bf16.msra.mxu0 %v80
  %99 = vmatprep.subr.bf16.mxu0 0
  %100 = vmatpush1.bf16.msra.mxu0 %v81
  %101 = vmatprep.subr.bf16.mxu0 0
  %102 = vmatpush1.bf16.msra.mxu0 %v82
  %103 = vmatprep.subr.bf16.mxu0 0
  %104 = vmatpush1.bf16.msra.mxu0 %v83
  %105 = vmatprep.subr.bf16.mxu0 0
  %106 = vmatpush1.bf16.msra.mxu0 %v84
  %107 = vmatprep.subr.bf16.mxu0 0
  %108 = vmatpush1.bf16.msra.mxu0 %v85
  %109 = vmatprep.subr.bf16.mxu0 0
  %110 = vmatpush1.bf16.msra.mxu0 %v86
  %111 = vmatprep.subr.bf16.mxu0 0
  %112 = vmatpush1.bf16.msra.mxu0 0
  %113 = vmatprep.subr.bf16.mxu0 0
  %114 = vmatpush1.bf16.msra.mxu0 0
  %115 = vmatprep.subr.bf16.mxu0 0
  %116 = vmatpush1.bf16.msra.mxu0 0
  %117 = vmatprep.subr.bf16.mxu0 0
  %118 = vmatpush1.bf16.msra.mxu0 0
  %119 = vmatprep.subr.bf16.mxu0 0
  %120 = vmatpush1.bf16.msra.mxu0 0
  %121 = vmatprep.subr.bf16.mxu0 0
  %122 = vmatpush1.bf16.msra.mxu0 0
  %123 = vmatprep.subr.bf16.mxu0 0
  %124 = vmatpush1.bf16.msra.mxu0 0
  %125 = vmatprep.subr.bf16.mxu0 0
  %126 = vmatpush1.bf16.msra.mxu0 0
  %127 = vmatprep.mubr.bf16.mxu0 0
  %128 = vmatmul.mubr.bf16.gmra.mrb[0].mxu0 %v45
  %v129 = vpop.f32.mrb[0].mxu0
  %v130 = vadd.f32 0.0, %v129
  %v131 = vpop.f32.mrb[0].mxu0
  %v132 = vpop.f32.mrb[0].mxu0
  %v133 = vadd.f32 0.0, %v132
  %v134 = vpop.f32.mrb[0].mxu0
  %135 = vdwg.mxu0
  %v136 = vadd.f32 %v21, %v130
  %v137 = vadd.f32 %v22, %v133
  %138 = vst [vmem:[#allocation2] sm:$0xff] %v136
  %139 = vst [vmem:[#allocation2 + $0x8] sm:$0xff] %v137
  // Predicated region
  $region18: #{clagnosco_autoencoder_forward.15} parent=0 // pred_check
    %p140 = pneg %p15
  $region19: #{clagnosco_autoencoder_forward.15} parent=0 // pred_check_branch
    %142 = sbr.rel (%p140) target = $region21
  $region20: #{clagnosco_autoencoder_forward.15} parent=0 // pred_region
    %v143 = vld [vmem:[#allocation2] sm:$0xff]
    %v144 = vld [vmem:[#allocation2 + $0x8] sm:$0xff]
    %v145 = vld [vmem:[%s2] sm:$0x1]
    %v147 = vlaneseq
    %v148 = vshrl.u32 %v147, 7
    %v149 = vsub.s32 0, %v148
    %v150 = vrot.slane %v145, %v149
    %v152 = vadd.f32 %v143, %v150
    %v153 = vadd.f32 %v144, %v150
    %154 = vst [vmem:[%s3] sm:$0xff] %v152
    %155 = vst [vmem:[%s3 + $0x8] sm:$0xff] %v153
  $region21: #{clagnosco_autoencoder_forward.15} parent=0 // pred_fallthru
    _
  // Predicated region
  $region22: #{clagnosco_autoencoder_forward.15} parent=0 // pred_check
    _
  $region23: #{clagnosco_autoencoder_forward.15} parent=0 // pred_check_branch
    %157 = sbr.rel (0) target = $region25
  $region24: #{clagnosco_autoencoder_forward.15} parent=0 // pred_region
    _
  $region25: #{clagnosco_autoencoder_forward.15} parent=0 // pred_fallthru
    _
  // Predicated region
  $region26: #{clagnosco_autoencoder_forward.15} parent=0 // pred_check
    _
  $region27: #{clagnosco_autoencoder_forward.15} parent=0 // pred_check_branch
    %159 = sbr.rel (0) target = $region29
  $region28: #{clagnosco_autoencoder_forward.15} parent=0 // pred_region
    _
  $region29: #{clagnosco_autoencoder_forward.15} parent=0 // pred_fallthru
    _

// kernel: clagnosco_autoencoder_forward.16
$region0: #{clagnosco_autoencoder_forward.16}
  #allocation0 [shape = 'u32[]', space=smem, size = 0x4, offset = 0x4, fixed_abs, tag = 'smem constant byte address 0x4 - core index']
  #allocation1 [shape = 'u32[144,128]{1,0:T(1,128)}', space=vmem, size = 0x12000, scoped, tag = 'internal scratch']
  #allocation2 [shape = 'f32[16,256]{1,0:T(8,128)}', space=vmem, size = 0x4000, scoped, tag = 'scratch operand']
  %s0 = inlined_call_operand.vmem [shape: bf16[1,16,128], index: 0, kind: input, shape index: {}]
  %s1 = inlined_call_operand.vmem [shape: bf16[1,128,256], index: 1, kind: input, shape index: {}]
  %s2 = inlined_call_operand.vmem [shape: f32[1,1,256], index: 2, kind: input, shape index: {}]
  %s3 = inlined_call_operand.vmem [shape: f32[1,16,256], index: 3, kind: output, shape index: {}]
  %s4 = sld [smem:[#allocation0]]
  $region30: #{clagnosco_autoencoder_forward.16} parent=0
    _
  %s6 = ssub.s32 1, %s4
  %s7 = scalar_select 0, %s6, %s4
  // Predicated region
  $region2: #{clagnosco_autoencoder_forward.16} parent=0 // pred_check
    _
  $region3: #{clagnosco_autoencoder_forward.16} parent=0 // pred_check_branch
    %9 = sbr.rel (0) target = $region5
  $region4: #{clagnosco_autoencoder_forward.16} parent=0 // pred_region
    _
  $region5: #{clagnosco_autoencoder_forward.16} parent=0 // pred_fallthru
    _
  // Predicated region
  $region6: #{clagnosco_autoencoder_forward.16} parent=0 // pred_check
    _
  $region7: #{clagnosco_autoencoder_forward.16} parent=0 // pred_check_branch
    %11 = sbr.rel (0) target = $region9
  $region8: #{clagnosco_autoencoder_forward.16} parent=0 // pred_region
    _
  $region9: #{clagnosco_autoencoder_forward.16} parent=0 // pred_fallthru
    _
  // Predicated region
  $region10: #{clagnosco_autoencoder_forward.16} parent=0 // pred_check
    _
  $region11: #{clagnosco_autoencoder_forward.16} parent=0 // pred_check_branch
    %13 = sbr.rel (0) target = $region13
  $region12: #{clagnosco_autoencoder_forward.16} parent=0 // pred_region
    _
  $region13: #{clagnosco_autoencoder_forward.16} parent=0 // pred_fallthru
    _
  %p15 = scmp.eq.s32.totalorder 0, 0
  // Predicated region
  $region14: #{clagnosco_autoencoder_forward.16} parent=0 // pred_check
    %p16 = pneg %p15
  $region15: #{clagnosco_autoencoder_forward.16} parent=0 // pred_check_branch
    %18 = sbr.rel (%p16) target = $region17
  $region16: #{clagnosco_autoencoder_forward.16} parent=0 // pred_region
    %19 = vst [vmem:[#allocation2] sm:$0xff] 0.0
    %20 = vst [vmem:[#allocation2 + $0x8] sm:$0xff] 0.0
    %21 = vst [vmem:[#allocation2 + $0x10] sm:$0xff] 0.0
    %22 = vst [vmem:[#allocation2 + $0x18] sm:$0xff] 0.0
  $region17: #{clagnosco_autoencoder_forward.16} parent=0 // pred_fallthru
    _
  %v23 = vld [vmem:[#allocation2] sm:$0xff]
  %v24 = vld [vmem:[#allocation2 + $0x8] sm:$0xff]
  %v25 = vld [vmem:[#allocation2 + $0x10] sm:$0xff]
  %v26 = vld [vmem:[#allocation2 + $0x18] sm:$0xff]
  %v27 = vld [vmem:[%s0] sm:$0xf]
  %v28 = vld [vmem:[%s0 + $0x4] sm:$0xf]
  %v29 = vld [vmem:[%s1] sm:$0xff]
  %v30 = vld [vmem:[%s1 + $0x8] sm:$0xff]
  %v31 = vld [vmem:[%s1 + $0x10] sm:$0xff]
  %v32 = vld [vmem:[%s1 + $0x18] sm:$0xff]
  %v33 = vld [vmem:[%s1 + $0x20] sm:$0xff]
  %v34 = vld [vmem:[%s1 + $0x28] sm:$0xff]
  %v35 = vld [vmem:[%s1 + $0x30] sm:$0xff]
  %v36 = vld [vmem:[%s1 + $0x38] sm:$0xff]
  %v37 = vld [vmem:[%s1 + $0x40] sm:$0xff]
  %v38 = vld [vmem:[%s1 + $0x48] sm:$0xff]
  %v39 = vld [vmem:[%s1 + $0x50] sm:$0xff]
  %v40 = vld [vmem:[%s1 + $0x58] sm:$0xff]
  %v41 = vld [vmem:[%s1 + $0x60] sm:$0xff]
  %v42 = vld [vmem:[%s1 + $0x68] sm:$0xff]
  %v43 = vld [vmem:[%s1 + $0x70] sm:$0xff]
  %v44 = vld [vmem:[%s1 + $0x78] sm:$0xff]
  %v47 = vunpack.c.l.b16 %v27
  %v48 = vunpack.c.l.b16 %v28
  %v49 = vpack.c.b16 %v48, %v47
  %v67 = vunpack.c.l.b16 %v29
  %v68 = vunpack.c.h.b16 %v29
  %v69 = vunpack.c.l.b16 %v30
  %v70 = vunpack.c.h.b16 %v30
  %v71 = vunpack.c.l.b16 %v31
  %v72 = vunpack.c.h.b16 %v31
  %v73 = vunpack.c.l.b16 %v32
  %v74 = vunpack.c.h.b16 %v32
  %v75 = vunpack.c.l.b16 %v33
  %v76 = vunpack.c.h.b16 %v33
  %v77 = vunpack.c.l.b16 %v34
  %v78 = vunpack.c.h.b16 %v34
  %v79 = vunpack.c.l.b16 %v35
  %v80 = vunpack.c.h.b16 %v35
  %v81 = vunpack.c.l.b16 %v36
  %v82 = vunpack.c.h.b16 %v36
  %v83 = vunpack.c.l.b16 %v37
  %v84 = vunpack.c.h.b16 %v37
  %v85 = vunpack.c.l.b16 %v38
  %v86 = vunpack.c.h.b16 %v38
  %v87 = vunpack.c.l.b16 %v39
  %v88 = vunpack.c.h.b16 %v39
  %v89 = vunpack.c.l.b16 %v40
  %v90 = vunpack.c.h.b16 %v40
  %v91 = vunpack.c.l.b16 %v41
  %v92 = vunpack.c.h.b16 %v41
  %v93 = vunpack.c.l.b16 %v42
  %v94 = vunpack.c.h.b16 %v42
  %v95 = vunpack.c.l.b16 %v43
  %v96 = vunpack.c.h.b16 %v43
  %v97 = vunpack.c.l.b16 %v44
  %v98 = vunpack.c.h.b16 %v44
  %v99 = vpack.c.b16 %v69, %v67
  %v100 = vpack.c.b16 %v70, %v68
  %v101 = vpack.c.b16 %v73, %v71
  %v102 = vpack.c.b16 %v74, %v72
  %v103 = vpack.c.b16 %v77, %v75
  %v104 = vpack.c.b16 %v78, %v76
  %v105 = vpack.c.b16 %v81, %v79
  %v106 = vpack.c.b16 %v82, %v80
  %v107 = vpack.c.b16 %v85, %v83
  %v108 = vpack.c.b16 %v86, %v84
  %v109 = vpack.c.b16 %v89, %v87
  %v110 = vpack.c.b16 %v90, %v88
  %v111 = vpack.c.b16 %v93, %v91
  %v112 = vpack.c.b16 %v94, %v92
  %v113 = vpack.c.b16 %v97, %v95
  %v114 = vpack.c.b16 %v98, %v96
  %131 = vmatprep.subr.bf16.mxu0 %v100
  %132 = vmatpush1.bf16.msra.mxu0 %v99
  %133 = vmatprep.subr.bf16.mxu0 %v102
  %134 = vmatpush1.bf16.msra.mxu0 %v101
  %135 = vmatprep.subr.bf16.mxu0 %v104
  %136 = vmatpush1.bf16.msra.mxu0 %v103
  %137 = vmatprep.subr.bf16.mxu0 %v106
  %138 = vmatpush1.bf16.msra.mxu0 %v105
  %139 = vmatprep.subr.bf16.mxu0 %v108
  %140 = vmatpush1.bf16.msra.mxu0 %v107
  %141 = vmatprep.subr.bf16.mxu0 %v110
  %142 = vmatpush1.bf16.msra.mxu0 %v109
  %143 = vmatprep.subr.bf16.mxu0 %v112
  %144 = vmatpush1.bf16.msra.mxu0 %v111
  %145 = vmatprep.subr.bf16.mxu0 %v114
  %146 = vmatpush1.bf16.msra.mxu0 %v113
  %147 = vmatprep.subr.bf16.mxu0 0
  %148 = vmatpush1.bf16.msra.mxu0 0
  %149 = vmatprep.subr.bf16.mxu0 0
  %150 = vmatpush1.bf16.msra.mxu0 0
  %151 = vmatprep.subr.bf16.mxu0 0
  %152 = vmatpush1.bf16.msra.mxu0 0
  %153 = vmatprep.subr.bf16.mxu0 0
  %154 = vmatpush1.bf16.msra.mxu0 0
  %155 = vmatprep.subr.bf16.mxu0 0
  %156 = vmatpush1.bf16.msra.mxu0 0
  %157 = vmatprep.subr.bf16.mxu0 0
  %158 = vmatpush1.bf16.msra.mxu0 0
  %159 = vmatprep.subr.bf16.mxu0 0
  %160 = vmatpush1.bf16.msra.mxu0 0
  %161 = vmatprep.subr.bf16.mxu0 0
  %162 = vmatpush1.bf16.msra.mxu0 0
  %163 = vmatprep.mubr.bf16.mxu0 0
  %164 = vmatmul.mubr.bf16.gmra.mrb[0].mxu0 %v49
  %v165 = vpop.f32.mrb[0].mxu0
  %v166 = vadd.f32 0.0, %v165
  %v167 = vpop.f32.mrb[0].mxu0
  %v168 = vadd.f32 0.0, %v167
  %v169 = vpop.f32.mrb[0].mxu0
  %v170 = vadd.f32 0.0, %v169
  %v171 = vpop.f32.mrb[0].mxu0
  %v172 = vadd.f32 0.0, %v171
  %173 = vdwg.mxu0
  %v174 = vadd.f32 %v23, %v166
  %v175 = vadd.f32 %v24, %v168
  %v176 = vadd.f32 %v25, %v170
  %v177 = vadd.f32 %v26, %v172
  %178 = vst [vmem:[#allocation2] sm:$0xff] %v174
  %179 = vst [vmem:[#allocation2 + $0x8] sm:$0xff] %v175
  %180 = vst [vmem:[#allocation2 + $0x10] sm:$0xff] %v176
  %181 = vst [vmem:[#allocation2 + $0x18] sm:$0xff] %v177
  // Predicated region
  $region18: #{clagnosco_autoencoder_forward.16} parent=0 // pred_check
    %p182 = pneg %p15
  $region19: #{clagnosco_autoencoder_forward.16} parent=0 // pred_check_branch
    %184 = sbr.rel (%p182) target = $region21
  $region20: #{clagnosco_autoencoder_forward.16} parent=0 // pred_region
    %v185 = vld [vmem:[#allocation2] sm:$0xff]
    %v186 = vld [vmem:[#allocation2 + $0x8] sm:$0xff]
    %v187 = vld [vmem:[#allocation2 + $0x10] sm:$0xff]
    %v188 = vld [vmem:[#allocation2 + $0x18] sm:$0xff]
    %v189 = vld [vmem:[%s2] sm:$0x3]
    %v191 = vlaneseq
    %v192 = vshrl.u32 %v191, 7
    %v193 = vsub.s32 0, %v192
    %v194 = vrot.slane %v189, %v193
    %v195 = vlaneseq
    %v196 = vshrl.u32 %v195, 7
    %v197 = vsub.s32 1, %v196
    %v198 = vrot.slane %v189, %v197
    %v201 = vadd.f32 %v185, %v194
    %v202 = vadd.f32 %v186, %v198
    %v203 = vadd.f32 %v187, %v194
    %v204 = vadd.f32 %v188, %v198
    %vm205 = vcmp.ge.f32.partialorder %v201, 0.0
    %vm206 = vcmp.ge.f32.partialorder %v202, 0.0
    %vm207 = vcmp.ge.f32.partialorder %v203, 0.0
    %vm208 = vcmp.ge.f32.partialorder %v204, 0.0
    %v209 = vmul.f32 %v201, 0.01
    %v210 = vmul.f32 %v202, 0.01
    %v211 = vmul.f32 %v203, 0.01
    %v212 = vmul.f32 %v204, 0.01
    %v213 = vsel %vm205, %v201, %v209
    %v214 = vsel %vm206, %v202, %v210
    %v215 = vsel %vm207, %v203, %v211
    %v216 = vsel %vm208, %v204, %v212
    %217 = vst [vmem:[%s3] sm:$0xff] %v213
    %218 = vst [vmem:[%s3 + $0x8] sm:$0xff] %v214
    %219 = vst [vmem:[%s3 + $0x10] sm:$0xff] %v215
    %220 = vst [vmem:[%s3 + $0x18] sm:$0xff] %v216
  $region21: #{clagnosco_autoencoder_forward.16} parent=0 // pred_fallthru
    _
  // Predicated region
  $region22: #{clagnosco_autoencoder_forward.16} parent=0 // pred_check
    _
  $region23: #{clagnosco_autoencoder_forward.16} parent=0 // pred_check_branch
    %222 = sbr.rel (0) target = $region25
  $region24: #{clagnosco_autoencoder_forward.16} parent=0 // pred_region
    _
  $region25: #{clagnosco_autoencoder_forward.16} parent=0 // pred_fallthru
    _
  // Predicated region
  $region26: #{clagnosco_autoencoder_forward.16} parent=0 // pred_check
    _
  $region27: #{clagnosco_autoencoder_forward.16} parent=0 // pred_check_branch
    %224 = sbr.rel (0) target = $region29
  $region28: #{clagnosco_autoencoder_forward.16} parent=0 // pred_region
    _
  $region29: #{clagnosco_autoencoder_forward.16} parent=0 // pred_fallthru
    _

// kernel: tile.8
$region0: #{tile.8}
  #allocation0 [shape = 's32[1]{0}', space=sflag, size = 0x4, scoped, tag = 'scoped memory for tile.8']
  %s0 = inlined_call_operand.vmem [shape: f32[256], index: 0, kind: input, shape index: {}]
  %s1 = inlined_call_operand.vmem [shape: f32[4,256], index: 1, kind: output, shape index: {}]
  // Predicated region
  $region2: #{tile.8} parent=0 // pred_check
    _
  $region3: #{tile.8} parent=0 // pred_check_branch
    %3 = sbr.rel (0) target = $region5
  $region4: #{tile.8} parent=0 // pred_region
    _
  $region5: #{tile.8} parent=0 // pred_fallthru
    _
  %v4 = vld [vmem:[%s0] ss:$0 sm:$0xff]
  %5 = vst [vmem:[%s1] sm:$0xf] %v4
  %s6 = scalar_lea.vmem %s0, 1
  %v7 = vld [vmem:[%s6] ss:$0 sm:$0xff]
  %s8 = scalar_lea.vmem %s1, 4
  %9 = vst [vmem:[%s8] sm:$0xf] %v7

// kernel: clagnosco_autoencoder_forward.17
$region0: #{clagnosco_autoencoder_forward.17}
  #allocation0 [shape = 'u32[]', space=smem, size = 0x4, offset = 0x4, fixed_abs, tag = 'smem constant byte address 0x4 - core index']
  #allocation1 [shape = 'u32[144,128]{1,0:T(1,128)}', space=vmem, size = 0x12000, scoped, tag = 'internal scratch']
  #allocation2 [shape = 'f32[16,256]{1,0:T(8,128)}', space=vmem, size = 0x4000, scoped, tag = 'scratch operand']
  %s0 = inlined_call_operand.vmem [shape: bf16[1,16,256], index: 0, kind: input, shape index: {}]
  %s1 = inlined_call_operand.vmem [shape: bf16[1,256,1024], index: 1, kind: input, shape index: {}]
  %s2 = inlined_call_operand.vmem [shape: f32[1,1,1024], index: 2, kind: input, shape index: {}]
  %s3 = inlined_call_operand.vmem [shape: f32[1,16,1024], index: 3, kind: output, shape index: {}]
  %s4 = sld [smem:[#allocation0]]
  $region110: #{clagnosco_autoencoder_forward.17} parent=0
    _
  %s6 = ssub.s32 1, %s4
  %s7 = scalar_select 0, %s6, %s4
  $region1: #{clagnosco_autoencoder_forward.17} parent=0
    #allocation3 [shape = 'u8[262144]{0}', space=vmem, size = 0x40000, scoped, tag = 'input window, operand 1']
    #allocation4 [shape = 'u8[32768]{0}', space=vmem, size = 0x8000, scoped, tag = 'output window, operand 0']
    loop: start=0, step=1, limit=6
    $region2: #{clagnosco_autoencoder_forward.17} parent=1 // loop_pre_header
      _
    $region3: #{clagnosco_autoencoder_forward.17} parent=1 // loop_header
      %s9 = sphi 0, %s13
      %p10 = scmp.ge.s32.totalorder %s9, 6
      %s16 = sphi 0, %s42
      %s17 = sphi 0, %s38
      %s18 = sphi 0, %s34
      %s19 = sphi 0, %s30
      %s20 = sphi 0, %s16
      %s21 = sphi 0, %s17
      %s22 = sphi 0, %s18
      %s23 = sphi 0, %s19
      %s24 = sphi 0, %s20
      %s25 = sphi 0, %s21
      %s26 = sphi 0, %s22
      %s27 = sphi 0, %s23
      %s49 = sphi 0, %s51
      %s52 = sphi 0, %s49
      %s53 = sphi 0, %s52
      %s69 = sphi 0, %s53
      %s79 = sphi 0, %s81
      %s82 = sphi 0, %s79
      %s83 = sphi 0, %s82
      %s99 = sphi 0, %s83
      %s107 = sphi 0, %s109
      %s110 = sphi 0, %s107
      %s111 = sphi 0, %s110
      %s127 = sphi 0, %s111
      %s137 = sphi 0, %s139
      %s140 = sphi 0, %s137
      %s141 = sphi 0, %s140
      %s157 = sphi 0, %s141
    $region4: #{clagnosco_autoencoder_forward.17} parent=1 // loop_header_branch
      %12 = sbr.rel (%p10) target = $region8
    $region5: #{clagnosco_autoencoder_forward.17} parent=1 // loop_body
      %s14 = ssub.s32 %s9, 1
      %s15 = ssub.s32 %s9, 2
      %s28 = sadd.s32 1, %s19
      %p29 = scmp.ge.s32.totalorder %s28, 1
      %s30 = scalar_select %p29, 0, %s28
      %s31 = sadd.s32 1, %s18
      %s32 = scalar_select %p29, %s31, %s18
      %p33 = scmp.ge.s32.totalorder %s32, 4
      %s34 = scalar_select %p33, 0, %s32
      %s35 = sadd.s32 1, %s17
      %s36 = scalar_select %p33, %s35, %s17
      %p37 = scmp.ge.s32.totalorder %s36, 1
      %s38 = scalar_select %p37, 0, %s36
      %s39 = sadd.s32 1, %s16
      %s40 = scalar_select %p37, %s39, %s16
      %p41 = scmp.ge.s32.totalorder %s40, 1
      %s42 = scalar_select %p41, 0, %s40
      %s43 = ssub.s32 %s16, %s42
      %s44 = ssub.s32 %s17, %s38
      %s45 = sor.u32 %s43, %s44
      %s46 = ssub.s32 %s19, %s30
      %s47 = sor.u32 %s45, %s46
      %p48 = scmp.eq.s32.totalorder %s47, 0
      %s50 = sadd.s32 %s49, 1
      %s51 = scalar_select %p48, %s49, %s50
      %p54 = pneg %p48
      %p55 = scmp.eq.s32.totalorder %s9, 3
      %p56 = por %p54, %p55
      %p57 = scmp.ne.s32.totalorder %s49, %s52
      %p58 = scmp.eq.s32.totalorder %s9, 0
      %p59 = por %p57, %p58
      %p60 = scmp.ne.s32.totalorder %s49, %s52
      %p61 = scmp.eq.s32.totalorder %s14, 3
      %p62 = por %p60, %p61
      %p63 = scmp.ne.s32.totalorder %s52, %s53
      %p64 = scmp.eq.s32.totalorder %s14, 0
      %p65 = por %p63, %p64
      %p66 = scmp.ne.s32.totalorder %s52, %s53
      %p67 = scmp.eq.s32.totalorder %s15, 3
      %p68 = por %p66, %p67
      %p70 = scmp.ne.s32.totalorder %s53, %s69
      %p71 = scmp.eq.s32.totalorder %s15, 0
      %p72 = por %p70, %p71
      %s73 = ssub.s32 %s16, %s42
      %s74 = ssub.s32 %s19, %s30
      %s75 = sor.u32 %s73, %s74
      %s76 = ssub.s32 %s18, %s34
      %s77 = sor.u32 %s75, %s76
      %p78 = scmp.eq.s32.totalorder %s77, 0
      %s80 = sadd.s32 %s79, 1
      %s81 = scalar_select %p78, %s79, %s80
      %p84 = pneg %p78
      %p85 = scmp.eq.s32.totalorder %s9, 3
      %p86 = por %p84, %p85
      %p87 = scmp.ne.s32.totalorder %s79, %s82
      %p88 = scmp.eq.s32.totalorder %s9, 0
      %p89 = por %p87, %p88
      %p90 = scmp.ne.s32.totalorder %s79, %s82
      %p91 = scmp.eq.s32.totalorder %s14, 3
      %p92 = por %p90, %p91
      %p93 = scmp.ne.s32.totalorder %s82, %s83
      %p94 = scmp.eq.s32.totalorder %s14, 0
      %p95 = por %p93, %p94
      %p96 = scmp.ne.s32.totalorder %s82, %s83
      %p97 = scmp.eq.s32.totalorder %s15, 3
      %p98 = por %p96, %p97
      %p100 = scmp.ne.s32.totalorder %s83, %s99
      %p101 = scmp.eq.s32.totalorder %s15, 0
      %p102 = por %p100, %p101
      %s103 = ssub.s32 %s16, %s42
      %s104 = ssub.s32 %s18, %s34
      %s105 = sor.u32 %s103, %s104
      %p106 = scmp.eq.s32.totalorder %s105, 0
      %s108 = sadd.s32 %s107, 1
      %s109 = scalar_select %p106, %s107, %s108
      %p112 = pneg %p106
      %p113 = scmp.eq.s32.totalorder %s9, 3
      %p114 = por %p112, %p113
      %p115 = scmp.ne.s32.totalorder %s107, %s110
      %p116 = scmp.eq.s32.totalorder %s9, 0
      %p117 = por %p115, %p116
      %p118 = scmp.ne.s32.totalorder %s107, %s110
      %p119 = scmp.eq.s32.totalorder %s14, 3
      %p120 = por %p118, %p119
      %p121 = scmp.ne.s32.totalorder %s110, %s111
      %p122 = scmp.eq.s32.totalorder %s14, 0
      %p123 = por %p121, %p122
      %p124 = scmp.ne.s32.totalorder %s110, %s111
      %p125 = scmp.eq.s32.totalorder %s15, 3
      %p126 = por %p124, %p125
      %p128 = scmp.ne.s32.totalorder %s111, %s127
      %p129 = scmp.eq.s32.totalorder %s15, 0
      %p130 = por %p128, %p129
      %s131 = ssub.s32 %s16, %s42
      %s132 = ssub.s32 %s17, %s38
      %s133 = sor.u32 %s131, %s132
      %s134 = ssub.s32 %s18, %s34
      %s135 = sor.u32 %s133, %s134
      %p136 = scmp.eq.s32.totalorder %s135, 0
      %s138 = sadd.s32 %s137, 1
      %s139 = scalar_select %p136, %s137, %s138
      %p142 = pneg %p136
      %p143 = scmp.eq.s32.totalorder %s9, 3
      %p144 = por %p142, %p143
      %p145 = scmp.ne.s32.totalorder %s137, %s140
      %p146 = scmp.eq.s32.totalorder %s9, 0
      %p147 = por %p145, %p146
      %p148 = scmp.ne.s32.totalorder %s137, %s140
      %p149 = scmp.eq.s32.totalorder %s14, 3
      %p150 = por %p148, %p149
      %p151 = scmp.ne.s32.totalorder %s140, %s141
      %p152 = scmp.eq.s32.totalorder %s14, 0
      %p153 = por %p151, %p152
      %p154 = scmp.ne.s32.totalorder %s140, %s141
      %p155 = scmp.eq.s32.totalorder %s15, 3
      %p156 = por %p154, %p155
      %p158 = scmp.ne.s32.totalorder %s141, %s157
      %p159 = scmp.eq.s32.totalorder %s15, 0
      %p160 = por %p158, %p159
      %p161 = scmp.le.s32.totalorder 1, %s9
      %p162 = scmp.lt.s32.totalorder %s9, 5
      %p163 = pnand %p161, %p162
      %p164 = pneg %p163
      // Predicated region
      $region9: #{clagnosco_autoencoder_forward.17} parent=5 // pred_check
        _
      $region10: #{clagnosco_autoencoder_forward.17} parent=5 // pred_check_branch
        %166 = sbr.rel (%p163) target = $region12
      $region11: #{clagnosco_autoencoder_forward.17} parent=5 // pred_region
        %s167 = ssub.s32 %s9, 1
        // Predicated region
        $region13: #{clagnosco_autoencoder_forward.17} parent=11 // pred_check
          %p168 = pneg %p65
        $region14: #{clagnosco_autoencoder_forward.17} parent=11 // pred_check_branch
          %170 = sbr.rel (%p168) target = $region16
        $region15: #{clagnosco_autoencoder_forward.17} parent=11 // pred_region
          %s171 = smul.u32 2, %s21
          %s172 = smul.u32 2, %s23
          %p173 = scmp.lt.s32.totalorder %s20, 0
          %s174 = scalar_select %p173, %s20, 0
          %p175 = scmp.lt.s32.totalorder %s171, 1
          %s176 = scalar_select %p175, %s171, 1
          %p177 = scmp.lt.s32.totalorder %s172, 1
          %s178 = scalar_select %p177, %s172, 1
          %s179 = smul.addr %s176, 2
          %s180 = sadd.s32 %s178, %s179
          %s181 = smul.addr %s174, 4
          %s182 = sadd.s32 %s180, %s181
          %s183 = smul.addr %s182, 4
          %s184 = scalar_lea.vmem %s0, %s183
          %s185 = smul.u32 2, %s21
          %s186 = smul.u32 2, %s23
        $region16: #{clagnosco_autoencoder_forward.17} parent=11 // pred_fallthru
          _
      $region12: #{clagnosco_autoencoder_forward.17} parent=5 // pred_fallthru
        _
      %p187 = scmp.lt.s32.totalorder %s9, 4
      // Predicated region
      $region17: #{clagnosco_autoencoder_forward.17} parent=5 // pred_check
        %p188 = pneg %p187
      $region18: #{clagnosco_autoencoder_forward.17} parent=5 // pred_check_branch
        %190 = sbr.rel (%p188) target = $region20
      $region19: #{clagnosco_autoencoder_forward.17} parent=5 // pred_region
        // Predicated region
        $region21: #{clagnosco_autoencoder_forward.17} parent=19 // pred_check
          %p191 = pneg %p89
        $region22: #{clagnosco_autoencoder_forward.17} parent=19 // pred_check_branch
          %193 = sbr.rel (%p191) target = $region24
        $region23: #{clagnosco_autoencoder_forward.17} parent=19 // pred_region
          %s194 = sand.u32 %s79, 1
          %s195 = sand.u32 %s79, 1
          %s196 = smul.addr %s195, 256
          %s197 = scalar_lea.vmem [#allocation3], %s196
          %s198 = smul.u32 32, %s19
          %s199 = smul.u32 2, %s18
          %s200 = smul.addr %s198, 8
          %s201 = sadd.s32 %s199, %s200
          %s202 = smul.addr %s16, 256
          %s203 = sadd.s32 %s201, %s202
          %s204 = smul.addr %s203, 4
          %s205 = scalar_lea.vmem %s1, %s204
          // Predicated region
          $region25: #{clagnosco_autoencoder_forward.17} parent=23 // pred_check
            _
          $region26: #{clagnosco_autoencoder_forward.17} parent=23 // pred_check_branch
            %207 = sbr.rel (0) target = $region28
          $region27: #{clagnosco_autoencoder_forward.17} parent=23 // pred_region
            // Predicated region
            $region29: #{clagnosco_autoencoder_forward.17} parent=27 // pred_check
              _
            $region30: #{clagnosco_autoencoder_forward.17} parent=27 // pred_check_branch
              %209 = sbr.rel (0) target = $region32
            $region31: #{clagnosco_autoencoder_forward.17} parent=27 // pred_region
              // Predicated region
              $region44: #{clagnosco_autoencoder_forward.17} parent=31 // pred_check
                _
              $region45: #{clagnosco_autoencoder_forward.17} parent=31 // pred_check_branch
                %286 = sbr.rel (0) target = $region47
              $region46: #{clagnosco_autoencoder_forward.17} parent=31 // pred_region
                loop: start=0, step=1, limit=1
                $region48: #{clagnosco_autoencoder_forward.17} parent=46 // loop_pre_header
                  _
                $region49: #{clagnosco_autoencoder_forward.17} parent=46 // loop_header
                  %s288 = sphi 0, %s292
                  %p289 = scmp.ge.s32.totalorder %s288, 1
                  %s293 = sphi %s205, %s205
                  %s294 = sphi %s197, %s197
                $region50: #{clagnosco_autoencoder_forward.17} parent=46 // loop_header_branch
                  %291 = sbr.rel (%p289) target = $region54
                $region51: #{clagnosco_autoencoder_forward.17} parent=46 // loop_body
                  %v295 = vld [vmem:[%s293] sm:$0xff]
                  %296 = vst [vmem:[%s294] sm:$0xff] %v295
                  %v297 = vld [vmem:[%s293 + $0x20] sm:$0xff]
                  %298 = vst [vmem:[%s294 + $0x8] sm:$0xff] %v297
                  %v299 = vld [vmem:[%s293 + $0x40] sm:$0xff]
                  %300 = vst [vmem:[%s294 + $0x10] sm:$0xff] %v299
                  %v301 = vld [vmem:[%s293 + $0x60] sm:$0xff]
                  %302 = vst [vmem:[%s294 + $0x18] sm:$0xff] %v301
                  %v303 = vld [vmem:[%s293 + $0x80] sm:$0xff]
                  %304 = vst [vmem:[%s294 + $0x20] sm:$0xff] %v303
                  %v305 = vld [vmem:[%s293 + $0xa0] sm:$0xff]
                  %306 = vst [vmem:[%s294 + $0x28] sm:$0xff] %v305
                  %v307 = vld [vmem:[%s293 + $0xc0] sm:$0xff]
                  %308 = vst [vmem:[%s294 + $0x30] sm:$0xff] %v307
                  %v309 = vld [vmem:[%s293 + $0xe0] sm:$0xff]
                  %310 = vst [vmem:[%s294 + $0x38] sm:$0xff] %v309
                  %v311 = vld [vmem:[%s293 + $0x100] sm:$0xff]
                  %312 = vst [vmem:[%s294 + $0x40] sm:$0xff] %v311
                  %v313 = vld [vmem:[%s293 + $0x120] sm:$0xff]
                  %314 = vst [vmem:[%s294 + $0x48] sm:$0xff] %v313
                  %v315 = vld [vmem:[%s293 + $0x140] sm:$0xff]
                  %316 = vst [vmem:[%s294 + $0x50] sm:$0xff] %v315
                  %v317 = vld [vmem:[%s293 + $0x160] sm:$0xff]
                  %318 = vst [vmem:[%s294 + $0x58] sm:$0xff] %v317
                  %v319 = vld [vmem:[%s293 + $0x180] sm:$0xff]
                  %320 = vst [vmem:[%s294 + $0x60] sm:$0xff] %v319
                  %v321 = vld [vmem:[%s293 + $0x1a0] sm:$0xff]
                  %322 = vst [vmem:[%s294 + $0x68] sm:$0xff] %v321
                  %v323 = vld [vmem:[%s293 + $0x1c0] sm:$0xff]
                  %324 = vst [vmem:[%s294 + $0x70] sm:$0xff] %v323
                  %v325 = vld [vmem:[%s293 + $0x1e0] sm:$0xff]
                  %326 = vst [vmem:[%s294 + $0x78] sm:$0xff] %v325
                  %v327 = vld [vmem:[%s293 + $0x200] sm:$0xff]
                  %328 = vst [vmem:[%s294 + $0x80] sm:$0xff] %v327
                  %v329 = vld [vmem:[%s293 + $0x220] sm:$0xff]
                  %330 = vst [vmem:[%s294 + $0x88] sm:$0xff] %v329
                  %v331 = vld [vmem:[%s293 + $0x240] sm:$0xff]
                  %332 = vst [vmem:[%s294 + $0x90] sm:$0xff] %v331
                  %v333 = vld [vmem:[%s293 + $0x260] sm:$0xff]
                  %334 = vst [vmem:[%s294 + $0x98] sm:$0xff] %v333
                  %v335 = vld [vmem:[%s293 + $0x280] sm:$0xff]
                  %336 = vst [vmem:[%s294 + $0xa0] sm:$0xff] %v335
                  %v337 = vld [vmem:[%s293 + $0x2a0] sm:$0xff]
                  %338 = vst [vmem:[%s294 + $0xa8] sm:$0xff] %v337
                  %v339 = vld [vmem:[%s293 + $0x2c0] sm:$0xff]
                  %340 = vst [vmem:[%s294 + $0xb0] sm:$0xff] %v339
                  %v341 = vld [vmem:[%s293 + $0x2e0] sm:$0xff]
                  %342 = vst [vmem:[%s294 + $0xb8] sm:$0xff] %v341
                  %v343 = vld [vmem:[%s293 + $0x300] sm:$0xff]
                  %344 = vst [vmem:[%s294 + $0xc0] sm:$0xff] %v343
                  %v345 = vld [vmem:[%s293 + $0x320] sm:$0xff]
                  %346 = vst [vmem:[%s294 + $0xc8] sm:$0xff] %v345
                  %v347 = vld [vmem:[%s293 + $0x340] sm:$0xff]
                  %348 = vst [vmem:[%s294 + $0xd0] sm:$0xff] %v347
                  %v349 = vld [vmem:[%s293 + $0x360] sm:$0xff]
                  %350 = vst [vmem:[%s294 + $0xd8] sm:$0xff] %v349
                  %v351 = vld [vmem:[%s293 + $0x380] sm:$0xff]
                  %352 = vst [vmem:[%s294 + $0xe0] sm:$0xff] %v351
                  %v353 = vld [vmem:[%s293 + $0x3a0] sm:$0xff]
                  %354 = vst [vmem:[%s294 + $0xe8] sm:$0xff] %v353
                  %v355 = vld [vmem:[%s293 + $0x3c0] sm:$0xff]
                  %356 = vst [vmem:[%s294 + $0xf0] sm:$0xff] %v355
                  %v357 = vld [vmem:[%s293 + $0x3e0] sm:$0xff]
                  %358 = vst [vmem:[%s294 + $0xf8] sm:$0xff] %v357
                $region52: #{clagnosco_autoencoder_forward.17} parent=46 // loop_footer
                  %s292 = sadd.s32 1, %s288
                $region53: #{clagnosco_autoencoder_forward.17} parent=46 // loop_footer_branch
                  %287 = sbr.rel target = $region49
                $region54: #{clagnosco_autoencoder_forward.17} parent=46 // loop_exit
                  _
              $region47: #{clagnosco_autoencoder_forward.17} parent=31 // pred_fallthru
                _
              // Predicated region
              $region55: #{clagnosco_autoencoder_forward.17} parent=31 // pred_check
                _
              $region56: #{clagnosco_autoencoder_forward.17} parent=31 // pred_check_branch
                %360 = sbr.rel target = $region58
              $region57: #{clagnosco_autoencoder_forward.17} parent=31 // pred_region
                _
              $region58: #{clagnosco_autoencoder_forward.17} parent=31 // pred_fallthru
                _
            $region32: #{clagnosco_autoencoder_forward.17} parent=27 // pred_fallthru
              _
            // Predicated region
            $region33: #{clagnosco_autoencoder_forward.17} parent=27 // pred_check
              _
            $region34: #{clagnosco_autoencoder_forward.17} parent=27 // pred_check_branch
              %211 = sbr.rel target = $region36
            $region35: #{clagnosco_autoencoder_forward.17} parent=27 // pred_region
              loop: start=0, step=1, limit=1
              $region37: #{clagnosco_autoencoder_forward.17} parent=35 // loop_pre_header
                _
              $region38: #{clagnosco_autoencoder_forward.17} parent=35 // loop_header
                %s214 = sphi 0, %s218
                %p215 = scmp.ge.s32.totalorder %s214, 1
                %s219 = sphi %s205, %s205
                %s220 = sphi %s197, %s197
              $region39: #{clagnosco_autoencoder_forward.17} parent=35 // loop_header_branch
                %217 = sbr.rel (%p215) target = $region43
              $region40: #{clagnosco_autoencoder_forward.17} parent=35 // loop_body
                %v221 = vld [vmem:[%s219] sm:$0xff]
                %222 = vst [vmem:[%s220] sm:$0xff] %v221
                %v223 = vld [vmem:[%s219 + $0x20] sm:$0xff]
                %224 = vst [vmem:[%s220 + $0x8] sm:$0xff] %v223
                %v225 = vld [vmem:[%s219 + $0x40] sm:$0xff]
                %226 = vst [vmem:[%s220 + $0x10] sm:$0xff] %v225
                %v227 = vld [vmem:[%s219 + $0x60] sm:$0xff]
                %228 = vst [vmem:[%s220 + $0x18] sm:$0xff] %v227
                %v229 = vld [vmem:[%s219 + $0x80] sm:$0xff]
                %230 = vst [vmem:[%s220 + $0x20] sm:$0xff] %v229
                %v231 = vld [vmem:[%s219 + $0xa0] sm:$0xff]
                %232 = vst [vmem:[%s220 + $0x28] sm:$0xff] %v231
                %v233 = vld [vmem:[%s219 + $0xc0] sm:$0xff]
                %234 = vst [vmem:[%s220 + $0x30] sm:$0xff] %v233
                %v235 = vld [vmem:[%s219 + $0xe0] sm:$0xff]
                %236 = vst [vmem:[%s220 + $0x38] sm:$0xff] %v235
                %v237 = vld [vmem:[%s219 + $0x100] sm:$0xff]
                %238 = vst [vmem:[%s220 + $0x40] sm:$0xff] %v237
                %v239 = vld [vmem:[%s219 + $0x120] sm:$0xff]
                %240 = vst [vmem:[%s220 + $0x48] sm:$0xff] %v239
                %v241 = vld [vmem:[%s219 + $0x140] sm:$0xff]
                %242 = vst [vmem:[%s220 + $0x50] sm:$0xff] %v241
                %v243 = vld [vmem:[%s219 + $0x160] sm:$0xff]
                %244 = vst [vmem:[%s220 + $0x58] sm:$0xff] %v243
                %v245 = vld [vmem:[%s219 + $0x180] sm:$0xff]
                %246 = vst [vmem:[%s220 + $0x60] sm:$0xff] %v245
                %v247 = vld [vmem:[%s219 + $0x1a0] sm:$0xff]
                %248 = vst [vmem:[%s220 + $0x68] sm:$0xff] %v247
                %v249 = vld [vmem:[%s219 + $0x1c0] sm:$0xff]
                %250 = vst [vmem:[%s220 + $0x70] sm:$0xff] %v249
                %v251 = vld [vmem:[%s219 + $0x1e0] sm:$0xff]
                %252 = vst [vmem:[%s220 + $0x78] sm:$0xff] %v251
                %v253 = vld [vmem:[%s219 + $0x200] sm:$0xff]
                %254 = vst [vmem:[%s220 + $0x80] sm:$0xff] %v253
                %v255 = vld [vmem:[%s219 + $0x220] sm:$0xff]
                %256 = vst [vmem:[%s220 + $0x88] sm:$0xff] %v255
                %v257 = vld [vmem:[%s219 + $0x240] sm:$0xff]
                %258 = vst [vmem:[%s220 + $0x90] sm:$0xff] %v257
                %v259 = vld [vmem:[%s219 + $0x260] sm:$0xff]
                %260 = vst [vmem:[%s220 + $0x98] sm:$0xff] %v259
                %v261 = vld [vmem:[%s219 + $0x280] sm:$0xff]
                %262 = vst [vmem:[%s220 + $0xa0] sm:$0xff] %v261
                %v263 = vld [vmem:[%s219 + $0x2a0] sm:$0xff]
                %264 = vst [vmem:[%s220 + $0xa8] sm:$0xff] %v263
                %v265 = vld [vmem:[%s219 + $0x2c0] sm:$0xff]
                %266 = vst [vmem:[%s220 + $0xb0] sm:$0xff] %v265
                %v267 = vld [vmem:[%s219 + $0x2e0] sm:$0xff]
                %268 = vst [vmem:[%s220 + $0xb8] sm:$0xff] %v267
                %v269 = vld [vmem:[%s219 + $0x300] sm:$0xff]
                %270 = vst [vmem:[%s220 + $0xc0] sm:$0xff] %v269
                %v271 = vld [vmem:[%s219 + $0x320] sm:$0xff]
                %272 = vst [vmem:[%s220 + $0xc8] sm:$0xff] %v271
                %v273 = vld [vmem:[%s219 + $0x340] sm:$0xff]
                %274 = vst [vmem:[%s220 + $0xd0] sm:$0xff] %v273
                %v275 = vld [vmem:[%s219 + $0x360] sm:$0xff]
                %276 = vst [vmem:[%s220 + $0xd8] sm:$0xff] %v275
                %v277 = vld [vmem:[%s219 + $0x380] sm:$0xff]
                %278 = vst [vmem:[%s220 + $0xe0] sm:$0xff] %v277
                %v279 = vld [vmem:[%s219 + $0x3a0] sm:$0xff]
                %280 = vst [vmem:[%s220 + $0xe8] sm:$0xff] %v279
                %v281 = vld [vmem:[%s219 + $0x3c0] sm:$0xff]
                %282 = vst [vmem:[%s220 + $0xf0] sm:$0xff] %v281
                %v283 = vld [vmem:[%s219 + $0x3e0] sm:$0xff]
                %284 = vst [vmem:[%s220 + $0xf8] sm:$0xff] %v283
              $region41: #{clagnosco_autoencoder_forward.17} parent=35 // loop_footer
                %s218 = sadd.s32 1, %s214
              $region42: #{clagnosco_autoencoder_forward.17} parent=35 // loop_footer_branch
                %213 = sbr.rel target = $region38
              $region43: #{clagnosco_autoencoder_forward.17} parent=35 // loop_exit
                _
            $region36: #{clagnosco_autoencoder_forward.17} parent=27 // pred_fallthru
              _
          $region28: #{clagnosco_autoencoder_forward.17} parent=23 // pred_fallthru
            _
          %361 = vnop
        $region24: #{clagnosco_autoencoder_forward.17} parent=19 // pred_fallthru
          _
        // Predicated region
        $region59: #{clagnosco_autoencoder_forward.17} parent=19 // pred_check
          %p362 = pneg %p117
        $region60: #{clagnosco_autoencoder_forward.17} parent=19 // pred_check_branch
          %364 = sbr.rel (%p362) target = $region62
        $region61: #{clagnosco_autoencoder_forward.17} parent=19 // pred_region
          %s365 = smul.u32 2, %s18
          %p366 = scmp.lt.s32.totalorder %s16, 0
          %s367 = scalar_select %p366, %s16, 0
          %p368 = scmp.lt.s32.totalorder %s365, 7
          %s369 = scalar_select %p368, %s365, 7
          %s370 = smul.addr %s367, 8
          %s371 = sadd.s32 %s369, %s370
          %s372 = scalar_lea.vmem %s2, %s371
          %s373 = smul.u32 2, %s18
        $region62: #{clagnosco_autoencoder_forward.17} parent=19 // pred_fallthru
          _
      $region20: #{clagnosco_autoencoder_forward.17} parent=5 // pred_fallthru
        _
      %p374 = scmp.le.s32.totalorder 1, %s9
      %p375 = scmp.lt.s32.totalorder %s9, 5
      %p376 = pnand %p374, %p375
      %p377 = pneg %p376
      // Predicated region
      $region63: #{clagnosco_autoencoder_forward.17} parent=5 // pred_check
        _
      $region64: #{clagnosco_autoencoder_forward.17} parent=5 // pred_check_branch
        %379 = sbr.rel (%p376) target = $region66
      $region65: #{clagnosco_autoencoder_forward.17} parent=5 // pred_region
        %s380 = ssub.s32 %s9, 1
        %s381 = sand.u32 %s82, 1
        %s382 = sand.u32 %s82, 1
        %s383 = smul.addr %s382, 256
        %s384 = scalar_lea.vmem [#allocation3], %s383
        // Predicated region
        $region67: #{clagnosco_autoencoder_forward.17} parent=65 // pred_check
          %p385 = pneg %p95
        $region68: #{clagnosco_autoencoder_forward.17} parent=65 // pred_check_branch
          %387 = sbr.rel (%p385) target = $region70
        $region69: #{clagnosco_autoencoder_forward.17} parent=65 // pred_region
          _
        $region70: #{clagnosco_autoencoder_forward.17} parent=65 // pred_fallthru
          _
        %s388 = smul.u32 2, %s21
        %s389 = smul.u32 2, %s23
        %p390 = scmp.lt.s32.totalorder %s20, 0
        %s391 = scalar_select %p390, %s20, 0
        %p392 = scmp.lt.s32.totalorder %s388, 1
        %s393 = scalar_select %p392, %s388, 1
        %p394 = scmp.lt.s32.totalorder %s389, 1
        %s395 = scalar_select %p394, %s389, 1
        %s396 = smul.addr %s393, 2
        %s397 = sadd.s32 %s395, %s396
        %s398 = smul.addr %s391, 4
        %s399 = sadd.s32 %s397, %s398
        %s400 = smul.addr %s399, 4
        %s401 = scalar_lea.vmem %s0, %s400
        %p402 = pneg %p65
        %p403 = pneg %p62
        %s404 = sand.u32 %s82, 1
        %s405 = sand.u32 %s82, 1
        %s406 = smul.addr %s405, 256
        %s407 = scalar_lea.vmem [#allocation3], %s406
        %p408 = pneg %p95
        %p409 = pneg %p92
        %s410 = smul.u32 2, %s22
        %p411 = scmp.lt.s32.totalorder %s20, 0
        %s412 = scalar_select %p411, %s20, 0
        %p413 = scmp.lt.s32.totalorder %s410, 7
        %s414 = scalar_select %p413, %s410, 7
        %s415 = smul.addr %s412, 8
        %s416 = sadd.s32 %s414, %s415
        %s417 = scalar_lea.vmem %s2, %s416
        %p418 = pneg %p123
        %p419 = pneg %p120
        %p420 = pneg %p153
        %p421 = pneg %p150
        %s422 = sand.u32 %s140, 1
        %s423 = sand.u32 %s140, 1
        %s424 = smul.addr %s423, 32
        %s425 = scalar_lea.vmem [#allocation4], %s424
        %s426 = smul.u32 2, %s21
        %s427 = smul.u32 2, %s23
        %p428 = scmp.lt.s32.totalorder %s20, 0
        %s429 = scalar_select %p428, %s20, 0
        %p430 = scmp.lt.s32.totalorder %s426, 1
        %s431 = scalar_select %p430, %s426, 1
        %p432 = scmp.lt.s32.totalorder %s427, 1
        %s433 = scalar_select %p432, %s427, 1
        %s434 = smul.addr %s431, 2
        %s435 = sadd.s32 %s433, %s434
        %s436 = smul.addr %s429, 4
        %s437 = sadd.s32 %s435, %s436
        %s438 = smul.addr %s437, 4
        %s439 = scalar_lea.vmem %s0, %s438
        %s440 = smul.u32 2, %s21
        %s441 = smul.u32 2, %s23
        %s442 = smul.u32 32, %s23
        %s443 = smul.u32 2, %s22
        %s444 = smul.u32 2, %s22
        %p445 = scmp.lt.s32.totalorder %s20, 0
        %s446 = scalar_select %p445, %s20, 0
        %p447 = scmp.lt.s32.totalorder %s444, 7
        %s448 = scalar_select %p447, %s444, 7
        %s449 = smul.addr %s446, 8
        %s450 = sadd.s32 %s448, %s449
        %s451 = scalar_lea.vmem %s2, %s450
        %s452 = smul.u32 2, %s22
        %s453 = smul.u32 2, %s21
        %s454 = smul.u32 2, %s22
        %p455 = scmp.eq.s32.totalorder %s23, 0
        // Predicated region
        $region71: #{clagnosco_autoencoder_forward.17} parent=65 // pred_check
          %p456 = pneg %p455
        $region72: #{clagnosco_autoencoder_forward.17} parent=65 // pred_check_branch
          %458 = sbr.rel (%p456) target = $region74
        $region73: #{clagnosco_autoencoder_forward.17} parent=65 // pred_region
          %459 = vst [vmem:[#allocation2] sm:$0xff] 0.0
          %460 = vst [vmem:[#allocation2 + $0x8] sm:$0xff] 0.0
          %461 = vst [vmem:[#allocation2 + $0x10] sm:$0xff] 0.0
          %462 = vst [vmem:[#allocation2 + $0x18] sm:$0xff] 0.0
        $region74: #{clagnosco_autoencoder_forward.17} parent=65 // pred_fallthru
          _
        %v463 = vld [vmem:[#allocation2] sm:$0xff]
        %v464 = vld [vmem:[#allocation2 + $0x8] sm:$0xff]
        %v465 = vld [vmem:[#allocation2 + $0x10] sm:$0xff]
        %v466 = vld [vmem:[#allocation2 + $0x18] sm:$0xff]
        %v467 = vld [vmem:[%s439] sm:$0xff]
        %v468 = vld [vmem:[%s439 + $0x8] sm:$0xff]
        %v469 = vld [vmem:[%s384] sm:$0xff]
        %v470 = vld [vmem:[%s384 + $0x8] sm:$0xff]
        %v471 = vld [vmem:[%s384 + $0x10] sm:$0xff]
        %v472 = vld [vmem:[%s384 + $0x18] sm:$0xff]
        %v473 = vld [vmem:[%s384 + $0x20] sm:$0xff]
        %v474 = vld [vmem:[%s384 + $0x28] sm:$0xff]
        %v475 = vld [vmem:[%s384 + $0x30] sm:$0xff]
        %v476 = vld [vmem:[%s384 + $0x38] sm:$0xff]
        %v477 = vld [vmem:[%s384 + $0x40] sm:$0xff]
        %v478 = vld [vmem:[%s384 + $0x48] sm:$0xff]
        %v479 = vld [vmem:[%s384 + $0x50] sm:$0xff]
        %v480 = vld [vmem:[%s384 + $0x58] sm:$0xff]
        %v481 = vld [vmem:[%s384 + $0x60] sm:$0xff]
        %v482 = vld [vmem:[%s384 + $0x68] sm:$0xff]
        %v483 = vld [vmem:[%s384 + $0x70] sm:$0xff]
        %v484 = vld [vmem:[%s384 + $0x78] sm:$0xff]
        %v485 = vld [vmem:[%s384 + $0x80] sm:$0xff]
        %v486 = vld [vmem:[%s384 + $0x88] sm:$0xff]
        %v487 = vld [vmem:[%s384 + $0x90] sm:$0xff]
        %v488 = vld [vmem:[%s384 + $0x98] sm:$0xff]
        %v489 = vld [vmem:[%s384 + $0xa0] sm:$0xff]
        %v490 = vld [vmem:[%s384 + $0xa8] sm:$0xff]
        %v491 = vld [vmem:[%s384 + $0xb0] sm:$0xff]
        %v492 = vld [vmem:[%s384 + $0xb8] sm:$0xff]
        %v493 = vld [vmem:[%s384 + $0xc0] sm:$0xff]
        %v494 = vld [vmem:[%s384 + $0xc8] sm:$0xff]
        %v495 = vld [vmem:[%s384 + $0xd0] sm:$0xff]
        %v496 = vld [vmem:[%s384 + $0xd8] sm:$0xff]
        %v497 = vld [vmem:[%s384 + $0xe0] sm:$0xff]
        %v498 = vld [vmem:[%s384 + $0xe8] sm:$0xff]
        %v499 = vld [vmem:[%s384 + $0xf0] sm:$0xff]
        %v500 = vld [vmem:[%s384 + $0xf8] sm:$0xff]
        %v503 = vunpack.c.l.b16 %v467
        %v504 = vunpack.c.h.b16 %v467
        %v505 = vunpack.c.l.b16 %v468
        %v506 = vunpack.c.h.b16 %v468
        %v507 = vpack.c.b16 %v505, %v503
        %v508 = vpack.c.b16 %v506, %v504
        %v543 = vunpack.c.l.b16 %v469
        %v544 = vunpack.c.h.b16 %v469
        %v545 = vunpack.c.l.b16 %v470
        %v546 = vunpack.c.h.b16 %v470
        %v547 = vunpack.c.l.b16 %v471
        %v548 = vunpack.c.h.b16 %v471
        %v549 = vunpack.c.l.b16 %v472
        %v550 = vunpack.c.h.b16 %v472
        %v551 = vunpack.c.l.b16 %v473
        %v552 = vunpack.c.h.b16 %v473
        %v553 = vunpack.c.l.b16 %v474
        %v554 = vunpack.c.h.b16 %v474
        %v555 = vunpack.c.l.b16 %v475
        %v556 = vunpack.c.h.b16 %v475
        %v557 = vunpack.c.l.b16 %v476
        %v558 = vunpack.c.h.b16 %v476
        %v559 = vunpack.c.l.b16 %v477
        %v560 = vunpack.c.h.b16 %v477
        %v561 = vunpack.c.l.b16 %v478
        %v562 = vunpack.c.h.b16 %v478
        %v563 = vunpack.c.l.b16 %v479
        %v564 = vunpack.c.h.b16 %v479
        %v565 = vunpack.c.l.b16 %v480
        %v566 = vunpack.c.h.b16 %v480
        %v567 = vunpack.c.l.b16 %v481
        %v568 = vunpack.c.h.b16 %v481
        %v569 = vunpack.c.l.b16 %v482
        %v570 = vunpack.c.h.b16 %v482
        %v571 = vunpack.c.l.b16 %v483
        %v572 = vunpack.c.h.b16 %v483
        %v573 = vunpack.c.l.b16 %v484
        %v574 = vunpack.c.h.b16 %v484
        %v575 = vunpack.c.l.b16 %v485
        %v576 = vunpack.c.h.b16 %v485
        %v577 = vunpack.c.l.b16 %v486
        %v578 = vunpack.c.h.b16 %v486
        %v579 = vunpack.c.l.b16 %v487
        %v580 = vunpack.c.h.b16 %v487
        %v581 = vunpack.c.l.b16 %v488
        %v582 = vunpack.c.h.b16 %v488
        %v583 = vunpack.c.l.b16 %v489
        %v584 = vunpack.c.h.b16 %v489
        %v585 = vunpack.c.l.b16 %v490
        %v586 = vunpack.c.h.b16 %v490
        %v587 = vunpack.c.l.b16 %v491
        %v588 = vunpack.c.h.b16 %v491
        %v589 = vunpack.c.l.b16 %v492
        %v590 = vunpack.c.h.b16 %v492
        %v591 = vunpack.c.l.b16 %v493
        %v592 = vunpack.c.h.b16 %v493
        %v593 = vunpack.c.l.b16 %v494
        %v594 = vunpack.c.h.b16 %v494
        %v595 = vunpack.c.l.b16 %v495
        %v596 = vunpack.c.h.b16 %v495
        %v597 = vunpack.c.l.b16 %v496
        %v598 = vunpack.c.h.b16 %v496
        %v599 = vunpack.c.l.b16 %v497
        %v600 = vunpack.c.h.b16 %v497
        %v601 = vunpack.c.l.b16 %v498
        %v602 = vunpack.c.h.b16 %v498
        %v603 = vunpack.c.l.b16 %v499
        %v604 = vunpack.c.h.b16 %v499
        %v605 = vunpack.c.l.b16 %v500
        %v606 = vunpack.c.h.b16 %v500
        %v607 = vpack.c.b16 %v545, %v543
        %v608 = vpack.c.b16 %v546, %v544
        %v609 = vpack.c.b16 %v549, %v547
        %v610 = vpack.c.b16 %v550, %v548
        %v611 = vpack.c.b16 %v553, %v551
        %v612 = vpack.c.b16 %v554, %v552
        %v613 = vpack.c.b16 %v557, %v555
        %v614 = vpack.c.b16 %v558, %v556
        %v615 = vpack.c.b16 %v561, %v559
        %v616 = vpack.c.b16 %v562, %v560
        %v617 = vpack.c.b16 %v565, %v563
        %v618 = vpack.c.b16 %v566, %v564
        %v619 = vpack.c.b16 %v569, %v567
        %v620 = vpack.c.b16 %v570, %v568
        %v621 = vpack.c.b16 %v573, %v571
        %v622 = vpack.c.b16 %v574, %v572
        %v623 = vpack.c.b16 %v577, %v575
        %v624 = vpack.c.b16 %v578, %v576
        %v625 = vpack.c.b16 %v581, %v579
        %v626 = vpack.c.b16 %v582, %v580
        %v627 = vpack.c.b16 %v585, %v583
        %v628 = vpack.c.b16 %v586, %v584
        %v629 = vpack.c.b16 %v589, %v587
        %v630 = vpack.c.b16 %v590, %v588
        %v631 = vpack.c.b16 %v593, %v591
        %v632 = vpack.c.b16 %v594, %v592
        %v633 = vpack.c.b16 %v597, %v595
        %v634 = vpack.c.b16 %v598, %v596
        %v635 = vpack.c.b16 %v601, %v599
        %v636 = vpack.c.b16 %v602, %v600
        %v637 = vpack.c.b16 %v605, %v603
        %v638 = vpack.c.b16 %v606, %v604
        %671 = vmatprep.subr.bf16.mxu0 %v608
        %672 = vmatpush1.bf16.msra.mxu0 %v607
        %673 = vmatprep.subr.bf16.mxu0 %v610
        %674 = vmatpush1.bf16.msra.mxu0 %v609
        %675 = vmatprep.subr.bf16.mxu0 %v612
        %676 = vmatpush1.bf16.msra.mxu0 %v611
        %677 = vmatprep.subr.bf16.mxu0 %v614
        %678 = vmatpush1.bf16.msra.mxu0 %v613
        %679 = vmatprep.subr.bf16.mxu0 %v616
        %680 = vmatpush1.bf16.msra.mxu0 %v615
        %681 = vmatprep.subr.bf16.mxu0 %v618
        %682 = vmatpush1.bf16.msra.mxu0 %v617
        %683 = vmatprep.subr.bf16.mxu0 %v620
        %684 = vmatpush1.bf16.msra.mxu0 %v619
        %685 = vmatprep.subr.bf16.mxu0 %v622
        %686 = vmatpush1.bf16.msra.mxu0 %v621
        %687 = vmatprep.subr.bf16.mxu0 %v624
        %688 = vmatpush1.bf16.msra.mxu0 %v623
        %689 = vmatprep.subr.bf16.mxu0 %v626
        %690 = vmatpush1.bf16.msra.mxu0 %v625
        %691 = vmatprep.subr.bf16.mxu0 %v628
        %692 = vmatpush1.bf16.msra.mxu0 %v627
        %693 = vmatprep.subr.bf16.mxu0 %v630
        %694 = vmatpush1.bf16.msra.mxu0 %v629
        %695 = vmatprep.subr.bf16.mxu0 %v632
        %696 = vmatpush1.bf16.msra.mxu0 %v631
        %697 = vmatprep.subr.bf16.mxu0 %v634
        %698 = vmatpush1.bf16.msra.mxu0 %v633
        %699 = vmatprep.subr.bf16.mxu0 %v636
        %700 = vmatpush1.bf16.msra.mxu0 %v635
        %701 = vmatprep.subr.bf16.mxu0 %v638
        %702 = vmatpush1.bf16.msra.mxu0 %v637
        %703 = vmatprep.mubr.bf16.mxu0 %v508
        %704 = vmatmul.mubr.bf16.gmra.mrb[0].mxu0 %v507
        %v705 = vpop.f32.mrb[0].mxu0
        %v706 = vadd.f32 0.0, %v705
        %v707 = vpop.f32.mrb[0].mxu0
        %v708 = vadd.f32 0.0, %v707
        %v709 = vpop.f32.mrb[0].mxu0
        %v710 = vadd.f32 0.0, %v709
        %v711 = vpop.f32.mrb[0].mxu0
        %v712 = vadd.f32 0.0, %v711
        %713 = vdwg.mxu0
        %v714 = vadd.f32 %v463, %v706
        %v715 = vadd.f32 %v464, %v708
        %v716 = vadd.f32 %v465, %v710
        %v717 = vadd.f32 %v466, %v712
        %718 = vst [vmem:[#allocation2] sm:$0xff] %v714
        %719 = vst [vmem:[#allocation2 + $0x8] sm:$0xff] %v715
        %720 = vst [vmem:[#allocation2 + $0x10] sm:$0xff] %v716
        %721 = vst [vmem:[#allocation2 + $0x18] sm:$0xff] %v717
        // Predicated region
        $region75: #{clagnosco_autoencoder_forward.17} parent=65 // pred_check
          %p722 = pneg %p455
        $region76: #{clagnosco_autoencoder_forward.17} parent=65 // pred_check_branch
          %724 = sbr.rel (%p722) target = $region78
        $region77: #{clagnosco_autoencoder_forward.17} parent=65 // pred_region
          %v725 = vld [vmem:[#allocation2] sm:$0xff]
          %v726 = vld [vmem:[#allocation2 + $0x8] sm:$0xff]
          %v727 = vld [vmem:[#allocation2 + $0x10] sm:$0xff]
          %v728 = vld [vmem:[#allocation2 + $0x18] sm:$0xff]
          %v729 = vld [vmem:[%s451] sm:$0x3]
          %v731 = vlaneseq
          %v732 = vshrl.u32 %v731, 7
          %v733 = vsub.s32 0, %v732
          %v734 = vrot.slane %v729, %v733
          %v735 = vlaneseq
          %v736 = vshrl.u32 %v735, 7
          %v737 = vsub.s32 1, %v736
          %v738 = vrot.slane %v729, %v737
          %v741 = vadd.f32 %v725, %v734
          %v742 = vadd.f32 %v726, %v738
          %v743 = vadd.f32 %v727, %v734
          %v744 = vadd.f32 %v728, %v738
          %vm745 = vcmp.ge.f32.partialorder %v741, 0.0
          %vm746 = vcmp.ge.f32.partialorder %v742, 0.0
          %vm747 = vcmp.ge.f32.partialorder %v743, 0.0
          %vm748 = vcmp.ge.f32.partialorder %v744, 0.0
          %v749 = vmul.f32 %v741, 0.01
          %v750 = vmul.f32 %v742, 0.01
          %v751 = vmul.f32 %v743, 0.01
          %v752 = vmul.f32 %v744, 0.01
          %v753 = vsel %vm745, %v741, %v749
          %v754 = vsel %vm746, %v742, %v750
          %v755 = vsel %vm747, %v743, %v751
          %v756 = vsel %vm748, %v744, %v752
          %757 = vst [vmem:[%s425] sm:$0xff] %v753
          %758 = vst [vmem:[%s425 + $0x8] sm:$0xff] %v754
          %759 = vst [vmem:[%s425 + $0x10] sm:$0xff] %v755
          %760 = vst [vmem:[%s425 + $0x18] sm:$0xff] %v756
        $region78: #{clagnosco_autoencoder_forward.17} parent=65 // pred_fallthru
          _
        %s761 = sand.u32 %s140, 1
        %s762 = sand.u32 %s140, 1
        %s763 = smul.addr %s762, 32
        %s764 = scalar_lea.vmem [#allocation4], %s763
        // Predicated region
        $region79: #{clagnosco_autoencoder_forward.17} parent=65 // pred_check
          %p765 = pneg %p150
        $region80: #{clagnosco_autoencoder_forward.17} parent=65 // pred_check_branch
          %767 = sbr.rel (%p765) target = $region82
        $region81: #{clagnosco_autoencoder_forward.17} parent=65 // pred_region
          %s768 = smul.u32 2, %s21
          %s769 = smul.u32 2, %s22
          %s770 = smul.addr %s768, 8
          %s771 = sadd.s32 %s769, %s770
          %s772 = smul.addr %s20, 16
          %s773 = sadd.s32 %s771, %s772
          %s774 = smul.addr %s773, 8
          %s775 = scalar_lea.vmem %s3, %s774
          // Predicated region
          $region83: #{clagnosco_autoencoder_forward.17} parent=81 // pred_check
            _
          $region84: #{clagnosco_autoencoder_forward.17} parent=81 // pred_check_branch
            %777 = sbr.rel (0) target = $region86
          $region85: #{clagnosco_autoencoder_forward.17} parent=81 // pred_region
            // Predicated region
            $region87: #{clagnosco_autoencoder_forward.17} parent=85 // pred_check
              _
            $region88: #{clagnosco_autoencoder_forward.17} parent=85 // pred_check_branch
              %779 = sbr.rel (0) target = $region90
            $region89: #{clagnosco_autoencoder_forward.17} parent=85 // pred_region
              loop: start=0, step=1, limit=1
              $region91: #{clagnosco_autoencoder_forward.17} parent=89 // loop_pre_header
                _
              $region92: #{clagnosco_autoencoder_forward.17} parent=89 // loop_header
                %s781 = sphi 0, %s785
                %p782 = scmp.ge.s32.totalorder %s781, 1
                %s786 = sphi %s764, %s764
                %s787 = sphi %s775, %s775
              $region93: #{clagnosco_autoencoder_forward.17} parent=89 // loop_header_branch
                %784 = sbr.rel (%p782) target = $region97
              $region94: #{clagnosco_autoencoder_forward.17} parent=89 // loop_body
                %v788 = vld [vmem:[%s786] sm:$0xff]
                %789 = vst [vmem:[%s787] sm:$0xff] %v788
                %v790 = vld [vmem:[%s786 + $0x8] sm:$0xff]
                %791 = vst [vmem:[%s787 + $0x8] sm:$0xff] %v790
                %v792 = vld [vmem:[%s786 + $0x10] sm:$0xff]
                %793 = vst [vmem:[%s787 + $0x40] sm:$0xff] %v792
                %v794 = vld [vmem:[%s786 + $0x18] sm:$0xff]
                %795 = vst [vmem:[%s787 + $0x48] sm:$0xff] %v794
              $region95: #{clagnosco_autoencoder_forward.17} parent=89 // loop_footer
                %s785 = sadd.s32 1, %s781
              $region96: #{clagnosco_autoencoder_forward.17} parent=89 // loop_footer_branch
                %780 = sbr.rel target = $region92
              $region97: #{clagnosco_autoencoder_forward.17} parent=89 // loop_exit
                _
            $region90: #{clagnosco_autoencoder_forward.17} parent=85 // pred_fallthru
              _
            // Predicated region
            $region98: #{clagnosco_autoencoder_forward.17} parent=85 // pred_check
              _
            $region99: #{clagnosco_autoencoder_forward.17} parent=85 // pred_check_branch
              %797 = sbr.rel target = $region101
            $region100: #{clagnosco_autoencoder_forward.17} parent=85 // pred_region
              _
            $region101: #{clagnosco_autoencoder_forward.17} parent=85 // pred_fallthru
              _
          $region86: #{clagnosco_autoencoder_forward.17} parent=81 // pred_fallthru
            _
          %798 = vnop
        $region82: #{clagnosco_autoencoder_forward.17} parent=65 // pred_fallthru
          _
      $region66: #{clagnosco_autoencoder_forward.17} parent=5 // pred_fallthru
        _
      %p799 = scmp.le.s32.totalorder 2, %s9
      // Predicated region
      $region102: #{clagnosco_autoencoder_forward.17} parent=5 // pred_check
        %p800 = pneg %p799
      $region103: #{clagnosco_autoencoder_forward.17} parent=5 // pred_check_branch
        %802 = sbr.rel (%p800) target = $region105
      $region104: #{clagnosco_autoencoder_forward.17} parent=5 // pred_region
        %s803 = ssub.s32 %s9, 2
        // Predicated region
        $region106: #{clagnosco_autoencoder_forward.17} parent=104 // pred_check
          %p804 = pneg %p156
        $region107: #{clagnosco_autoencoder_forward.17} parent=104 // pred_check_branch
          %806 = sbr.rel (%p804) target = $region109
        $region108: #{clagnosco_autoencoder_forward.17} parent=104 // pred_region
          %s807 = sand.u32 %s141, 1
          %s808 = sand.u32 %s141, 1
          %s809 = smul.addr %s808, 32
          %s810 = scalar_lea.vmem [#allocation4], %s809
        $region109: #{clagnosco_autoencoder_forward.17} parent=104 // pred_fallthru
          _
      $region105: #{clagnosco_autoencoder_forward.17} parent=5 // pred_fallthru
        _
    $region6: #{clagnosco_autoencoder_forward.17} parent=1 // loop_footer
      %s13 = sadd.s32 1, %s9
    $region7: #{clagnosco_autoencoder_forward.17} parent=1 // loop_footer_branch
      %8 = sbr.rel target = $region3
    $region8: #{clagnosco_autoencoder_forward.17} parent=1 // loop_exit
      _

// kernel: clagnosco_autoencoder_forward.18
$region0: #{clagnosco_autoencoder_forward.18}
  #allocation0 [shape = 'u32[]', space=smem, size = 0x4, offset = 0x4, fixed_abs, tag = 'smem constant byte address 0x4 - core index']
  #allocation1 [shape = 'u32[144,128]{1,0:T(1,128)}', space=vmem, size = 0x12000, scoped, tag = 'internal scratch']
  #allocation2 [shape = 'f32[16,128]{1,0:T(8,128)}', space=vmem, size = 0x2000, scoped, tag = 'scratch operand']
  %s0 = inlined_call_operand.vmem [shape: bf16[4,16,1024], index: 0, kind: input, shape index: {}]
  %s1 = inlined_call_operand.vmem [shape: bf16[4,1024,128], index: 1, kind: input, shape index: {}]
  %s2 = inlined_call_operand.vmem [shape: f32[4,1,128], index: 2, kind: input, shape index: {}]
  %s3 = inlined_call_operand.vmem [shape: f32[4,16,128], index: 3, kind: output, shape index: {}]
  %s4 = sld [smem:[#allocation0]]
  $region76: #{clagnosco_autoencoder_forward.18} parent=0
    _
  %s6 = ssub.s32 1, %s4
  %s7 = scalar_select 0, %s6, %s4
  $region1: #{clagnosco_autoencoder_forward.18} parent=0
    #allocation3 [shape = 'u8[32768]{0}', space=vmem, size = 0x8000, scoped, tag = 'input window, operand 0']
    loop: start=0, step=1, limit=10
    $region2: #{clagnosco_autoencoder_forward.18} parent=1 // loop_pre_header
      _
    $region3: #{clagnosco_autoencoder_forward.18} parent=1 // loop_header
      %s9 = sphi 0, %s13
      %p10 = scmp.ge.s32.totalorder %s9, 10
      %s16 = sphi 0, %s42
      %s17 = sphi 0, %s38
      %s18 = sphi 0, %s34
      %s19 = sphi 0, %s30
      %s20 = sphi 0, %s16
      %s21 = sphi 0, %s17
      %s22 = sphi 0, %s18
      %s23 = sphi 0, %s19
      %s24 = sphi 0, %s20
      %s25 = sphi 0, %s21
      %s26 = sphi 0, %s22
      %s27 = sphi 0, %s23
      %s49 = sphi 0, %s51
      %s52 = sphi 0, %s49
      %s53 = sphi 0, %s52
      %s69 = sphi 0, %s53
      %s79 = sphi 0, %s81
      %s82 = sphi 0, %s79
      %s83 = sphi 0, %s82
      %s99 = sphi 0, %s83
      %s107 = sphi 0, %s109
      %s110 = sphi 0, %s107
      %s111 = sphi 0, %s110
      %s127 = sphi 0, %s111
      %s137 = sphi 0, %s139
      %s140 = sphi 0, %s137
      %s141 = sphi 0, %s140
      %s157 = sphi 0, %s141
    $region4: #{clagnosco_autoencoder_forward.18} parent=1 // loop_header_branch
      %12 = sbr.rel (%p10) target = $region8
    $region5: #{clagnosco_autoencoder_forward.18} parent=1 // loop_body
      %s14 = ssub.s32 %s9, 1
      %s15 = ssub.s32 %s9, 2
      %s28 = sadd.s32 1, %s19
      %p29 = scmp.ge.s32.totalorder %s28, 2
      %s30 = scalar_select %p29, 0, %s28
      %s31 = sadd.s32 1, %s18
      %s32 = scalar_select %p29, %s31, %s18
      %p33 = scmp.ge.s32.totalorder %s32, 1
      %s34 = scalar_select %p33, 0, %s32
      %s35 = sadd.s32 1, %s17
      %s36 = scalar_select %p33, %s35, %s17
      %p37 = scmp.ge.s32.totalorder %s36, 1
      %s38 = scalar_select %p37, 0, %s36
      %s39 = sadd.s32 1, %s16
      %s40 = scalar_select %p37, %s39, %s16
      %p41 = scmp.ge.s32.totalorder %s40, 4
      %s42 = scalar_select %p41, 0, %s40
      %s43 = ssub.s32 %s16, %s42
      %s44 = ssub.s32 %s17, %s38
      %s45 = sor.u32 %s43, %s44
      %s46 = ssub.s32 %s19, %s30
      %s47 = sor.u32 %s45, %s46
      %p48 = scmp.eq.s32.totalorder %s47, 0
      %s50 = sadd.s32 %s49, 1
      %s51 = scalar_select %p48, %s49, %s50
      %p54 = pneg %p48
      %p55 = scmp.eq.s32.totalorder %s9, 7
      %p56 = por %p54, %p55
      %p57 = scmp.ne.s32.totalorder %s49, %s52
      %p58 = scmp.eq.s32.totalorder %s9, 0
      %p59 = por %p57, %p58
      %p60 = scmp.ne.s32.totalorder %s49, %s52
      %p61 = scmp.eq.s32.totalorder %s14, 7
      %p62 = por %p60, %p61
      %p63 = scmp.ne.s32.totalorder %s52, %s53
      %p64 = scmp.eq.s32.totalorder %s14, 0
      %p65 = por %p63, %p64
      %p66 = scmp.ne.s32.totalorder %s52, %s53
      %p67 = scmp.eq.s32.totalorder %s15, 7
      %p68 = por %p66, %p67
      %p70 = scmp.ne.s32.totalorder %s53, %s69
      %p71 = scmp.eq.s32.totalorder %s15, 0
      %p72 = por %p70, %p71
      %s73 = ssub.s32 %s16, %s42
      %s74 = ssub.s32 %s19, %s30
      %s75 = sor.u32 %s73, %s74
      %s76 = ssub.s32 %s18, %s34
      %s77 = sor.u32 %s75, %s76
      %p78 = scmp.eq.s32.totalorder %s77, 0
      %s80 = sadd.s32 %s79, 1
      %s81 = scalar_select %p78, %s79, %s80
      %p84 = pneg %p78
      %p85 = scmp.eq.s32.totalorder %s9, 7
      %p86 = por %p84, %p85
      %p87 = scmp.ne.s32.totalorder %s79, %s82
      %p88 = scmp.eq.s32.totalorder %s9, 0
      %p89 = por %p87, %p88
      %p90 = scmp.ne.s32.totalorder %s79, %s82
      %p91 = scmp.eq.s32.totalorder %s14, 7
      %p92 = por %p90, %p91
      %p93 = scmp.ne.s32.totalorder %s82, %s83
      %p94 = scmp.eq.s32.totalorder %s14, 0
      %p95 = por %p93, %p94
      %p96 = scmp.ne.s32.totalorder %s82, %s83
      %p97 = scmp.eq.s32.totalorder %s15, 7
      %p98 = por %p96, %p97
      %p100 = scmp.ne.s32.totalorder %s83, %s99
      %p101 = scmp.eq.s32.totalorder %s15, 0
      %p102 = por %p100, %p101
      %s103 = ssub.s32 %s16, %s42
      %s104 = ssub.s32 %s18, %s34
      %s105 = sor.u32 %s103, %s104
      %p106 = scmp.eq.s32.totalorder %s105, 0
      %s108 = sadd.s32 %s107, 1
      %s109 = scalar_select %p106, %s107, %s108
      %p112 = pneg %p106
      %p113 = scmp.eq.s32.totalorder %s9, 7
      %p114 = por %p112, %p113
      %p115 = scmp.ne.s32.totalorder %s107, %s110
      %p116 = scmp.eq.s32.totalorder %s9, 0
      %p117 = por %p115, %p116
      %p118 = scmp.ne.s32.totalorder %s107, %s110
      %p119 = scmp.eq.s32.totalorder %s14, 7
      %p120 = por %p118, %p119
      %p121 = scmp.ne.s32.totalorder %s110, %s111
      %p122 = scmp.eq.s32.totalorder %s14, 0
      %p123 = por %p121, %p122
      %p124 = scmp.ne.s32.totalorder %s110, %s111
      %p125 = scmp.eq.s32.totalorder %s15, 7
      %p126 = por %p124, %p125
      %p128 = scmp.ne.s32.totalorder %s111, %s127
      %p129 = scmp.eq.s32.totalorder %s15, 0
      %p130 = por %p128, %p129
      %s131 = ssub.s32 %s16, %s42
      %s132 = ssub.s32 %s17, %s38
      %s133 = sor.u32 %s131, %s132
      %s134 = ssub.s32 %s18, %s34
      %s135 = sor.u32 %s133, %s134
      %p136 = scmp.eq.s32.totalorder %s135, 0
      %s138 = sadd.s32 %s137, 1
      %s139 = scalar_select %p136, %s137, %s138
      %p142 = pneg %p136
      %p143 = scmp.eq.s32.totalorder %s9, 7
      %p144 = por %p142, %p143
      %p145 = scmp.ne.s32.totalorder %s137, %s140
      %p146 = scmp.eq.s32.totalorder %s9, 0
      %p147 = por %p145, %p146
      %p148 = scmp.ne.s32.totalorder %s137, %s140
      %p149 = scmp.eq.s32.totalorder %s14, 7
      %p150 = por %p148, %p149
      %p151 = scmp.ne.s32.totalorder %s140, %s141
      %p152 = scmp.eq.s32.totalorder %s14, 0
      %p153 = por %p151, %p152
      %p154 = scmp.ne.s32.totalorder %s140, %s141
      %p155 = scmp.eq.s32.totalorder %s15, 7
      %p156 = por %p154, %p155
      %p158 = scmp.ne.s32.totalorder %s141, %s157
      %p159 = scmp.eq.s32.totalorder %s15, 0
      %p160 = por %p158, %p159
      %p161 = scmp.le.s32.totalorder 1, %s9
      %p162 = scmp.lt.s32.totalorder %s9, 9
      %p163 = pnand %p161, %p162
      %p164 = pneg %p163
      // Predicated region
      $region9: #{clagnosco_autoencoder_forward.18} parent=5 // pred_check
        _
      $region10: #{clagnosco_autoencoder_forward.18} parent=5 // pred_check_branch
        %166 = sbr.rel (%p163) target = $region12
      $region11: #{clagnosco_autoencoder_forward.18} parent=5 // pred_region
        %s167 = ssub.s32 %s9, 1
      $region12: #{clagnosco_autoencoder_forward.18} parent=5 // pred_fallthru
        _
      %p168 = scmp.lt.s32.totalorder %s9, 8
      // Predicated region
      $region13: #{clagnosco_autoencoder_forward.18} parent=5 // pred_check
        %p169 = pneg %p168
      $region14: #{clagnosco_autoencoder_forward.18} parent=5 // pred_check_branch
        %171 = sbr.rel (%p169) target = $region16
      $region15: #{clagnosco_autoencoder_forward.18} parent=5 // pred_region
        // Predicated region
        $region17: #{clagnosco_autoencoder_forward.18} parent=15 // pred_check
          %p172 = pneg %p59
        $region18: #{clagnosco_autoencoder_forward.18} parent=15 // pred_check_branch
          %174 = sbr.rel (%p172) target = $region20
        $region19: #{clagnosco_autoencoder_forward.18} parent=15 // pred_region
          %s175 = sand.u32 %s49, 1
          %s176 = sand.u32 %s49, 1
          %s177 = smul.addr %s176, 32
          %s178 = scalar_lea.vmem [#allocation3], %s177
          %s179 = smul.u32 2, %s17
          %s180 = smul.u32 4, %s19
          %s181 = smul.addr %s179, 8
          %s182 = sadd.s32 %s180, %s181
          %s183 = smul.addr %s16, 16
          %s184 = sadd.s32 %s182, %s183
          %s185 = smul.addr %s184, 4
          %s186 = scalar_lea.vmem %s0, %s185
          // Predicated region
          $region21: #{clagnosco_autoencoder_forward.18} parent=19 // pred_check
            _
          $region22: #{clagnosco_autoencoder_forward.18} parent=19 // pred_check_branch
            %188 = sbr.rel (0) target = $region24
          $region23: #{clagnosco_autoencoder_forward.18} parent=19 // pred_region
            // Predicated region
            $region25: #{clagnosco_autoencoder_forward.18} parent=23 // pred_check
              _
            $region26: #{clagnosco_autoencoder_forward.18} parent=23 // pred_check_branch
              %190 = sbr.rel (0) target = $region28
            $region27: #{clagnosco_autoencoder_forward.18} parent=23 // pred_region
              loop: start=0, step=1, limit=1
              $region29: #{clagnosco_autoencoder_forward.18} parent=27 // loop_pre_header
                _
              $region30: #{clagnosco_autoencoder_forward.18} parent=27 // loop_header
                %s192 = sphi 0, %s196
                %p193 = scmp.ge.s32.totalorder %s192, 1
                %s197 = sphi %s186, %s186
                %s198 = sphi %s178, %s178
              $region31: #{clagnosco_autoencoder_forward.18} parent=27 // loop_header_branch
                %195 = sbr.rel (%p193) target = $region35
              $region32: #{clagnosco_autoencoder_forward.18} parent=27 // loop_body
                %v199 = vld [vmem:[%s197] sm:$0xff]
                %200 = vst [vmem:[%s198] sm:$0xff] %v199
                %v201 = vld [vmem:[%s197 + $0x8] sm:$0xff]
                %202 = vst [vmem:[%s198 + $0x8] sm:$0xff] %v201
                %v203 = vld [vmem:[%s197 + $0x20] sm:$0xff]
                %204 = vst [vmem:[%s198 + $0x10] sm:$0xff] %v203
                %v205 = vld [vmem:[%s197 + $0x28] sm:$0xff]
                %206 = vst [vmem:[%s198 + $0x18] sm:$0xff] %v205
              $region33: #{clagnosco_autoencoder_forward.18} parent=27 // loop_footer
                %s196 = sadd.s32 1, %s192
              $region34: #{clagnosco_autoencoder_forward.18} parent=27 // loop_footer_branch
                %191 = sbr.rel target = $region30
              $region35: #{clagnosco_autoencoder_forward.18} parent=27 // loop_exit
                _
            $region28: #{clagnosco_autoencoder_forward.18} parent=23 // pred_fallthru
              _
            // Predicated region
            $region36: #{clagnosco_autoencoder_forward.18} parent=23 // pred_check
              _
            $region37: #{clagnosco_autoencoder_forward.18} parent=23 // pred_check_branch
              %208 = sbr.rel target = $region39
            $region38: #{clagnosco_autoencoder_forward.18} parent=23 // pred_region
              _
            $region39: #{clagnosco_autoencoder_forward.18} parent=23 // pred_fallthru
              _
          $region24: #{clagnosco_autoencoder_forward.18} parent=19 // pred_fallthru
            _
          %209 = vnop
        $region20: #{clagnosco_autoencoder_forward.18} parent=15 // pred_fallthru
          _
        // Predicated region
        $region40: #{clagnosco_autoencoder_forward.18} parent=15 // pred_check
          %p210 = pneg %p89
        $region41: #{clagnosco_autoencoder_forward.18} parent=15 // pred_check_branch
          %212 = sbr.rel (%p210) target = $region43
        $region42: #{clagnosco_autoencoder_forward.18} parent=15 // pred_region
          %s213 = smul.u32 64, %s19
          %p214 = scmp.lt.s32.totalorder %s16, 3
          %s215 = scalar_select %p214, %s16, 3
          %p216 = scmp.lt.s32.totalorder %s213, 127
          %s217 = scalar_select %p216, %s213, 127
          %p218 = scmp.lt.s32.totalorder %s18, 0
          %s219 = scalar_select %p218, %s18, 0
          %s220 = sadd.s32 %s219, %s217
          %s221 = smul.addr %s215, 128
          %s222 = sadd.s32 %s220, %s221
          %s223 = smul.addr %s222, 4
          %s224 = scalar_lea.vmem %s1, %s223
          %s225 = smul.u32 64, %s19
        $region43: #{clagnosco_autoencoder_forward.18} parent=15 // pred_fallthru
          _
        // Predicated region
        $region44: #{clagnosco_autoencoder_forward.18} parent=15 // pred_check
          %p226 = pneg %p117
        $region45: #{clagnosco_autoencoder_forward.18} parent=15 // pred_check_branch
          %228 = sbr.rel (%p226) target = $region47
        $region46: #{clagnosco_autoencoder_forward.18} parent=15 // pred_region
          %p229 = scmp.lt.s32.totalorder %s16, 3
          %s230 = scalar_select %p229, %s16, 3
          %p231 = scmp.lt.s32.totalorder %s18, 0
          %s232 = scalar_select %p231, %s18, 0
          %s233 = sadd.s32 %s232, %s230
          %s234 = scalar_lea.vmem %s2, %s233
        $region47: #{clagnosco_autoencoder_forward.18} parent=15 // pred_fallthru
          _
      $region16: #{clagnosco_autoencoder_forward.18} parent=5 // pred_fallthru
        _
      %p235 = scmp.le.s32.totalorder 1, %s9
      %p236 = scmp.lt.s32.totalorder %s9, 9
      %p237 = pnand %p235, %p236
      %p238 = pneg %p237
      // Predicated region
      $region48: #{clagnosco_autoencoder_forward.18} parent=5 // pred_check
        _
      $region49: #{clagnosco_autoencoder_forward.18} parent=5 // pred_check_branch
        %240 = sbr.rel (%p237) target = $region51
      $region50: #{clagnosco_autoencoder_forward.18} parent=5 // pred_region
        %s241 = ssub.s32 %s9, 1
        %s242 = sand.u32 %s52, 1
        %s243 = sand.u32 %s52, 1
        %s244 = smul.addr %s243, 32
        %s245 = scalar_lea.vmem [#allocation3], %s244
        // Predicated region
        $region52: #{clagnosco_autoencoder_forward.18} parent=50 // pred_check
          %p246 = pneg %p65
        $region53: #{clagnosco_autoencoder_forward.18} parent=50 // pred_check_branch
          %248 = sbr.rel (%p246) target = $region55
        $region54: #{clagnosco_autoencoder_forward.18} parent=50 // pred_region
          _
        $region55: #{clagnosco_autoencoder_forward.18} parent=50 // pred_fallthru
          _
        %s249 = sand.u32 %s52, 1
        %s250 = sand.u32 %s52, 1
        %s251 = smul.addr %s250, 32
        %s252 = scalar_lea.vmem [#allocation3], %s251
        %p253 = pneg %p65
        %p254 = pneg %p62
        %s255 = smul.u32 64, %s23
        %p256 = scmp.lt.s32.totalorder %s20, 3
        %s257 = scalar_select %p256, %s20, 3
        %p258 = scmp.lt.s32.totalorder %s255, 127
        %s259 = scalar_select %p258, %s255, 127
        %p260 = scmp.lt.s32.totalorder %s22, 0
        %s261 = scalar_select %p260, %s22, 0
        %s262 = sadd.s32 %s261, %s259
        %s263 = smul.addr %s257, 128
        %s264 = sadd.s32 %s262, %s263
        %s265 = smul.addr %s264, 4
        %s266 = scalar_lea.vmem %s1, %s265
        %p267 = pneg %p95
        %p268 = pneg %p92
        %p269 = scmp.lt.s32.totalorder %s20, 3
        %s270 = scalar_select %p269, %s20, 3
        %p271 = scmp.lt.s32.totalorder %s22, 0
        %s272 = scalar_select %p271, %s22, 0
        %s273 = sadd.s32 %s272, %s270
        %s274 = scalar_lea.vmem %s2, %s273
        %p275 = pneg %p123
        %p276 = pneg %p120
        %p277 = pneg %p153
        %p278 = pneg %p150
        %s279 = smul.u32 2, %s21
        %p280 = scmp.lt.s32.totalorder %s20, 3
        %s281 = scalar_select %p280, %s20, 3
        %p282 = scmp.lt.s32.totalorder %s279, 1
        %s283 = scalar_select %p282, %s279, 1
        %p284 = scmp.lt.s32.totalorder %s22, 0
        %s285 = scalar_select %p284, %s22, 0
        %s286 = sadd.s32 %s285, %s283
        %s287 = smul.addr %s281, 2
        %s288 = sadd.s32 %s286, %s287
        %s289 = smul.addr %s288, 8
        %s290 = scalar_lea.vmem %s3, %s289
        %s291 = smul.u32 2, %s21
        %s292 = smul.u32 4, %s23
        %s293 = smul.u32 64, %s23
        %p294 = scmp.lt.s32.totalorder %s20, 3
        %s295 = scalar_select %p294, %s20, 3
        %p296 = scmp.lt.s32.totalorder %s293, 127
        %s297 = scalar_select %p296, %s293, 127
        %p298 = scmp.lt.s32.totalorder %s22, 0
        %s299 = scalar_select %p298, %s22, 0
        %s300 = sadd.s32 %s299, %s297
        %s301 = smul.addr %s295, 128
        %s302 = sadd.s32 %s300, %s301
        %s303 = smul.addr %s302, 4
        %s304 = scalar_lea.vmem %s1, %s303
        %s305 = smul.u32 64, %s23
        %p306 = scmp.lt.s32.totalorder %s20, 3
        %s307 = scalar_select %p306, %s20, 3
        %p308 = scmp.lt.s32.totalorder %s22, 0
        %s309 = scalar_select %p308, %s22, 0
        %s310 = sadd.s32 %s309, %s307
        %s311 = scalar_lea.vmem %s2, %s310
        %s312 = smul.u32 2, %s21
        %p313 = scmp.lt.s32.totalorder %s20, 3
        %s314 = scalar_select %p313, %s20, 3
        %p315 = scmp.lt.s32.totalorder %s312, 1
        %s316 = scalar_select %p315, %s312, 1
        %p317 = scmp.lt.s32.totalorder %s22, 0
        %s318 = scalar_select %p317, %s22, 0
        %s319 = sadd.s32 %s318, %s316
        %s320 = smul.addr %s314, 2
        %s321 = sadd.s32 %s319, %s320
        %s322 = smul.addr %s321, 8
        %s323 = scalar_lea.vmem %s3, %s322
        %s324 = smul.u32 2, %s21
        %p326 = scmp.eq.s32.totalorder %s23, 0
        // Predicated region
        $region56: #{clagnosco_autoencoder_forward.18} parent=50 // pred_check
          %p327 = pneg %p326
        $region57: #{clagnosco_autoencoder_forward.18} parent=50 // pred_check_branch
          %329 = sbr.rel (%p327) target = $region59
        $region58: #{clagnosco_autoencoder_forward.18} parent=50 // pred_region
          %330 = vst [vmem:[#allocation2] sm:$0xff] 0.0
          %331 = vst [vmem:[#allocation2 + $0x8] sm:$0xff] 0.0
        $region59: #{clagnosco_autoencoder_forward.18} parent=50 // pred_fallthru
          _
        %v332 = vld [vmem:[#allocation2] sm:$0xff]
        %v333 = vld [vmem:[#allocation2 + $0x8] sm:$0xff]
        %v334 = vld [vmem:[%s245] sm:$0xff]
        %v335 = vld [vmem:[%s245 + $0x8] sm:$0xff]
        %v336 = vld [vmem:[%s245 + $0x10] sm:$0xff]
        %v337 = vld [vmem:[%s245 + $0x18] sm:$0xff]
        %v338 = vld [vmem:[%s304] sm:$0xf]
        %v339 = vld [vmem:[%s304 + $0x4] sm:$0xf]
        %v340 = vld [vmem:[%s304 + $0x8] sm:$0xf]
        %v341 = vld [vmem:[%s304 + $0xc] sm:$0xf]
        %v342 = vld [vmem:[%s304 + $0x10] sm:$0xf]
        %v343 = vld [vmem:[%s304 + $0x14] sm:$0xf]
        %v344 = vld [vmem:[%s304 + $0x18] sm:$0xf]
        %v345 = vld [vmem:[%s304 + $0x1c] sm:$0xf]
        %v346 = vld [vmem:[%s304 + $0x20] sm:$0xf]
        %v347 = vld [vmem:[%s304 + $0x24] sm:$0xf]
        %v348 = vld [vmem:[%s304 + $0x28] sm:$0xf]
        %v349 = vld [vmem:[%s304 + $0x2c] sm:$0xf]
        %v350 = vld [vmem:[%s304 + $0x30] sm:$0xf]
        %v351 = vld [vmem:[%s304 + $0x34] sm:$0xf]
        %v352 = vld [vmem:[%s304 + $0x38] sm:$0xf]
        %v353 = vld [vmem:[%s304 + $0x3c] sm:$0xf]
        %v354 = vld [vmem:[%s304 + $0x40] sm:$0xf]
        %v355 = vld [vmem:[%s304 + $0x44] sm:$0xf]
        %v356 = vld [vmem:[%s304 + $0x48] sm:$0xf]
        %v357 = vld [vmem:[%s304 + $0x4c] sm:$0xf]
        %v358 = vld [vmem:[%s304 + $0x50] sm:$0xf]
        %v359 = vld [vmem:[%s304 + $0x54] sm:$0xf]
        %v360 = vld [vmem:[%s304 + $0x58] sm:$0xf]
        %v361 = vld [vmem:[%s304 + $0x5c] sm:$0xf]
        %v362 = vld [vmem:[%s304 + $0x60] sm:$0xf]
        %v363 = vld [vmem:[%s304 + $0x64] sm:$0xf]
        %v364 = vld [vmem:[%s304 + $0x68] sm:$0xf]
        %v365 = vld [vmem:[%s304 + $0x6c] sm:$0xf]
        %v366 = vld [vmem:[%s304 + $0x70] sm:$0xf]
        %v367 = vld [vmem:[%s304 + $0x74] sm:$0xf]
        %v368 = vld [vmem:[%s304 + $0x78] sm:$0xf]
        %v369 = vld [vmem:[%s304 + $0x7c] sm:$0xf]
        %v370 = vld [vmem:[%s304 + $0x80] sm:$0xf]
        %v371 = vld [vmem:[%s304 + $0x84] sm:$0xf]
        %v372 = vld [vmem:[%s304 + $0x88] sm:$0xf]
        %v373 = vld [vmem:[%s304 + $0x8c] sm:$0xf]
        %v374 = vld [vmem:[%s304 + $0x90] sm:$0xf]
        %v375 = vld [vmem:[%s304 + $0x94] sm:$0xf]
        %v376 = vld [vmem:[%s304 + $0x98] sm:$0xf]
        %v377 = vld [vmem:[%s304 + $0x9c] sm:$0xf]
        %v378 = vld [vmem:[%s304 + $0xa0] sm:$0xf]
        %v379 = vld [vmem:[%s304 + $0xa4] sm:$0xf]
        %v380 = vld [vmem:[%s304 + $0xa8] sm:$0xf]
        %v381 = vld [vmem:[%s304 + $0xac] sm:$0xf]
        %v382 = vld [vmem:[%s304 + $0xb0] sm:$0xf]
        %v383 = vld [vmem:[%s304 + $0xb4] sm:$0xf]
        %v384 = vld [vmem:[%s304 + $0xb8] sm:$0xf]
        %v385 = vld [vmem:[%s304 + $0xbc] sm:$0xf]
        %v386 = vld [vmem:[%s304 + $0xc0] sm:$0xf]
        %v387 = vld [vmem:[%s304 + $0xc4] sm:$0xf]
        %v388 = vld [vmem:[%s304 + $0xc8] sm:$0xf]
        %v389 = vld [vmem:[%s304 + $0xcc] sm:$0xf]
        %v390 = vld [vmem:[%s304 + $0xd0] sm:$0xf]
        %v391 = vld [vmem:[%s304 + $0xd4] sm:$0xf]
        %v392 = vld [vmem:[%s304 + $0xd8] sm:$0xf]
        %v393 = vld [vmem:[%s304 + $0xdc] sm:$0xf]
        %v394 = vld [vmem:[%s304 + $0xe0] sm:$0xf]
        %v395 = vld [vmem:[%s304 + $0xe4] sm:$0xf]
        %v396 = vld [vmem:[%s304 + $0xe8] sm:$0xf]
        %v397 = vld [vmem:[%s304 + $0xec] sm:$0xf]
        %v398 = vld [vmem:[%s304 + $0xf0] sm:$0xf]
        %v399 = vld [vmem:[%s304 + $0xf4] sm:$0xf]
        %v400 = vld [vmem:[%s304 + $0xf8] sm:$0xf]
        %v401 = vld [vmem:[%s304 + $0xfc] sm:$0xf]
        %v406 = vunpack.c.l.b16 %v334
        %v407 = vunpack.c.h.b16 %v334
        %v408 = vunpack.c.l.b16 %v335
        %v409 = vunpack.c.h.b16 %v335
        %v410 = vunpack.c.l.b16 %v336
        %v411 = vunpack.c.h.b16 %v336
        %v412 = vunpack.c.l.b16 %v337
        %v413 = vunpack.c.h.b16 %v337
        %v414 = vpack.c.b16 %v410, %v406
        %v415 = vpack.c.b16 %v411, %v407
        %v416 = vpack.c.b16 %v412, %v408
        %v417 = vpack.c.b16 %v413, %v409
        %v486 = vunpack.c.l.b16 %v338
        %v487 = vunpack.c.l.b16 %v339
        %v488 = vunpack.c.l.b16 %v340
        %v489 = vunpack.c.l.b16 %v341
        %v490 = vunpack.c.l.b16 %v342
        %v491 = vunpack.c.l.b16 %v343
        %v492 = vunpack.c.l.b16 %v344
        %v493 = vunpack.c.l.b16 %v345
        %v494 = vunpack.c.l.b16 %v346
        %v495 = vunpack.c.l.b16 %v347
        %v496 = vunpack.c.l.b16 %v348
        %v497 = vunpack.c.l.b16 %v349
        %v498 = vunpack.c.l.b16 %v350
        %v499 = vunpack.c.l.b16 %v351
        %v500 = vunpack.c.l.b16 %v352
        %v501 = vunpack.c.l.b16 %v353
        %v502 = vunpack.c.l.b16 %v354
        %v503 = vunpack.c.l.b16 %v355
        %v504 = vunpack.c.l.b16 %v356
        %v505 = vunpack.c.l.b16 %v357
        %v506 = vunpack.c.l.b16 %v358
        %v507 = vunpack.c.l.b16 %v359
        %v508 = vunpack.c.l.b16 %v360
        %v509 = vunpack.c.l.b16 %v361
        %v510 = vunpack.c.l.b16 %v362
        %v511 = vunpack.c.l.b16 %v363
        %v512 = vunpack.c.l.b16 %v364
        %v513 = vunpack.c.l.b16 %v365
        %v514 = vunpack.c.l.b16 %v366
        %v515 = vunpack.c.l.b16 %v367
        %v516 = vunpack.c.l.b16 %v368
        %v517 = vunpack.c.l.b16 %v369
        %v518 = vunpack.c.l.b16 %v370
        %v519 = vunpack.c.l.b16 %v371
        %v520 = vunpack.c.l.b16 %v372
        %v521 = vunpack.c.l.b16 %v373
        %v522 = vunpack.c.l.b16 %v374
        %v523 = vunpack.c.l.b16 %v375
        %v524 = vunpack.c.l.b16 %v376
        %v525 = vunpack.c.l.b16 %v377
        %v526 = vunpack.c.l.b16 %v378
        %v527 = vunpack.c.l.b16 %v379
        %v528 = vunpack.c.l.b16 %v380
        %v529 = vunpack.c.l.b16 %v381
        %v530 = vunpack.c.l.b16 %v382
        %v531 = vunpack.c.l.b16 %v383
        %v532 = vunpack.c.l.b16 %v384
        %v533 = vunpack.c.l.b16 %v385
        %v534 = vunpack.c.l.b16 %v386
        %v535 = vunpack.c.l.b16 %v387
        %v536 = vunpack.c.l.b16 %v388
        %v537 = vunpack.c.l.b16 %v389
        %v538 = vunpack.c.l.b16 %v390
        %v539 = vunpack.c.l.b16 %v391
        %v540 = vunpack.c.l.b16 %v392
        %v541 = vunpack.c.l.b16 %v393
        %v542 = vunpack.c.l.b16 %v394
        %v543 = vunpack.c.l.b16 %v395
        %v544 = vunpack.c.l.b16 %v396
        %v545 = vunpack.c.l.b16 %v397
        %v546 = vunpack.c.l.b16 %v398
        %v547 = vunpack.c.l.b16 %v399
        %v548 = vunpack.c.l.b16 %v400
        %v549 = vunpack.c.l.b16 %v401
        %v550 = vpack.c.b16 %v487, %v486
        %v551 = vpack.c.b16 %v489, %v488
        %v552 = vpack.c.b16 %v491, %v490
        %v553 = vpack.c.b16 %v493, %v492
        %v554 = vpack.c.b16 %v495, %v494
        %v555 = vpack.c.b16 %v497, %v496
        %v556 = vpack.c.b16 %v499, %v498
        %v557 = vpack.c.b16 %v501, %v500
        %v558 = vpack.c.b16 %v503, %v502
        %v559 = vpack.c.b16 %v505, %v504
        %v560 = vpack.c.b16 %v507, %v506
        %v561 = vpack.c.b16 %v509, %v508
        %v562 = vpack.c.b16 %v511, %v510
        %v563 = vpack.c.b16 %v513, %v512
        %v564 = vpack.c.b16 %v515, %v514
        %v565 = vpack.c.b16 %v517, %v516
        %v566 = vpack.c.b16 %v519, %v518
        %v567 = vpack.c.b16 %v521, %v520
        %v568 = vpack.c.b16 %v523, %v522
        %v569 = vpack.c.b16 %v525, %v524
        %v570 = vpack.c.b16 %v527, %v526
        %v571 = vpack.c.b16 %v529, %v528
        %v572 = vpack.c.b16 %v531, %v530
        %v573 = vpack.c.b16 %v533, %v532
        %v574 = vpack.c.b16 %v535, %v534
        %v575 = vpack.c.b16 %v537, %v536
        %v576 = vpack.c.b16 %v539, %v538
        %v577 = vpack.c.b16 %v541, %v540
        %v578 = vpack.c.b16 %v543, %v542
        %v579 = vpack.c.b16 %v545, %v544
        %v580 = vpack.c.b16 %v547, %v546
        %v581 = vpack.c.b16 %v549, %v548
        %614 = vmatprep.subr.bf16.mxu0 0
        %615 = vmatpush1.bf16.msra.mxu0 %v550
        %616 = vmatprep.subr.bf16.mxu0 0
        %617 = vmatpush1.bf16.msra.mxu0 %v551
        %618 = vmatprep.subr.bf16.mxu0 0
        %619 = vmatpush1.bf16.msra.mxu0 %v552
        %620 = vmatprep.subr.bf16.mxu0 0
        %621 = vmatpush1.bf16.msra.mxu0 %v553
        %622 = vmatprep.subr.bf16.mxu0 0
        %623 = vmatpush1.bf16.msra.mxu0 %v554
        %624 = vmatprep.subr.bf16.mxu0 0
        %625 = vmatpush1.bf16.msra.mxu0 %v555
        %626 = vmatprep.subr.bf16.mxu0 0
        %627 = vmatpush1.bf16.msra.mxu0 %v556
        %628 = vmatprep.subr.bf16.mxu0 0
        %629 = vmatpush1.bf16.msra.mxu0 %v557
        %630 = vmatprep.subr.bf16.mxu0 0
        %631 = vmatpush1.bf16.msra.mxu0 %v558
        %632 = vmatprep.subr.bf16.mxu0 0
        %633 = vmatpush1.bf16.msra.mxu0 %v559
        %634 = vmatprep.subr.bf16.mxu0 0
        %635 = vmatpush1.bf16.msra.mxu0 %v560
        %636 = vmatprep.subr.bf16.mxu0 0
        %637 = vmatpush1.bf16.msra.mxu0 %v561
        %638 = vmatprep.subr.bf16.mxu0 0
        %639 = vmatpush1.bf16.msra.mxu0 %v562
        %640 = vmatprep.subr.bf16.mxu0 0
        %641 = vmatpush1.bf16.msra.mxu0 %v563
        %642 = vmatprep.subr.bf16.mxu0 0
        %643 = vmatpush1.bf16.msra.mxu0 %v564
        %644 = vmatprep.subr.bf16.mxu0 0
        %645 = vmatpush1.bf16.msra.mxu0 %v565
        %646 = vmatprep.mubr.bf16.mxu0 %v415
        %647 = vmatmul.mubr.bf16.gmra.mrb[0].mxu0 %v414
        %v648 = vpop.f32.mrb[0].mxu0
        %v649 = vadd.f32 0.0, %v648
        %v650 = vpop.f32.mrb[0].mxu0
        %v651 = vpop.f32.mrb[0].mxu0
        %v652 = vadd.f32 0.0, %v651
        %v653 = vpop.f32.mrb[0].mxu0
        %654 = vdwg.mxu0
        %655 = vmatprep.subr.bf16.mxu0 0
        %656 = vmatpush1.bf16.msra.mxu0 %v566
        %657 = vmatprep.subr.bf16.mxu0 0
        %658 = vmatpush1.bf16.msra.mxu0 %v567
        %659 = vmatprep.subr.bf16.mxu0 0
        %660 = vmatpush1.bf16.msra.mxu0 %v568
        %661 = vmatprep.subr.bf16.mxu0 0
        %662 = vmatpush1.bf16.msra.mxu0 %v569
        %663 = vmatprep.subr.bf16.mxu0 0
        %664 = vmatpush1.bf16.msra.mxu0 %v570
        %665 = vmatprep.subr.bf16.mxu0 0
        %666 = vmatpush1.bf16.msra.mxu0 %v571
        %667 = vmatprep.subr.bf16.mxu0 0
        %668 = vmatpush1.bf16.msra.mxu0 %v572
        %669 = vmatprep.subr.bf16.mxu0 0
        %670 = vmatpush1.bf16.msra.mxu0 %v573
        %671 = vmatprep.subr.bf16.mxu0 0
        %672 = vmatpush1.bf16.msra.mxu0 %v574
        %673 = vmatprep.subr.bf16.mxu0 0
        %674 = vmatpush1.bf16.msra.mxu0 %v575
        %675 = vmatprep.subr.bf16.mxu0 0
        %676 = vmatpush1.bf16.msra.mxu0 %v576
        %677 = vmatprep.subr.bf16.mxu0 0
        %678 = vmatpush1.bf16.msra.mxu0 %v577
        %679 = vmatprep.subr.bf16.mxu0 0
        %680 = vmatpush1.bf16.msra.mxu0 %v578
        %681 = vmatprep.subr.bf16.mxu0 0
        %682 = vmatpush1.bf16.msra.mxu0 %v579
        %683 = vmatprep.subr.bf16.mxu0 0
        %684 = vmatpush1.bf16.msra.mxu0 %v580
        %685 = vmatprep.subr.bf16.mxu0 0
        %686 = vmatpush1.bf16.msra.mxu0 %v581
        %687 = vmatprep.mubr.bf16.mxu0 %v417
        %688 = vmatmul.mubr.bf16.gmra.mrb[0].mxu0 %v416
        %v689 = vpop.f32.mrb[0].mxu0
        %v690 = vadd.f32 %v649, %v689
        %v691 = vpop.f32.mrb[0].mxu0
        %v692 = vpop.f32.mrb[0].mxu0
        %v693 = vadd.f32 %v652, %v692
        %v694 = vpop.f32.mrb[0].mxu0
        %695 = vdwg.mxu0
        %v696 = vadd.f32 %v332, %v690
        %v697 = vadd.f32 %v333, %v693
        %698 = vst [vmem:[#allocation2] sm:$0xff] %v696
        %699 = vst [vmem:[#allocation2 + $0x8] sm:$0xff] %v697
        %p700 = scmp.eq.s32.totalorder %s23, 1
        // Predicated region
        $region60: #{clagnosco_autoencoder_forward.18} parent=50 // pred_check
          %p701 = pneg %p700
        $region61: #{clagnosco_autoencoder_forward.18} parent=50 // pred_check_branch
          %703 = sbr.rel (%p701) target = $region63
        $region62: #{clagnosco_autoencoder_forward.18} parent=50 // pred_region
          %v704 = vld [vmem:[#allocation2] sm:$0xff]
          %v705 = vld [vmem:[#allocation2 + $0x8] sm:$0xff]
          %v706 = vld [vmem:[%s311] sm:$0x1]
          %v708 = vlaneseq
          %v709 = vshrl.u32 %v708, 7
          %v710 = vsub.s32 0, %v709
          %v711 = vrot.slane %v706, %v710
          %v713 = vadd.f32 %v704, %v711
          %v714 = vadd.f32 %v705, %v711
          %vm715 = vcmp.ge.f32.partialorder %v713, 0.0
          %vm716 = vcmp.ge.f32.partialorder %v714, 0.0
          %v717 = vmul.f32 %v713, 0.01
          %v718 = vmul.f32 %v714, 0.01
          %v719 = vsel %vm715, %v713, %v717
          %v720 = vsel %vm716, %v714, %v718
          %721 = vst [vmem:[%s323] sm:$0xff] %v719
          %722 = vst [vmem:[%s323 + $0x8] sm:$0xff] %v720
        $region63: #{clagnosco_autoencoder_forward.18} parent=50 // pred_fallthru
          _
        %s723 = smul.u32 2, %s21
        %p724 = scmp.lt.s32.totalorder %s20, 3
        %s725 = scalar_select %p724, %s20, 3
        %p726 = scmp.lt.s32.totalorder %s723, 1
        %s727 = scalar_select %p726, %s723, 1
        %p728 = scmp.lt.s32.totalorder %s22, 0
        %s729 = scalar_select %p728, %s22, 0
        %s730 = sadd.s32 %s729, %s727
        %s731 = smul.addr %s725, 2
        %s732 = sadd.s32 %s730, %s731
        %s733 = smul.addr %s732, 8
        %s734 = scalar_lea.vmem %s3, %s733
        // Predicated region
        $region64: #{clagnosco_autoencoder_forward.18} parent=50 // pred_check
          %p735 = pneg %p150
        $region65: #{clagnosco_autoencoder_forward.18} parent=50 // pred_check_branch
          %737 = sbr.rel (%p735) target = $region67
        $region66: #{clagnosco_autoencoder_forward.18} parent=50 // pred_region
          %s738 = smul.u32 2, %s21
        $region67: #{clagnosco_autoencoder_forward.18} parent=50 // pred_fallthru
          _
      $region51: #{clagnosco_autoencoder_forward.18} parent=5 // pred_fallthru
        _
      %p739 = scmp.le.s32.totalorder 2, %s9
      // Predicated region
      $region68: #{clagnosco_autoencoder_forward.18} parent=5 // pred_check
        %p740 = pneg %p739
      $region69: #{clagnosco_autoencoder_forward.18} parent=5 // pred_check_branch
        %742 = sbr.rel (%p740) target = $region71
      $region70: #{clagnosco_autoencoder_forward.18} parent=5 // pred_region
        %s743 = ssub.s32 %s9, 2
        // Predicated region
        $region72: #{clagnosco_autoencoder_forward.18} parent=70 // pred_check
          %p744 = pneg %p156
        $region73: #{clagnosco_autoencoder_forward.18} parent=70 // pred_check_branch
          %746 = sbr.rel (%p744) target = $region75
        $region74: #{clagnosco_autoencoder_forward.18} parent=70 // pred_region
          %s747 = smul.u32 2, %s25
          %p748 = scmp.lt.s32.totalorder %s24, 3
          %s749 = scalar_select %p748, %s24, 3
          %p750 = scmp.lt.s32.totalorder %s747, 1
          %s751 = scalar_select %p750, %s747, 1
          %p752 = scmp.lt.s32.totalorder %s26, 0
          %s753 = scalar_select %p752, %s26, 0
          %s754 = sadd.s32 %s753, %s751
          %s755 = smul.addr %s749, 2
          %s756 = sadd.s32 %s754, %s755
          %s757 = smul.addr %s756, 8
          %s758 = scalar_lea.vmem %s3, %s757
        $region75: #{clagnosco_autoencoder_forward.18} parent=70 // pred_fallthru
          _
      $region71: #{clagnosco_autoencoder_forward.18} parent=5 // pred_fallthru
        _
    $region6: #{clagnosco_autoencoder_forward.18} parent=1 // loop_footer
      %s13 = sadd.s32 1, %s9
    $region7: #{clagnosco_autoencoder_forward.18} parent=1 // loop_footer_branch
      %8 = sbr.rel target = $region3
    $region8: #{clagnosco_autoencoder_forward.18} parent=1 // loop_exit
      _

// kernel: clagnosco_autoencoder_forward.19
$region0: #{clagnosco_autoencoder_forward.19}
  #allocation0 [shape = 'u32[]', space=smem, size = 0x4, offset = 0x4, fixed_abs, tag = 'smem constant byte address 0x4 - core index']
  #allocation1 [shape = 'u32[144,128]{1,0:T(1,128)}', space=vmem, size = 0x12000, scoped, tag = 'internal scratch']
  #allocation2 [shape = 'f32[32,128]{1,0:T(8,128)}', space=vmem, size = 0x4000, scoped, tag = 'scratch operand']
  %s0 = inlined_call_operand.vmem [shape: bf16[4,32,512], index: 0, kind: input, shape index: {}]
  %s1 = inlined_call_operand.vmem [shape: bf16[4,512,128], index: 1, kind: input, shape index: {}]
  %s2 = inlined_call_operand.vmem [shape: f32[4,1,128], index: 2, kind: input, shape index: {}]
  %s3 = inlined_call_operand.vmem [shape: f32[4,32,128], index: 3, kind: output, shape index: {}]
  %s4 = sld [smem:[#allocation0]]
  $region53: #{clagnosco_autoencoder_forward.19} parent=0
    _
  %s6 = ssub.s32 1, %s4
  %s7 = scalar_select 0, %s6, %s4
  loop: start=0, step=1, limit=6
  $region2: #{clagnosco_autoencoder_forward.19} parent=0 // loop_pre_header
    _
  $region3: #{clagnosco_autoencoder_forward.19} parent=0 // loop_header
    %s9 = sphi 0, %s13
    %p10 = scmp.ge.s32.totalorder %s9, 6
    %s16 = sphi 0, %s42
    %s17 = sphi 0, %s38
    %s18 = sphi 0, %s34
    %s19 = sphi 0, %s30
    %s20 = sphi 0, %s16
    %s21 = sphi 0, %s17
    %s22 = sphi 0, %s18
    %s23 = sphi 0, %s19
    %s24 = sphi 0, %s20
    %s25 = sphi 0, %s21
    %s26 = sphi 0, %s22
    %s27 = sphi 0, %s23
    %s49 = sphi 0, %s51
    %s52 = sphi 0, %s49
    %s53 = sphi 0, %s52
    %s69 = sphi 0, %s53
    %s79 = sphi 0, %s81
    %s82 = sphi 0, %s79
    %s83 = sphi 0, %s82
    %s99 = sphi 0, %s83
    %s107 = sphi 0, %s109
    %s110 = sphi 0, %s107
    %s111 = sphi 0, %s110
    %s127 = sphi 0, %s111
    %s137 = sphi 0, %s139
    %s140 = sphi 0, %s137
    %s141 = sphi 0, %s140
    %s157 = sphi 0, %s141
  $region4: #{clagnosco_autoencoder_forward.19} parent=0 // loop_header_branch
    %12 = sbr.rel (%p10) target = $region8
  $region5: #{clagnosco_autoencoder_forward.19} parent=0 // loop_body
    %s14 = ssub.s32 %s9, 1
    %s15 = ssub.s32 %s9, 2
    %s28 = sadd.s32 1, %s19
    %p29 = scmp.ge.s32.totalorder %s28, 1
    %s30 = scalar_select %p29, 0, %s28
    %s31 = sadd.s32 1, %s18
    %s32 = scalar_select %p29, %s31, %s18
    %p33 = scmp.ge.s32.totalorder %s32, 1
    %s34 = scalar_select %p33, 0, %s32
    %s35 = sadd.s32 1, %s17
    %s36 = scalar_select %p33, %s35, %s17
    %p37 = scmp.ge.s32.totalorder %s36, 1
    %s38 = scalar_select %p37, 0, %s36
    %s39 = sadd.s32 1, %s16
    %s40 = scalar_select %p37, %s39, %s16
    %p41 = scmp.ge.s32.totalorder %s40, 4
    %s42 = scalar_select %p41, 0, %s40
    %s43 = ssub.s32 %s16, %s42
    %s44 = ssub.s32 %s17, %s38
    %s45 = sor.u32 %s43, %s44
    %s46 = ssub.s32 %s19, %s30
    %s47 = sor.u32 %s45, %s46
    %p48 = scmp.eq.s32.totalorder %s47, 0
    %s50 = sadd.s32 %s49, 1
    %s51 = scalar_select %p48, %s49, %s50
    %p54 = pneg %p48
    %p55 = scmp.eq.s32.totalorder %s9, 3
    %p56 = por %p54, %p55
    %p57 = scmp.ne.s32.totalorder %s49, %s52
    %p58 = scmp.eq.s32.totalorder %s9, 0
    %p59 = por %p57, %p58
    %p60 = scmp.ne.s32.totalorder %s49, %s52
    %p61 = scmp.eq.s32.totalorder %s14, 3
    %p62 = por %p60, %p61
    %p63 = scmp.ne.s32.totalorder %s52, %s53
    %p64 = scmp.eq.s32.totalorder %s14, 0
    %p65 = por %p63, %p64
    %p66 = scmp.ne.s32.totalorder %s52, %s53
    %p67 = scmp.eq.s32.totalorder %s15, 3
    %p68 = por %p66, %p67
    %p70 = scmp.ne.s32.totalorder %s53, %s69
    %p71 = scmp.eq.s32.totalorder %s15, 0
    %p72 = por %p70, %p71
    %s73 = ssub.s32 %s16, %s42
    %s74 = ssub.s32 %s19, %s30
    %s75 = sor.u32 %s73, %s74
    %s76 = ssub.s32 %s18, %s34
    %s77 = sor.u32 %s75, %s76
    %p78 = scmp.eq.s32.totalorder %s77, 0
    %s80 = sadd.s32 %s79, 1
    %s81 = scalar_select %p78, %s79, %s80
    %p84 = pneg %p78
    %p85 = scmp.eq.s32.totalorder %s9, 3
    %p86 = por %p84, %p85
    %p87 = scmp.ne.s32.totalorder %s79, %s82
    %p88 = scmp.eq.s32.totalorder %s9, 0
    %p89 = por %p87, %p88
    %p90 = scmp.ne.s32.totalorder %s79, %s82
    %p91 = scmp.eq.s32.totalorder %s14, 3
    %p92 = por %p90, %p91
    %p93 = scmp.ne.s32.totalorder %s82, %s83
    %p94 = scmp.eq.s32.totalorder %s14, 0
    %p95 = por %p93, %p94
    %p96 = scmp.ne.s32.totalorder %s82, %s83
    %p97 = scmp.eq.s32.totalorder %s15, 3
    %p98 = por %p96, %p97
    %p100 = scmp.ne.s32.totalorder %s83, %s99
    %p101 = scmp.eq.s32.totalorder %s15, 0
    %p102 = por %p100, %p101
    %s103 = ssub.s32 %s16, %s42
    %s104 = ssub.s32 %s18, %s34
    %s105 = sor.u32 %s103, %s104
    %p106 = scmp.eq.s32.totalorder %s105, 0
    %s108 = sadd.s32 %s107, 1
    %s109 = scalar_select %p106, %s107, %s108
    %p112 = pneg %p106
    %p113 = scmp.eq.s32.totalorder %s9, 3
    %p114 = por %p112, %p113
    %p115 = scmp.ne.s32.totalorder %s107, %s110
    %p116 = scmp.eq.s32.totalorder %s9, 0
    %p117 = por %p115, %p116
    %p118 = scmp.ne.s32.totalorder %s107, %s110
    %p119 = scmp.eq.s32.totalorder %s14, 3
    %p120 = por %p118, %p119
    %p121 = scmp.ne.s32.totalorder %s110, %s111
    %p122 = scmp.eq.s32.totalorder %s14, 0
    %p123 = por %p121, %p122
    %p124 = scmp.ne.s32.totalorder %s110, %s111
    %p125 = scmp.eq.s32.totalorder %s15, 3
    %p126 = por %p124, %p125
    %p128 = scmp.ne.s32.totalorder %s111, %s127
    %p129 = scmp.eq.s32.totalorder %s15, 0
    %p130 = por %p128, %p129
    %s131 = ssub.s32 %s16, %s42
    %s132 = ssub.s32 %s17, %s38
    %s133 = sor.u32 %s131, %s132
    %s134 = ssub.s32 %s18, %s34
    %s135 = sor.u32 %s133, %s134
    %p136 = scmp.eq.s32.totalorder %s135, 0
    %s138 = sadd.s32 %s137, 1
    %s139 = scalar_select %p136, %s137, %s138
    %p142 = pneg %p136
    %p143 = scmp.eq.s32.totalorder %s9, 3
    %p144 = por %p142, %p143
    %p145 = scmp.ne.s32.totalorder %s137, %s140
    %p146 = scmp.eq.s32.totalorder %s9, 0
    %p147 = por %p145, %p146
    %p148 = scmp.ne.s32.totalorder %s137, %s140
    %p149 = scmp.eq.s32.totalorder %s14, 3
    %p150 = por %p148, %p149
    %p151 = scmp.ne.s32.totalorder %s140, %s141
    %p152 = scmp.eq.s32.totalorder %s14, 0
    %p153 = por %p151, %p152
    %p154 = scmp.ne.s32.totalorder %s140, %s141
    %p155 = scmp.eq.s32.totalorder %s15, 3
    %p156 = por %p154, %p155
    %p158 = scmp.ne.s32.totalorder %s141, %s157
    %p159 = scmp.eq.s32.totalorder %s15, 0
    %p160 = por %p158, %p159
    %p161 = scmp.le.s32.totalorder 1, %s9
    %p162 = scmp.lt.s32.totalorder %s9, 5
    %p163 = pnand %p161, %p162
    %p164 = pneg %p163
    // Predicated region
    $region9: #{clagnosco_autoencoder_forward.19} parent=5 // pred_check
      _
    $region10: #{clagnosco_autoencoder_forward.19} parent=5 // pred_check_branch
      %166 = sbr.rel (%p163) target = $region12
    $region11: #{clagnosco_autoencoder_forward.19} parent=5 // pred_region
      %s167 = ssub.s32 %s9, 1
    $region12: #{clagnosco_autoencoder_forward.19} parent=5 // pred_fallthru
      _
    %p168 = scmp.lt.s32.totalorder %s9, 4
    // Predicated region
    $region13: #{clagnosco_autoencoder_forward.19} parent=5 // pred_check
      %p169 = pneg %p168
    $region14: #{clagnosco_autoencoder_forward.19} parent=5 // pred_check_branch
      %171 = sbr.rel (%p169) target = $region16
    $region15: #{clagnosco_autoencoder_forward.19} parent=5 // pred_region
      // Predicated region
      $region17: #{clagnosco_autoencoder_forward.19} parent=15 // pred_check
        %p172 = pneg %p59
      $region18: #{clagnosco_autoencoder_forward.19} parent=15 // pred_check_branch
        %174 = sbr.rel (%p172) target = $region20
      $region19: #{clagnosco_autoencoder_forward.19} parent=15 // pred_region
        %s175 = smul.u32 4, %s17
        %s176 = smul.u32 4, %s19
        %p177 = scmp.lt.s32.totalorder %s16, 3
        %s178 = scalar_select %p177, %s16, 3
        %p179 = scmp.lt.s32.totalorder %s175, 3
        %s180 = scalar_select %p179, %s175, 3
        %p181 = scmp.lt.s32.totalorder %s176, 3
        %s182 = scalar_select %p181, %s176, 3
        %s183 = smul.addr %s180, 4
        %s184 = sadd.s32 %s182, %s183
        %s185 = smul.addr %s178, 16
        %s186 = sadd.s32 %s184, %s185
        %s187 = smul.addr %s186, 4
        %s188 = scalar_lea.vmem %s0, %s187
        %s189 = smul.u32 4, %s17
        %s190 = smul.u32 4, %s19
      $region20: #{clagnosco_autoencoder_forward.19} parent=15 // pred_fallthru
        _
      // Predicated region
      $region21: #{clagnosco_autoencoder_forward.19} parent=15 // pred_check
        %p191 = pneg %p89
      $region22: #{clagnosco_autoencoder_forward.19} parent=15 // pred_check_branch
        %193 = sbr.rel (%p191) target = $region24
      $region23: #{clagnosco_autoencoder_forward.19} parent=15 // pred_region
        %s194 = smul.u32 64, %s19
        %p195 = scmp.lt.s32.totalorder %s16, 3
        %s196 = scalar_select %p195, %s16, 3
        %p197 = scmp.lt.s32.totalorder %s194, 63
        %s198 = scalar_select %p197, %s194, 63
        %p199 = scmp.lt.s32.totalorder %s18, 0
        %s200 = scalar_select %p199, %s18, 0
        %s201 = sadd.s32 %s200, %s198
        %s202 = smul.addr %s196, 64
        %s203 = sadd.s32 %s201, %s202
        %s204 = smul.addr %s203, 4
        %s205 = scalar_lea.vmem %s1, %s204
        %s206 = smul.u32 64, %s19
      $region24: #{clagnosco_autoencoder_forward.19} parent=15 // pred_fallthru
        _
      // Predicated region
      $region25: #{clagnosco_autoencoder_forward.19} parent=15 // pred_check
        %p207 = pneg %p117
      $region26: #{clagnosco_autoencoder_forward.19} parent=15 // pred_check_branch
        %209 = sbr.rel (%p207) target = $region28
      $region27: #{clagnosco_autoencoder_forward.19} parent=15 // pred_region
        %p210 = scmp.lt.s32.totalorder %s16, 3
        %s211 = scalar_select %p210, %s16, 3
        %p212 = scmp.lt.s32.totalorder %s18, 0
        %s213 = scalar_select %p212, %s18, 0
        %s214 = sadd.s32 %s213, %s211
        %s215 = scalar_lea.vmem %s2, %s214
      $region28: #{clagnosco_autoencoder_forward.19} parent=15 // pred_fallthru
        _
    $region16: #{clagnosco_autoencoder_forward.19} parent=5 // pred_fallthru
      _
    %p216 = scmp.le.s32.totalorder 1, %s9
    %p217 = scmp.lt.s32.totalorder %s9, 5
    %p218 = pnand %p216, %p217
    %p219 = pneg %p218
    // Predicated region
    $region29: #{clagnosco_autoencoder_forward.19} parent=5 // pred_check
      _
    $region30: #{clagnosco_autoencoder_forward.19} parent=5 // pred_check_branch
      %221 = sbr.rel (%p218) target = $region32
    $region31: #{clagnosco_autoencoder_forward.19} parent=5 // pred_region
      %s222 = ssub.s32 %s9, 1
      %s223 = smul.u32 4, %s21
      %s224 = smul.u32 4, %s23
      %p225 = scmp.lt.s32.totalorder %s20, 3
      %s226 = scalar_select %p225, %s20, 3
      %p227 = scmp.lt.s32.totalorder %s223, 3
      %s228 = scalar_select %p227, %s223, 3
      %p229 = scmp.lt.s32.totalorder %s224, 3
      %s230 = scalar_select %p229, %s224, 3
      %s231 = smul.addr %s228, 4
      %s232 = sadd.s32 %s230, %s231
      %s233 = smul.addr %s226, 16
      %s234 = sadd.s32 %s232, %s233
      %s235 = smul.addr %s234, 4
      %s236 = scalar_lea.vmem %s0, %s235
      %p237 = pneg %p65
      %p238 = pneg %p62
      %s239 = smul.u32 64, %s23
      %p240 = scmp.lt.s32.totalorder %s20, 3
      %s241 = scalar_select %p240, %s20, 3
      %p242 = scmp.lt.s32.totalorder %s239, 63
      %s243 = scalar_select %p242, %s239, 63
      %p244 = scmp.lt.s32.totalorder %s22, 0
      %s245 = scalar_select %p244, %s22, 0
      %s246 = sadd.s32 %s245, %s243
      %s247 = smul.addr %s241, 64
      %s248 = sadd.s32 %s246, %s247
      %s249 = smul.addr %s248, 4
      %s250 = scalar_lea.vmem %s1, %s249
      %p251 = pneg %p95
      %p252 = pneg %p92
      %p253 = scmp.lt.s32.totalorder %s20, 3
      %s254 = scalar_select %p253, %s20, 3
      %p255 = scmp.lt.s32.totalorder %s22, 0
      %s256 = scalar_select %p255, %s22, 0
      %s257 = sadd.s32 %s256, %s254
      %s258 = scalar_lea.vmem %s2, %s257
      %p259 = pneg %p123
      %p260 = pneg %p120
      %p261 = pneg %p153
      %p262 = pneg %p150
      %s263 = smul.u32 4, %s21
      %p264 = scmp.lt.s32.totalorder %s20, 3
      %s265 = scalar_select %p264, %s20, 3
      %p266 = scmp.lt.s32.totalorder %s263, 3
      %s267 = scalar_select %p266, %s263, 3
      %p268 = scmp.lt.s32.totalorder %s22, 0
      %s269 = scalar_select %p268, %s22, 0
      %s270 = sadd.s32 %s269, %s267
      %s271 = smul.addr %s265, 4
      %s272 = sadd.s32 %s270, %s271
      %s273 = smul.addr %s272, 8
      %s274 = scalar_lea.vmem %s3, %s273
      %s275 = smul.u32 4, %s21
      %s276 = smul.u32 4, %s23
      %p277 = scmp.lt.s32.totalorder %s20, 3
      %s278 = scalar_select %p277, %s20, 3
      %p279 = scmp.lt.s32.totalorder %s275, 3
      %s280 = scalar_select %p279, %s275, 3
      %p281 = scmp.lt.s32.totalorder %s276, 3
      %s282 = scalar_select %p281, %s276, 3
      %s283 = smul.addr %s280, 4
      %s284 = sadd.s32 %s282, %s283
      %s285 = smul.addr %s278, 16
      %s286 = sadd.s32 %s284, %s285
      %s287 = smul.addr %s286, 4
      %s288 = scalar_lea.vmem %s0, %s287
      %s289 = smul.u32 4, %s21
      %s290 = smul.u32 4, %s23
      %s291 = smul.u32 64, %s23
      %p292 = scmp.lt.s32.totalorder %s20, 3
      %s293 = scalar_select %p292, %s20, 3
      %p294 = scmp.lt.s32.totalorder %s291, 63
      %s295 = scalar_select %p294, %s291, 63
      %p296 = scmp.lt.s32.totalorder %s22, 0
      %s297 = scalar_select %p296, %s22, 0
      %s298 = sadd.s32 %s297, %s295
      %s299 = smul.addr %s293, 64
      %s300 = sadd.s32 %s298, %s299
      %s301 = smul.addr %s300, 4
      %s302 = scalar_lea.vmem %s1, %s301
      %s303 = smul.u32 64, %s23
      %p304 = scmp.lt.s32.totalorder %s20, 3
      %s305 = scalar_select %p304, %s20, 3
      %p306 = scmp.lt.s32.totalorder %s22, 0
      %s307 = scalar_select %p306, %s22, 0
      %s308 = sadd.s32 %s307, %s305
      %s309 = scalar_lea.vmem %s2, %s308
      %s310 = smul.u32 4, %s21
      %p311 = scmp.lt.s32.totalorder %s20, 3
      %s312 = scalar_select %p311, %s20, 3
      %p313 = scmp.lt.s32.totalorder %s310, 3
      %s314 = scalar_select %p313, %s310, 3
      %p315 = scmp.lt.s32.totalorder %s22, 0
      %s316 = scalar_select %p315, %s22, 0
      %s317 = sadd.s32 %s316, %s314
      %s318 = smul.addr %s312, 4
      %s319 = sadd.s32 %s317, %s318
      %s320 = smul.addr %s319, 8
      %s321 = scalar_lea.vmem %s3, %s320
      %s322 = smul.u32 4, %s21
      %p324 = scmp.eq.s32.totalorder %s23, 0
      // Predicated region
      $region33: #{clagnosco_autoencoder_forward.19} parent=31 // pred_check
        %p325 = pneg %p324
      $region34: #{clagnosco_autoencoder_forward.19} parent=31 // pred_check_branch
        %327 = sbr.rel (%p325) target = $region36
      $region35: #{clagnosco_autoencoder_forward.19} parent=31 // pred_region
        %328 = vst [vmem:[#allocation2] sm:$0xff] 0.0
        %329 = vst [vmem:[#allocation2 + $0x8] sm:$0xff] 0.0
        %330 = vst [vmem:[#allocation2 + $0x10] sm:$0xff] 0.0
        %331 = vst [vmem:[#allocation2 + $0x18] sm:$0xff] 0.0
      $region36: #{clagnosco_autoencoder_forward.19} parent=31 // pred_fallthru
        _
      %v332 = vld [vmem:[#allocation2] sm:$0xff]
      %v333 = vld [vmem:[#allocation2 + $0x8] sm:$0xff]
      %v334 = vld [vmem:[#allocation2 + $0x10] sm:$0xff]
      %v335 = vld [vmem:[#allocation2 + $0x18] sm:$0xff]
      %v336 = vld [vmem:[%s288] sm:$0xff]
      %v337 = vld [vmem:[%s288 + $0x8] sm:$0xff]
      %v338 = vld [vmem:[%s288 + $0x10] sm:$0xff]
      %v339 = vld [vmem:[%s288 + $0x18] sm:$0xff]
      %v340 = vld [vmem:[%s288 + $0x20] sm:$0xff]
      %v341 = vld [vmem:[%s288 + $0x28] sm:$0xff]
      %v342 = vld [vmem:[%s288 + $0x30] sm:$0xff]
      %v343 = vld [vmem:[%s288 + $0x38] sm:$0xff]
      %v344 = vld [vmem:[%s302] sm:$0xf]
      %v345 = vld [vmem:[%s302 + $0x4] sm:$0xf]
      %v346 = vld [vmem:[%s302 + $0x8] sm:$0xf]
      %v347 = vld [vmem:[%s302 + $0xc] sm:$0xf]
      %v348 = vld [vmem:[%s302 + $0x10] sm:$0xf]
      %v349 = vld [vmem:[%s302 + $0x14] sm:$0xf]
      %v350 = vld [vmem:[%s302 + $0x18] sm:$0xf]
      %v351 = vld [vmem:[%s302 + $0x1c] sm:$0xf]
      %v352 = vld [vmem:[%s302 + $0x20] sm:$0xf]
      %v353 = vld [vmem:[%s302 + $0x24] sm:$0xf]
      %v354 = vld [vmem:[%s302 + $0x28] sm:$0xf]
      %v355 = vld [vmem:[%s302 + $0x2c] sm:$0xf]
      %v356 = vld [vmem:[%s302 + $0x30] sm:$0xf]
      %v357 = vld [vmem:[%s302 + $0x34] sm:$0xf]
      %v358 = vld [vmem:[%s302 + $0x38] sm:$0xf]
      %v359 = vld [vmem:[%s302 + $0x3c] sm:$0xf]
      %v360 = vld [vmem:[%s302 + $0x40] sm:$0xf]
      %v361 = vld [vmem:[%s302 + $0x44] sm:$0xf]
      %v362 = vld [vmem:[%s302 + $0x48] sm:$0xf]
      %v363 = vld [vmem:[%s302 + $0x4c] sm:$0xf]
      %v364 = vld [vmem:[%s302 + $0x50] sm:$0xf]
      %v365 = vld [vmem:[%s302 + $0x54] sm:$0xf]
      %v366 = vld [vmem:[%s302 + $0x58] sm:$0xf]
      %v367 = vld [vmem:[%s302 + $0x5c] sm:$0xf]
      %v368 = vld [vmem:[%s302 + $0x60] sm:$0xf]
      %v369 = vld [vmem:[%s302 + $0x64] sm:$0xf]
      %v370 = vld [vmem:[%s302 + $0x68] sm:$0xf]
      %v371 = vld [vmem:[%s302 + $0x6c] sm:$0xf]
      %v372 = vld [vmem:[%s302 + $0x70] sm:$0xf]
      %v373 = vld [vmem:[%s302 + $0x74] sm:$0xf]
      %v374 = vld [vmem:[%s302 + $0x78] sm:$0xf]
      %v375 = vld [vmem:[%s302 + $0x7c] sm:$0xf]
      %v376 = vld [vmem:[%s302 + $0x80] sm:$0xf]
      %v377 = vld [vmem:[%s302 + $0x84] sm:$0xf]
      %v378 = vld [vmem:[%s302 + $0x88] sm:$0xf]
      %v379 = vld [vmem:[%s302 + $0x8c] sm:$0xf]
      %v380 = vld [vmem:[%s302 + $0x90] sm:$0xf]
      %v381 = vld [vmem:[%s302 + $0x94] sm:$0xf]
      %v382 = vld [vmem:[%s302 + $0x98] sm:$0xf]
      %v383 = vld [vmem:[%s302 + $0x9c] sm:$0xf]
      %v384 = vld [vmem:[%s302 + $0xa0] sm:$0xf]
      %v385 = vld [vmem:[%s302 + $0xa4] sm:$0xf]
      %v386 = vld [vmem:[%s302 + $0xa8] sm:$0xf]
      %v387 = vld [vmem:[%s302 + $0xac] sm:$0xf]
      %v388 = vld [vmem:[%s302 + $0xb0] sm:$0xf]
      %v389 = vld [vmem:[%s302 + $0xb4] sm:$0xf]
      %v390 = vld [vmem:[%s302 + $0xb8] sm:$0xf]
      %v391 = vld [vmem:[%s302 + $0xbc] sm:$0xf]
      %v392 = vld [vmem:[%s302 + $0xc0] sm:$0xf]
      %v393 = vld [vmem:[%s302 + $0xc4] sm:$0xf]
      %v394 = vld [vmem:[%s302 + $0xc8] sm:$0xf]
      %v395 = vld [vmem:[%s302 + $0xcc] sm:$0xf]
      %v396 = vld [vmem:[%s302 + $0xd0] sm:$0xf]
      %v397 = vld [vmem:[%s302 + $0xd4] sm:$0xf]
      %v398 = vld [vmem:[%s302 + $0xd8] sm:$0xf]
      %v399 = vld [vmem:[%s302 + $0xdc] sm:$0xf]
      %v400 = vld [vmem:[%s302 + $0xe0] sm:$0xf]
      %v401 = vld [vmem:[%s302 + $0xe4] sm:$0xf]
      %v402 = vld [vmem:[%s302 + $0xe8] sm:$0xf]
      %v403 = vld [vmem:[%s302 + $0xec] sm:$0xf]
      %v404 = vld [vmem:[%s302 + $0xf0] sm:$0xf]
      %v405 = vld [vmem:[%s302 + $0xf4] sm:$0xf]
      %v406 = vld [vmem:[%s302 + $0xf8] sm:$0xf]
      %v407 = vld [vmem:[%s302 + $0xfc] sm:$0xf]
      %v416 = vunpack.c.l.b16 %v336
      %v417 = vunpack.c.h.b16 %v336
      %v418 = vunpack.c.l.b16 %v337
      %v419 = vunpack.c.h.b16 %v337
      %v420 = vunpack.c.l.b16 %v338
      %v421 = vunpack.c.h.b16 %v338
      %v422 = vunpack.c.l.b16 %v339
      %v423 = vunpack.c.h.b16 %v339
      %v424 = vunpack.c.l.b16 %v340
      %v425 = vunpack.c.h.b16 %v340
      %v426 = vunpack.c.l.b16 %v341
      %v427 = vunpack.c.h.b16 %v341
      %v428 = vunpack.c.l.b16 %v342
      %v429 = vunpack.c.h.b16 %v342
      %v430 = vunpack.c.l.b16 %v343
      %v431 = vunpack.c.h.b16 %v343
      %v432 = vpack.c.b16 %v420, %v416
      %v433 = vpack.c.b16 %v421, %v417
      %v434 = vpack.c.b16 %v422, %v418
      %v435 = vpack.c.b16 %v423, %v419
      %v436 = vpack.c.b16 %v428, %v424
      %v437 = vpack.c.b16 %v429, %v425
      %v438 = vpack.c.b16 %v430, %v426
      %v439 = vpack.c.b16 %v431, %v427
      %v512 = vunpack.c.l.b16 %v344
      %v513 = vunpack.c.l.b16 %v345
      %v514 = vunpack.c.l.b16 %v346
      %v515 = vunpack.c.l.b16 %v347
      %v516 = vunpack.c.l.b16 %v348
      %v517 = vunpack.c.l.b16 %v349
      %v518 = vunpack.c.l.b16 %v350
      %v519 = vunpack.c.l.b16 %v351
      %v520 = vunpack.c.l.b16 %v352
      %v521 = vunpack.c.l.b16 %v353
      %v522 = vunpack.c.l.b16 %v354
      %v523 = vunpack.c.l.b16 %v355
      %v524 = vunpack.c.l.b16 %v356
      %v525 = vunpack.c.l.b16 %v357
      %v526 = vunpack.c.l.b16 %v358
      %v527 = vunpack.c.l.b16 %v359
      %v528 = vunpack.c.l.b16 %v360
      %v529 = vunpack.c.l.b16 %v361
      %v530 = vunpack.c.l.b16 %v362
      %v531 = vunpack.c.l.b16 %v363
      %v532 = vunpack.c.l.b16 %v364
      %v533 = vunpack.c.l.b16 %v365
      %v534 = vunpack.c.l.b16 %v366
      %v535 = vunpack.c.l.b16 %v367
      %v536 = vunpack.c.l.b16 %v368
      %v537 = vunpack.c.l.b16 %v369
      %v538 = vunpack.c.l.b16 %v370
      %v539 = vunpack.c.l.b16 %v371
      %v540 = vunpack.c.l.b16 %v372
      %v541 = vunpack.c.l.b16 %v373
      %v542 = vunpack.c.l.b16 %v374
      %v543 = vunpack.c.l.b16 %v375
      %v544 = vunpack.c.l.b16 %v376
      %v545 = vunpack.c.l.b16 %v377
      %v546 = vunpack.c.l.b16 %v378
      %v547 = vunpack.c.l.b16 %v379
      %v548 = vunpack.c.l.b16 %v380
      %v549 = vunpack.c.l.b16 %v381
      %v550 = vunpack.c.l.b16 %v382
      %v551 = vunpack.c.l.b16 %v383
      %v552 = vunpack.c.l.b16 %v384
      %v553 = vunpack.c.l.b16 %v385
      %v554 = vunpack.c.l.b16 %v386
      %v555 = vunpack.c.l.b16 %v387
      %v556 = vunpack.c.l.b16 %v388
      %v557 = vunpack.c.l.b16 %v389
      %v558 = vunpack.c.l.b16 %v390
      %v559 = vunpack.c.l.b16 %v391
      %v560 = vunpack.c.l.b16 %v392
      %v561 = vunpack.c.l.b16 %v393
      %v562 = vunpack.c.l.b16 %v394
      %v563 = vunpack.c.l.b16 %v395
      %v564 = vunpack.c.l.b16 %v396
      %v565 = vunpack.c.l.b16 %v397
      %v566 = vunpack.c.l.b16 %v398
      %v567 = vunpack.c.l.b16 %v399
      %v568 = vunpack.c.l.b16 %v400
      %v569 = vunpack.c.l.b16 %v401
      %v570 = vunpack.c.l.b16 %v402
      %v571 = vunpack.c.l.b16 %v403
      %v572 = vunpack.c.l.b16 %v404
      %v573 = vunpack.c.l.b16 %v405
      %v574 = vunpack.c.l.b16 %v406
      %v575 = vunpack.c.l.b16 %v407
      %v576 = vpack.c.b16 %v513, %v512
      %v577 = vpack.c.b16 %v515, %v514
      %v578 = vpack.c.b16 %v517, %v516
      %v579 = vpack.c.b16 %v519, %v518
      %v580 = vpack.c.b16 %v521, %v520
      %v581 = vpack.c.b16 %v523, %v522
      %v582 = vpack.c.b16 %v525, %v524
      %v583 = vpack.c.b16 %v527, %v526
      %v584 = vpack.c.b16 %v529, %v528
      %v585 = vpack.c.b16 %v531, %v530
      %v586 = vpack.c.b16 %v533, %v532
      %v587 = vpack.c.b16 %v535, %v534
      %v588 = vpack.c.b16 %v537, %v536
      %v589 = vpack.c.b16 %v539, %v538
      %v590 = vpack.c.b16 %v541, %v540
      %v591 = vpack.c.b16 %v543, %v542
      %v592 = vpack.c.b16 %v545, %v544
      %v593 = vpack.c.b16 %v547, %v546
      %v594 = vpack.c.b16 %v549, %v548
      %v595 = vpack.c.b16 %v551, %v550
      %v596 = vpack.c.b16 %v553, %v552
      %v597 = vpack.c.b16 %v555, %v554
      %v598 = vpack.c.b16 %v557, %v556
      %v599 = vpack.c.b16 %v559, %v558
      %v600 = vpack.c.b16 %v561, %v560
      %v601 = vpack.c.b16 %v563, %v562
      %v602 = vpack.c.b16 %v565, %v564
      %v603 = vpack.c.b16 %v567, %v566
      %v604 = vpack.c.b16 %v569, %v568
      %v605 = vpack.c.b16 %v571, %v570
      %v606 = vpack.c.b16 %v573, %v572
      %v607 = vpack.c.b16 %v575, %v574
      %640 = vmatprep.subr.bf16.mxu0 0
      %641 = vmatpush1.bf16.msra.mxu0 %v576
      %642 = vmatprep.subr.bf16.mxu0 0
      %643 = vmatpush1.bf16.msra.mxu0 %v577
      %644 = vmatprep.subr.bf16.mxu0 0
      %645 = vmatpush1.bf16.msra.mxu0 %v578
      %646 = vmatprep.subr.bf16.mxu0 0
      %647 = vmatpush1.bf16.msra.mxu0 %v579
      %648 = vmatprep.subr.bf16.mxu0 0
      %649 = vmatpush1.bf16.msra.mxu0 %v580
      %650 = vmatprep.subr.bf16.mxu0 0
      %651 = vmatpush1.bf16.msra.mxu0 %v581
      %652 = vmatprep.subr.bf16.mxu0 0
      %653 = vmatpush1.bf16.msra.mxu0 %v582
      %654 = vmatprep.subr.bf16.mxu0 0
      %655 = vmatpush1.bf16.msra.mxu0 %v583
      %656 = vmatprep.subr.bf16.mxu0 0
      %657 = vmatpush1.bf16.msra.mxu0 %v584
      %658 = vmatprep.subr.bf16.mxu0 0
      %659 = vmatpush1.bf16.msra.mxu0 %v585
      %660 = vmatprep.subr.bf16.mxu0 0
      %661 = vmatpush1.bf16.msra.mxu0 %v586
      %662 = vmatprep.subr.bf16.mxu0 0
      %663 = vmatpush1.bf16.msra.mxu0 %v587
      %664 = vmatprep.subr.bf16.mxu0 0
      %665 = vmatpush1.bf16.msra.mxu0 %v588
      %666 = vmatprep.subr.bf16.mxu0 0
      %667 = vmatpush1.bf16.msra.mxu0 %v589
      %668 = vmatprep.subr.bf16.mxu0 0
      %669 = vmatpush1.bf16.msra.mxu0 %v590
      %670 = vmatprep.subr.bf16.mxu0 0
      %671 = vmatpush1.bf16.msra.mxu0 %v591
      %672 = vmatprep.mubr.bf16.mxu0 %v433
      %673 = vmatmul.mubr.bf16.gmra.mrb[0].mxu0 %v432
      %v674 = vpop.f32.mrb[0].mxu0
      %v675 = vadd.f32 0.0, %v674
      %v676 = vpop.f32.mrb[0].mxu0
      %v677 = vpop.f32.mrb[0].mxu0
      %v678 = vadd.f32 0.0, %v677
      %v679 = vpop.f32.mrb[0].mxu0
      %680 = vmatprep.mubr.bf16.mxu0 %v437
      %681 = vmatmul.mubr.bf16.gmra.mrb[0].mxu0 %v436
      %v682 = vpop.f32.mrb[0].mxu0
      %v683 = vadd.f32 0.0, %v682
      %v684 = vpop.f32.mrb[0].mxu0
      %v685 = vpop.f32.mrb[0].mxu0
      %v686 = vadd.f32 0.0, %v685
      %v687 = vpop.f32.mrb[0].mxu0
      %688 = vdwg.mxu0
      %689 = vmatprep.subr.bf16.mxu0 0
      %690 = vmatpush1.bf16.msra.mxu0 %v592
      %691 = vmatprep.subr.bf16.mxu0 0
      %692 = vmatpush1.bf16.msra.mxu0 %v593
      %693 = vmatprep.subr.bf16.mxu0 0
      %694 = vmatpush1.bf16.msra.mxu0 %v594
      %695 = vmatprep.subr.bf16.mxu0 0
      %696 = vmatpush1.bf16.msra.mxu0 %v595
      %697 = vmatprep.subr.bf16.mxu0 0
      %698 = vmatpush1.bf16.msra.mxu0 %v596
      %699 = vmatprep.subr.bf16.mxu0 0
      %700 = vmatpush1.bf16.msra.mxu0 %v597
      %701 = vmatprep.subr.bf16.mxu0 0
      %702 = vmatpush1.bf16.msra.mxu0 %v598
      %703 = vmatprep.subr.bf16.mxu0 0
      %704 = vmatpush1.bf16.msra.mxu0 %v599
      %705 = vmatprep.subr.bf16.mxu0 0
      %706 = vmatpush1.bf16.msra.mxu0 %v600
      %707 = vmatprep.subr.bf16.mxu0 0
      %708 = vmatpush1.bf16.msra.mxu0 %v601
      %709 = vmatprep.subr.bf16.mxu0 0
      %710 = vmatpush1.bf16.msra.mxu0 %v602
      %711 = vmatprep.subr.bf16.mxu0 0
      %712 = vmatpush1.bf16.msra.mxu0 %v603
      %713 = vmatprep.subr.bf16.mxu0 0
      %714 = vmatpush1.bf16.msra.mxu0 %v604
      %715 = vmatprep.subr.bf16.mxu0 0
      %716 = vmatpush1.bf16.msra.mxu0 %v605
      %717 = vmatprep.subr.bf16.mxu0 0
      %718 = vmatpush1.bf16.msra.mxu0 %v606
      %719 = vmatprep.subr.bf16.mxu0 0
      %720 = vmatpush1.bf16.msra.mxu0 %v607
      %721 = vmatprep.mubr.bf16.mxu0 %v435
      %722 = vmatmul.mubr.bf16.gmra.mrb[0].mxu0 %v434
      %v723 = vpop.f32.mrb[0].mxu0
      %v724 = vadd.f32 %v675, %v723
      %v725 = vpop.f32.mrb[0].mxu0
      %v726 = vpop.f32.mrb[0].mxu0
      %v727 = vadd.f32 %v678, %v726
      %v728 = vpop.f32.mrb[0].mxu0
      %729 = vmatprep.mubr.bf16.mxu0 %v439
      %730 = vmatmul.mubr.bf16.gmra.mrb[0].mxu0 %v438
      %v731 = vpop.f32.mrb[0].mxu0
      %v732 = vadd.f32 %v683, %v731
      %v733 = vpop.f32.mrb[0].mxu0
      %v734 = vpop.f32.mrb[0].mxu0
      %v735 = vadd.f32 %v686, %v734
      %v736 = vpop.f32.mrb[0].mxu0
      %737 = vdwg.mxu0
      %v738 = vadd.f32 %v332, %v724
      %v739 = vadd.f32 %v333, %v727
      %v740 = vadd.f32 %v334, %v732
      %v741 = vadd.f32 %v335, %v735
      %742 = vst [vmem:[#allocation2] sm:$0xff] %v738
      %743 = vst [vmem:[#allocation2 + $0x8] sm:$0xff] %v739
      %744 = vst [vmem:[#allocation2 + $0x10] sm:$0xff] %v740
      %745 = vst [vmem:[#allocation2 + $0x18] sm:$0xff] %v741
      // Predicated region
      $region37: #{clagnosco_autoencoder_forward.19} parent=31 // pred_check
        %p746 = pneg %p324
      $region38: #{clagnosco_autoencoder_forward.19} parent=31 // pred_check_branch
        %748 = sbr.rel (%p746) target = $region40
      $region39: #{clagnosco_autoencoder_forward.19} parent=31 // pred_region
        %v749 = vld [vmem:[#allocation2] sm:$0xff]
        %v750 = vld [vmem:[#allocation2 + $0x8] sm:$0xff]
        %v751 = vld [vmem:[#allocation2 + $0x10] sm:$0xff]
        %v752 = vld [vmem:[#allocation2 + $0x18] sm:$0xff]
        %v753 = vld [vmem:[%s309] sm:$0x1]
        %v755 = vlaneseq
        %v756 = vshrl.u32 %v755, 7
        %v757 = vsub.s32 0, %v756
        %v758 = vrot.slane %v753, %v757
        %v760 = vadd.f32 %v749, %v758
        %v761 = vadd.f32 %v750, %v758
        %v762 = vadd.f32 %v751, %v758
        %v763 = vadd.f32 %v752, %v758
        %vm764 = vcmp.ge.f32.partialorder %v760, 0.0
        %vm765 = vcmp.ge.f32.partialorder %v761, 0.0
        %vm766 = vcmp.ge.f32.partialorder %v762, 0.0
        %vm767 = vcmp.ge.f32.partialorder %v763, 0.0
        %v768 = vmul.f32 %v760, 0.01
        %v769 = vmul.f32 %v761, 0.01
        %v770 = vmul.f32 %v762, 0.01
        %v771 = vmul.f32 %v763, 0.01
        %v772 = vsel %vm764, %v760, %v768
        %v773 = vsel %vm765, %v761, %v769
        %v774 = vsel %vm766, %v762, %v770
        %v775 = vsel %vm767, %v763, %v771
        %776 = vst [vmem:[%s321] sm:$0xff] %v772
        %777 = vst [vmem:[%s321 + $0x8] sm:$0xff] %v773
        %778 = vst [vmem:[%s321 + $0x10] sm:$0xff] %v774
        %779 = vst [vmem:[%s321 + $0x18] sm:$0xff] %v775
      $region40: #{clagnosco_autoencoder_forward.19} parent=31 // pred_fallthru
        _
      %s780 = smul.u32 4, %s21
      %p781 = scmp.lt.s32.totalorder %s20, 3
      %s782 = scalar_select %p781, %s20, 3
      %p783 = scmp.lt.s32.totalorder %s780, 3
      %s784 = scalar_select %p783, %s780, 3
      %p785 = scmp.lt.s32.totalorder %s22, 0
      %s786 = scalar_select %p785, %s22, 0
      %s787 = sadd.s32 %s786, %s784
      %s788 = smul.addr %s782, 4
      %s789 = sadd.s32 %s787, %s788
      %s790 = smul.addr %s789, 8
      %s791 = scalar_lea.vmem %s3, %s790
      // Predicated region
      $region41: #{clagnosco_autoencoder_forward.19} parent=31 // pred_check
        %p792 = pneg %p150
      $region42: #{clagnosco_autoencoder_forward.19} parent=31 // pred_check_branch
        %794 = sbr.rel (%p792) target = $region44
      $region43: #{clagnosco_autoencoder_forward.19} parent=31 // pred_region
        %s795 = smul.u32 4, %s21
      $region44: #{clagnosco_autoencoder_forward.19} parent=31 // pred_fallthru
        _
    $region32: #{clagnosco_autoencoder_forward.19} parent=5 // pred_fallthru
      _
    %p796 = scmp.le.s32.totalorder 2, %s9
    // Predicated region
    $region45: #{clagnosco_autoencoder_forward.19} parent=5 // pred_check
      %p797 = pneg %p796
    $region46: #{clagnosco_autoencoder_forward.19} parent=5 // pred_check_branch
      %799 = sbr.rel (%p797) target = $region48
    $region47: #{clagnosco_autoencoder_forward.19} parent=5 // pred_region
      %s800 = ssub.s32 %s9, 2
      // Predicated region
      $region49: #{clagnosco_autoencoder_forward.19} parent=47 // pred_check
        %p801 = pneg %p156
      $region50: #{clagnosco_autoencoder_forward.19} parent=47 // pred_check_branch
        %803 = sbr.rel (%p801) target = $region52
      $region51: #{clagnosco_autoencoder_forward.19} parent=47 // pred_region
        %s804 = smul.u32 4, %s25
        %p805 = scmp.lt.s32.totalorder %s24, 3
        %s806 = scalar_select %p805, %s24, 3
        %p807 = scmp.lt.s32.totalorder %s804, 3
        %s808 = scalar_select %p807, %s804, 3
        %p809 = scmp.lt.s32.totalorder %s26, 0
        %s810 = scalar_select %p809, %s26, 0
        %s811 = sadd.s32 %s810, %s808
        %s812 = smul.addr %s806, 4
        %s813 = sadd.s32 %s811, %s812
        %s814 = smul.addr %s813, 8
        %s815 = scalar_lea.vmem %s3, %s814
      $region52: #{clagnosco_autoencoder_forward.19} parent=47 // pred_fallthru
        _
    $region48: #{clagnosco_autoencoder_forward.19} parent=5 // pred_fallthru
      _
  $region6: #{clagnosco_autoencoder_forward.19} parent=0 // loop_footer
    %s13 = sadd.s32 1, %s9
  $region7: #{clagnosco_autoencoder_forward.19} parent=0 // loop_footer_branch
    %8 = sbr.rel target = $region3
  $region8: #{clagnosco_autoencoder_forward.19} parent=0 // loop_exit
    _

// kernel: clagnosco_autoencoder_forward.20
$region0: #{clagnosco_autoencoder_forward.20}
  #allocation0 [shape = 'u32[]', space=smem, size = 0x4, offset = 0x4, fixed_abs, tag = 'smem constant byte address 0x4 - core index']
  #allocation1 [shape = 'u32[144,128]{1,0:T(1,128)}', space=vmem, size = 0x12000, scoped, tag = 'internal scratch']
  #allocation2 [shape = 'f32[128,128]{1,0:T(8,128)}', space=vmem, size = 0x10000, scoped, tag = 'scratch operand']
  %s0 = inlined_call_operand.vmem [shape: bf16[4,128,256], index: 0, kind: input, shape index: {}]
  %s1 = inlined_call_operand.vmem [shape: bf16[4,256,128], index: 1, kind: input, shape index: {}]
  %s2 = inlined_call_operand.vmem [shape: f32[4,1,128], index: 2, kind: input, shape index: {}]
  %s3 = inlined_call_operand.vmem [shape: f32[4,128,128], index: 3, kind: output, shape index: {}]
  %s4 = sld [smem:[#allocation0]]
  $region53: #{clagnosco_autoencoder_forward.20} parent=0
    _
  %s6 = ssub.s32 1, %s4
  %s7 = scalar_select 0, %s6, %s4
  loop: start=0, step=1, limit=6
  $region2: #{clagnosco_autoencoder_forward.20} parent=0 // loop_pre_header
    _
  $region3: #{clagnosco_autoencoder_forward.20} parent=0 // loop_header
    %s9 = sphi 0, %s13
    %p10 = scmp.ge.s32.totalorder %s9, 6
    %s16 = sphi 0, %s42
    %s17 = sphi 0, %s38
    %s18 = sphi 0, %s34
    %s19 = sphi 0, %s30
    %s20 = sphi 0, %s16
    %s21 = sphi 0, %s17
    %s22 = sphi 0, %s18
    %s23 = sphi 0, %s19
    %s24 = sphi 0, %s20
    %s25 = sphi 0, %s21
    %s26 = sphi 0, %s22
    %s27 = sphi 0, %s23
    %s49 = sphi 0, %s51
    %s52 = sphi 0, %s49
    %s53 = sphi 0, %s52
    %s69 = sphi 0, %s53
    %s79 = sphi 0, %s81
    %s82 = sphi 0, %s79
    %s83 = sphi 0, %s82
    %s99 = sphi 0, %s83
    %s107 = sphi 0, %s109
    %s110 = sphi 0, %s107
    %s111 = sphi 0, %s110
    %s127 = sphi 0, %s111
    %s137 = sphi 0, %s139
    %s140 = sphi 0, %s137
    %s141 = sphi 0, %s140
    %s157 = sphi 0, %s141
  $region4: #{clagnosco_autoencoder_forward.20} parent=0 // loop_header_branch
    %12 = sbr.rel (%p10) target = $region8
  $region5: #{clagnosco_autoencoder_forward.20} parent=0 // loop_body
    %s14 = ssub.s32 %s9, 1
    %s15 = ssub.s32 %s9, 2
    %s28 = sadd.s32 1, %s19
    %p29 = scmp.ge.s32.totalorder %s28, 1
    %s30 = scalar_select %p29, 0, %s28
    %s31 = sadd.s32 1, %s18
    %s32 = scalar_select %p29, %s31, %s18
    %p33 = scmp.ge.s32.totalorder %s32, 1
    %s34 = scalar_select %p33, 0, %s32
    %s35 = sadd.s32 1, %s17
    %s36 = scalar_select %p33, %s35, %s17
    %p37 = scmp.ge.s32.totalorder %s36, 1
    %s38 = scalar_select %p37, 0, %s36
    %s39 = sadd.s32 1, %s16
    %s40 = scalar_select %p37, %s39, %s16
    %p41 = scmp.ge.s32.totalorder %s40, 4
    %s42 = scalar_select %p41, 0, %s40
    %s43 = ssub.s32 %s16, %s42
    %s44 = ssub.s32 %s17, %s38
    %s45 = sor.u32 %s43, %s44
    %s46 = ssub.s32 %s19, %s30
    %s47 = sor.u32 %s45, %s46
    %p48 = scmp.eq.s32.totalorder %s47, 0
    %s50 = sadd.s32 %s49, 1
    %s51 = scalar_select %p48, %s49, %s50
    %p54 = pneg %p48
    %p55 = scmp.eq.s32.totalorder %s9, 3
    %p56 = por %p54, %p55
    %p57 = scmp.ne.s32.totalorder %s49, %s52
    %p58 = scmp.eq.s32.totalorder %s9, 0
    %p59 = por %p57, %p58
    %p60 = scmp.ne.s32.totalorder %s49, %s52
    %p61 = scmp.eq.s32.totalorder %s14, 3
    %p62 = por %p60, %p61
    %p63 = scmp.ne.s32.totalorder %s52, %s53
    %p64 = scmp.eq.s32.totalorder %s14, 0
    %p65 = por %p63, %p64
    %p66 = scmp.ne.s32.totalorder %s52, %s53
    %p67 = scmp.eq.s32.totalorder %s15, 3
    %p68 = por %p66, %p67
    %p70 = scmp.ne.s32.totalorder %s53, %s69
    %p71 = scmp.eq.s32.totalorder %s15, 0
    %p72 = por %p70, %p71
    %s73 = ssub.s32 %s16, %s42
    %s74 = ssub.s32 %s19, %s30
    %s75 = sor.u32 %s73, %s74
    %s76 = ssub.s32 %s18, %s34
    %s77 = sor.u32 %s75, %s76
    %p78 = scmp.eq.s32.totalorder %s77, 0
    %s80 = sadd.s32 %s79, 1
    %s81 = scalar_select %p78, %s79, %s80
    %p84 = pneg %p78
    %p85 = scmp.eq.s32.totalorder %s9, 3
    %p86 = por %p84, %p85
    %p87 = scmp.ne.s32.totalorder %s79, %s82
    %p88 = scmp.eq.s32.totalorder %s9, 0
    %p89 = por %p87, %p88
    %p90 = scmp.ne.s32.totalorder %s79, %s82
    %p91 = scmp.eq.s32.totalorder %s14, 3
    %p92 = por %p90, %p91
    %p93 = scmp.ne.s32.totalorder %s82, %s83
    %p94 = scmp.eq.s32.totalorder %s14, 0
    %p95 = por %p93, %p94
    %p96 = scmp.ne.s32.totalorder %s82, %s83
    %p97 = scmp.eq.s32.totalorder %s15, 3
    %p98 = por %p96, %p97
    %p100 = scmp.ne.s32.totalorder %s83, %s99
    %p101 = scmp.eq.s32.totalorder %s15, 0
    %p102 = por %p100, %p101
    %s103 = ssub.s32 %s16, %s42
    %s104 = ssub.s32 %s18, %s34
    %s105 = sor.u32 %s103, %s104
    %p106 = scmp.eq.s32.totalorder %s105, 0
    %s108 = sadd.s32 %s107, 1
    %s109 = scalar_select %p106, %s107, %s108
    %p112 = pneg %p106
    %p113 = scmp.eq.s32.totalorder %s9, 3
    %p114 = por %p112, %p113
    %p115 = scmp.ne.s32.totalorder %s107, %s110
    %p116 = scmp.eq.s32.totalorder %s9, 0
    %p117 = por %p115, %p116
    %p118 = scmp.ne.s32.totalorder %s107, %s110
    %p119 = scmp.eq.s32.totalorder %s14, 3
    %p120 = por %p118, %p119
    %p121 = scmp.ne.s32.totalorder %s110, %s111
    %p122 = scmp.eq.s32.totalorder %s14, 0
    %p123 = por %p121, %p122
    %p124 = scmp.ne.s32.totalorder %s110, %s111
    %p125 = scmp.eq.s32.totalorder %s15, 3
    %p126 = por %p124, %p125
    %p128 = scmp.ne.s32.totalorder %s111, %s127
    %p129 = scmp.eq.s32.totalorder %s15, 0
    %p130 = por %p128, %p129
    %s131 = ssub.s32 %s16, %s42
    %s132 = ssub.s32 %s17, %s38
    %s133 = sor.u32 %s131, %s132
    %s134 = ssub.s32 %s18, %s34
    %s135 = sor.u32 %s133, %s134
    %p136 = scmp.eq.s32.totalorder %s135, 0
    %s138 = sadd.s32 %s137, 1
    %s139 = scalar_select %p136, %s137, %s138
    %p142 = pneg %p136
    %p143 = scmp.eq.s32.totalorder %s9, 3
    %p144 = por %p142, %p143
    %p145 = scmp.ne.s32.totalorder %s137, %s140
    %p146 = scmp.eq.s32.totalorder %s9, 0
    %p147 = por %p145, %p146
    %p148 = scmp.ne.s32.totalorder %s137, %s140
    %p149 = scmp.eq.s32.totalorder %s14, 3
    %p150 = por %p148, %p149
    %p151 = scmp.ne.s32.totalorder %s140, %s141
    %p152 = scmp.eq.s32.totalorder %s14, 0
    %p153 = por %p151, %p152
    %p154 = scmp.ne.s32.totalorder %s140, %s141
    %p155 = scmp.eq.s32.totalorder %s15, 3
    %p156 = por %p154, %p155
    %p158 = scmp.ne.s32.totalorder %s141, %s157
    %p159 = scmp.eq.s32.totalorder %s15, 0
    %p160 = por %p158, %p159
    %p161 = scmp.le.s32.totalorder 1, %s9
    %p162 = scmp.lt.s32.totalorder %s9, 5
    %p163 = pnand %p161, %p162
    %p164 = pneg %p163
    // Predicated region
    $region9: #{clagnosco_autoencoder_forward.20} parent=5 // pred_check
      _
    $region10: #{clagnosco_autoencoder_forward.20} parent=5 // pred_check_branch
      %166 = sbr.rel (%p163) target = $region12
    $region11: #{clagnosco_autoencoder_forward.20} parent=5 // pred_region
      %s167 = ssub.s32 %s9, 1
    $region12: #{clagnosco_autoencoder_forward.20} parent=5 // pred_fallthru
      _
    %p168 = scmp.lt.s32.totalorder %s9, 4
    // Predicated region
    $region13: #{clagnosco_autoencoder_forward.20} parent=5 // pred_check
      %p169 = pneg %p168
    $region14: #{clagnosco_autoencoder_forward.20} parent=5 // pred_check_branch
      %171 = sbr.rel (%p169) target = $region16
    $region15: #{clagnosco_autoencoder_forward.20} parent=5 // pred_region
      // Predicated region
      $region17: #{clagnosco_autoencoder_forward.20} parent=15 // pred_check
        %p172 = pneg %p59
      $region18: #{clagnosco_autoencoder_forward.20} parent=15 // pred_check_branch
        %174 = sbr.rel (%p172) target = $region20
      $region19: #{clagnosco_autoencoder_forward.20} parent=15 // pred_region
        %s175 = smul.u32 16, %s17
        %s176 = smul.u32 2, %s19
        %p177 = scmp.lt.s32.totalorder %s16, 3
        %s178 = scalar_select %p177, %s16, 3
        %p179 = scmp.lt.s32.totalorder %s175, 15
        %s180 = scalar_select %p179, %s175, 15
        %p181 = scmp.lt.s32.totalorder %s176, 1
        %s182 = scalar_select %p181, %s176, 1
        %s183 = smul.addr %s180, 2
        %s184 = sadd.s32 %s182, %s183
        %s185 = smul.addr %s178, 32
        %s186 = sadd.s32 %s184, %s185
        %s187 = smul.addr %s186, 4
        %s188 = scalar_lea.vmem %s0, %s187
        %s189 = smul.u32 16, %s17
        %s190 = smul.u32 2, %s19
      $region20: #{clagnosco_autoencoder_forward.20} parent=15 // pred_fallthru
        _
      // Predicated region
      $region21: #{clagnosco_autoencoder_forward.20} parent=15 // pred_check
        %p191 = pneg %p89
      $region22: #{clagnosco_autoencoder_forward.20} parent=15 // pred_check_branch
        %193 = sbr.rel (%p191) target = $region24
      $region23: #{clagnosco_autoencoder_forward.20} parent=15 // pred_region
        %s194 = smul.u32 32, %s19
        %p195 = scmp.lt.s32.totalorder %s16, 3
        %s196 = scalar_select %p195, %s16, 3
        %p197 = scmp.lt.s32.totalorder %s194, 31
        %s198 = scalar_select %p197, %s194, 31
        %p199 = scmp.lt.s32.totalorder %s18, 0
        %s200 = scalar_select %p199, %s18, 0
        %s201 = sadd.s32 %s200, %s198
        %s202 = smul.addr %s196, 32
        %s203 = sadd.s32 %s201, %s202
        %s204 = smul.addr %s203, 4
        %s205 = scalar_lea.vmem %s1, %s204
        %s206 = smul.u32 32, %s19
      $region24: #{clagnosco_autoencoder_forward.20} parent=15 // pred_fallthru
        _
      // Predicated region
      $region25: #{clagnosco_autoencoder_forward.20} parent=15 // pred_check
        %p207 = pneg %p117
      $region26: #{clagnosco_autoencoder_forward.20} parent=15 // pred_check_branch
        %209 = sbr.rel (%p207) target = $region28
      $region27: #{clagnosco_autoencoder_forward.20} parent=15 // pred_region
        %p210 = scmp.lt.s32.totalorder %s16, 3
        %s211 = scalar_select %p210, %s16, 3
        %p212 = scmp.lt.s32.totalorder %s18, 0
        %s213 = scalar_select %p212, %s18, 0
        %s214 = sadd.s32 %s213, %s211
        %s215 = scalar_lea.vmem %s2, %s214
      $region28: #{clagnosco_autoencoder_forward.20} parent=15 // pred_fallthru
        _
    $region16: #{clagnosco_autoencoder_forward.20} parent=5 // pred_fallthru
      _
    %p216 = scmp.le.s32.totalorder 1, %s9
    %p217 = scmp.lt.s32.totalorder %s9, 5
    %p218 = pnand %p216, %p217
    %p219 = pneg %p218
    // Predicated region
    $region29: #{clagnosco_autoencoder_forward.20} parent=5 // pred_check
      _
    $region30: #{clagnosco_autoencoder_forward.20} parent=5 // pred_check_branch
      %221 = sbr.rel (%p218) target = $region32
    $region31: #{clagnosco_autoencoder_forward.20} parent=5 // pred_region
      %s222 = ssub.s32 %s9, 1
      %s223 = smul.u32 16, %s21
      %s224 = smul.u32 2, %s23
      %p225 = scmp.lt.s32.totalorder %s20, 3
      %s226 = scalar_select %p225, %s20, 3
      %p227 = scmp.lt.s32.totalorder %s223, 15
      %s228 = scalar_select %p227, %s223, 15
      %p229 = scmp.lt.s32.totalorder %s224, 1
      %s230 = scalar_select %p229, %s224, 1
      %s231 = smul.addr %s228, 2
      %s232 = sadd.s32 %s230, %s231
      %s233 = smul.addr %s226, 32
      %s234 = sadd.s32 %s232, %s233
      %s235 = smul.addr %s234, 4
      %s236 = scalar_lea.vmem %s0, %s235
      %p237 = pneg %p65
      %p238 = pneg %p62
      %s239 = smul.u32 32, %s23
      %p240 = scmp.lt.s32.totalorder %s20, 3
      %s241 = scalar_select %p240, %s20, 3
      %p242 = scmp.lt.s32.totalorder %s239, 31
      %s243 = scalar_select %p242, %s239, 31
      %p244 = scmp.lt.s32.totalorder %s22, 0
      %s245 = scalar_select %p244, %s22, 0
      %s246 = sadd.s32 %s245, %s243
      %s247 = smul.addr %s241, 32
      %s248 = sadd.s32 %s246, %s247
      %s249 = smul.addr %s248, 4
      %s250 = scalar_lea.vmem %s1, %s249
      %p251 = pneg %p95
      %p252 = pneg %p92
      %p253 = scmp.lt.s32.totalorder %s20, 3
      %s254 = scalar_select %p253, %s20, 3
      %p255 = scmp.lt.s32.totalorder %s22, 0
      %s256 = scalar_select %p255, %s22, 0
      %s257 = sadd.s32 %s256, %s254
      %s258 = scalar_lea.vmem %s2, %s257
      %p259 = pneg %p123
      %p260 = pneg %p120
      %p261 = pneg %p153
      %p262 = pneg %p150
      %s263 = smul.u32 16, %s21
      %p264 = scmp.lt.s32.totalorder %s20, 3
      %s265 = scalar_select %p264, %s20, 3
      %p266 = scmp.lt.s32.totalorder %s263, 15
      %s267 = scalar_select %p266, %s263, 15
      %p268 = scmp.lt.s32.totalorder %s22, 0
      %s269 = scalar_select %p268, %s22, 0
      %s270 = sadd.s32 %s269, %s267
      %s271 = smul.addr %s265, 16
      %s272 = sadd.s32 %s270, %s271
      %s273 = smul.addr %s272, 8
      %s274 = scalar_lea.vmem %s3, %s273
      %s275 = smul.u32 16, %s21
      %s276 = smul.u32 2, %s23
      %p277 = scmp.lt.s32.totalorder %s20, 3
      %s278 = scalar_select %p277, %s20, 3
      %p279 = scmp.lt.s32.totalorder %s275, 15
      %s280 = scalar_select %p279, %s275, 15
      %p281 = scmp.lt.s32.totalorder %s276, 1
      %s282 = scalar_select %p281, %s276, 1
      %s283 = smul.addr %s280, 2
      %s284 = sadd.s32 %s282, %s283
      %s285 = smul.addr %s278, 32
      %s286 = sadd.s32 %s284, %s285
      %s287 = smul.addr %s286, 4
      %s288 = scalar_lea.vmem %s0, %s287
      %s289 = smul.u32 16, %s21
      %s290 = smul.u32 2, %s23
      %s291 = smul.u32 32, %s23
      %p292 = scmp.lt.s32.totalorder %s20, 3
      %s293 = scalar_select %p292, %s20, 3
      %p294 = scmp.lt.s32.totalorder %s291, 31
      %s295 = scalar_select %p294, %s291, 31
      %p296 = scmp.lt.s32.totalorder %s22, 0
      %s297 = scalar_select %p296, %s22, 0
      %s298 = sadd.s32 %s297, %s295
      %s299 = smul.addr %s293, 32
      %s300 = sadd.s32 %s298, %s299
      %s301 = smul.addr %s300, 4
      %s302 = scalar_lea.vmem %s1, %s301
      %s303 = smul.u32 32, %s23
      %p304 = scmp.lt.s32.totalorder %s20, 3
      %s305 = scalar_select %p304, %s20, 3
      %p306 = scmp.lt.s32.totalorder %s22, 0
      %s307 = scalar_select %p306, %s22, 0
      %s308 = sadd.s32 %s307, %s305
      %s309 = scalar_lea.vmem %s2, %s308
      %s310 = smul.u32 16, %s21
      %p311 = scmp.lt.s32.totalorder %s20, 3
      %s312 = scalar_select %p311, %s20, 3
      %p313 = scmp.lt.s32.totalorder %s310, 15
      %s314 = scalar_select %p313, %s310, 15
      %p315 = scmp.lt.s32.totalorder %s22, 0
      %s316 = scalar_select %p315, %s22, 0
      %s317 = sadd.s32 %s316, %s314
      %s318 = smul.addr %s312, 16
      %s319 = sadd.s32 %s317, %s318
      %s320 = smul.addr %s319, 8
      %s321 = scalar_lea.vmem %s3, %s320
      %s322 = smul.u32 16, %s21
      %p324 = scmp.eq.s32.totalorder %s23, 0
      // Predicated region
      $region33: #{clagnosco_autoencoder_forward.20} parent=31 // pred_check
        %p325 = pneg %p324
      $region34: #{clagnosco_autoencoder_forward.20} parent=31 // pred_check_branch
        %327 = sbr.rel (%p325) target = $region36
      $region35: #{clagnosco_autoencoder_forward.20} parent=31 // pred_region
        %328 = vst [vmem:[#allocation2] sm:$0xff] 0.0
        %329 = vst [vmem:[#allocation2 + $0x8] sm:$0xff] 0.0
        %330 = vst [vmem:[#allocation2 + $0x10] sm:$0xff] 0.0
        %331 = vst [vmem:[#allocation2 + $0x18] sm:$0xff] 0.0
        %332 = vst [vmem:[#allocation2 + $0x20] sm:$0xff] 0.0
        %333 = vst [vmem:[#allocation2 + $0x28] sm:$0xff] 0.0
        %334 = vst [vmem:[#allocation2 + $0x30] sm:$0xff] 0.0
        %335 = vst [vmem:[#allocation2 + $0x38] sm:$0xff] 0.0
        %336 = vst [vmem:[#allocation2 + $0x40] sm:$0xff] 0.0
        %337 = vst [vmem:[#allocation2 + $0x48] sm:$0xff] 0.0
        %338 = vst [vmem:[#allocation2 + $0x50] sm:$0xff] 0.0
        %339 = vst [vmem:[#allocation2 + $0x58] sm:$0xff] 0.0
        %340 = vst [vmem:[#allocation2 + $0x60] sm:$0xff] 0.0
        %341 = vst [vmem:[#allocation2 + $0x68] sm:$0xff] 0.0
        %342 = vst [vmem:[#allocation2 + $0x70] sm:$0xff] 0.0
        %343 = vst [vmem:[#allocation2 + $0x78] sm:$0xff] 0.0
      $region36: #{clagnosco_autoencoder_forward.20} parent=31 // pred_fallthru
        _
      %v344 = vld [vmem:[#allocation2] sm:$0xff]
      %v345 = vld [vmem:[#allocation2 + $0x8] sm:$0xff]
      %v346 = vld [vmem:[#allocation2 + $0x10] sm:$0xff]
      %v347 = vld [vmem:[#allocation2 + $0x18] sm:$0xff]
      %v348 = vld [vmem:[#allocation2 + $0x20] sm:$0xff]
      %v349 = vld [vmem:[#allocation2 + $0x28] sm:$0xff]
      %v350 = vld [vmem:[#allocation2 + $0x30] sm:$0xff]
      %v351 = vld [vmem:[#allocation2 + $0x38] sm:$0xff]
      %v352 = vld [vmem:[#allocation2 + $0x40] sm:$0xff]
      %v353 = vld [vmem:[#allocation2 + $0x48] sm:$0xff]
      %v354 = vld [vmem:[#allocation2 + $0x50] sm:$0xff]
      %v355 = vld [vmem:[#allocation2 + $0x58] sm:$0xff]
      %v356 = vld [vmem:[#allocation2 + $0x60] sm:$0xff]
      %v357 = vld [vmem:[#allocation2 + $0x68] sm:$0xff]
      %v358 = vld [vmem:[#allocation2 + $0x70] sm:$0xff]
      %v359 = vld [vmem:[#allocation2 + $0x78] sm:$0xff]
      %v360 = vld [vmem:[%s288] sm:$0xff]
      %v361 = vld [vmem:[%s288 + $0x8] sm:$0xff]
      %v362 = vld [vmem:[%s288 + $0x10] sm:$0xff]
      %v363 = vld [vmem:[%s288 + $0x18] sm:$0xff]
      %v364 = vld [vmem:[%s288 + $0x20] sm:$0xff]
      %v365 = vld [vmem:[%s288 + $0x28] sm:$0xff]
      %v366 = vld [vmem:[%s288 + $0x30] sm:$0xff]
      %v367 = vld [vmem:[%s288 + $0x38] sm:$0xff]
      %v368 = vld [vmem:[%s288 + $0x40] sm:$0xff]
      %v369 = vld [vmem:[%s288 + $0x48] sm:$0xff]
      %v370 = vld [vmem:[%s288 + $0x50] sm:$0xff]
      %v371 = vld [vmem:[%s288 + $0x58] sm:$0xff]
      %v372 = vld [vmem:[%s288 + $0x60] sm:$0xff]
      %v373 = vld [vmem:[%s288 + $0x68] sm:$0xff]
      %v374 = vld [vmem:[%s288 + $0x70] sm:$0xff]
      %v375 = vld [vmem:[%s288 + $0x78] sm:$0xff]
      %v376 = vld [vmem:[%s302] sm:$0xf]
      %v377 = vld [vmem:[%s302 + $0x4] sm:$0xf]
      %v378 = vld [vmem:[%s302 + $0x8] sm:$0xf]
      %v379 = vld [vmem:[%s302 + $0xc] sm:$0xf]
      %v380 = vld [vmem:[%s302 + $0x10] sm:$0xf]
      %v381 = vld [vmem:[%s302 + $0x14] sm:$0xf]
      %v382 = vld [vmem:[%s302 + $0x18] sm:$0xf]
      %v383 = vld [vmem:[%s302 + $0x1c] sm:$0xf]
      %v384 = vld [vmem:[%s302 + $0x20] sm:$0xf]
      %v385 = vld [vmem:[%s302 + $0x24] sm:$0xf]
      %v386 = vld [vmem:[%s302 + $0x28] sm:$0xf]
      %v387 = vld [vmem:[%s302 + $0x2c] sm:$0xf]
      %v388 = vld [vmem:[%s302 + $0x30] sm:$0xf]
      %v389 = vld [vmem:[%s302 + $0x34] sm:$0xf]
      %v390 = vld [vmem:[%s302 + $0x38] sm:$0xf]
      %v391 = vld [vmem:[%s302 + $0x3c] sm:$0xf]
      %v392 = vld [vmem:[%s302 + $0x40] sm:$0xf]
      %v393 = vld [vmem:[%s302 + $0x44] sm:$0xf]
      %v394 = vld [vmem:[%s302 + $0x48] sm:$0xf]
      %v395 = vld [vmem:[%s302 + $0x4c] sm:$0xf]
      %v396 = vld [vmem:[%s302 + $0x50] sm:$0xf]
      %v397 = vld [vmem:[%s302 + $0x54] sm:$0xf]
      %v398 = vld [vmem:[%s302 + $0x58] sm:$0xf]
      %v399 = vld [vmem:[%s302 + $0x5c] sm:$0xf]
      %v400 = vld [vmem:[%s302 + $0x60] sm:$0xf]
      %v401 = vld [vmem:[%s302 + $0x64] sm:$0xf]
      %v402 = vld [vmem:[%s302 + $0x68] sm:$0xf]
      %v403 = vld [vmem:[%s302 + $0x6c] sm:$0xf]
      %v404 = vld [vmem:[%s302 + $0x70] sm:$0xf]
      %v405 = vld [vmem:[%s302 + $0x74] sm:$0xf]
      %v406 = vld [vmem:[%s302 + $0x78] sm:$0xf]
      %v407 = vld [vmem:[%s302 + $0x7c] sm:$0xf]
      %v424 = vunpack.c.l.b16 %v360
      %v425 = vunpack.c.h.b16 %v360
      %v426 = vunpack.c.l.b16 %v361
      %v427 = vunpack.c.h.b16 %v361
      %v428 = vunpack.c.l.b16 %v362
      %v429 = vunpack.c.h.b16 %v362
      %v430 = vunpack.c.l.b16 %v363
      %v431 = vunpack.c.h.b16 %v363
      %v432 = vunpack.c.l.b16 %v364
      %v433 = vunpack.c.h.b16 %v364
      %v434 = vunpack.c.l.b16 %v365
      %v435 = vunpack.c.h.b16 %v365
      %v436 = vunpack.c.l.b16 %v366
      %v437 = vunpack.c.h.b16 %v366
      %v438 = vunpack.c.l.b16 %v367
      %v439 = vunpack.c.h.b16 %v367
      %v440 = vunpack.c.l.b16 %v368
      %v441 = vunpack.c.h.b16 %v368
      %v442 = vunpack.c.l.b16 %v369
      %v443 = vunpack.c.h.b16 %v369
      %v444 = vunpack.c.l.b16 %v370
      %v445 = vunpack.c.h.b16 %v370
      %v446 = vunpack.c.l.b16 %v371
      %v447 = vunpack.c.h.b16 %v371
      %v448 = vunpack.c.l.b16 %v372
      %v449 = vunpack.c.h.b16 %v372
      %v450 = vunpack.c.l.b16 %v373
      %v451 = vunpack.c.h.b16 %v373
      %v452 = vunpack.c.l.b16 %v374
      %v453 = vunpack.c.h.b16 %v374
      %v454 = vunpack.c.l.b16 %v375
      %v455 = vunpack.c.h.b16 %v375
      %v456 = vpack.c.b16 %v426, %v424
      %v457 = vpack.c.b16 %v427, %v425
      %v458 = vpack.c.b16 %v430, %v428
      %v459 = vpack.c.b16 %v431, %v429
      %v460 = vpack.c.b16 %v434, %v432
      %v461 = vpack.c.b16 %v435, %v433
      %v462 = vpack.c.b16 %v438, %v436
      %v463 = vpack.c.b16 %v439, %v437
      %v464 = vpack.c.b16 %v442, %v440
      %v465 = vpack.c.b16 %v443, %v441
      %v466 = vpack.c.b16 %v446, %v444
      %v467 = vpack.c.b16 %v447, %v445
      %v468 = vpack.c.b16 %v450, %v448
      %v469 = vpack.c.b16 %v451, %v449
      %v470 = vpack.c.b16 %v454, %v452
      %v471 = vpack.c.b16 %v455, %v453
      %v520 = vunpack.c.l.b16 %v376
      %v521 = vunpack.c.l.b16 %v377
      %v522 = vunpack.c.l.b16 %v378
      %v523 = vunpack.c.l.b16 %v379
      %v524 = vunpack.c.l.b16 %v380
      %v525 = vunpack.c.l.b16 %v381
      %v526 = vunpack.c.l.b16 %v382
      %v527 = vunpack.c.l.b16 %v383
      %v528 = vunpack.c.l.b16 %v384
      %v529 = vunpack.c.l.b16 %v385
      %v530 = vunpack.c.l.b16 %v386
      %v531 = vunpack.c.l.b16 %v387
      %v532 = vunpack.c.l.b16 %v388
      %v533 = vunpack.c.l.b16 %v389
      %v534 = vunpack.c.l.b16 %v390
      %v535 = vunpack.c.l.b16 %v391
      %v536 = vunpack.c.l.b16 %v392
      %v537 = vunpack.c.l.b16 %v393
      %v538 = vunpack.c.l.b16 %v394
      %v539 = vunpack.c.l.b16 %v395
      %v540 = vunpack.c.l.b16 %v396
      %v541 = vunpack.c.l.b16 %v397
      %v542 = vunpack.c.l.b16 %v398
      %v543 = vunpack.c.l.b16 %v399
      %v544 = vunpack.c.l.b16 %v400
      %v545 = vunpack.c.l.b16 %v401
      %v546 = vunpack.c.l.b16 %v402
      %v547 = vunpack.c.l.b16 %v403
      %v548 = vunpack.c.l.b16 %v404
      %v549 = vunpack.c.l.b16 %v405
      %v550 = vunpack.c.l.b16 %v406
      %v551 = vunpack.c.l.b16 %v407
      %v552 = vpack.c.b16 %v521, %v520
      %v553 = vpack.c.b16 %v523, %v522
      %v554 = vpack.c.b16 %v525, %v524
      %v555 = vpack.c.b16 %v527, %v526
      %v556 = vpack.c.b16 %v529, %v528
      %v557 = vpack.c.b16 %v531, %v530
      %v558 = vpack.c.b16 %v533, %v532
      %v559 = vpack.c.b16 %v535, %v534
      %v560 = vpack.c.b16 %v537, %v536
      %v561 = vpack.c.b16 %v539, %v538
      %v562 = vpack.c.b16 %v541, %v540
      %v563 = vpack.c.b16 %v543, %v542
      %v564 = vpack.c.b16 %v545, %v544
      %v565 = vpack.c.b16 %v547, %v546
      %v566 = vpack.c.b16 %v549, %v548
      %v567 = vpack.c.b16 %v551, %v550
      %584 = vmatprep.subr.bf16.mxu0 0
      %585 = vmatpush1.bf16.msra.mxu0 %v552
      %586 = vmatprep.subr.bf16.mxu0 0
      %587 = vmatpush1.bf16.msra.mxu0 %v553
      %588 = vmatprep.subr.bf16.mxu0 0
      %589 = vmatpush1.bf16.msra.mxu0 %v554
      %590 = vmatprep.subr.bf16.mxu0 0
      %591 = vmatpush1.bf16.msra.mxu0 %v555
      %592 = vmatprep.subr.bf16.mxu0 0
      %593 = vmatpush1.bf16.msra.mxu0 %v556
      %594 = vmatprep.subr.bf16.mxu0 0
      %595 = vmatpush1.bf16.msra.mxu0 %v557
      %596 = vmatprep.subr.bf16.mxu0 0
      %597 = vmatpush1.bf16.msra.mxu0 %v558
      %598 = vmatprep.subr.bf16.mxu0 0
      %599 = vmatpush1.bf16.msra.mxu0 %v559
      %600 = vmatprep.subr.bf16.mxu0 0
      %601 = vmatpush1.bf16.msra.mxu0 %v560
      %602 = vmatprep.subr.bf16.mxu0 0
      %603 = vmatpush1.bf16.msra.mxu0 %v561
      %604 = vmatprep.subr.bf16.mxu0 0
      %605 = vmatpush1.bf16.msra.mxu0 %v562
      %606 = vmatprep.subr.bf16.mxu0 0
      %607 = vmatpush1.bf16.msra.mxu0 %v563
      %608 = vmatprep.subr.bf16.mxu0 0
      %609 = vmatpush1.bf16.msra.mxu0 %v564
      %610 = vmatprep.subr.bf16.mxu0 0
      %611 = vmatpush1.bf16.msra.mxu0 %v565
      %612 = vmatprep.subr.bf16.mxu0 0
      %613 = vmatpush1.bf16.msra.mxu0 %v566
      %614 = vmatprep.subr.bf16.mxu0 0
      %615 = vmatpush1.bf16.msra.mxu0 %v567
      %616 = vmatprep.mubr.bf16.mxu0 %v457
      %617 = vmatmul.mubr.bf16.gmra.mrb[0].mxu0 %v456
      %v618 = vpop.f32.mrb[0].mxu0
      %v619 = vadd.f32 0.0, %v618
      %v620 = vpop.f32.mrb[0].mxu0
      %v621 = vpop.f32.mrb[0].mxu0
      %v622 = vadd.f32 0.0, %v621
      %v623 = vpop.f32.mrb[0].mxu0
      %624 = vmatprep.mubr.bf16.mxu0 %v459
      %625 = vmatmul.mubr.bf16.gmra.mrb[0].mxu0 %v458
      %v626 = vpop.f32.mrb[0].mxu0
      %v627 = vadd.f32 0.0, %v626
      %v628 = vpop.f32.mrb[0].mxu0
      %v629 = vpop.f32.mrb[0].mxu0
      %v630 = vadd.f32 0.0, %v629
      %v631 = vpop.f32.mrb[0].mxu0
      %632 = vmatprep.mubr.bf16.mxu0 %v461
      %633 = vmatmul.mubr.bf16.gmra.mrb[0].mxu0 %v460
      %v634 = vpop.f32.mrb[0].mxu0
      %v635 = vadd.f32 0.0, %v634
      %v636 = vpop.f32.mrb[0].mxu0
      %v637 = vpop.f32.mrb[0].mxu0
      %v638 = vadd.f32 0.0, %v637
      %v639 = vpop.f32.mrb[0].mxu0
      %640 = vmatprep.mubr.bf16.mxu0 %v463
      %641 = vmatmul.mubr.bf16.gmra.mrb[0].mxu0 %v462
      %v642 = vpop.f32.mrb[0].mxu0
      %v643 = vadd.f32 0.0, %v642
      %v644 = vpop.f32.mrb[0].mxu0
      %v645 = vpop.f32.mrb[0].mxu0
      %v646 = vadd.f32 0.0, %v645
      %v647 = vpop.f32.mrb[0].mxu0
      %648 = vmatprep.mubr.bf16.mxu0 %v465
      %649 = vmatmul.mubr.bf16.gmra.mrb[0].mxu0 %v464
      %v650 = vpop.f32.mrb[0].mxu0
      %v651 = vadd.f32 0.0, %v650
      %v652 = vpop.f32.mrb[0].mxu0
      %v653 = vpop.f32.mrb[0].mxu0
      %v654 = vadd.f32 0.0, %v653
      %v655 = vpop.f32.mrb[0].mxu0
      %656 = vmatprep.mubr.bf16.mxu0 %v467
      %657 = vmatmul.mubr.bf16.gmra.mrb[0].mxu0 %v466
      %v658 = vpop.f32.mrb[0].mxu0
      %v659 = vadd.f32 0.0, %v658
      %v660 = vpop.f32.mrb[0].mxu0
      %v661 = vpop.f32.mrb[0].mxu0
      %v662 = vadd.f32 0.0, %v661
      %v663 = vpop.f32.mrb[0].mxu0
      %664 = vmatprep.mubr.bf16.mxu0 %v469
      %665 = vmatmul.mubr.bf16.gmra.mrb[0].mxu0 %v468
      %v666 = vpop.f32.mrb[0].mxu0
      %v667 = vadd.f32 0.0, %v666
      %v668 = vpop.f32.mrb[0].mxu0
      %v669 = vpop.f32.mrb[0].mxu0
      %v670 = vadd.f32 0.0, %v669
      %v671 = vpop.f32.mrb[0].mxu0
      %672 = vmatprep.mubr.bf16.mxu0 %v471
      %673 = vmatmul.mubr.bf16.gmra.mrb[0].mxu0 %v470
      %v674 = vpop.f32.mrb[0].mxu0
      %v675 = vadd.f32 0.0, %v674
      %v676 = vpop.f32.mrb[0].mxu0
      %v677 = vpop.f32.mrb[0].mxu0
      %v678 = vadd.f32 0.0, %v677
      %v679 = vpop.f32.mrb[0].mxu0
      %680 = vdwg.mxu0
      %v681 = vadd.f32 %v344, %v619
      %v682 = vadd.f32 %v345, %v622
      %v683 = vadd.f32 %v346, %v627
      %v684 = vadd.f32 %v347, %v630
      %v685 = vadd.f32 %v348, %v635
      %v686 = vadd.f32 %v349, %v638
      %v687 = vadd.f32 %v350, %v643
      %v688 = vadd.f32 %v351, %v646
      %v689 = vadd.f32 %v352, %v651
      %v690 = vadd.f32 %v353, %v654
      %v691 = vadd.f32 %v354, %v659
      %v692 = vadd.f32 %v355, %v662
      %v693 = vadd.f32 %v356, %v667
      %v694 = vadd.f32 %v357, %v670
      %v695 = vadd.f32 %v358, %v675
      %v696 = vadd.f32 %v359, %v678
      %697 = vst [vmem:[#allocation2] sm:$0xff] %v681
      %698 = vst [vmem:[#allocation2 + $0x8] sm:$0xff] %v682
      %699 = vst [vmem:[#allocation2 + $0x10] sm:$0xff] %v683
      %700 = vst [vmem:[#allocation2 + $0x18] sm:$0xff] %v684
      %701 = vst [vmem:[#allocation2 + $0x20] sm:$0xff] %v685
      %702 = vst [vmem:[#allocation2 + $0x28] sm:$0xff] %v686
      %703 = vst [vmem:[#allocation2 + $0x30] sm:$0xff] %v687
      %704 = vst [vmem:[#allocation2 + $0x38] sm:$0xff] %v688
      %705 = vst [vmem:[#allocation2 + $0x40] sm:$0xff] %v689
      %706 = vst [vmem:[#allocation2 + $0x48] sm:$0xff] %v690
      %707 = vst [vmem:[#allocation2 + $0x50] sm:$0xff] %v691
      %708 = vst [vmem:[#allocation2 + $0x58] sm:$0xff] %v692
      %709 = vst [vmem:[#allocation2 + $0x60] sm:$0xff] %v693
      %710 = vst [vmem:[#allocation2 + $0x68] sm:$0xff] %v694
      %711 = vst [vmem:[#allocation2 + $0x70] sm:$0xff] %v695
      %712 = vst [vmem:[#allocation2 + $0x78] sm:$0xff] %v696
      // Predicated region
      $region37: #{clagnosco_autoencoder_forward.20} parent=31 // pred_check
        %p713 = pneg %p324
      $region38: #{clagnosco_autoencoder_forward.20} parent=31 // pred_check_branch
        %715 = sbr.rel (%p713) target = $region40
      $region39: #{clagnosco_autoencoder_forward.20} parent=31 // pred_region
        %v716 = vld [vmem:[#allocation2] sm:$0xff]
        %v717 = vld [vmem:[#allocation2 + $0x8] sm:$0xff]
        %v718 = vld [vmem:[#allocation2 + $0x10] sm:$0xff]
        %v719 = vld [vmem:[#allocation2 + $0x18] sm:$0xff]
        %v720 = vld [vmem:[#allocation2 + $0x20] sm:$0xff]
        %v721 = vld [vmem:[#allocation2 + $0x28] sm:$0xff]
        %v722 = vld [vmem:[#allocation2 + $0x30] sm:$0xff]
        %v723 = vld [vmem:[#allocation2 + $0x38] sm:$0xff]
        %v724 = vld [vmem:[#allocation2 + $0x40] sm:$0xff]
        %v725 = vld [vmem:[#allocation2 + $0x48] sm:$0xff]
        %v726 = vld [vmem:[#allocation2 + $0x50] sm:$0xff]
        %v727 = vld [vmem:[#allocation2 + $0x58] sm:$0xff]
        %v728 = vld [vmem:[#allocation2 + $0x60] sm:$0xff]
        %v729 = vld [vmem:[#allocation2 + $0x68] sm:$0xff]
        %v730 = vld [vmem:[#allocation2 + $0x70] sm:$0xff]
        %v731 = vld [vmem:[#allocation2 + $0x78] sm:$0xff]
        %v732 = vld [vmem:[%s309] sm:$0x1]
        %v734 = vlaneseq
        %v735 = vshrl.u32 %v734, 7
        %v736 = vsub.s32 0, %v735
        %v737 = vrot.slane %v732, %v736
        %v739 = vadd.f32 %v716, %v737
        %v740 = vadd.f32 %v717, %v737
        %v741 = vadd.f32 %v718, %v737
        %v742 = vadd.f32 %v719, %v737
        %v743 = vadd.f32 %v720, %v737
        %v744 = vadd.f32 %v721, %v737
        %v745 = vadd.f32 %v722, %v737
        %v746 = vadd.f32 %v723, %v737
        %v747 = vadd.f32 %v724, %v737
        %v748 = vadd.f32 %v725, %v737
        %v749 = vadd.f32 %v726, %v737
        %v750 = vadd.f32 %v727, %v737
        %v751 = vadd.f32 %v728, %v737
        %v752 = vadd.f32 %v729, %v737
        %v753 = vadd.f32 %v730, %v737
        %v754 = vadd.f32 %v731, %v737
        %vm755 = vcmp.ge.f32.partialorder %v739, 0.0
        %vm756 = vcmp.ge.f32.partialorder %v740, 0.0
        %vm757 = vcmp.ge.f32.partialorder %v741, 0.0
        %vm758 = vcmp.ge.f32.partialorder %v742, 0.0
        %vm759 = vcmp.ge.f32.partialorder %v743, 0.0
        %vm760 = vcmp.ge.f32.partialorder %v744, 0.0
        %vm761 = vcmp.ge.f32.partialorder %v745, 0.0
        %vm762 = vcmp.ge.f32.partialorder %v746, 0.0
        %vm763 = vcmp.ge.f32.partialorder %v747, 0.0
        %vm764 = vcmp.ge.f32.partialorder %v748, 0.0
        %vm765 = vcmp.ge.f32.partialorder %v749, 0.0
        %vm766 = vcmp.ge.f32.partialorder %v750, 0.0
        %vm767 = vcmp.ge.f32.partialorder %v751, 0.0
        %vm768 = vcmp.ge.f32.partialorder %v752, 0.0
        %vm769 = vcmp.ge.f32.partialorder %v753, 0.0
        %vm770 = vcmp.ge.f32.partialorder %v754, 0.0
        %v771 = vmul.f32 %v739, 0.01
        %v772 = vmul.f32 %v740, 0.01
        %v773 = vmul.f32 %v741, 0.01
        %v774 = vmul.f32 %v742, 0.01
        %v775 = vmul.f32 %v743, 0.01
        %v776 = vmul.f32 %v744, 0.01
        %v777 = vmul.f32 %v745, 0.01
        %v778 = vmul.f32 %v746, 0.01
        %v779 = vmul.f32 %v747, 0.01
        %v780 = vmul.f32 %v748, 0.01
        %v781 = vmul.f32 %v749, 0.01
        %v782 = vmul.f32 %v750, 0.01
        %v783 = vmul.f32 %v751, 0.01
        %v784 = vmul.f32 %v752, 0.01
        %v785 = vmul.f32 %v753, 0.01
        %v786 = vmul.f32 %v754, 0.01
        %v787 = vsel %vm755, %v739, %v771
        %v788 = vsel %vm756, %v740, %v772
        %v789 = vsel %vm757, %v741, %v773
        %v790 = vsel %vm758, %v742, %v774
        %v791 = vsel %vm759, %v743, %v775
        %v792 = vsel %vm760, %v744, %v776
        %v793 = vsel %vm761, %v745, %v777
        %v794 = vsel %vm762, %v746, %v778
        %v795 = vsel %vm763, %v747, %v779
        %v796 = vsel %vm764, %v748, %v780
        %v797 = vsel %vm765, %v749, %v781
        %v798 = vsel %vm766, %v750, %v782
        %v799 = vsel %vm767, %v751, %v783
        %v800 = vsel %vm768, %v752, %v784
        %v801 = vsel %vm769, %v753, %v785
        %v802 = vsel %vm770, %v754, %v786
        %803 = vst [vmem:[%s321] sm:$0xff] %v787
        %804 = vst [vmem:[%s321 + $0x8] sm:$0xff] %v788
        %805 = vst [vmem:[%s321 + $0x10] sm:$0xff] %v789
        %806 = vst [vmem:[%s321 + $0x18] sm:$0xff] %v790
        %807 = vst [vmem:[%s321 + $0x20] sm:$0xff] %v791
        %808 = vst [vmem:[%s321 + $0x28] sm:$0xff] %v792
        %809 = vst [vmem:[%s321 + $0x30] sm:$0xff] %v793
        %810 = vst [vmem:[%s321 + $0x38] sm:$0xff] %v794
        %811 = vst [vmem:[%s321 + $0x40] sm:$0xff] %v795
        %812 = vst [vmem:[%s321 + $0x48] sm:$0xff] %v796
        %813 = vst [vmem:[%s321 + $0x50] sm:$0xff] %v797
        %814 = vst [vmem:[%s321 + $0x58] sm:$0xff] %v798
        %815 = vst [vmem:[%s321 + $0x60] sm:$0xff] %v799
        %816 = vst [vmem:[%s321 + $0x68] sm:$0xff] %v800
        %817 = vst [vmem:[%s321 + $0x70] sm:$0xff] %v801
        %818 = vst [vmem:[%s321 + $0x78] sm:$0xff] %v802
      $region40: #{clagnosco_autoencoder_forward.20} parent=31 // pred_fallthru
        _
      %s819 = smul.u32 16, %s21
      %p820 = scmp.lt.s32.totalorder %s20, 3
      %s821 = scalar_select %p820, %s20, 3
      %p822 = scmp.lt.s32.totalorder %s819, 15
      %s823 = scalar_select %p822, %s819, 15
      %p824 = scmp.lt.s32.totalorder %s22, 0
      %s825 = scalar_select %p824, %s22, 0
      %s826 = sadd.s32 %s825, %s823
      %s827 = smul.addr %s821, 16
      %s828 = sadd.s32 %s826, %s827
      %s829 = smul.addr %s828, 8
      %s830 = scalar_lea.vmem %s3, %s829
      // Predicated region
      $region41: #{clagnosco_autoencoder_forward.20} parent=31 // pred_check
        %p831 = pneg %p150
      $region42: #{clagnosco_autoencoder_forward.20} parent=31 // pred_check_branch
        %833 = sbr.rel (%p831) target = $region44
      $region43: #{clagnosco_autoencoder_forward.20} parent=31 // pred_region
        %s834 = smul.u32 16, %s21
      $region44: #{clagnosco_autoencoder_forward.20} parent=31 // pred_fallthru
        _
    $region32: #{clagnosco_autoencoder_forward.20} parent=5 // pred_fallthru
      _
    %p835 = scmp.le.s32.totalorder 2, %s9
    // Predicated region
    $region45: #{clagnosco_autoencoder_forward.20} parent=5 // pred_check
      %p836 = pneg %p835
    $region46: #{clagnosco_autoencoder_forward.20} parent=5 // pred_check_branch
      %838 = sbr.rel (%p836) target = $region48
    $region47: #{clagnosco_autoencoder_forward.20} parent=5 // pred_region
      %s839 = ssub.s32 %s9, 2
      // Predicated region
      $region49: #{clagnosco_autoencoder_forward.20} parent=47 // pred_check
        %p840 = pneg %p156
      $region50: #{clagnosco_autoencoder_forward.20} parent=47 // pred_check_branch
        %842 = sbr.rel (%p840) target = $region52
      $region51: #{clagnosco_autoencoder_forward.20} parent=47 // pred_region
        %s843 = smul.u32 16, %s25
        %p844 = scmp.lt.s32.totalorder %s24, 3
        %s845 = scalar_select %p844, %s24, 3
        %p846 = scmp.lt.s32.totalorder %s843, 15
        %s847 = scalar_select %p846, %s843, 15
        %p848 = scmp.lt.s32.totalorder %s26, 0
        %s849 = scalar_select %p848, %s26, 0
        %s850 = sadd.s32 %s849, %s847
        %s851 = smul.addr %s845, 16
        %s852 = sadd.s32 %s850, %s851
        %s853 = smul.addr %s852, 8
        %s854 = scalar_lea.vmem %s3, %s853
      $region52: #{clagnosco_autoencoder_forward.20} parent=47 // pred_fallthru
        _
    $region48: #{clagnosco_autoencoder_forward.20} parent=5 // pred_fallthru
      _
  $region6: #{clagnosco_autoencoder_forward.20} parent=0 // loop_footer
    %s13 = sadd.s32 1, %s9
  $region7: #{clagnosco_autoencoder_forward.20} parent=0 // loop_footer_branch
    %8 = sbr.rel target = $region3
  $region8: #{clagnosco_autoencoder_forward.20} parent=0 // loop_exit
    _

// kernel: clagnosco_autoencoder_forward.21
$region0: #{clagnosco_autoencoder_forward.21}
  #allocation0 [shape = 'u32[]', space=smem, size = 0x4, offset = 0x4, fixed_abs, tag = 'smem constant byte address 0x4 - core index']
  #allocation1 [shape = 'u32[144,128]{1,0:T(1,128)}', space=vmem, size = 0x12000, scoped, tag = 'internal scratch']
  #allocation2 [shape = 'f32[256,128]{1,0:T(8,128)}', space=vmem, size = 0x20000, scoped, tag = 'scratch operand']
  %s0 = inlined_call_operand.vmem [shape: bf16[4,512,128], index: 0, kind: input, shape index: {}]
  %s1 = inlined_call_operand.vmem [shape: bf16[4,128,128], index: 1, kind: input, shape index: {}]
  %s2 = inlined_call_operand.vmem [shape: f32[4,1,128], index: 2, kind: input, shape index: {}]
  %s3 = inlined_call_operand.vmem [shape: f32[4,512,128], index: 3, kind: output, shape index: {}]
  %s4 = sld [smem:[#allocation0]]
  $region53: #{clagnosco_autoencoder_forward.21} parent=0
    _
  %s6 = ssub.s32 1, %s4
  %s7 = scalar_select 0, %s6, %s4
  loop: start=0, step=1, limit=10
  $region2: #{clagnosco_autoencoder_forward.21} parent=0 // loop_pre_header
    _
  $region3: #{clagnosco_autoencoder_forward.21} parent=0 // loop_header
    %s9 = sphi 0, %s13
    %p10 = scmp.ge.s32.totalorder %s9, 10
    %s16 = sphi 0, %s42
    %s17 = sphi 0, %s38
    %s18 = sphi 0, %s34
    %s19 = sphi 0, %s30
    %s20 = sphi 0, %s16
    %s21 = sphi 0, %s17
    %s22 = sphi 0, %s18
    %s23 = sphi 0, %s19
    %s24 = sphi 0, %s20
    %s25 = sphi 0, %s21
    %s26 = sphi 0, %s22
    %s27 = sphi 0, %s23
    %s49 = sphi 0, %s51
    %s52 = sphi 0, %s49
    %s53 = sphi 0, %s52
    %s69 = sphi 0, %s53
    %s79 = sphi 0, %s81
    %s82 = sphi 0, %s79
    %s83 = sphi 0, %s82
    %s99 = sphi 0, %s83
    %s107 = sphi 0, %s109
    %s110 = sphi 0, %s107
    %s111 = sphi 0, %s110
    %s127 = sphi 0, %s111
    %s137 = sphi 0, %s139
    %s140 = sphi 0, %s137
    %s141 = sphi 0, %s140
    %s157 = sphi 0, %s141
  $region4: #{clagnosco_autoencoder_forward.21} parent=0 // loop_header_branch
    %12 = sbr.rel (%p10) target = $region8
  $region5: #{clagnosco_autoencoder_forward.21} parent=0 // loop_body
    %s14 = ssub.s32 %s9, 1
    %s15 = ssub.s32 %s9, 2
    %s28 = sadd.s32 1, %s19
    %p29 = scmp.ge.s32.totalorder %s28, 1
    %s30 = scalar_select %p29, 0, %s28
    %s31 = sadd.s32 1, %s18
    %s32 = scalar_select %p29, %s31, %s18
    %p33 = scmp.ge.s32.totalorder %s32, 1
    %s34 = scalar_select %p33, 0, %s32
    %s35 = sadd.s32 1, %s17
    %s36 = scalar_select %p33, %s35, %s17
    %p37 = scmp.ge.s32.totalorder %s36, 2
    %s38 = scalar_select %p37, 0, %s36
    %s39 = sadd.s32 1, %s16
    %s40 = scalar_select %p37, %s39, %s16
    %p41 = scmp.ge.s32.totalorder %s40, 4
    %s42 = scalar_select %p41, 0, %s40
    %s43 = ssub.s32 %s16, %s42
    %s44 = ssub.s32 %s17, %s38
    %s45 = sor.u32 %s43, %s44
    %s46 = ssub.s32 %s19, %s30
    %s47 = sor.u32 %s45, %s46
    %p48 = scmp.eq.s32.totalorder %s47, 0
    %s50 = sadd.s32 %s49, 1
    %s51 = scalar_select %p48, %s49, %s50
    %p54 = pneg %p48
    %p55 = scmp.eq.s32.totalorder %s9, 7
    %p56 = por %p54, %p55
    %p57 = scmp.ne.s32.totalorder %s49, %s52
    %p58 = scmp.eq.s32.totalorder %s9, 0
    %p59 = por %p57, %p58
    %p60 = scmp.ne.s32.totalorder %s49, %s52
    %p61 = scmp.eq.s32.totalorder %s14, 7
    %p62 = por %p60, %p61
    %p63 = scmp.ne.s32.totalorder %s52, %s53
    %p64 = scmp.eq.s32.totalorder %s14, 0
    %p65 = por %p63, %p64
    %p66 = scmp.ne.s32.totalorder %s52, %s53
    %p67 = scmp.eq.s32.totalorder %s15, 7
    %p68 = por %p66, %p67
    %p70 = scmp.ne.s32.totalorder %s53, %s69
    %p71 = scmp.eq.s32.totalorder %s15, 0
    %p72 = por %p70, %p71
    %s73 = ssub.s32 %s16, %s42
    %s74 = ssub.s32 %s19, %s30
    %s75 = sor.u32 %s73, %s74
    %s76 = ssub.s32 %s18, %s34
    %s77 = sor.u32 %s75, %s76
    %p78 = scmp.eq.s32.totalorder %s77, 0
    %s80 = sadd.s32 %s79, 1
    %s81 = scalar_select %p78, %s79, %s80
    %p84 = pneg %p78
    %p85 = scmp.eq.s32.totalorder %s9, 7
    %p86 = por %p84, %p85
    %p87 = scmp.ne.s32.totalorder %s79, %s82
    %p88 = scmp.eq.s32.totalorder %s9, 0
    %p89 = por %p87, %p88
    %p90 = scmp.ne.s32.totalorder %s79, %s82
    %p91 = scmp.eq.s32.totalorder %s14, 7
    %p92 = por %p90, %p91
    %p93 = scmp.ne.s32.totalorder %s82, %s83
    %p94 = scmp.eq.s32.totalorder %s14, 0
    %p95 = por %p93, %p94
    %p96 = scmp.ne.s32.totalorder %s82, %s83
    %p97 = scmp.eq.s32.totalorder %s15, 7
    %p98 = por %p96, %p97
    %p100 = scmp.ne.s32.totalorder %s83, %s99
    %p101 = scmp.eq.s32.totalorder %s15, 0
    %p102 = por %p100, %p101
    %s103 = ssub.s32 %s16, %s42
    %s104 = ssub.s32 %s18, %s34
    %s105 = sor.u32 %s103, %s104
    %p106 = scmp.eq.s32.totalorder %s105, 0
    %s108 = sadd.s32 %s107, 1
    %s109 = scalar_select %p106, %s107, %s108
    %p112 = pneg %p106
    %p113 = scmp.eq.s32.totalorder %s9, 7
    %p114 = por %p112, %p113
    %p115 = scmp.ne.s32.totalorder %s107, %s110
    %p116 = scmp.eq.s32.totalorder %s9, 0
    %p117 = por %p115, %p116
    %p118 = scmp.ne.s32.totalorder %s107, %s110
    %p119 = scmp.eq.s32.totalorder %s14, 7
    %p120 = por %p118, %p119
    %p121 = scmp.ne.s32.totalorder %s110, %s111
    %p122 = scmp.eq.s32.totalorder %s14, 0
    %p123 = por %p121, %p122
    %p124 = scmp.ne.s32.totalorder %s110, %s111
    %p125 = scmp.eq.s32.totalorder %s15, 7
    %p126 = por %p124, %p125
    %p128 = scmp.ne.s32.totalorder %s111, %s127
    %p129 = scmp.eq.s32.totalorder %s15, 0
    %p130 = por %p128, %p129
    %s131 = ssub.s32 %s16, %s42
    %s132 = ssub.s32 %s17, %s38
    %s133 = sor.u32 %s131, %s132
    %s134 = ssub.s32 %s18, %s34
    %s135 = sor.u32 %s133, %s134
    %p136 = scmp.eq.s32.totalorder %s135, 0
    %s138 = sadd.s32 %s137, 1
    %s139 = scalar_select %p136, %s137, %s138
    %p142 = pneg %p136
    %p143 = scmp.eq.s32.totalorder %s9, 7
    %p144 = por %p142, %p143
    %p145 = scmp.ne.s32.totalorder %s137, %s140
    %p146 = scmp.eq.s32.totalorder %s9, 0
    %p147 = por %p145, %p146
    %p148 = scmp.ne.s32.totalorder %s137, %s140
    %p149 = scmp.eq.s32.totalorder %s14, 7
    %p150 = por %p148, %p149
    %p151 = scmp.ne.s32.totalorder %s140, %s141
    %p152 = scmp.eq.s32.totalorder %s14, 0
    %p153 = por %p151, %p152
    %p154 = scmp.ne.s32.totalorder %s140, %s141
    %p155 = scmp.eq.s32.totalorder %s15, 7
    %p156 = por %p154, %p155
    %p158 = scmp.ne.s32.totalorder %s141, %s157
    %p159 = scmp.eq.s32.totalorder %s15, 0
    %p160 = por %p158, %p159
    %p161 = scmp.le.s32.totalorder 1, %s9
    %p162 = scmp.lt.s32.totalorder %s9, 9
    %p163 = pnand %p161, %p162
    %p164 = pneg %p163
    // Predicated region
    $region9: #{clagnosco_autoencoder_forward.21} parent=5 // pred_check
      _
    $region10: #{clagnosco_autoencoder_forward.21} parent=5 // pred_check_branch
      %166 = sbr.rel (%p163) target = $region12
    $region11: #{clagnosco_autoencoder_forward.21} parent=5 // pred_region
      %s167 = ssub.s32 %s9, 1
    $region12: #{clagnosco_autoencoder_forward.21} parent=5 // pred_fallthru
      _
    %p168 = scmp.lt.s32.totalorder %s9, 8
    // Predicated region
    $region13: #{clagnosco_autoencoder_forward.21} parent=5 // pred_check
      %p169 = pneg %p168
    $region14: #{clagnosco_autoencoder_forward.21} parent=5 // pred_check_branch
      %171 = sbr.rel (%p169) target = $region16
    $region15: #{clagnosco_autoencoder_forward.21} parent=5 // pred_region
      // Predicated region
      $region17: #{clagnosco_autoencoder_forward.21} parent=15 // pred_check
        %p172 = pneg %p59
      $region18: #{clagnosco_autoencoder_forward.21} parent=15 // pred_check_branch
        %174 = sbr.rel (%p172) target = $region20
      $region19: #{clagnosco_autoencoder_forward.21} parent=15 // pred_region
        %s175 = smul.u32 32, %s17
        %p176 = scmp.lt.s32.totalorder %s16, 3
        %s177 = scalar_select %p176, %s16, 3
        %p178 = scmp.lt.s32.totalorder %s175, 63
        %s179 = scalar_select %p178, %s175, 63
        %p180 = scmp.lt.s32.totalorder %s19, 0
        %s181 = scalar_select %p180, %s19, 0
        %s182 = sadd.s32 %s181, %s179
        %s183 = smul.addr %s177, 64
        %s184 = sadd.s32 %s182, %s183
        %s185 = smul.addr %s184, 4
        %s186 = scalar_lea.vmem %s0, %s185
        %s187 = smul.u32 32, %s17
      $region20: #{clagnosco_autoencoder_forward.21} parent=15 // pred_fallthru
        _
      // Predicated region
      $region21: #{clagnosco_autoencoder_forward.21} parent=15 // pred_check
        %p188 = pneg %p89
      $region22: #{clagnosco_autoencoder_forward.21} parent=15 // pred_check_branch
        %190 = sbr.rel (%p188) target = $region24
      $region23: #{clagnosco_autoencoder_forward.21} parent=15 // pred_region
        %s191 = smul.u32 16, %s19
        %p192 = scmp.lt.s32.totalorder %s16, 3
        %s193 = scalar_select %p192, %s16, 3
        %p194 = scmp.lt.s32.totalorder %s191, 15
        %s195 = scalar_select %p194, %s191, 15
        %p196 = scmp.lt.s32.totalorder %s18, 0
        %s197 = scalar_select %p196, %s18, 0
        %s198 = sadd.s32 %s197, %s195
        %s199 = smul.addr %s193, 16
        %s200 = sadd.s32 %s198, %s199
        %s201 = smul.addr %s200, 4
        %s202 = scalar_lea.vmem %s1, %s201
        %s203 = smul.u32 16, %s19
      $region24: #{clagnosco_autoencoder_forward.21} parent=15 // pred_fallthru
        _
      // Predicated region
      $region25: #{clagnosco_autoencoder_forward.21} parent=15 // pred_check
        %p204 = pneg %p117
      $region26: #{clagnosco_autoencoder_forward.21} parent=15 // pred_check_branch
        %206 = sbr.rel (%p204) target = $region28
      $region27: #{clagnosco_autoencoder_forward.21} parent=15 // pred_region
        %p207 = scmp.lt.s32.totalorder %s16, 3
        %s208 = scalar_select %p207, %s16, 3
        %p209 = scmp.lt.s32.totalorder %s18, 0
        %s210 = scalar_select %p209, %s18, 0
        %s211 = sadd.s32 %s210, %s208
        %s212 = scalar_lea.vmem %s2, %s211
      $region28: #{clagnosco_autoencoder_forward.21} parent=15 // pred_fallthru
        _
    $region16: #{clagnosco_autoencoder_forward.21} parent=5 // pred_fallthru
      _
    %p213 = scmp.le.s32.totalorder 1, %s9
    %p214 = scmp.lt.s32.totalorder %s9, 9
    %p215 = pnand %p213, %p214
    %p216 = pneg %p215
    // Predicated region
    $region29: #{clagnosco_autoencoder_forward.21} parent=5 // pred_check
      _
    $region30: #{clagnosco_autoencoder_forward.21} parent=5 // pred_check_branch
      %218 = sbr.rel (%p215) target = $region32
    $region31: #{clagnosco_autoencoder_forward.21} parent=5 // pred_region
      %s219 = ssub.s32 %s9, 1
      %s220 = smul.u32 32, %s21
      %p221 = scmp.lt.s32.totalorder %s20, 3
      %s222 = scalar_select %p221, %s20, 3
      %p223 = scmp.lt.s32.totalorder %s220, 63
      %s224 = scalar_select %p223, %s220, 63
      %p225 = scmp.lt.s32.totalorder %s23, 0
      %s226 = scalar_select %p225, %s23, 0
      %s227 = sadd.s32 %s226, %s224
      %s228 = smul.addr %s222, 64
      %s229 = sadd.s32 %s227, %s228
      %s230 = smul.addr %s229, 4
      %s231 = scalar_lea.vmem %s0, %s230
      %p232 = pneg %p65
      %p233 = pneg %p62
      %s234 = smul.u32 16, %s23
      %p235 = scmp.lt.s32.totalorder %s20, 3
      %s236 = scalar_select %p235, %s20, 3
      %p237 = scmp.lt.s32.totalorder %s234, 15
      %s238 = scalar_select %p237, %s234, 15
      %p239 = scmp.lt.s32.totalorder %s22, 0
      %s240 = scalar_select %p239, %s22, 0
      %s241 = sadd.s32 %s240, %s238
      %s242 = smul.addr %s236, 16
      %s243 = sadd.s32 %s241, %s242
      %s244 = smul.addr %s243, 4
      %s245 = scalar_lea.vmem %s1, %s244
      %p246 = pneg %p95
      %p247 = pneg %p92
      %p248 = scmp.lt.s32.totalorder %s20, 3
      %s249 = scalar_select %p248, %s20, 3
      %p250 = scmp.lt.s32.totalorder %s22, 0
      %s251 = scalar_select %p250, %s22, 0
      %s252 = sadd.s32 %s251, %s249
      %s253 = scalar_lea.vmem %s2, %s252
      %p254 = pneg %p123
      %p255 = pneg %p120
      %p256 = pneg %p153
      %p257 = pneg %p150
      %s258 = smul.u32 32, %s21
      %p259 = scmp.lt.s32.totalorder %s20, 3
      %s260 = scalar_select %p259, %s20, 3
      %p261 = scmp.lt.s32.totalorder %s258, 63
      %s262 = scalar_select %p261, %s258, 63
      %p263 = scmp.lt.s32.totalorder %s22, 0
      %s264 = scalar_select %p263, %s22, 0
      %s265 = sadd.s32 %s264, %s262
      %s266 = smul.addr %s260, 64
      %s267 = sadd.s32 %s265, %s266
      %s268 = smul.addr %s267, 8
      %s269 = scalar_lea.vmem %s3, %s268
      %s270 = smul.u32 32, %s21
      %p271 = scmp.lt.s32.totalorder %s20, 3
      %s272 = scalar_select %p271, %s20, 3
      %p273 = scmp.lt.s32.totalorder %s270, 63
      %s274 = scalar_select %p273, %s270, 63
      %p275 = scmp.lt.s32.totalorder %s23, 0
      %s276 = scalar_select %p275, %s23, 0
      %s277 = sadd.s32 %s276, %s274
      %s278 = smul.addr %s272, 64
      %s279 = sadd.s32 %s277, %s278
      %s280 = smul.addr %s279, 4
      %s281 = scalar_lea.vmem %s0, %s280
      %s282 = smul.u32 32, %s21
      %s283 = smul.u32 16, %s23
      %p284 = scmp.lt.s32.totalorder %s20, 3
      %s285 = scalar_select %p284, %s20, 3
      %p286 = scmp.lt.s32.totalorder %s283, 15
      %s287 = scalar_select %p286, %s283, 15
      %p288 = scmp.lt.s32.totalorder %s22, 0
      %s289 = scalar_select %p288, %s22, 0
      %s290 = sadd.s32 %s289, %s287
      %s291 = smul.addr %s285, 16
      %s292 = sadd.s32 %s290, %s291
      %s293 = smul.addr %s292, 4
      %s294 = scalar_lea.vmem %s1, %s293
      %s295 = smul.u32 16, %s23
      %p296 = scmp.lt.s32.totalorder %s20, 3
      %s297 = scalar_select %p296, %s20, 3
      %p298 = scmp.lt.s32.totalorder %s22, 0
      %s299 = scalar_select %p298, %s22, 0
      %s300 = sadd.s32 %s299, %s297
      %s301 = scalar_lea.vmem %s2, %s300
      %s302 = smul.u32 32, %s21
      %p303 = scmp.lt.s32.totalorder %s20, 3
      %s304 = scalar_select %p303, %s20, 3
      %p305 = scmp.lt.s32.totalorder %s302, 63
      %s306 = scalar_select %p305, %s302, 63
      %p307 = scmp.lt.s32.totalorder %s22, 0
      %s308 = scalar_select %p307, %s22, 0
      %s309 = sadd.s32 %s308, %s306
      %s310 = smul.addr %s304, 64
      %s311 = sadd.s32 %s309, %s310
      %s312 = smul.addr %s311, 8
      %s313 = scalar_lea.vmem %s3, %s312
      %s314 = smul.u32 32, %s21
      %p316 = scmp.eq.s32.totalorder %s23, 0
      // Predicated region
      $region33: #{clagnosco_autoencoder_forward.21} parent=31 // pred_check
        %p317 = pneg %p316
      $region34: #{clagnosco_autoencoder_forward.21} parent=31 // pred_check_branch
        %319 = sbr.rel (%p317) target = $region36
      $region35: #{clagnosco_autoencoder_forward.21} parent=31 // pred_region
        %320 = vst [vmem:[#allocation2] sm:$0xff] 0.0
        %321 = vst [vmem:[#allocation2 + $0x8] sm:$0xff] 0.0
        %322 = vst [vmem:[#allocation2 + $0x10] sm:$0xff] 0.0
        %323 = vst [vmem:[#allocation2 + $0x18] sm:$0xff] 0.0
        %324 = vst [vmem:[#allocation2 + $0x20] sm:$0xff] 0.0
        %325 = vst [vmem:[#allocation2 + $0x28] sm:$0xff] 0.0
        %326 = vst [vmem:[#allocation2 + $0x30] sm:$0xff] 0.0
        %327 = vst [vmem:[#allocation2 + $0x38] sm:$0xff] 0.0
        %328 = vst [vmem:[#allocation2 + $0x40] sm:$0xff] 0.0
        %329 = vst [vmem:[#allocation2 + $0x48] sm:$0xff] 0.0
        %330 = vst [vmem:[#allocation2 + $0x50] sm:$0xff] 0.0
        %331 = vst [vmem:[#allocation2 + $0x58] sm:$0xff] 0.0
        %332 = vst [vmem:[#allocation2 + $0x60] sm:$0xff] 0.0
        %333 = vst [vmem:[#allocation2 + $0x68] sm:$0xff] 0.0
        %334 = vst [vmem:[#allocation2 + $0x70] sm:$0xff] 0.0
        %335 = vst [vmem:[#allocation2 + $0x78] sm:$0xff] 0.0
        %336 = vst [vmem:[#allocation2 + $0x80] sm:$0xff] 0.0
        %337 = vst [vmem:[#allocation2 + $0x88] sm:$0xff] 0.0
        %338 = vst [vmem:[#allocation2 + $0x90] sm:$0xff] 0.0
        %339 = vst [vmem:[#allocation2 + $0x98] sm:$0xff] 0.0
        %340 = vst [vmem:[#allocation2 + $0xa0] sm:$0xff] 0.0
        %341 = vst [vmem:[#allocation2 + $0xa8] sm:$0xff] 0.0
        %342 = vst [vmem:[#allocation2 + $0xb0] sm:$0xff] 0.0
        %343 = vst [vmem:[#allocation2 + $0xb8] sm:$0xff] 0.0
        %344 = vst [vmem:[#allocation2 + $0xc0] sm:$0xff] 0.0
        %345 = vst [vmem:[#allocation2 + $0xc8] sm:$0xff] 0.0
        %346 = vst [vmem:[#allocation2 + $0xd0] sm:$0xff] 0.0
        %347 = vst [vmem:[#allocation2 + $0xd8] sm:$0xff] 0.0
        %348 = vst [vmem:[#allocation2 + $0xe0] sm:$0xff] 0.0
        %349 = vst [vmem:[#allocation2 + $0xe8] sm:$0xff] 0.0
        %350 = vst [vmem:[#allocation2 + $0xf0] sm:$0xff] 0.0
        %351 = vst [vmem:[#allocation2 + $0xf8] sm:$0xff] 0.0
      $region36: #{clagnosco_autoencoder_forward.21} parent=31 // pred_fallthru
        _
      %v352 = vld [vmem:[#allocation2] sm:$0xff]
      %v353 = vld [vmem:[#allocation2 + $0x8] sm:$0xff]
      %v354 = vld [vmem:[#allocation2 + $0x10] sm:$0xff]
      %v355 = vld [vmem:[#allocation2 + $0x18] sm:$0xff]
      %v356 = vld [vmem:[#allocation2 + $0x20] sm:$0xff]
      %v357 = vld [vmem:[#allocation2 + $0x28] sm:$0xff]
      %v358 = vld [vmem:[#allocation2 + $0x30] sm:$0xff]
      %v359 = vld [vmem:[#allocation2 + $0x38] sm:$0xff]
      %v360 = vld [vmem:[#allocation2 + $0x40] sm:$0xff]
      %v361 = vld [vmem:[#allocation2 + $0x48] sm:$0xff]
      %v362 = vld [vmem:[#allocation2 + $0x50] sm:$0xff]
      %v363 = vld [vmem:[#allocation2 + $0x58] sm:$0xff]
      %v364 = vld [vmem:[#allocation2 + $0x60] sm:$0xff]
      %v365 = vld [vmem:[#allocation2 + $0x68] sm:$0xff]
      %v366 = vld [vmem:[#allocation2 + $0x70] sm:$0xff]
      %v367 = vld [vmem:[#allocation2 + $0x78] sm:$0xff]
      %v368 = vld [vmem:[#allocation2 + $0x80] sm:$0xff]
      %v369 = vld [vmem:[#allocation2 + $0x88] sm:$0xff]
      %v370 = vld [vmem:[#allocation2 + $0x90] sm:$0xff]
      %v371 = vld [vmem:[#allocation2 + $0x98] sm:$0xff]
      %v372 = vld [vmem:[#allocation2 + $0xa0] sm:$0xff]
      %v373 = vld [vmem:[#allocation2 + $0xa8] sm:$0xff]
      %v374 = vld [vmem:[#allocation2 + $0xb0] sm:$0xff]
      %v375 = vld [vmem:[#allocation2 + $0xb8] sm:$0xff]
      %v376 = vld [vmem:[#allocation2 + $0xc0] sm:$0xff]
      %v377 = vld [vmem:[#allocation2 + $0xc8] sm:$0xff]
      %v378 = vld [vmem:[#allocation2 + $0xd0] sm:$0xff]
      %v379 = vld [vmem:[#allocation2 + $0xd8] sm:$0xff]
      %v380 = vld [vmem:[#allocation2 + $0xe0] sm:$0xff]
      %v381 = vld [vmem:[#allocation2 + $0xe8] sm:$0xff]
      %v382 = vld [vmem:[#allocation2 + $0xf0] sm:$0xff]
      %v383 = vld [vmem:[#allocation2 + $0xf8] sm:$0xff]
      %v384 = vld [vmem:[%s281] sm:$0xf]
      %v385 = vld [vmem:[%s281 + $0x4] sm:$0xf]
      %v386 = vld [vmem:[%s281 + $0x8] sm:$0xf]
      %v387 = vld [vmem:[%s281 + $0xc] sm:$0xf]
      %v388 = vld [vmem:[%s281 + $0x10] sm:$0xf]
      %v389 = vld [vmem:[%s281 + $0x14] sm:$0xf]
      %v390 = vld [vmem:[%s281 + $0x18] sm:$0xf]
      %v391 = vld [vmem:[%s281 + $0x1c] sm:$0xf]
      %v392 = vld [vmem:[%s281 + $0x20] sm:$0xf]
      %v393 = vld [vmem:[%s281 + $0x24] sm:$0xf]
      %v394 = vld [vmem:[%s281 + $0x28] sm:$0xf]
      %v395 = vld [vmem:[%s281 + $0x2c] sm:$0xf]
      %v396 = vld [vmem:[%s281 + $0x30] sm:$0xf]
      %v397 = vld [vmem:[%s281 + $0x34] sm:$0xf]
      %v398 = vld [vmem:[%s281 + $0x38] sm:$0xf]
      %v399 = vld [vmem:[%s281 + $0x3c] sm:$0xf]
      %v400 = vld [vmem:[%s281 + $0x40] sm:$0xf]
      %v401 = vld [vmem:[%s281 + $0x44] sm:$0xf]
      %v402 = vld [vmem:[%s281 + $0x48] sm:$0xf]
      %v403 = vld [vmem:[%s281 + $0x4c] sm:$0xf]
      %v404 = vld [vmem:[%s281 + $0x50] sm:$0xf]
      %v405 = vld [vmem:[%s281 + $0x54] sm:$0xf]
      %v406 = vld [vmem:[%s281 + $0x58] sm:$0xf]
      %v407 = vld [vmem:[%s281 + $0x5c] sm:$0xf]
      %v408 = vld [vmem:[%s281 + $0x60] sm:$0xf]
      %v409 = vld [vmem:[%s281 + $0x64] sm:$0xf]
      %v410 = vld [vmem:[%s281 + $0x68] sm:$0xf]
      %v411 = vld [vmem:[%s281 + $0x6c] sm:$0xf]
      %v412 = vld [vmem:[%s281 + $0x70] sm:$0xf]
      %v413 = vld [vmem:[%s281 + $0x74] sm:$0xf]
      %v414 = vld [vmem:[%s281 + $0x78] sm:$0xf]
      %v415 = vld [vmem:[%s281 + $0x7c] sm:$0xf]
      %v416 = vld [vmem:[%s294] sm:$0xf]
      %v417 = vld [vmem:[%s294 + $0x4] sm:$0xf]
      %v418 = vld [vmem:[%s294 + $0x8] sm:$0xf]
      %v419 = vld [vmem:[%s294 + $0xc] sm:$0xf]
      %v420 = vld [vmem:[%s294 + $0x10] sm:$0xf]
      %v421 = vld [vmem:[%s294 + $0x14] sm:$0xf]
      %v422 = vld [vmem:[%s294 + $0x18] sm:$0xf]
      %v423 = vld [vmem:[%s294 + $0x1c] sm:$0xf]
      %v424 = vld [vmem:[%s294 + $0x20] sm:$0xf]
      %v425 = vld [vmem:[%s294 + $0x24] sm:$0xf]
      %v426 = vld [vmem:[%s294 + $0x28] sm:$0xf]
      %v427 = vld [vmem:[%s294 + $0x2c] sm:$0xf]
      %v428 = vld [vmem:[%s294 + $0x30] sm:$0xf]
      %v429 = vld [vmem:[%s294 + $0x34] sm:$0xf]
      %v430 = vld [vmem:[%s294 + $0x38] sm:$0xf]
      %v431 = vld [vmem:[%s294 + $0x3c] sm:$0xf]
      %v464 = vunpack.c.l.b16 %v384
      %v465 = vunpack.c.l.b16 %v385
      %v466 = vunpack.c.l.b16 %v386
      %v467 = vunpack.c.l.b16 %v387
      %v468 = vunpack.c.l.b16 %v388
      %v469 = vunpack.c.l.b16 %v389
      %v470 = vunpack.c.l.b16 %v390
      %v471 = vunpack.c.l.b16 %v391
      %v472 = vunpack.c.l.b16 %v392
      %v473 = vunpack.c.l.b16 %v393
      %v474 = vunpack.c.l.b16 %v394
      %v475 = vunpack.c.l.b16 %v395
      %v476 = vunpack.c.l.b16 %v396
      %v477 = vunpack.c.l.b16 %v397
      %v478 = vunpack.c.l.b16 %v398
      %v479 = vunpack.c.l.b16 %v399
      %v480 = vunpack.c.l.b16 %v400
      %v481 = vunpack.c.l.b16 %v401
      %v482 = vunpack.c.l.b16 %v402
      %v483 = vunpack.c.l.b16 %v403
      %v484 = vunpack.c.l.b16 %v404
      %v485 = vunpack.c.l.b16 %v405
      %v486 = vunpack.c.l.b16 %v406
      %v487 = vunpack.c.l.b16 %v407
      %v488 = vunpack.c.l.b16 %v408
      %v489 = vunpack.c.l.b16 %v409
      %v490 = vunpack.c.l.b16 %v410
      %v491 = vunpack.c.l.b16 %v411
      %v492 = vunpack.c.l.b16 %v412
      %v493 = vunpack.c.l.b16 %v413
      %v494 = vunpack.c.l.b16 %v414
      %v495 = vunpack.c.l.b16 %v415
      %v496 = vpack.c.b16 %v465, %v464
      %v497 = vpack.c.b16 %v467, %v466
      %v498 = vpack.c.b16 %v469, %v468
      %v499 = vpack.c.b16 %v471, %v470
      %v500 = vpack.c.b16 %v473, %v472
      %v501 = vpack.c.b16 %v475, %v474
      %v502 = vpack.c.b16 %v477, %v476
      %v503 = vpack.c.b16 %v479, %v478
      %v504 = vpack.c.b16 %v481, %v480
      %v505 = vpack.c.b16 %v483, %v482
      %v506 = vpack.c.b16 %v485, %v484
      %v507 = vpack.c.b16 %v487, %v486
      %v508 = vpack.c.b16 %v489, %v488
      %v509 = vpack.c.b16 %v491, %v490
      %v510 = vpack.c.b16 %v493, %v492
      %v511 = vpack.c.b16 %v495, %v494
      %v544 = vunpack.c.l.b16 %v416
      %v545 = vunpack.c.l.b16 %v417
      %v546 = vunpack.c.l.b16 %v418
      %v547 = vunpack.c.l.b16 %v419
      %v548 = vunpack.c.l.b16 %v420
      %v549 = vunpack.c.l.b16 %v421
      %v550 = vunpack.c.l.b16 %v422
      %v551 = vunpack.c.l.b16 %v423
      %v552 = vunpack.c.l.b16 %v424
      %v553 = vunpack.c.l.b16 %v425
      %v554 = vunpack.c.l.b16 %v426
      %v555 = vunpack.c.l.b16 %v427
      %v556 = vunpack.c.l.b16 %v428
      %v557 = vunpack.c.l.b16 %v429
      %v558 = vunpack.c.l.b16 %v430
      %v559 = vunpack.c.l.b16 %v431
      %v560 = vpack.c.b16 %v545, %v544
      %v561 = vpack.c.b16 %v547, %v546
      %v562 = vpack.c.b16 %v549, %v548
      %v563 = vpack.c.b16 %v551, %v550
      %v564 = vpack.c.b16 %v553, %v552
      %v565 = vpack.c.b16 %v555, %v554
      %v566 = vpack.c.b16 %v557, %v556
      %v567 = vpack.c.b16 %v559, %v558
      %576 = vmatprep.subr.bf16.mxu0 0
      %577 = vmatpush1.bf16.msra.mxu0 %v560
      %578 = vmatprep.subr.bf16.mxu0 0
      %579 = vmatpush1.bf16.msra.mxu0 %v561
      %580 = vmatprep.subr.bf16.mxu0 0
      %581 = vmatpush1.bf16.msra.mxu0 %v562
      %582 = vmatprep.subr.bf16.mxu0 0
      %583 = vmatpush1.bf16.msra.mxu0 %v563
      %584 = vmatprep.subr.bf16.mxu0 0
      %585 = vmatpush1.bf16.msra.mxu0 %v564
      %586 = vmatprep.subr.bf16.mxu0 0
      %587 = vmatpush1.bf16.msra.mxu0 %v565
      %588 = vmatprep.subr.bf16.mxu0 0
      %589 = vmatpush1.bf16.msra.mxu0 %v566
      %590 = vmatprep.subr.bf16.mxu0 0
      %591 = vmatpush1.bf16.msra.mxu0 %v567
      %592 = vmatprep.subr.bf16.mxu0 0
      %593 = vmatpush1.bf16.msra.mxu0 0
      %594 = vmatprep.subr.bf16.mxu0 0
      %595 = vmatpush1.bf16.msra.mxu0 0
      %596 = vmatprep.subr.bf16.mxu0 0
      %597 = vmatpush1.bf16.msra.mxu0 0
      %598 = vmatprep.subr.bf16.mxu0 0
      %599 = vmatpush1.bf16.msra.mxu0 0
      %600 = vmatprep.subr.bf16.mxu0 0
      %601 = vmatpush1.bf16.msra.mxu0 0
      %602 = vmatprep.subr.bf16.mxu0 0
      %603 = vmatpush1.bf16.msra.mxu0 0
      %604 = vmatprep.subr.bf16.mxu0 0
      %605 = vmatpush1.bf16.msra.mxu0 0
      %606 = vmatprep.subr.bf16.mxu0 0
      %607 = vmatpush1.bf16.msra.mxu0 0
      %608 = vmatprep.mubr.bf16.mxu0 0
      %609 = vmatmul.mubr.bf16.gmra.mrb[0].mxu0 %v496
      %v610 = vpop.f32.mrb[0].mxu0
      %v611 = vadd.f32 0.0, %v610
      %v612 = vpop.f32.mrb[0].mxu0
      %v613 = vpop.f32.mrb[0].mxu0
      %v614 = vadd.f32 0.0, %v613
      %v615 = vpop.f32.mrb[0].mxu0
      %616 = vmatprep.mubr.bf16.mxu0 0
      %617 = vmatmul.mubr.bf16.gmra.mrb[0].mxu0 %v497
      %v618 = vpop.f32.mrb[0].mxu0
      %v619 = vadd.f32 0.0, %v618
      %v620 = vpop.f32.mrb[0].mxu0
      %v621 = vpop.f32.mrb[0].mxu0
      %v622 = vadd.f32 0.0, %v621
      %v623 = vpop.f32.mrb[0].mxu0
      %624 = vmatprep.mubr.bf16.mxu0 0
      %625 = vmatmul.mubr.bf16.gmra.mrb[0].mxu0 %v498
      %v626 = vpop.f32.mrb[0].mxu0
      %v627 = vadd.f32 0.0, %v626
      %v628 = vpop.f32.mrb[0].mxu0
      %v629 = vpop.f32.mrb[0].mxu0
      %v630 = vadd.f32 0.0, %v629
      %v631 = vpop.f32.mrb[0].mxu0
      %632 = vmatprep.mubr.bf16.mxu0 0
      %633 = vmatmul.mubr.bf16.gmra.mrb[0].mxu0 %v499
      %v634 = vpop.f32.mrb[0].mxu0
      %v635 = vadd.f32 0.0, %v634
      %v636 = vpop.f32.mrb[0].mxu0
      %v637 = vpop.f32.mrb[0].mxu0
      %v638 = vadd.f32 0.0, %v637
      %v639 = vpop.f32.mrb[0].mxu0
      %640 = vmatprep.mubr.bf16.mxu0 0
      %641 = vmatmul.mubr.bf16.gmra.mrb[0].mxu0 %v500
      %v642 = vpop.f32.mrb[0].mxu0
      %v643 = vadd.f32 0.0, %v642
      %v644 = vpop.f32.mrb[0].mxu0
      %v645 = vpop.f32.mrb[0].mxu0
      %v646 = vadd.f32 0.0, %v645
      %v647 = vpop.f32.mrb[0].mxu0
      %648 = vmatprep.mubr.bf16.mxu0 0
      %649 = vmatmul.mubr.bf16.gmra.mrb[0].mxu0 %v501
      %v650 = vpop.f32.mrb[0].mxu0
      %v651 = vadd.f32 0.0, %v650
      %v652 = vpop.f32.mrb[0].mxu0
      %v653 = vpop.f32.mrb[0].mxu0
      %v654 = vadd.f32 0.0, %v653
      %v655 = vpop.f32.mrb[0].mxu0
      %656 = vmatprep.mubr.bf16.mxu0 0
      %657 = vmatmul.mubr.bf16.gmra.mrb[0].mxu0 %v502
      %v658 = vpop.f32.mrb[0].mxu0
      %v659 = vadd.f32 0.0, %v658
      %v660 = vpop.f32.mrb[0].mxu0
      %v661 = vpop.f32.mrb[0].mxu0
      %v662 = vadd.f32 0.0, %v661
      %v663 = vpop.f32.mrb[0].mxu0
      %664 = vmatprep.mubr.bf16.mxu0 0
      %665 = vmatmul.mubr.bf16.gmra.mrb[0].mxu0 %v503
      %v666 = vpop.f32.mrb[0].mxu0
      %v667 = vadd.f32 0.0, %v666
      %v668 = vpop.f32.mrb[0].mxu0
      %v669 = vpop.f32.mrb[0].mxu0
      %v670 = vadd.f32 0.0, %v669
      %v671 = vpop.f32.mrb[0].mxu0
      %672 = vmatprep.mubr.bf16.mxu0 0
      %673 = vmatmul.mubr.bf16.gmra.mrb[0].mxu0 %v504
      %v674 = vpop.f32.mrb[0].mxu0
      %v675 = vadd.f32 0.0, %v674
      %v676 = vpop.f32.mrb[0].mxu0
      %v677 = vpop.f32.mrb[0].mxu0
      %v678 = vadd.f32 0.0, %v677
      %v679 = vpop.f32.mrb[0].mxu0
      %680 = vmatprep.mubr.bf16.mxu0 0
      %681 = vmatmul.mubr.bf16.gmra.mrb[0].mxu0 %v505
      %v682 = vpop.f32.mrb[0].mxu0
      %v683 = vadd.f32 0.0, %v682
      %v684 = vpop.f32.mrb[0].mxu0
      %v685 = vpop.f32.mrb[0].mxu0
      %v686 = vadd.f32 0.0, %v685
      %v687 = vpop.f32.mrb[0].mxu0
      %688 = vmatprep.mubr.bf16.mxu0 0
      %689 = vmatmul.mubr.bf16.gmra.mrb[0].mxu0 %v506
      %v690 = vpop.f32.mrb[0].mxu0
      %v691 = vadd.f32 0.0, %v690
      %v692 = vpop.f32.mrb[0].mxu0
      %v693 = vpop.f32.mrb[0].mxu0
      %v694 = vadd.f32 0.0, %v693
      %v695 = vpop.f32.mrb[0].mxu0
      %696 = vmatprep.mubr.bf16.mxu0 0
      %697 = vmatmul.mubr.bf16.gmra.mrb[0].mxu0 %v507
      %v698 = vpop.f32.mrb[0].mxu0
      %v699 = vadd.f32 0.0, %v698
      %v700 = vpop.f32.mrb[0].mxu0
      %v701 = vpop.f32.mrb[0].mxu0
      %v702 = vadd.f32 0.0, %v701
      %v703 = vpop.f32.mrb[0].mxu0
      %704 = vmatprep.mubr.bf16.mxu0 0
      %705 = vmatmul.mubr.bf16.gmra.mrb[0].mxu0 %v508
      %v706 = vpop.f32.mrb[0].mxu0
      %v707 = vadd.f32 0.0, %v706
      %v708 = vpop.f32.mrb[0].mxu0
      %v709 = vpop.f32.mrb[0].mxu0
      %v710 = vadd.f32 0.0, %v709
      %v711 = vpop.f32.mrb[0].mxu0
      %712 = vmatprep.mubr.bf16.mxu0 0
      %713 = vmatmul.mubr.bf16.gmra.mrb[0].mxu0 %v509
      %v714 = vpop.f32.mrb[0].mxu0
      %v715 = vadd.f32 0.0, %v714
      %v716 = vpop.f32.mrb[0].mxu0
      %v717 = vpop.f32.mrb[0].mxu0
      %v718 = vadd.f32 0.0, %v717
      %v719 = vpop.f32.mrb[0].mxu0
      %720 = vmatprep.mubr.bf16.mxu0 0
      %721 = vmatmul.mubr.bf16.gmra.mrb[0].mxu0 %v510
      %v722 = vpop.f32.mrb[0].mxu0
      %v723 = vadd.f32 0.0, %v722
      %v724 = vpop.f32.mrb[0].mxu0
      %v725 = vpop.f32.mrb[0].mxu0
      %v726 = vadd.f32 0.0, %v725
      %v727 = vpop.f32.mrb[0].mxu0
      %728 = vmatprep.mubr.bf16.mxu0 0
      %729 = vmatmul.mubr.bf16.gmra.mrb[0].mxu0 %v511
      %v730 = vpop.f32.mrb[0].mxu0
      %v731 = vadd.f32 0.0, %v730
      %v732 = vpop.f32.mrb[0].mxu0
      %v733 = vpop.f32.mrb[0].mxu0
      %v734 = vadd.f32 0.0, %v733
      %v735 = vpop.f32.mrb[0].mxu0
      %736 = vdwg.mxu0
      %v737 = vadd.f32 %v352, %v611
      %v738 = vadd.f32 %v353, %v614
      %v739 = vadd.f32 %v354, %v619
      %v740 = vadd.f32 %v355, %v622
      %v741 = vadd.f32 %v356, %v627
      %v742 = vadd.f32 %v357, %v630
      %v743 = vadd.f32 %v358, %v635
      %v744 = vadd.f32 %v359, %v638
      %v745 = vadd.f32 %v360, %v643
      %v746 = vadd.f32 %v361, %v646
      %v747 = vadd.f32 %v362, %v651
      %v748 = vadd.f32 %v363, %v654
      %v749 = vadd.f32 %v364, %v659
      %v750 = vadd.f32 %v365, %v662
      %v751 = vadd.f32 %v366, %v667
      %v752 = vadd.f32 %v367, %v670
      %v753 = vadd.f32 %v368, %v675
      %v754 = vadd.f32 %v369, %v678
      %v755 = vadd.f32 %v370, %v683
      %v756 = vadd.f32 %v371, %v686
      %v757 = vadd.f32 %v372, %v691
      %v758 = vadd.f32 %v373, %v694
      %v759 = vadd.f32 %v374, %v699
      %v760 = vadd.f32 %v375, %v702
      %v761 = vadd.f32 %v376, %v707
      %v762 = vadd.f32 %v377, %v710
      %v763 = vadd.f32 %v378, %v715
      %v764 = vadd.f32 %v379, %v718
      %v765 = vadd.f32 %v380, %v723
      %v766 = vadd.f32 %v381, %v726
      %v767 = vadd.f32 %v382, %v731
      %v768 = vadd.f32 %v383, %v734
      %769 = vst [vmem:[#allocation2] sm:$0xff] %v737
      %770 = vst [vmem:[#allocation2 + $0x8] sm:$0xff] %v738
      %771 = vst [vmem:[#allocation2 + $0x10] sm:$0xff] %v739
      %772 = vst [vmem:[#allocation2 + $0x18] sm:$0xff] %v740
      %773 = vst [vmem:[#allocation2 + $0x20] sm:$0xff] %v741
      %774 = vst [vmem:[#allocation2 + $0x28] sm:$0xff] %v742
      %775 = vst [vmem:[#allocation2 + $0x30] sm:$0xff] %v743
      %776 = vst [vmem:[#allocation2 + $0x38] sm:$0xff] %v744
      %777 = vst [vmem:[#allocation2 + $0x40] sm:$0xff] %v745
      %778 = vst [vmem:[#allocation2 + $0x48] sm:$0xff] %v746
      %779 = vst [vmem:[#allocation2 + $0x50] sm:$0xff] %v747
      %780 = vst [vmem:[#allocation2 + $0x58] sm:$0xff] %v748
      %781 = vst [vmem:[#allocation2 + $0x60] sm:$0xff] %v749
      %782 = vst [vmem:[#allocation2 + $0x68] sm:$0xff] %v750
      %783 = vst [vmem:[#allocation2 + $0x70] sm:$0xff] %v751
      %784 = vst [vmem:[#allocation2 + $0x78] sm:$0xff] %v752
      %785 = vst [vmem:[#allocation2 + $0x80] sm:$0xff] %v753
      %786 = vst [vmem:[#allocation2 + $0x88] sm:$0xff] %v754
      %787 = vst [vmem:[#allocation2 + $0x90] sm:$0xff] %v755
      %788 = vst [vmem:[#allocation2 + $0x98] sm:$0xff] %v756
      %789 = vst [vmem:[#allocation2 + $0xa0] sm:$0xff] %v757
      %790 = vst [vmem:[#allocation2 + $0xa8] sm:$0xff] %v758
      %791 = vst [vmem:[#allocation2 + $0xb0] sm:$0xff] %v759
      %792 = vst [vmem:[#allocation2 + $0xb8] sm:$0xff] %v760
      %793 = vst [vmem:[#allocation2 + $0xc0] sm:$0xff] %v761
      %794 = vst [vmem:[#allocation2 + $0xc8] sm:$0xff] %v762
      %795 = vst [vmem:[#allocation2 + $0xd0] sm:$0xff] %v763
      %796 = vst [vmem:[#allocation2 + $0xd8] sm:$0xff] %v764
      %797 = vst [vmem:[#allocation2 + $0xe0] sm:$0xff] %v765
      %798 = vst [vmem:[#allocation2 + $0xe8] sm:$0xff] %v766
      %799 = vst [vmem:[#allocation2 + $0xf0] sm:$0xff] %v767
      %800 = vst [vmem:[#allocation2 + $0xf8] sm:$0xff] %v768
      // Predicated region
      $region37: #{clagnosco_autoencoder_forward.21} parent=31 // pred_check
        %p801 = pneg %p316
      $region38: #{clagnosco_autoencoder_forward.21} parent=31 // pred_check_branch
        %803 = sbr.rel (%p801) target = $region40
      $region39: #{clagnosco_autoencoder_forward.21} parent=31 // pred_region
        %v804 = vld [vmem:[#allocation2] sm:$0xff]
        %v805 = vld [vmem:[#allocation2 + $0x8] sm:$0xff]
        %v806 = vld [vmem:[#allocation2 + $0x10] sm:$0xff]
        %v807 = vld [vmem:[#allocation2 + $0x18] sm:$0xff]
        %v808 = vld [vmem:[#allocation2 + $0x20] sm:$0xff]
        %v809 = vld [vmem:[#allocation2 + $0x28] sm:$0xff]
        %v810 = vld [vmem:[#allocation2 + $0x30] sm:$0xff]
        %v811 = vld [vmem:[#allocation2 + $0x38] sm:$0xff]
        %v812 = vld [vmem:[#allocation2 + $0x40] sm:$0xff]
        %v813 = vld [vmem:[#allocation2 + $0x48] sm:$0xff]
        %v814 = vld [vmem:[#allocation2 + $0x50] sm:$0xff]
        %v815 = vld [vmem:[#allocation2 + $0x58] sm:$0xff]
        %v816 = vld [vmem:[#allocation2 + $0x60] sm:$0xff]
        %v817 = vld [vmem:[#allocation2 + $0x68] sm:$0xff]
        %v818 = vld [vmem:[#allocation2 + $0x70] sm:$0xff]
        %v819 = vld [vmem:[#allocation2 + $0x78] sm:$0xff]
        %v820 = vld [vmem:[#allocation2 + $0x80] sm:$0xff]
        %v821 = vld [vmem:[#allocation2 + $0x88] sm:$0xff]
        %v822 = vld [vmem:[#allocation2 + $0x90] sm:$0xff]
        %v823 = vld [vmem:[#allocation2 + $0x98] sm:$0xff]
        %v824 = vld [vmem:[#allocation2 + $0xa0] sm:$0xff]
        %v825 = vld [vmem:[#allocation2 + $0xa8] sm:$0xff]
        %v826 = vld [vmem:[#allocation2 + $0xb0] sm:$0xff]
        %v827 = vld [vmem:[#allocation2 + $0xb8] sm:$0xff]
        %v828 = vld [vmem:[#allocation2 + $0xc0] sm:$0xff]
        %v829 = vld [vmem:[#allocation2 + $0xc8] sm:$0xff]
        %v830 = vld [vmem:[#allocation2 + $0xd0] sm:$0xff]
        %v831 = vld [vmem:[#allocation2 + $0xd8] sm:$0xff]
        %v832 = vld [vmem:[#allocation2 + $0xe0] sm:$0xff]
        %v833 = vld [vmem:[#allocation2 + $0xe8] sm:$0xff]
        %v834 = vld [vmem:[#allocation2 + $0xf0] sm:$0xff]
        %v835 = vld [vmem:[#allocation2 + $0xf8] sm:$0xff]
        %v836 = vld [vmem:[%s301] sm:$0x1]
        %v838 = vlaneseq
        %v839 = vshrl.u32 %v838, 7
        %v840 = vsub.s32 0, %v839
        %v841 = vrot.slane %v836, %v840
        %v843 = vadd.f32 %v804, %v841
        %v844 = vadd.f32 %v805, %v841
        %v845 = vadd.f32 %v806, %v841
        %v846 = vadd.f32 %v807, %v841
        %v847 = vadd.f32 %v808, %v841
        %v848 = vadd.f32 %v809, %v841
        %v849 = vadd.f32 %v810, %v841
        %v850 = vadd.f32 %v811, %v841
        %v851 = vadd.f32 %v812, %v841
        %v852 = vadd.f32 %v813, %v841
        %v853 = vadd.f32 %v814, %v841
        %v854 = vadd.f32 %v815, %v841
        %v855 = vadd.f32 %v816, %v841
        %v856 = vadd.f32 %v817, %v841
        %v857 = vadd.f32 %v818, %v841
        %v858 = vadd.f32 %v819, %v841
        %v859 = vadd.f32 %v820, %v841
        %v860 = vadd.f32 %v821, %v841
        %v861 = vadd.f32 %v822, %v841
        %v862 = vadd.f32 %v823, %v841
        %v863 = vadd.f32 %v824, %v841
        %v864 = vadd.f32 %v825, %v841
        %v865 = vadd.f32 %v826, %v841
        %v866 = vadd.f32 %v827, %v841
        %v867 = vadd.f32 %v828, %v841
        %v868 = vadd.f32 %v829, %v841
        %v869 = vadd.f32 %v830, %v841
        %v870 = vadd.f32 %v831, %v841
        %v871 = vadd.f32 %v832, %v841
        %v872 = vadd.f32 %v833, %v841
        %v873 = vadd.f32 %v834, %v841
        %v874 = vadd.f32 %v835, %v841
        %v875 = vxor.u32 %v843, 2147483648
        %v876 = vxor.u32 %v844, 2147483648
        %v877 = vxor.u32 %v845, 2147483648
        %v878 = vxor.u32 %v846, 2147483648
        %v879 = vxor.u32 %v847, 2147483648
        %v880 = vxor.u32 %v848, 2147483648
        %v881 = vxor.u32 %v849, 2147483648
        %v882 = vxor.u32 %v850, 2147483648
        %v883 = vxor.u32 %v851, 2147483648
        %v884 = vxor.u32 %v852, 2147483648
        %v885 = vxor.u32 %v853, 2147483648
        %v886 = vxor.u32 %v854, 2147483648
        %v887 = vxor.u32 %v855, 2147483648
        %v888 = vxor.u32 %v856, 2147483648
        %v889 = vxor.u32 %v857, 2147483648
        %v890 = vxor.u32 %v858, 2147483648
        %v891 = vxor.u32 %v859, 2147483648
        %v892 = vxor.u32 %v860, 2147483648
        %v893 = vxor.u32 %v861, 2147483648
        %v894 = vxor.u32 %v862, 2147483648
        %v895 = vxor.u32 %v863, 2147483648
        %v896 = vxor.u32 %v864, 2147483648
        %v897 = vxor.u32 %v865, 2147483648
        %v898 = vxor.u32 %v866, 2147483648
        %v899 = vxor.u32 %v867, 2147483648
        %v900 = vxor.u32 %v868, 2147483648
        %v901 = vxor.u32 %v869, 2147483648
        %v902 = vxor.u32 %v870, 2147483648
        %v903 = vxor.u32 %v871, 2147483648
        %v904 = vxor.u32 %v872, 2147483648
        %v905 = vxor.u32 %v873, 2147483648
        %v906 = vxor.u32 %v874, 2147483648
        %v907 = vmul.f32 %v875, 1.442695
        %v908 = vpow.pop %v907
        %v909 = vmul.f32 %v876, 1.442695
        %v910 = vpow.pop %v909
        %v911 = vmul.f32 %v877, 1.442695
        %v912 = vpow.pop %v911
        %v913 = vmul.f32 %v878, 1.442695
        %v914 = vpow.pop %v913
        %v915 = vmul.f32 %v879, 1.442695
        %v916 = vpow.pop %v915
        %v917 = vmul.f32 %v880, 1.442695
        %v918 = vpow.pop %v917
        %v919 = vmul.f32 %v881, 1.442695
        %v920 = vpow.pop %v919
        %v921 = vmul.f32 %v882, 1.442695
        %v922 = vpow.pop %v921
        %v923 = vmul.f32 %v883, 1.442695
        %v924 = vpow.pop %v923
        %v925 = vmul.f32 %v884, 1.442695
        %v926 = vpow.pop %v925
        %v927 = vmul.f32 %v885, 1.442695
        %v928 = vpow.pop %v927
        %v929 = vmul.f32 %v886, 1.442695
        %v930 = vpow.pop %v929
        %v931 = vmul.f32 %v887, 1.442695
        %v932 = vpow.pop %v931
        %v933 = vmul.f32 %v888, 1.442695
        %v934 = vpow.pop %v933
        %v935 = vmul.f32 %v889, 1.442695
        %v936 = vpow.pop %v935
        %v937 = vmul.f32 %v890, 1.442695
        %v938 = vpow.pop %v937
        %v939 = vmul.f32 %v891, 1.442695
        %v940 = vpow.pop %v939
        %v941 = vmul.f32 %v892, 1.442695
        %v942 = vpow.pop %v941
        %v943 = vmul.f32 %v893, 1.442695
        %v944 = vpow.pop %v943
        %v945 = vmul.f32 %v894, 1.442695
        %v946 = vpow.pop %v945
        %v947 = vmul.f32 %v895, 1.442695
        %v948 = vpow.pop %v947
        %v949 = vmul.f32 %v896, 1.442695
        %v950 = vpow.pop %v949
        %v951 = vmul.f32 %v897, 1.442695
        %v952 = vpow.pop %v951
        %v953 = vmul.f32 %v898, 1.442695
        %v954 = vpow.pop %v953
        %v955 = vmul.f32 %v899, 1.442695
        %v956 = vpow.pop %v955
        %v957 = vmul.f32 %v900, 1.442695
        %v958 = vpow.pop %v957
        %v959 = vmul.f32 %v901, 1.442695
        %v960 = vpow.pop %v959
        %v961 = vmul.f32 %v902, 1.442695
        %v962 = vpow.pop %v961
        %v963 = vmul.f32 %v903, 1.442695
        %v964 = vpow.pop %v963
        %v965 = vmul.f32 %v904, 1.442695
        %v966 = vpow.pop %v965
        %v967 = vmul.f32 %v905, 1.442695
        %v968 = vpow.pop %v967
        %v969 = vmul.f32 %v906, 1.442695
        %v970 = vpow.pop %v969
        %v971 = vadd.f32 %v908, 1.0
        %v972 = vadd.f32 %v910, 1.0
        %v973 = vadd.f32 %v912, 1.0
        %v974 = vadd.f32 %v914, 1.0
        %v975 = vadd.f32 %v916, 1.0
        %v976 = vadd.f32 %v918, 1.0
        %v977 = vadd.f32 %v920, 1.0
        %v978 = vadd.f32 %v922, 1.0
        %v979 = vadd.f32 %v924, 1.0
        %v980 = vadd.f32 %v926, 1.0
        %v981 = vadd.f32 %v928, 1.0
        %v982 = vadd.f32 %v930, 1.0
        %v983 = vadd.f32 %v932, 1.0
        %v984 = vadd.f32 %v934, 1.0
        %v985 = vadd.f32 %v936, 1.0
        %v986 = vadd.f32 %v938, 1.0
        %v987 = vadd.f32 %v940, 1.0
        %v988 = vadd.f32 %v942, 1.0
        %v989 = vadd.f32 %v944, 1.0
        %v990 = vadd.f32 %v946, 1.0
        %v991 = vadd.f32 %v948, 1.0
        %v992 = vadd.f32 %v950, 1.0
        %v993 = vadd.f32 %v952, 1.0
        %v994 = vadd.f32 %v954, 1.0
        %v995 = vadd.f32 %v956, 1.0
        %v996 = vadd.f32 %v958, 1.0
        %v997 = vadd.f32 %v960, 1.0
        %v998 = vadd.f32 %v962, 1.0
        %v999 = vadd.f32 %v964, 1.0
        %v1000 = vadd.f32 %v966, 1.0
        %v1001 = vadd.f32 %v968, 1.0
        %v1002 = vadd.f32 %v970, 1.0
        %v1003 = vrcp.pop %v971
        %v1004 = vmul.f32 1.0, %v1003
        %v1005 = vrcp.pop %v972
        %v1006 = vmul.f32 1.0, %v1005
        %v1007 = vrcp.pop %v973
        %v1008 = vmul.f32 1.0, %v1007
        %v1009 = vrcp.pop %v974
        %v1010 = vmul.f32 1.0, %v1009
        %v1011 = vrcp.pop %v975
        %v1012 = vmul.f32 1.0, %v1011
        %v1013 = vrcp.pop %v976
        %v1014 = vmul.f32 1.0, %v1013
        %v1015 = vrcp.pop %v977
        %v1016 = vmul.f32 1.0, %v1015
        %v1017 = vrcp.pop %v978
        %v1018 = vmul.f32 1.0, %v1017
        %v1019 = vrcp.pop %v979
        %v1020 = vmul.f32 1.0, %v1019
        %v1021 = vrcp.pop %v980
        %v1022 = vmul.f32 1.0, %v1021
        %v1023 = vrcp.pop %v981
        %v1024 = vmul.f32 1.0, %v1023
        %v1025 = vrcp.pop %v982
        %v1026 = vmul.f32 1.0, %v1025
        %v1027 = vrcp.pop %v983
        %v1028 = vmul.f32 1.0, %v1027
        %v1029 = vrcp.pop %v984
        %v1030 = vmul.f32 1.0, %v1029
        %v1031 = vrcp.pop %v985
        %v1032 = vmul.f32 1.0, %v1031
        %v1033 = vrcp.pop %v986
        %v1034 = vmul.f32 1.0, %v1033
        %v1035 = vrcp.pop %v987
        %v1036 = vmul.f32 1.0, %v1035
        %v1037 = vrcp.pop %v988
        %v1038 = vmul.f32 1.0, %v1037
        %v1039 = vrcp.pop %v989
        %v1040 = vmul.f32 1.0, %v1039
        %v1041 = vrcp.pop %v990
        %v1042 = vmul.f32 1.0, %v1041
        %v1043 = vrcp.pop %v991
        %v1044 = vmul.f32 1.0, %v1043
        %v1045 = vrcp.pop %v992
        %v1046 = vmul.f32 1.0, %v1045
        %v1047 = vrcp.pop %v993
        %v1048 = vmul.f32 1.0, %v1047
        %v1049 = vrcp.pop %v994
        %v1050 = vmul.f32 1.0, %v1049
        %v1051 = vrcp.pop %v995
        %v1052 = vmul.f32 1.0, %v1051
        %v1053 = vrcp.pop %v996
        %v1054 = vmul.f32 1.0, %v1053
        %v1055 = vrcp.pop %v997
        %v1056 = vmul.f32 1.0, %v1055
        %v1057 = vrcp.pop %v998
        %v1058 = vmul.f32 1.0, %v1057
        %v1059 = vrcp.pop %v999
        %v1060 = vmul.f32 1.0, %v1059
        %v1061 = vrcp.pop %v1000
        %v1062 = vmul.f32 1.0, %v1061
        %v1063 = vrcp.pop %v1001
        %v1064 = vmul.f32 1.0, %v1063
        %v1065 = vrcp.pop %v1002
        %v1066 = vmul.f32 1.0, %v1065
        %1067 = vst [vmem:[%s313] sm:$0xff] %v1004
        %1068 = vst [vmem:[%s313 + $0x8] sm:$0xff] %v1006
        %1069 = vst [vmem:[%s313 + $0x10] sm:$0xff] %v1008
        %1070 = vst [vmem:[%s313 + $0x18] sm:$0xff] %v1010
        %1071 = vst [vmem:[%s313 + $0x20] sm:$0xff] %v1012
        %1072 = vst [vmem:[%s313 + $0x28] sm:$0xff] %v1014
        %1073 = vst [vmem:[%s313 + $0x30] sm:$0xff] %v1016
        %1074 = vst [vmem:[%s313 + $0x38] sm:$0xff] %v1018
        %1075 = vst [vmem:[%s313 + $0x40] sm:$0xff] %v1020
        %1076 = vst [vmem:[%s313 + $0x48] sm:$0xff] %v1022
        %1077 = vst [vmem:[%s313 + $0x50] sm:$0xff] %v1024
        %1078 = vst [vmem:[%s313 + $0x58] sm:$0xff] %v1026
        %1079 = vst [vmem:[%s313 + $0x60] sm:$0xff] %v1028
        %1080 = vst [vmem:[%s313 + $0x68] sm:$0xff] %v1030
        %1081 = vst [vmem:[%s313 + $0x70] sm:$0xff] %v1032
        %1082 = vst [vmem:[%s313 + $0x78] sm:$0xff] %v1034
        %1083 = vst [vmem:[%s313 + $0x80] sm:$0xff] %v1036
        %1084 = vst [vmem:[%s313 + $0x88] sm:$0xff] %v1038
        %1085 = vst [vmem:[%s313 + $0x90] sm:$0xff] %v1040
        %1086 = vst [vmem:[%s313 + $0x98] sm:$0xff] %v1042
        %1087 = vst [vmem:[%s313 + $0xa0] sm:$0xff] %v1044
        %1088 = vst [vmem:[%s313 + $0xa8] sm:$0xff] %v1046
        %1089 = vst [vmem:[%s313 + $0xb0] sm:$0xff] %v1048
        %1090 = vst [vmem:[%s313 + $0xb8] sm:$0xff] %v1050
        %1091 = vst [vmem:[%s313 + $0xc0] sm:$0xff] %v1052
        %1092 = vst [vmem:[%s313 + $0xc8] sm:$0xff] %v1054
        %1093 = vst [vmem:[%s313 + $0xd0] sm:$0xff] %v1056
        %1094 = vst [vmem:[%s313 + $0xd8] sm:$0xff] %v1058
        %1095 = vst [vmem:[%s313 + $0xe0] sm:$0xff] %v1060
        %1096 = vst [vmem:[%s313 + $0xe8] sm:$0xff] %v1062
        %1097 = vst [vmem:[%s313 + $0xf0] sm:$0xff] %v1064
        %1098 = vst [vmem:[%s313 + $0xf8] sm:$0xff] %v1066
      $region40: #{clagnosco_autoencoder_forward.21} parent=31 // pred_fallthru
        _
      %s1099 = smul.u32 32, %s21
      %p1100 = scmp.lt.s32.totalorder %s20, 3
      %s1101 = scalar_select %p1100, %s20, 3
      %p1102 = scmp.lt.s32.totalorder %s1099, 63
      %s1103 = scalar_select %p1102, %s1099, 63
      %p1104 = scmp.lt.s32.totalorder %s22, 0
      %s1105 = scalar_select %p1104, %s22, 0
      %s1106 = sadd.s32 %s1105, %s1103
      %s1107 = smul.addr %s1101, 64
      %s1108 = sadd.s32 %s1106, %s1107
      %s1109 = smul.addr %s1108, 8
      %s1110 = scalar_lea.vmem %s3, %s1109
      // Predicated region
      $region41: #{clagnosco_autoencoder_forward.21} parent=31 // pred_check
        %p1111 = pneg %p150
      $region42: #{clagnosco_autoencoder_forward.21} parent=31 // pred_check_branch
        %1113 = sbr.rel (%p1111) target = $region44
      $region43: #{clagnosco_autoencoder_forward.21} parent=31 // pred_region
        %s1114 = smul.u32 32, %s21
      $region44: #{clagnosco_autoencoder_forward.21} parent=31 // pred_fallthru
        _
    $region32: #{clagnosco_autoencoder_forward.21} parent=5 // pred_fallthru
      _
    %p1115 = scmp.le.s32.totalorder 2, %s9
    // Predicated region
    $region45: #{clagnosco_autoencoder_forward.21} parent=5 // pred_check
      %p1116 = pneg %p1115
    $region46: #{clagnosco_autoencoder_forward.21} parent=5 // pred_check_branch
      %1118 = sbr.rel (%p1116) target = $region48
    $region47: #{clagnosco_autoencoder_forward.21} parent=5 // pred_region
      %s1119 = ssub.s32 %s9, 2
      // Predicated region
      $region49: #{clagnosco_autoencoder_forward.21} parent=47 // pred_check
        %p1120 = pneg %p156
      $region50: #{clagnosco_autoencoder_forward.21} parent=47 // pred_check_branch
        %1122 = sbr.rel (%p1120) target = $region52
      $region51: #{clagnosco_autoencoder_forward.21} parent=47 // pred_region
        %s1123 = smul.u32 32, %s25
        %p1124 = scmp.lt.s32.totalorder %s24, 3
        %s1125 = scalar_select %p1124, %s24, 3
        %p1126 = scmp.lt.s32.totalorder %s1123, 63
        %s1127 = scalar_select %p1126, %s1123, 63
        %p1128 = scmp.lt.s32.totalorder %s26, 0
        %s1129 = scalar_select %p1128, %s26, 0
        %s1130 = sadd.s32 %s1129, %s1127
        %s1131 = smul.addr %s1125, 64
        %s1132 = sadd.s32 %s1130, %s1131
        %s1133 = smul.addr %s1132, 8
        %s1134 = scalar_lea.vmem %s3, %s1133
      $region52: #{clagnosco_autoencoder_forward.21} parent=47 // pred_fallthru
        _
    $region48: #{clagnosco_autoencoder_forward.21} parent=5 // pred_fallthru
      _
  $region6: #{clagnosco_autoencoder_forward.21} parent=0 // loop_footer
    %s13 = sadd.s32 1, %s9
  $region7: #{clagnosco_autoencoder_forward.21} parent=0 // loop_footer_branch
    %8 = sbr.rel target = $region3
  $region8: #{clagnosco_autoencoder_forward.21} parent=0 // loop_exit
    _

</llo_original>
